<compile_context>
chip_gen: v5e
topology: v5e:2x2
jax: 0.10.0
libtpu: 0.0.40
codegen_flags: <defaults>
</compile_context>

<pallas_src>
import numpy as np

import jax
import jax.numpy as jnp
from jax.experimental import pallas as pl
from jax.experimental.pallas import tpu as pltpu


# ----------------------------------------------------------------------------
# Fused Pallas kernel: conv1 -> pool -> conv2 -> pool -> flatten -> fc -> sigmoid
# (one grid step == one image)
# ----------------------------------------------------------------------------
def fused_kernel(p1_ref, w1_ref, b1_ref, w2s_ref, b2_ref, gsel_ref,
                 fc1w_ref, fc1b_ref, fc2w_ref, fc2b_ref, fc3w_ref, fc3b_ref,
                 out_ref):
    f32 = jnp.float32

    # ---- conv1 + tanh at pool-surviving positions, then the 2x2 pool mean ----
    # p1_ref block: (1, 625, 108). Row i*25+j holds the 6x6x3 input window that
    # is shared by the four surviving conv1 positions (5i+dr, 5j+dc); the
    # column index is (u*6+v)*3 + ci with u, v in 0..5.
    patch = p1_ref[0]                              # (625, 108)
    b1 = b1_ref[...]                               # (1, 6)
    y1 = jnp.zeros((625, 6), f32)                  # pooled conv1 out, row=i*25+j
    for dd in range(4):                            # dd = dr*2 + dc
        pre = jnp.dot(patch, w1_ref[dd],
                      preferred_element_type=f32)  # (625, 6)
        y1 = y1 + jnp.tanh(pre + b1)
    y1 = y1 * 0.25

    # ---- conv2 as 25 shifted-slice accumulating matmuls ----
    # m2[q, co] = pre-bias conv2 output at flattened position q = r*25 + c.
    m2 = jnp.zeros((521, 16), f32)
    for k in range(25):                            # k = kh*5 + kw
        off = (k // 5) * 25 + (k % 5)
        m2 = m2 + jnp.dot(y1[off:off + 521, :], w2s_ref[k],
                          preferred_element_type=f32)           # (521, 16)

    # Keep only the 64 pool-surviving conv2 positions via a constant 0/1
    # selection matmul; gsel rows are ordered (dr, dc, i, j).
    sel = jnp.dot(gsel_ref[...], m2, preferred_element_type=f32)  # (64, 16)
    t2 = jnp.tanh(sel + b2_ref[...])
    pooled = 0.25 * (t2[0:16] + t2[16:32] + t2[32:48] + t2[48:64])  # (16, 16)

    # ---- flatten to a (1, 256) row vector, order (s = i*4+j, cout) ----
    # fc1 weights were pre-permuted to this order, so no NCHW transpose here.
    feat = jnp.concatenate([pooled[s:s + 1, :] for s in range(16)], axis=1)

    # ---- fused fc stack + sigmoid ----
    h = jnp.tanh(jnp.dot(feat, fc1w_ref[...], preferred_element_type=f32)
                 + fc1b_ref[...])                                  # (1, 120)
    h = jnp.tanh(jnp.dot(h, fc2w_ref[...], preferred_element_type=f32)
                 + fc2b_ref[...])                                  # (1, 84)
    z = jnp.sum(h * fc3w_ref[...], axis=1, keepdims=True) + fc3b_ref[...]
    out_ref[...] = (1.0 / (1.0 + jnp.exp(-z))).reshape(1, 1, 1)


# ----------------------------------------------------------------------------
# Glue: pooled-position input windows for conv1 (pure layout plumbing)
# ----------------------------------------------------------------------------
def conv1_pooled_patches(x_nhwc):
    """x:(B,128,128,3) -> (B, 625, 108).  Row i*25+j holds the 6x6x3 input
    window shared by the four pool-surviving conv1 positions of pooled cell
    (i, j); column = (u*6+v)*3 + ci, u, v in 0..5."""
    B = x_nhwc.shape[0]
    taps = []
    for u in range(6):
        for v in range(6):
            taps.append(x_nhwc[:, u:u + 121:5, v:v + 121:5, :])  # (B, 25, 25, 3)
    p = jnp.stack(taps, axis=3)                                  # (B,25,25,36,3)
    return p.reshape(B, 625, 108)


# ----------------------------------------------------------------------------
# One-time weight layout preparation (done outside jit, once per model)
# ----------------------------------------------------------------------------
def preprocess_params(params):
    # conv1 weights -> four zero-padded (108, 6) slabs, one per pool offset
    # (dr, dc): W1[dd, (u*6+v)*3+ci, co] = w1[co, ci, u-dr, v-dc] when in range.
    w1_np = np.asarray(params["conv1_w"], np.float32)        # (6, 3, 5, 5)
    w1s = np.zeros((4, 108, 6), np.float32)
    for dd in range(4):
        dr, dc = dd // 2, dd % 2
        for kh in range(5):
            for kw in range(5):
                base = ((dr + kh) * 6 + (dc + kw)) * 3
                for ci in range(3):
                    w1s[dd, base + ci, :] = w1_np[:, ci, kh, kw]

    # conv2 weights -> (25, 6, 16) tap slabs, index (kh*5+kw, cin, cout)
    w2s = jnp.transpose(params["conv2_w"], (2, 3, 1, 0)).reshape(25, 6, 16)

    # constant 0/1 matrix selecting the 64 pool-surviving conv2 positions
    # q = (5i+dr)*25 + (5j+dc), rows ordered (dr, dc, i, j)
    g = np.zeros((64, 521), np.float32)
    p = 0
    for dr in range(2):
        for dc in range(2):
            for i in range(4):
                for j in range(4):
                    g[p, 125 * i + 25 * dr + 5 * j + dc] = 1.0
                    p += 1

    # fc1: permute input columns from PyTorch NCHW flatten order (co*16 + s)
    # to the kernel's (s*16 + co) order, and store as (in, out).
    fc1w = jnp.transpose(params["fc1_w"].reshape(120, 16, 16), (2, 1, 0))
    fc1w = fc1w.reshape(256, 120)

    return {
        "w1s": jnp.asarray(w1s),
        "b1": params["conv1_b"].reshape(1, 6),
        "w2s": w2s,
        "b2": params["conv2_b"].reshape(1, 16),
        "gsel": jnp.asarray(g),
        "fc1w": fc1w,
        "fc1b": params["fc1_b"].reshape(1, 120),
        "fc2w": params["fc2_w"].T,                 # (120, 84)
        "fc2b": params["fc2_b"].reshape(1, 84),
        "fc3w": params["fc3_w"],                   # (1, 84), used via mul+sum
        "fc3b": params["fc3_b"].reshape(1, 1),
    }


# ----------------------------------------------------------------------------
# Full forward pass (single pallas_call, grid over batch)
# ----------------------------------------------------------------------------
def brain_tumor_cnn_forward(x_nchw, prep):
    B = x_nchw.shape[0]
    x = jnp.transpose(x_nchw, (0, 2, 3, 1))         # NCHW -> NHWC
    p1 = conv1_pooled_patches(x)                    # (B, 625, 108)

    out = pl.pallas_call(
        fused_kernel,
        out_shape=jax.ShapeDtypeStruct((B, 1, 1), jnp.float32),
        grid=(B,),
        in_specs=[
            pl.BlockSpec((1, 625, 108), lambda b: (b, 0, 0)),
            pl.BlockSpec((4, 108, 6), lambda b: (0, 0, 0)),
            pl.BlockSpec((1, 6), lambda b: (0, 0)),
            pl.BlockSpec((25, 6, 16), lambda b: (0, 0, 0)),
            pl.BlockSpec((1, 16), lambda b: (0, 0)),
            pl.BlockSpec((64, 521), lambda b: (0, 0)),
            pl.BlockSpec((256, 120), lambda b: (0, 0)),
            pl.BlockSpec((1, 120), lambda b: (0, 0)),
            pl.BlockSpec((120, 84), lambda b: (0, 0)),
            pl.BlockSpec((1, 84), lambda b: (0, 0)),
            pl.BlockSpec((1, 84), lambda b: (0, 0)),
            pl.BlockSpec((1, 1), lambda b: (0, 0)),
        ],
        out_specs=pl.BlockSpec((1, 1, 1), lambda b: (b, 0, 0)),
        compiler_params=pltpu.CompilerParams(
            dimension_semantics=("parallel",)),
    )(p1, prep["w1s"], prep["b1"], prep["w2s"], prep["b2"], prep["gsel"],
      prep["fc1w"], prep["fc1b"], prep["fc2w"], prep["fc2b"],
      prep["fc3w"], prep["fc3b"])
    return out.reshape(B, 1)


# ----------------------------------------------------------------------------
# Parameter init (deterministic, PyTorch-default-style uniform(-1/sqrt(fan_in)))
# ----------------------------------------------------------------------------
def init_params(key):
    def u(key, shape, fan_in):
        bound = 1.0 / jnp.sqrt(jnp.float32(fan_in))
        return jax.random.uniform(key, shape, jnp.float32, -bound, bound)

    ks = jax.random.split(key, 10)
    p = {}
    p["conv1_w"] = u(ks[0], (6, 3, 5, 5), 3 * 5 * 5)
    p["conv1_b"] = u(ks[1], (6,), 3 * 5 * 5)
    p["conv2_w"] = u(ks[2], (16, 6, 5, 5), 6 * 5 * 5)
    p["conv2_b"] = u(ks[3], (16,), 6 * 5 * 5)
    p["fc1_w"] = u(ks[4], (120, 256), 256)
    p["fc1_b"] = u(ks[5], (120,), 256)
    p["fc2_w"] = u(ks[6], (84, 120), 120)
    p["fc2_b"] = u(ks[7], (84,), 120)
    p["fc3_w"] = u(ks[8], (1, 84), 84)
    p["fc3_b"] = u(ks[9], (1,), 84)
    return p


# ----------------------------------------------------------------------------
# Pure-JAX reference (for correctness verification only)
# ----------------------------------------------------------------------------
def _avgpool_nchw(x, k, s):
    B, C, H, W = x.shape
    Ho = (H - k) // s + 1
    Wo = (W - k) // s + 1
    acc = jnp.zeros((B, C, Ho, Wo), x.dtype)
    for di in range(k):
        for dj in range(k):
            acc = acc + x[:, :, di:di + (Ho - 1) * s + 1:s,
                          dj:dj + (Wo - 1) * s + 1:s]
    return acc / float(k * k)


def reference_forward(x_nchw, params):
    hi = jax.lax.Precision.HIGHEST
    dn = ("NCHW", "OIHW", "NCHW")
    y = jax.lax.conv_general_dilated(x_nchw, params["conv1_w"], (1, 1), "VALID",
                                     dimension_numbers=dn, precision=hi)
    y = jnp.tanh(y + params["conv1_b"][None, :, None, None])
    y = _avgpool_nchw(y, 2, 5)
    y = jax.lax.conv_general_dilated(y, params["conv2_w"], (1, 1), "VALID",
                                     dimension_numbers=dn, precision=hi)
    y = jnp.tanh(y + params["conv2_b"][None, :, None, None])
    y = _avgpool_nchw(y, 2, 5)
    f = y.reshape(y.shape[0], -1)
    h = jnp.tanh(jnp.dot(f, params["fc1_w"].T, precision=hi) + params["fc1_b"])
    h = jnp.tanh(jnp.dot(h, params["fc2_w"].T, precision=hi) + params["fc2_b"])
    z = jnp.dot(h, params["fc3_w"].T, precision=hi) + params["fc3_b"]
    return jax.nn.sigmoid(z)


# ----------------------------------------------------------------------------
if __name__ == "__main__":
    # fc1 (in_features=256 = 16*4*4) forces the 128x128 spatial input size.
    key = jax.random.PRNGKey(0)
    kx, kp = jax.random.split(key)
    x = jax.random.normal(kx, (2, 3, 128, 128), jnp.float32)   # NCHW, like PyTorch
    params = init_params(kp)
    prep = preprocess_params(params)                           # one-time weight prep

    fwd = jax.jit(brain_tumor_cnn_forward)
    out = jax.block_until_ready(fwd(x, prep))

    assert out.shape == (2, 1), out.shape
    assert bool(jnp.all(jnp.isfinite(out)))
    assert bool(jnp.all((out > 0.0) & (out < 1.0)))            # sigmoid range

    ref = jax.block_until_ready(jax.jit(reference_forward)(x, params))
    err = float(jnp.max(jnp.abs(out - ref)))
    assert err < 1e-3, f"mismatch vs pure-JAX reference: {err}"

    print("KERNEL_OK")
</pallas_src>

<mosaic_0001>
module attributes {stable_mosaic.version = 11 : i64} {
  func.func @fused_kernel(%arg0: i32, %arg1: memref<1x625x108xf32, #tpu.memory_space<vmem>>, %arg2: memref<4x108x6xf32, #tpu.memory_space<vmem>>, %arg3: memref<1x6xf32, #tpu.memory_space<vmem>>, %arg4: memref<25x6x16xf32, #tpu.memory_space<vmem>>, %arg5: memref<1x16xf32, #tpu.memory_space<vmem>>, %arg6: memref<64x521xf32, #tpu.memory_space<vmem>>, %arg7: memref<256x120xf32, #tpu.memory_space<vmem>>, %arg8: memref<1x120xf32, #tpu.memory_space<vmem>>, %arg9: memref<120x84xf32, #tpu.memory_space<vmem>>, %arg10: memref<1x84xf32, #tpu.memory_space<vmem>>, %arg11: memref<1x84xf32, #tpu.memory_space<vmem>>, %arg12: memref<1x1xf32, #tpu.memory_space<vmem>>, %arg13: memref<1x1x1xf32, #tpu.memory_space<vmem>>) attributes {dimension_semantics = [#tpu.dimension_semantics<parallel>], iteration_bounds = array<i64: 2>, scalar_prefetch = 0 : i64, scratch_operands = 0 : i64, tpu.core_type = #tpu.core_type<tc>, window_params = [{transform_indices = @transform_0, window_bounds = array<i64: 1, 625, 108>}, {pipeline_mode = #tpu.pipeline_mode<synchronous>, transform_indices = @transform_1, window_bounds = array<i64: 4, 108, 6>}, {pipeline_mode = #tpu.pipeline_mode<synchronous>, transform_indices = @transform_2, window_bounds = array<i64: 1, 6>}, {pipeline_mode = #tpu.pipeline_mode<synchronous>, transform_indices = @transform_3, window_bounds = array<i64: 25, 6, 16>}, {pipeline_mode = #tpu.pipeline_mode<synchronous>, transform_indices = @transform_4, window_bounds = array<i64: 1, 16>}, {pipeline_mode = #tpu.pipeline_mode<synchronous>, transform_indices = @transform_5, window_bounds = array<i64: 64, 521>}, {pipeline_mode = #tpu.pipeline_mode<synchronous>, transform_indices = @transform_6, window_bounds = array<i64: 256, 120>}, {pipeline_mode = #tpu.pipeline_mode<synchronous>, transform_indices = @transform_7, window_bounds = array<i64: 1, 120>}, {pipeline_mode = #tpu.pipeline_mode<synchronous>, transform_indices = @transform_8, window_bounds = array<i64: 120, 84>}, {pipeline_mode = #tpu.pipeline_mode<synchronous>, transform_indices = @transform_9, window_bounds = array<i64: 1, 84>}, {pipeline_mode = #tpu.pipeline_mode<synchronous>, transform_indices = @transform_10, window_bounds = array<i64: 1, 84>}, {pipeline_mode = #tpu.pipeline_mode<synchronous>, transform_indices = @transform_11, window_bounds = array<i64: 1, 1>}, {transform_indices = @transform_12, window_bounds = array<i64: 1, 1, 1>}]} {
    %c0 = arith.constant 0 : index
    %c0_0 = arith.constant 0 : index
    %c0_1 = arith.constant 0 : index
    %0 = vector.load %arg1[%c0, %c0_0, %c0_1] : memref<1x625x108xf32, #tpu.memory_space<vmem>>, vector<1x625x108xf32>
    %1 = vector.shape_cast %0 : vector<1x625x108xf32> to vector<625x108xf32>
    %c0_2 = arith.constant 0 : index
    %c0_3 = arith.constant 0 : index
    %2 = vector.load %arg3[%c0_2, %c0_3] : memref<1x6xf32, #tpu.memory_space<vmem>>, vector<1x6xf32>
    %cst = arith.constant 0.000000e+00 : f32
    %3 = vector.broadcast %cst : f32 to vector<625x6xf32>
    %c0_4 = arith.constant 0 : index
    %c0_5 = arith.constant 0 : index
    %c0_6 = arith.constant 0 : index
    %4 = vector.load %arg2[%c0_4, %c0_5, %c0_6] : memref<4x108x6xf32, #tpu.memory_space<vmem>>, vector<1x108x6xf32>
    %5 = vector.shape_cast %4 : vector<1x108x6xf32> to vector<108x6xf32>
    %cst_7 = arith.constant dense<0.000000e+00> : vector<625x6xf32>
    %6 = tpu.matmul %1, %5, %cst_7 {dimension_numbers = #tpu.dot_dimension_numbers<[1], [0], [0], [1], [0, 0, 1, 1], [], []>} : vector<625x108xf32>, vector<108x6xf32>, vector<625x6xf32> -> vector<625x6xf32>
    %7 = vector.broadcast %2 : vector<1x6xf32> to vector<625x6xf32>
    %8 = arith.addf %6, %7 : vector<625x6xf32>
    %9 = math.tanh %8 : vector<625x6xf32>
    %10 = arith.addf %3, %9 : vector<625x6xf32>
    %c1 = arith.constant 1 : index
    %c0_8 = arith.constant 0 : index
    %c0_9 = arith.constant 0 : index
    %11 = vector.load %arg2[%c1, %c0_8, %c0_9] : memref<4x108x6xf32, #tpu.memory_space<vmem>>, vector<1x108x6xf32>
    %12 = vector.shape_cast %11 : vector<1x108x6xf32> to vector<108x6xf32>
    %cst_10 = arith.constant dense<0.000000e+00> : vector<625x6xf32>
    %13 = tpu.matmul %1, %12, %cst_10 {dimension_numbers = #tpu.dot_dimension_numbers<[1], [0], [0], [1], [0, 0, 1, 1], [], []>} : vector<625x108xf32>, vector<108x6xf32>, vector<625x6xf32> -> vector<625x6xf32>
    %14 = vector.broadcast %2 : vector<1x6xf32> to vector<625x6xf32>
    %15 = arith.addf %13, %14 : vector<625x6xf32>
    %16 = math.tanh %15 : vector<625x6xf32>
    %17 = arith.addf %10, %16 : vector<625x6xf32>
    %c2 = arith.constant 2 : index
    %c0_11 = arith.constant 0 : index
    %c0_12 = arith.constant 0 : index
    %18 = vector.load %arg2[%c2, %c0_11, %c0_12] : memref<4x108x6xf32, #tpu.memory_space<vmem>>, vector<1x108x6xf32>
    %19 = vector.shape_cast %18 : vector<1x108x6xf32> to vector<108x6xf32>
    %cst_13 = arith.constant dense<0.000000e+00> : vector<625x6xf32>
    %20 = tpu.matmul %1, %19, %cst_13 {dimension_numbers = #tpu.dot_dimension_numbers<[1], [0], [0], [1], [0, 0, 1, 1], [], []>} : vector<625x108xf32>, vector<108x6xf32>, vector<625x6xf32> -> vector<625x6xf32>
    %21 = vector.broadcast %2 : vector<1x6xf32> to vector<625x6xf32>
    %22 = arith.addf %20, %21 : vector<625x6xf32>
    %23 = math.tanh %22 : vector<625x6xf32>
    %24 = arith.addf %17, %23 : vector<625x6xf32>
    %c3 = arith.constant 3 : index
    %c0_14 = arith.constant 0 : index
    %c0_15 = arith.constant 0 : index
    %25 = vector.load %arg2[%c3, %c0_14, %c0_15] : memref<4x108x6xf32, #tpu.memory_space<vmem>>, vector<1x108x6xf32>
    %26 = vector.shape_cast %25 : vector<1x108x6xf32> to vector<108x6xf32>
    %cst_16 = arith.constant dense<0.000000e+00> : vector<625x6xf32>
    %27 = tpu.matmul %1, %26, %cst_16 {dimension_numbers = #tpu.dot_dimension_numbers<[1], [0], [0], [1], [0, 0, 1, 1], [], []>} : vector<625x108xf32>, vector<108x6xf32>, vector<625x6xf32> -> vector<625x6xf32>
    %28 = vector.broadcast %2 : vector<1x6xf32> to vector<625x6xf32>
    %29 = arith.addf %27, %28 : vector<625x6xf32>
    %30 = math.tanh %29 : vector<625x6xf32>
    %31 = arith.addf %24, %30 : vector<625x6xf32>
    %cst_17 = arith.constant 2.500000e-01 : f32
    %32 = vector.broadcast %cst_17 : f32 to vector<625x6xf32>
    %33 = arith.mulf %31, %32 : vector<625x6xf32>
    %cst_18 = arith.constant 0.000000e+00 : f32
    %34 = vector.broadcast %cst_18 : f32 to vector<521x16xf32>
    %35 = vector.extract_strided_slice %33 {offsets = [0, 0], sizes = [521, 6], strides = [1, 1]} : vector<625x6xf32> to vector<521x6xf32>
    %c0_19 = arith.constant 0 : index
    %c0_20 = arith.constant 0 : index
    %c0_21 = arith.constant 0 : index
    %36 = vector.load %arg4[%c0_19, %c0_20, %c0_21] : memref<25x6x16xf32, #tpu.memory_space<vmem>>, vector<1x6x16xf32>
    %37 = vector.shape_cast %36 : vector<1x6x16xf32> to vector<6x16xf32>
    %cst_22 = arith.constant dense<0.000000e+00> : vector<521x16xf32>
    %38 = tpu.matmul %35, %37, %cst_22 {dimension_numbers = #tpu.dot_dimension_numbers<[1], [0], [0], [1], [0, 0, 1, 1], [], []>} : vector<521x6xf32>, vector<6x16xf32>, vector<521x16xf32> -> vector<521x16xf32>
    %39 = arith.addf %34, %38 : vector<521x16xf32>
    %40 = vector.extract_strided_slice %33 {offsets = [1, 0], sizes = [521, 6], strides = [1, 1]} : vector<625x6xf32> to vector<521x6xf32>
    %c1_23 = arith.constant 1 : index
    %c0_24 = arith.constant 0 : index
    %c0_25 = arith.constant 0 : index
    %41 = vector.load %arg4[%c1_23, %c0_24, %c0_25] : memref<25x6x16xf32, #tpu.memory_space<vmem>>, vector<1x6x16xf32>
    %42 = vector.shape_cast %41 : vector<1x6x16xf32> to vector<6x16xf32>
    %cst_26 = arith.constant dense<0.000000e+00> : vector<521x16xf32>
    %43 = tpu.matmul %40, %42, %cst_26 {dimension_numbers = #tpu.dot_dimension_numbers<[1], [0], [0], [1], [0, 0, 1, 1], [], []>} : vector<521x6xf32>, vector<6x16xf32>, vector<521x16xf32> -> vector<521x16xf32>
    %44 = arith.addf %39, %43 : vector<521x16xf32>
    %45 = vector.extract_strided_slice %33 {offsets = [2, 0], sizes = [521, 6], strides = [1, 1]} : vector<625x6xf32> to vector<521x6xf32>
    %c2_27 = arith.constant 2 : index
    %c0_28 = arith.constant 0 : index
    %c0_29 = arith.constant 0 : index
    %46 = vector.load %arg4[%c2_27, %c0_28, %c0_29] : memref<25x6x16xf32, #tpu.memory_space<vmem>>, vector<1x6x16xf32>
    %47 = vector.shape_cast %46 : vector<1x6x16xf32> to vector<6x16xf32>
    %cst_30 = arith.constant dense<0.000000e+00> : vector<521x16xf32>
    %48 = tpu.matmul %45, %47, %cst_30 {dimension_numbers = #tpu.dot_dimension_numbers<[1], [0], [0], [1], [0, 0, 1, 1], [], []>} : vector<521x6xf32>, vector<6x16xf32>, vector<521x16xf32> -> vector<521x16xf32>
    %49 = arith.addf %44, %48 : vector<521x16xf32>
    %50 = vector.extract_strided_slice %33 {offsets = [3, 0], sizes = [521, 6], strides = [1, 1]} : vector<625x6xf32> to vector<521x6xf32>
    %c3_31 = arith.constant 3 : index
    %c0_32 = arith.constant 0 : index
    %c0_33 = arith.constant 0 : index
    %51 = vector.load %arg4[%c3_31, %c0_32, %c0_33] : memref<25x6x16xf32, #tpu.memory_space<vmem>>, vector<1x6x16xf32>
    %52 = vector.shape_cast %51 : vector<1x6x16xf32> to vector<6x16xf32>
    %cst_34 = arith.constant dense<0.000000e+00> : vector<521x16xf32>
    %53 = tpu.matmul %50, %52, %cst_34 {dimension_numbers = #tpu.dot_dimension_numbers<[1], [0], [0], [1], [0, 0, 1, 1], [], []>} : vector<521x6xf32>, vector<6x16xf32>, vector<521x16xf32> -> vector<521x16xf32>
    %54 = arith.addf %49, %53 : vector<521x16xf32>
    %55 = vector.extract_strided_slice %33 {offsets = [4, 0], sizes = [521, 6], strides = [1, 1]} : vector<625x6xf32> to vector<521x6xf32>
    %c4 = arith.constant 4 : index
    %c0_35 = arith.constant 0 : index
    %c0_36 = arith.constant 0 : index
    %56 = vector.load %arg4[%c4, %c0_35, %c0_36] : memref<25x6x16xf32, #tpu.memory_space<vmem>>, vector<1x6x16xf32>
    %57 = vector.shape_cast %56 : vector<1x6x16xf32> to vector<6x16xf32>
    %cst_37 = arith.constant dense<0.000000e+00> : vector<521x16xf32>
    %58 = tpu.matmul %55, %57, %cst_37 {dimension_numbers = #tpu.dot_dimension_numbers<[1], [0], [0], [1], [0, 0, 1, 1], [], []>} : vector<521x6xf32>, vector<6x16xf32>, vector<521x16xf32> -> vector<521x16xf32>
    %59 = arith.addf %54, %58 : vector<521x16xf32>
    %60 = vector.extract_strided_slice %33 {offsets = [25, 0], sizes = [521, 6], strides = [1, 1]} : vector<625x6xf32> to vector<521x6xf32>
    %c5 = arith.constant 5 : index
    %c0_38 = arith.constant 0 : index
    %c0_39 = arith.constant 0 : index
    %61 = vector.load %arg4[%c5, %c0_38, %c0_39] : memref<25x6x16xf32, #tpu.memory_space<vmem>>, vector<1x6x16xf32>
    %62 = vector.shape_cast %61 : vector<1x6x16xf32> to vector<6x16xf32>
    %cst_40 = arith.constant dense<0.000000e+00> : vector<521x16xf32>
    %63 = tpu.matmul %60, %62, %cst_40 {dimension_numbers = #tpu.dot_dimension_numbers<[1], [0], [0], [1], [0, 0, 1, 1], [], []>} : vector<521x6xf32>, vector<6x16xf32>, vector<521x16xf32> -> vector<521x16xf32>
    %64 = arith.addf %59, %63 : vector<521x16xf32>
    %65 = vector.extract_strided_slice %33 {offsets = [26, 0], sizes = [521, 6], strides = [1, 1]} : vector<625x6xf32> to vector<521x6xf32>
    %c6 = arith.constant 6 : index
    %c0_41 = arith.constant 0 : index
    %c0_42 = arith.constant 0 : index
    %66 = vector.load %arg4[%c6, %c0_41, %c0_42] : memref<25x6x16xf32, #tpu.memory_space<vmem>>, vector<1x6x16xf32>
    %67 = vector.shape_cast %66 : vector<1x6x16xf32> to vector<6x16xf32>
    %cst_43 = arith.constant dense<0.000000e+00> : vector<521x16xf32>
    %68 = tpu.matmul %65, %67, %cst_43 {dimension_numbers = #tpu.dot_dimension_numbers<[1], [0], [0], [1], [0, 0, 1, 1], [], []>} : vector<521x6xf32>, vector<6x16xf32>, vector<521x16xf32> -> vector<521x16xf32>
    %69 = arith.addf %64, %68 : vector<521x16xf32>
    %70 = vector.extract_strided_slice %33 {offsets = [27, 0], sizes = [521, 6], strides = [1, 1]} : vector<625x6xf32> to vector<521x6xf32>
    %c7 = arith.constant 7 : index
    %c0_44 = arith.constant 0 : index
    %c0_45 = arith.constant 0 : index
    %71 = vector.load %arg4[%c7, %c0_44, %c0_45] : memref<25x6x16xf32, #tpu.memory_space<vmem>>, vector<1x6x16xf32>
    %72 = vector.shape_cast %71 : vector<1x6x16xf32> to vector<6x16xf32>
    %cst_46 = arith.constant dense<0.000000e+00> : vector<521x16xf32>
    %73 = tpu.matmul %70, %72, %cst_46 {dimension_numbers = #tpu.dot_dimension_numbers<[1], [0], [0], [1], [0, 0, 1, 1], [], []>} : vector<521x6xf32>, vector<6x16xf32>, vector<521x16xf32> -> vector<521x16xf32>
    %74 = arith.addf %69, %73 : vector<521x16xf32>
    %75 = vector.extract_strided_slice %33 {offsets = [28, 0], sizes = [521, 6], strides = [1, 1]} : vector<625x6xf32> to vector<521x6xf32>
    %c8 = arith.constant 8 : index
    %c0_47 = arith.constant 0 : index
    %c0_48 = arith.constant 0 : index
    %76 = vector.load %arg4[%c8, %c0_47, %c0_48] : memref<25x6x16xf32, #tpu.memory_space<vmem>>, vector<1x6x16xf32>
    %77 = vector.shape_cast %76 : vector<1x6x16xf32> to vector<6x16xf32>
    %cst_49 = arith.constant dense<0.000000e+00> : vector<521x16xf32>
    %78 = tpu.matmul %75, %77, %cst_49 {dimension_numbers = #tpu.dot_dimension_numbers<[1], [0], [0], [1], [0, 0, 1, 1], [], []>} : vector<521x6xf32>, vector<6x16xf32>, vector<521x16xf32> -> vector<521x16xf32>
    %79 = arith.addf %74, %78 : vector<521x16xf32>
    %80 = vector.extract_strided_slice %33 {offsets = [29, 0], sizes = [521, 6], strides = [1, 1]} : vector<625x6xf32> to vector<521x6xf32>
    %c9 = arith.constant 9 : index
    %c0_50 = arith.constant 0 : index
    %c0_51 = arith.constant 0 : index
    %81 = vector.load %arg4[%c9, %c0_50, %c0_51] : memref<25x6x16xf32, #tpu.memory_space<vmem>>, vector<1x6x16xf32>
    %82 = vector.shape_cast %81 : vector<1x6x16xf32> to vector<6x16xf32>
    %cst_52 = arith.constant dense<0.000000e+00> : vector<521x16xf32>
    %83 = tpu.matmul %80, %82, %cst_52 {dimension_numbers = #tpu.dot_dimension_numbers<[1], [0], [0], [1], [0, 0, 1, 1], [], []>} : vector<521x6xf32>, vector<6x16xf32>, vector<521x16xf32> -> vector<521x16xf32>
    %84 = arith.addf %79, %83 : vector<521x16xf32>
    %85 = vector.extract_strided_slice %33 {offsets = [50, 0], sizes = [521, 6], strides = [1, 1]} : vector<625x6xf32> to vector<521x6xf32>
    %c10 = arith.constant 10 : index
    %c0_53 = arith.constant 0 : index
    %c0_54 = arith.constant 0 : index
    %86 = vector.load %arg4[%c10, %c0_53, %c0_54] : memref<25x6x16xf32, #tpu.memory_space<vmem>>, vector<1x6x16xf32>
    %87 = vector.shape_cast %86 : vector<1x6x16xf32> to vector<6x16xf32>
    %cst_55 = arith.constant dense<0.000000e+00> : vector<521x16xf32>
    %88 = tpu.matmul %85, %87, %cst_55 {dimension_numbers = #tpu.dot_dimension_numbers<[1], [0], [0], [1], [0, 0, 1, 1], [], []>} : vector<521x6xf32>, vector<6x16xf32>, vector<521x16xf32> -> vector<521x16xf32>
    %89 = arith.addf %84, %88 : vector<521x16xf32>
    %90 = vector.extract_strided_slice %33 {offsets = [51, 0], sizes = [521, 6], strides = [1, 1]} : vector<625x6xf32> to vector<521x6xf32>
    %c11 = arith.constant 11 : index
    %c0_56 = arith.constant 0 : index
    %c0_57 = arith.constant 0 : index
    %91 = vector.load %arg4[%c11, %c0_56, %c0_57] : memref<25x6x16xf32, #tpu.memory_space<vmem>>, vector<1x6x16xf32>
    %92 = vector.shape_cast %91 : vector<1x6x16xf32> to vector<6x16xf32>
    %cst_58 = arith.constant dense<0.000000e+00> : vector<521x16xf32>
    %93 = tpu.matmul %90, %92, %cst_58 {dimension_numbers = #tpu.dot_dimension_numbers<[1], [0], [0], [1], [0, 0, 1, 1], [], []>} : vector<521x6xf32>, vector<6x16xf32>, vector<521x16xf32> -> vector<521x16xf32>
    %94 = arith.addf %89, %93 : vector<521x16xf32>
    %95 = vector.extract_strided_slice %33 {offsets = [52, 0], sizes = [521, 6], strides = [1, 1]} : vector<625x6xf32> to vector<521x6xf32>
    %c12 = arith.constant 12 : index
    %c0_59 = arith.constant 0 : index
    %c0_60 = arith.constant 0 : index
    %96 = vector.load %arg4[%c12, %c0_59, %c0_60] : memref<25x6x16xf32, #tpu.memory_space<vmem>>, vector<1x6x16xf32>
    %97 = vector.shape_cast %96 : vector<1x6x16xf32> to vector<6x16xf32>
    %cst_61 = arith.constant dense<0.000000e+00> : vector<521x16xf32>
    %98 = tpu.matmul %95, %97, %cst_61 {dimension_numbers = #tpu.dot_dimension_numbers<[1], [0], [0], [1], [0, 0, 1, 1], [], []>} : vector<521x6xf32>, vector<6x16xf32>, vector<521x16xf32> -> vector<521x16xf32>
    %99 = arith.addf %94, %98 : vector<521x16xf32>
    %100 = vector.extract_strided_slice %33 {offsets = [53, 0], sizes = [521, 6], strides = [1, 1]} : vector<625x6xf32> to vector<521x6xf32>
    %c13 = arith.constant 13 : index
    %c0_62 = arith.constant 0 : index
    %c0_63 = arith.constant 0 : index
    %101 = vector.load %arg4[%c13, %c0_62, %c0_63] : memref<25x6x16xf32, #tpu.memory_space<vmem>>, vector<1x6x16xf32>
    %102 = vector.shape_cast %101 : vector<1x6x16xf32> to vector<6x16xf32>
    %cst_64 = arith.constant dense<0.000000e+00> : vector<521x16xf32>
    %103 = tpu.matmul %100, %102, %cst_64 {dimension_numbers = #tpu.dot_dimension_numbers<[1], [0], [0], [1], [0, 0, 1, 1], [], []>} : vector<521x6xf32>, vector<6x16xf32>, vector<521x16xf32> -> vector<521x16xf32>
    %104 = arith.addf %99, %103 : vector<521x16xf32>
    %105 = vector.extract_strided_slice %33 {offsets = [54, 0], sizes = [521, 6], strides = [1, 1]} : vector<625x6xf32> to vector<521x6xf32>
    %c14 = arith.constant 14 : index
    %c0_65 = arith.constant 0 : index
    %c0_66 = arith.constant 0 : index
    %106 = vector.load %arg4[%c14, %c0_65, %c0_66] : memref<25x6x16xf32, #tpu.memory_space<vmem>>, vector<1x6x16xf32>
    %107 = vector.shape_cast %106 : vector<1x6x16xf32> to vector<6x16xf32>
    %cst_67 = arith.constant dense<0.000000e+00> : vector<521x16xf32>
    %108 = tpu.matmul %105, %107, %cst_67 {dimension_numbers = #tpu.dot_dimension_numbers<[1], [0], [0], [1], [0, 0, 1, 1], [], []>} : vector<521x6xf32>, vector<6x16xf32>, vector<521x16xf32> -> vector<521x16xf32>
    %109 = arith.addf %104, %108 : vector<521x16xf32>
    %110 = vector.extract_strided_slice %33 {offsets = [75, 0], sizes = [521, 6], strides = [1, 1]} : vector<625x6xf32> to vector<521x6xf32>
    %c15 = arith.constant 15 : index
    %c0_68 = arith.constant 0 : index
    %c0_69 = arith.constant 0 : index
    %111 = vector.load %arg4[%c15, %c0_68, %c0_69] : memref<25x6x16xf32, #tpu.memory_space<vmem>>, vector<1x6x16xf32>
    %112 = vector.shape_cast %111 : vector<1x6x16xf32> to vector<6x16xf32>
    %cst_70 = arith.constant dense<0.000000e+00> : vector<521x16xf32>
    %113 = tpu.matmul %110, %112, %cst_70 {dimension_numbers = #tpu.dot_dimension_numbers<[1], [0], [0], [1], [0, 0, 1, 1], [], []>} : vector<521x6xf32>, vector<6x16xf32>, vector<521x16xf32> -> vector<521x16xf32>
    %114 = arith.addf %109, %113 : vector<521x16xf32>
    %115 = vector.extract_strided_slice %33 {offsets = [76, 0], sizes = [521, 6], strides = [1, 1]} : vector<625x6xf32> to vector<521x6xf32>
    %c16 = arith.constant 16 : index
    %c0_71 = arith.constant 0 : index
    %c0_72 = arith.constant 0 : index
    %116 = vector.load %arg4[%c16, %c0_71, %c0_72] : memref<25x6x16xf32, #tpu.memory_space<vmem>>, vector<1x6x16xf32>
    %117 = vector.shape_cast %116 : vector<1x6x16xf32> to vector<6x16xf32>
    %cst_73 = arith.constant dense<0.000000e+00> : vector<521x16xf32>
    %118 = tpu.matmul %115, %117, %cst_73 {dimension_numbers = #tpu.dot_dimension_numbers<[1], [0], [0], [1], [0, 0, 1, 1], [], []>} : vector<521x6xf32>, vector<6x16xf32>, vector<521x16xf32> -> vector<521x16xf32>
    %119 = arith.addf %114, %118 : vector<521x16xf32>
    %120 = vector.extract_strided_slice %33 {offsets = [77, 0], sizes = [521, 6], strides = [1, 1]} : vector<625x6xf32> to vector<521x6xf32>
    %c17 = arith.constant 17 : index
    %c0_74 = arith.constant 0 : index
    %c0_75 = arith.constant 0 : index
    %121 = vector.load %arg4[%c17, %c0_74, %c0_75] : memref<25x6x16xf32, #tpu.memory_space<vmem>>, vector<1x6x16xf32>
    %122 = vector.shape_cast %121 : vector<1x6x16xf32> to vector<6x16xf32>
    %cst_76 = arith.constant dense<0.000000e+00> : vector<521x16xf32>
    %123 = tpu.matmul %120, %122, %cst_76 {dimension_numbers = #tpu.dot_dimension_numbers<[1], [0], [0], [1], [0, 0, 1, 1], [], []>} : vector<521x6xf32>, vector<6x16xf32>, vector<521x16xf32> -> vector<521x16xf32>
    %124 = arith.addf %119, %123 : vector<521x16xf32>
    %125 = vector.extract_strided_slice %33 {offsets = [78, 0], sizes = [521, 6], strides = [1, 1]} : vector<625x6xf32> to vector<521x6xf32>
    %c18 = arith.constant 18 : index
    %c0_77 = arith.constant 0 : index
    %c0_78 = arith.constant 0 : index
    %126 = vector.load %arg4[%c18, %c0_77, %c0_78] : memref<25x6x16xf32, #tpu.memory_space<vmem>>, vector<1x6x16xf32>
    %127 = vector.shape_cast %126 : vector<1x6x16xf32> to vector<6x16xf32>
    %cst_79 = arith.constant dense<0.000000e+00> : vector<521x16xf32>
    %128 = tpu.matmul %125, %127, %cst_79 {dimension_numbers = #tpu.dot_dimension_numbers<[1], [0], [0], [1], [0, 0, 1, 1], [], []>} : vector<521x6xf32>, vector<6x16xf32>, vector<521x16xf32> -> vector<521x16xf32>
    %129 = arith.addf %124, %128 : vector<521x16xf32>
    %130 = vector.extract_strided_slice %33 {offsets = [79, 0], sizes = [521, 6], strides = [1, 1]} : vector<625x6xf32> to vector<521x6xf32>
    %c19 = arith.constant 19 : index
    %c0_80 = arith.constant 0 : index
    %c0_81 = arith.constant 0 : index
    %131 = vector.load %arg4[%c19, %c0_80, %c0_81] : memref<25x6x16xf32, #tpu.memory_space<vmem>>, vector<1x6x16xf32>
    %132 = vector.shape_cast %131 : vector<1x6x16xf32> to vector<6x16xf32>
    %cst_82 = arith.constant dense<0.000000e+00> : vector<521x16xf32>
    %133 = tpu.matmul %130, %132, %cst_82 {dimension_numbers = #tpu.dot_dimension_numbers<[1], [0], [0], [1], [0, 0, 1, 1], [], []>} : vector<521x6xf32>, vector<6x16xf32>, vector<521x16xf32> -> vector<521x16xf32>
    %134 = arith.addf %129, %133 : vector<521x16xf32>
    %135 = vector.extract_strided_slice %33 {offsets = [100, 0], sizes = [521, 6], strides = [1, 1]} : vector<625x6xf32> to vector<521x6xf32>
    %c20 = arith.constant 20 : index
    %c0_83 = arith.constant 0 : index
    %c0_84 = arith.constant 0 : index
    %136 = vector.load %arg4[%c20, %c0_83, %c0_84] : memref<25x6x16xf32, #tpu.memory_space<vmem>>, vector<1x6x16xf32>
    %137 = vector.shape_cast %136 : vector<1x6x16xf32> to vector<6x16xf32>
    %cst_85 = arith.constant dense<0.000000e+00> : vector<521x16xf32>
    %138 = tpu.matmul %135, %137, %cst_85 {dimension_numbers = #tpu.dot_dimension_numbers<[1], [0], [0], [1], [0, 0, 1, 1], [], []>} : vector<521x6xf32>, vector<6x16xf32>, vector<521x16xf32> -> vector<521x16xf32>
    %139 = arith.addf %134, %138 : vector<521x16xf32>
    %140 = vector.extract_strided_slice %33 {offsets = [101, 0], sizes = [521, 6], strides = [1, 1]} : vector<625x6xf32> to vector<521x6xf32>
    %c21 = arith.constant 21 : index
    %c0_86 = arith.constant 0 : index
    %c0_87 = arith.constant 0 : index
    %141 = vector.load %arg4[%c21, %c0_86, %c0_87] : memref<25x6x16xf32, #tpu.memory_space<vmem>>, vector<1x6x16xf32>
    %142 = vector.shape_cast %141 : vector<1x6x16xf32> to vector<6x16xf32>
    %cst_88 = arith.constant dense<0.000000e+00> : vector<521x16xf32>
    %143 = tpu.matmul %140, %142, %cst_88 {dimension_numbers = #tpu.dot_dimension_numbers<[1], [0], [0], [1], [0, 0, 1, 1], [], []>} : vector<521x6xf32>, vector<6x16xf32>, vector<521x16xf32> -> vector<521x16xf32>
    %144 = arith.addf %139, %143 : vector<521x16xf32>
    %145 = vector.extract_strided_slice %33 {offsets = [102, 0], sizes = [521, 6], strides = [1, 1]} : vector<625x6xf32> to vector<521x6xf32>
    %c22 = arith.constant 22 : index
    %c0_89 = arith.constant 0 : index
    %c0_90 = arith.constant 0 : index
    %146 = vector.load %arg4[%c22, %c0_89, %c0_90] : memref<25x6x16xf32, #tpu.memory_space<vmem>>, vector<1x6x16xf32>
    %147 = vector.shape_cast %146 : vector<1x6x16xf32> to vector<6x16xf32>
    %cst_91 = arith.constant dense<0.000000e+00> : vector<521x16xf32>
    %148 = tpu.matmul %145, %147, %cst_91 {dimension_numbers = #tpu.dot_dimension_numbers<[1], [0], [0], [1], [0, 0, 1, 1], [], []>} : vector<521x6xf32>, vector<6x16xf32>, vector<521x16xf32> -> vector<521x16xf32>
    %149 = arith.addf %144, %148 : vector<521x16xf32>
    %150 = vector.extract_strided_slice %33 {offsets = [103, 0], sizes = [521, 6], strides = [1, 1]} : vector<625x6xf32> to vector<521x6xf32>
    %c23 = arith.constant 23 : index
    %c0_92 = arith.constant 0 : index
    %c0_93 = arith.constant 0 : index
    %151 = vector.load %arg4[%c23, %c0_92, %c0_93] : memref<25x6x16xf32, #tpu.memory_space<vmem>>, vector<1x6x16xf32>
    %152 = vector.shape_cast %151 : vector<1x6x16xf32> to vector<6x16xf32>
    %cst_94 = arith.constant dense<0.000000e+00> : vector<521x16xf32>
    %153 = tpu.matmul %150, %152, %cst_94 {dimension_numbers = #tpu.dot_dimension_numbers<[1], [0], [0], [1], [0, 0, 1, 1], [], []>} : vector<521x6xf32>, vector<6x16xf32>, vector<521x16xf32> -> vector<521x16xf32>
    %154 = arith.addf %149, %153 : vector<521x16xf32>
    %155 = vector.extract_strided_slice %33 {offsets = [104, 0], sizes = [521, 6], strides = [1, 1]} : vector<625x6xf32> to vector<521x6xf32>
    %c24 = arith.constant 24 : index
    %c0_95 = arith.constant 0 : index
    %c0_96 = arith.constant 0 : index
    %156 = vector.load %arg4[%c24, %c0_95, %c0_96] : memref<25x6x16xf32, #tpu.memory_space<vmem>>, vector<1x6x16xf32>
    %157 = vector.shape_cast %156 : vector<1x6x16xf32> to vector<6x16xf32>
    %cst_97 = arith.constant dense<0.000000e+00> : vector<521x16xf32>
    %158 = tpu.matmul %155, %157, %cst_97 {dimension_numbers = #tpu.dot_dimension_numbers<[1], [0], [0], [1], [0, 0, 1, 1], [], []>} : vector<521x6xf32>, vector<6x16xf32>, vector<521x16xf32> -> vector<521x16xf32>
    %159 = arith.addf %154, %158 : vector<521x16xf32>
    %c0_98 = arith.constant 0 : index
    %c0_99 = arith.constant 0 : index
    %160 = vector.load %arg6[%c0_98, %c0_99] : memref<64x521xf32, #tpu.memory_space<vmem>>, vector<64x521xf32>
    %cst_100 = arith.constant dense<0.000000e+00> : vector<64x16xf32>
    %161 = tpu.matmul %160, %159, %cst_100 {dimension_numbers = #tpu.dot_dimension_numbers<[1], [0], [0], [1], [0, 0, 1, 1], [], []>} : vector<64x521xf32>, vector<521x16xf32>, vector<64x16xf32> -> vector<64x16xf32>
    %c0_101 = arith.constant 0 : index
    %c0_102 = arith.constant 0 : index
    %162 = vector.load %arg5[%c0_101, %c0_102] : memref<1x16xf32, #tpu.memory_space<vmem>>, vector<1x16xf32>
    %163 = vector.broadcast %162 : vector<1x16xf32> to vector<64x16xf32>
    %164 = arith.addf %161, %163 : vector<64x16xf32>
    %165 = math.tanh %164 : vector<64x16xf32>
    %166 = vector.extract_strided_slice %165 {offsets = [0, 0], sizes = [16, 16], strides = [1, 1]} : vector<64x16xf32> to vector<16x16xf32>
    %167 = vector.extract_strided_slice %165 {offsets = [16, 0], sizes = [16, 16], strides = [1, 1]} : vector<64x16xf32> to vector<16x16xf32>
    %168 = arith.addf %166, %167 : vector<16x16xf32>
    %169 = vector.extract_strided_slice %165 {offsets = [32, 0], sizes = [16, 16], strides = [1, 1]} : vector<64x16xf32> to vector<16x16xf32>
    %170 = arith.addf %168, %169 : vector<16x16xf32>
    %171 = vector.extract_strided_slice %165 {offsets = [48, 0], sizes = [16, 16], strides = [1, 1]} : vector<64x16xf32> to vector<16x16xf32>
    %172 = arith.addf %170, %171 : vector<16x16xf32>
    %cst_103 = arith.constant 2.500000e-01 : f32
    %173 = vector.broadcast %cst_103 : f32 to vector<16x16xf32>
    %174 = arith.mulf %173, %172 : vector<16x16xf32>
    %175 = vector.extract_strided_slice %174 {offsets = [0, 0], sizes = [1, 16], strides = [1, 1]} : vector<16x16xf32> to vector<1x16xf32>
    %176 = vector.extract_strided_slice %174 {offsets = [1, 0], sizes = [1, 16], strides = [1, 1]} : vector<16x16xf32> to vector<1x16xf32>
    %177 = vector.extract_strided_slice %174 {offsets = [2, 0], sizes = [1, 16], strides = [1, 1]} : vector<16x16xf32> to vector<1x16xf32>
    %178 = vector.extract_strided_slice %174 {offsets = [3, 0], sizes = [1, 16], strides = [1, 1]} : vector<16x16xf32> to vector<1x16xf32>
    %179 = vector.extract_strided_slice %174 {offsets = [4, 0], sizes = [1, 16], strides = [1, 1]} : vector<16x16xf32> to vector<1x16xf32>
    %180 = vector.extract_strided_slice %174 {offsets = [5, 0], sizes = [1, 16], strides = [1, 1]} : vector<16x16xf32> to vector<1x16xf32>
    %181 = vector.extract_strided_slice %174 {offsets = [6, 0], sizes = [1, 16], strides = [1, 1]} : vector<16x16xf32> to vector<1x16xf32>
    %182 = vector.extract_strided_slice %174 {offsets = [7, 0], sizes = [1, 16], strides = [1, 1]} : vector<16x16xf32> to vector<1x16xf32>
    %183 = vector.extract_strided_slice %174 {offsets = [8, 0], sizes = [1, 16], strides = [1, 1]} : vector<16x16xf32> to vector<1x16xf32>
    %184 = vector.extract_strided_slice %174 {offsets = [9, 0], sizes = [1, 16], strides = [1, 1]} : vector<16x16xf32> to vector<1x16xf32>
    %185 = vector.extract_strided_slice %174 {offsets = [10, 0], sizes = [1, 16], strides = [1, 1]} : vector<16x16xf32> to vector<1x16xf32>
    %186 = vector.extract_strided_slice %174 {offsets = [11, 0], sizes = [1, 16], strides = [1, 1]} : vector<16x16xf32> to vector<1x16xf32>
    %187 = vector.extract_strided_slice %174 {offsets = [12, 0], sizes = [1, 16], strides = [1, 1]} : vector<16x16xf32> to vector<1x16xf32>
    %188 = vector.extract_strided_slice %174 {offsets = [13, 0], sizes = [1, 16], strides = [1, 1]} : vector<16x16xf32> to vector<1x16xf32>
    %189 = vector.extract_strided_slice %174 {offsets = [14, 0], sizes = [1, 16], strides = [1, 1]} : vector<16x16xf32> to vector<1x16xf32>
    %190 = vector.extract_strided_slice %174 {offsets = [15, 0], sizes = [1, 16], strides = [1, 1]} : vector<16x16xf32> to vector<1x16xf32>
    %191 = tpu.concatenate %175, %176, %177, %178, %179, %180, %181, %182, %183, %184, %185, %186, %187, %188, %189, %190 in 1 : vector<1x16xf32>, vector<1x16xf32>, vector<1x16xf32>, vector<1x16xf32>, vector<1x16xf32>, vector<1x16xf32>, vector<1x16xf32>, vector<1x16xf32>, vector<1x16xf32>, vector<1x16xf32>, vector<1x16xf32>, vector<1x16xf32>, vector<1x16xf32>, vector<1x16xf32>, vector<1x16xf32>, vector<1x16xf32> -> vector<1x256xf32>
    %c0_104 = arith.constant 0 : index
    %c0_105 = arith.constant 0 : index
    %192 = vector.load %arg7[%c0_104, %c0_105] : memref<256x120xf32, #tpu.memory_space<vmem>>, vector<256x120xf32>
    %cst_106 = arith.constant dense<0.000000e+00> : vector<1x120xf32>
    %193 = tpu.matmul %191, %192, %cst_106 {dimension_numbers = #tpu.dot_dimension_numbers<[1], [0], [0], [1], [0, 0, 1, 1], [], []>} : vector<1x256xf32>, vector<256x120xf32>, vector<1x120xf32> -> vector<1x120xf32>
    %c0_107 = arith.constant 0 : index
    %c0_108 = arith.constant 0 : index
    %194 = vector.load %arg8[%c0_107, %c0_108] : memref<1x120xf32, #tpu.memory_space<vmem>>, vector<1x120xf32>
    %195 = arith.addf %193, %194 : vector<1x120xf32>
    %196 = math.tanh %195 : vector<1x120xf32>
    %c0_109 = arith.constant 0 : index
    %c0_110 = arith.constant 0 : index
    %197 = vector.load %arg9[%c0_109, %c0_110] : memref<120x84xf32, #tpu.memory_space<vmem>>, vector<120x84xf32>
    %cst_111 = arith.constant dense<0.000000e+00> : vector<1x84xf32>
    %198 = tpu.matmul %196, %197, %cst_111 {dimension_numbers = #tpu.dot_dimension_numbers<[1], [0], [0], [1], [0, 0, 1, 1], [], []>} : vector<1x120xf32>, vector<120x84xf32>, vector<1x84xf32> -> vector<1x84xf32>
    %c0_112 = arith.constant 0 : index
    %c0_113 = arith.constant 0 : index
    %199 = vector.load %arg10[%c0_112, %c0_113] : memref<1x84xf32, #tpu.memory_space<vmem>>, vector<1x84xf32>
    %200 = arith.addf %198, %199 : vector<1x84xf32>
    %201 = math.tanh %200 : vector<1x84xf32>
    %c0_114 = arith.constant 0 : index
    %c0_115 = arith.constant 0 : index
    %202 = vector.load %arg11[%c0_114, %c0_115] : memref<1x84xf32, #tpu.memory_space<vmem>>, vector<1x84xf32>
    %203 = arith.mulf %201, %202 : vector<1x84xf32>
    %cst_116 = arith.constant dense<0.000000e+00> : vector<1xf32>
    %204 = vector.multi_reduction <add>, %203, %cst_116 [1] : vector<1x84xf32> to vector<1xf32>
    %205 = vector.shape_cast %204 : vector<1xf32> to vector<1x1xf32>
    %c0_117 = arith.constant 0 : index
    %c0_118 = arith.constant 0 : index
    %206 = vector.load %arg12[%c0_117, %c0_118] : memref<1x1xf32, #tpu.memory_space<vmem>>, vector<1x1xf32>
    %207 = arith.addf %205, %206 : vector<1x1xf32>
    %cst_119 = arith.constant 0.000000e+00 : f32
    %208 = vector.broadcast %cst_119 : f32 to vector<1x1xf32>
    %209 = arith.subf %208, %207 : vector<1x1xf32>
    %210 = math.exp %209 : vector<1x1xf32>
    %cst_120 = arith.constant 1.000000e+00 : f32
    %211 = vector.broadcast %cst_120 : f32 to vector<1x1xf32>
    %212 = arith.addf %211, %210 : vector<1x1xf32>
    %cst_121 = arith.constant 1.000000e+00 : f32
    %213 = vector.broadcast %cst_121 : f32 to vector<1x1xf32>
    %214 = arith.divf %213, %212 : vector<1x1xf32>
    %215 = vector.shape_cast %214 : vector<1x1xf32> to vector<1x1x1xf32>
    %c0_122 = arith.constant 0 : index
    %c0_123 = arith.constant 0 : index
    %c0_124 = arith.constant 0 : index
    %216 = vector.load %arg13[%c0_122, %c0_123, %c0_124] : memref<1x1x1xf32, #tpu.memory_space<vmem>>, vector<1x1x1xf32>
    tpu.vector_store %arg13[%c0_122, %c0_123, %c0_124], %215 {strides = array<i32>} : memref<1x1x1xf32, #tpu.memory_space<vmem>>, vector<1x1x1xf32>,
    return
  }
  func.func @transform_0(%arg0: i32) -> (i32, i32, i32) {
    %c0_i32 = arith.constant 0 : i32
    %c0_i32_0 = arith.constant 0 : i32
    %c0_i32_1 = arith.constant 0 : i32
    return %arg0, %c0_i32, %c0_i32_0 : i32, i32, i32
  }
  func.func @transform_1(%arg0: i32) -> (i32, i32, i32) {
    %c0_i32 = arith.constant 0 : i32
    %c0_i32_0 = arith.constant 0 : i32
    %c0_i32_1 = arith.constant 0 : i32
    %c0_i32_2 = arith.constant 0 : i32
    return %c0_i32, %c0_i32_0, %c0_i32_1 : i32, i32, i32
  }
  func.func @transform_2(%arg0: i32) -> (i32, i32) {
    %c0_i32 = arith.constant 0 : i32
    %c0_i32_0 = arith.constant 0 : i32
    %c0_i32_1 = arith.constant 0 : i32
    return %c0_i32, %c0_i32_0 : i32, i32
  }
  func.func @transform_3(%arg0: i32) -> (i32, i32, i32) {
    %c0_i32 = arith.constant 0 : i32
    %c0_i32_0 = arith.constant 0 : i32
    %c0_i32_1 = arith.constant 0 : i32
    %c0_i32_2 = arith.constant 0 : i32
    return %c0_i32, %c0_i32_0, %c0_i32_1 : i32, i32, i32
  }
  func.func @transform_4(%arg0: i32) -> (i32, i32) {
    %c0_i32 = arith.constant 0 : i32
    %c0_i32_0 = arith.constant 0 : i32
    %c0_i32_1 = arith.constant 0 : i32
    return %c0_i32, %c0_i32_0 : i32, i32
  }
  func.func @transform_5(%arg0: i32) -> (i32, i32) {
    %c0_i32 = arith.constant 0 : i32
    %c0_i32_0 = arith.constant 0 : i32
    %c0_i32_1 = arith.constant 0 : i32
    return %c0_i32, %c0_i32_0 : i32, i32
  }
  func.func @transform_6(%arg0: i32) -> (i32, i32) {
    %c0_i32 = arith.constant 0 : i32
    %c0_i32_0 = arith.constant 0 : i32
    %c0_i32_1 = arith.constant 0 : i32
    return %c0_i32, %c0_i32_0 : i32, i32
  }
  func.func @transform_7(%arg0: i32) -> (i32, i32) {
    %c0_i32 = arith.constant 0 : i32
    %c0_i32_0 = arith.constant 0 : i32
    %c0_i32_1 = arith.constant 0 : i32
    return %c0_i32, %c0_i32_0 : i32, i32
  }
  func.func @transform_8(%arg0: i32) -> (i32, i32) {
    %c0_i32 = arith.constant 0 : i32
    %c0_i32_0 = arith.constant 0 : i32
    %c0_i32_1 = arith.constant 0 : i32
    return %c0_i32, %c0_i32_0 : i32, i32
  }
  func.func @transform_9(%arg0: i32) -> (i32, i32) {
    %c0_i32 = arith.constant 0 : i32
    %c0_i32_0 = arith.constant 0 : i32
    %c0_i32_1 = arith.constant 0 : i32
    return %c0_i32, %c0_i32_0 : i32, i32
  }
  func.func @transform_10(%arg0: i32) -> (i32, i32) {
    %c0_i32 = arith.constant 0 : i32
    %c0_i32_0 = arith.constant 0 : i32
    %c0_i32_1 = arith.constant 0 : i32
    return %c0_i32, %c0_i32_0 : i32, i32
  }
  func.func @transform_11(%arg0: i32) -> (i32, i32) {
    %c0_i32 = arith.constant 0 : i32
    %c0_i32_0 = arith.constant 0 : i32
    %c0_i32_1 = arith.constant 0 : i32
    return %c0_i32, %c0_i32_0 : i32, i32
  }
  func.func @transform_12(%arg0: i32) -> (i32, i32, i32) {
    %c0_i32 = arith.constant 0 : i32
    %c0_i32_0 = arith.constant 0 : i32
    %c0_i32_1 = arith.constant 0 : i32
    return %arg0, %c0_i32, %c0_i32_0 : i32, i32, i32
  }
}

</mosaic_0001>

<llo_original>
// kernel: brain_tumor_cnn_forward.1
$region0: #{brain_tumor_cnn_forward.1}
  #allocation0 [shape = 'u32[]', space=smem, size = 0x4, offset = 0x4, fixed_abs, tag = 'smem constant byte address 0x4 - core index']
  #allocation1 [shape = 'u32[72,128]{1,0:T(1,128)}', space=vmem, size = 0x9000, scoped, tag = 'internal scratch']
  #allocation2 [shape = 'f32[1,1]{1,0:T(1,128)S(1)}', space=vmem, size = 0x200, scoped, tag = 'scoped memory for brain_tumor_cnn_forward.1']
  %s0 = inlined_call_operand.vmem [shape: f32[2,625,108], index: 0, kind: input, shape index: {}]
  %s1 = inlined_call_operand.vmem [shape: f32[4,108,6], index: 1, kind: input, shape index: {}]
  %s2 = inlined_call_operand.vmem [shape: f32[1,6], index: 2, kind: input, shape index: {}]
  %s3 = inlined_call_operand.vmem [shape: f32[25,6,16], index: 3, kind: input, shape index: {}]
  %s4 = inlined_call_operand.vmem [shape: f32[1,16], index: 4, kind: input, shape index: {}]
  %s5 = inlined_call_operand.vmem [shape: f32[64,521], index: 5, kind: input, shape index: {}]
  %s6 = inlined_call_operand.vmem [shape: f32[256,120], index: 6, kind: input, shape index: {}]
  %s7 = inlined_call_operand.vmem [shape: f32[1,120], index: 7, kind: input, shape index: {}]
  %s8 = inlined_call_operand.vmem [shape: f32[120,84], index: 8, kind: input, shape index: {}]
  %s9 = inlined_call_operand.vmem [shape: f32[1,84], index: 9, kind: input, shape index: {}]
  %s10 = inlined_call_operand.vmem [shape: f32[1,84], index: 10, kind: input, shape index: {}]
  %s11 = inlined_call_operand.<no memory space> [shape: f32[1,1], index: 11, kind: input, shape index: {}]
  %s12 = inlined_call_operand.vmem [shape: f32[2,1,1], index: 12, kind: output, shape index: {}]
  %s13 = sld [smem:[#allocation0]]
  $region81: #{brain_tumor_cnn_forward.1} parent=0
    _
  %s15 = ssub.s32 1, %s13
  %s16 = scalar_select 0, %s15, %s13
  %v17 = vstv %s11
  %18 = vst [vmem:[#allocation2] sm:$0x1] %v17
  loop: start=0, step=1, limit=4
  $region2: #{brain_tumor_cnn_forward.1} parent=0 // loop_pre_header
    _
  $region3: #{brain_tumor_cnn_forward.1} parent=0 // loop_header
    %s20 = sphi 0, %s24
    %p21 = scmp.ge.s32.totalorder %s20, 4
    %s30 = sphi 0, %s32
    %s33 = sphi 0, %s30
    %s34 = sphi 0, %s33
    %s50 = sphi 0, %s34
    %s54 = sphi 0, %s54
    %s56 = sphi 0, %s54
    %s57 = sphi 0, %s56
    %s71 = sphi 0, %s57
    %s75 = sphi 0, %s75
    %s77 = sphi 0, %s75
    %s78 = sphi 0, %s77
    %s92 = sphi 0, %s78
    %s96 = sphi 0, %s96
    %s98 = sphi 0, %s96
    %s99 = sphi 0, %s98
    %s113 = sphi 0, %s99
    %s117 = sphi 0, %s117
    %s119 = sphi 0, %s117
    %s120 = sphi 0, %s119
    %s134 = sphi 0, %s120
    %s138 = sphi 0, %s138
    %s140 = sphi 0, %s138
    %s141 = sphi 0, %s140
    %s155 = sphi 0, %s141
    %s159 = sphi 0, %s159
    %s161 = sphi 0, %s159
    %s162 = sphi 0, %s161
    %s176 = sphi 0, %s162
    %s180 = sphi 0, %s180
    %s182 = sphi 0, %s180
    %s183 = sphi 0, %s182
    %s197 = sphi 0, %s183
    %s201 = sphi 0, %s201
    %s203 = sphi 0, %s201
    %s204 = sphi 0, %s203
    %s218 = sphi 0, %s204
    %s222 = sphi 0, %s222
    %s224 = sphi 0, %s222
    %s225 = sphi 0, %s224
    %s239 = sphi 0, %s225
    %s243 = sphi 0, %s243
    %s245 = sphi 0, %s243
    %s246 = sphi 0, %s245
    %s260 = sphi 0, %s246
    %s264 = sphi 0, %s264
    %s266 = sphi 0, %s264
    %s267 = sphi 0, %s266
    %s281 = sphi 0, %s267
    %s287 = sphi 0, %s289
    %s290 = sphi 0, %s287
    %s291 = sphi 0, %s290
    %s307 = sphi 0, %s291
  $region4: #{brain_tumor_cnn_forward.1} parent=0 // loop_header_branch
    %23 = sbr.rel (%p21) target = $region8
  $region5: #{brain_tumor_cnn_forward.1} parent=0 // loop_body
    %s25 = ssub.s32 %s20, 1
    %s26 = ssub.s32 %s20, 2
    %s27 = sadd.s32 %s20, 1
    %s28 = ssub.s32 %s20, %s27
    %p29 = scmp.eq.s32.totalorder %s28, 0
    %s31 = sadd.s32 %s30, 1
    %s32 = scalar_select %p29, %s30, %s31
    %p35 = pneg %p29
    %p36 = scmp.eq.s32.totalorder %s20, 1
    %p37 = por %p35, %p36
    %p38 = scmp.ne.s32.totalorder %s30, %s33
    %p39 = scmp.eq.s32.totalorder %s20, 0
    %p40 = por %p38, %p39
    %p41 = scmp.ne.s32.totalorder %s30, %s33
    %p42 = scmp.eq.s32.totalorder %s25, 1
    %p43 = por %p41, %p42
    %p44 = scmp.ne.s32.totalorder %s33, %s34
    %p45 = scmp.eq.s32.totalorder %s25, 0
    %p46 = por %p44, %p45
    %p47 = scmp.ne.s32.totalorder %s33, %s34
    %p48 = scmp.eq.s32.totalorder %s26, 1
    %p49 = por %p47, %p48
    %p51 = scmp.ne.s32.totalorder %s34, %s50
    %p52 = scmp.eq.s32.totalorder %s26, 0
    %p53 = por %p51, %p52
    %s55 = sadd.s32 %s54, 1
    %p58 = scmp.eq.s32.totalorder %s20, 1
    %p59 = scmp.ne.s32.totalorder %s54, %s56
    %p60 = scmp.eq.s32.totalorder %s20, 0
    %p61 = por %p59, %p60
    %p62 = scmp.ne.s32.totalorder %s54, %s56
    %p63 = scmp.eq.s32.totalorder %s25, 1
    %p64 = por %p62, %p63
    %p65 = scmp.ne.s32.totalorder %s56, %s57
    %p66 = scmp.eq.s32.totalorder %s25, 0
    %p67 = por %p65, %p66
    %p68 = scmp.ne.s32.totalorder %s56, %s57
    %p69 = scmp.eq.s32.totalorder %s26, 1
    %p70 = por %p68, %p69
    %p72 = scmp.ne.s32.totalorder %s57, %s71
    %p73 = scmp.eq.s32.totalorder %s26, 0
    %p74 = por %p72, %p73
    %s76 = sadd.s32 %s75, 1
    %p79 = scmp.eq.s32.totalorder %s20, 1
    %p80 = scmp.ne.s32.totalorder %s75, %s77
    %p81 = scmp.eq.s32.totalorder %s20, 0
    %p82 = por %p80, %p81
    %p83 = scmp.ne.s32.totalorder %s75, %s77
    %p84 = scmp.eq.s32.totalorder %s25, 1
    %p85 = por %p83, %p84
    %p86 = scmp.ne.s32.totalorder %s77, %s78
    %p87 = scmp.eq.s32.totalorder %s25, 0
    %p88 = por %p86, %p87
    %p89 = scmp.ne.s32.totalorder %s77, %s78
    %p90 = scmp.eq.s32.totalorder %s26, 1
    %p91 = por %p89, %p90
    %p93 = scmp.ne.s32.totalorder %s78, %s92
    %p94 = scmp.eq.s32.totalorder %s26, 0
    %p95 = por %p93, %p94
    %s97 = sadd.s32 %s96, 1
    %p100 = scmp.eq.s32.totalorder %s20, 1
    %p101 = scmp.ne.s32.totalorder %s96, %s98
    %p102 = scmp.eq.s32.totalorder %s20, 0
    %p103 = por %p101, %p102
    %p104 = scmp.ne.s32.totalorder %s96, %s98
    %p105 = scmp.eq.s32.totalorder %s25, 1
    %p106 = por %p104, %p105
    %p107 = scmp.ne.s32.totalorder %s98, %s99
    %p108 = scmp.eq.s32.totalorder %s25, 0
    %p109 = por %p107, %p108
    %p110 = scmp.ne.s32.totalorder %s98, %s99
    %p111 = scmp.eq.s32.totalorder %s26, 1
    %p112 = por %p110, %p111
    %p114 = scmp.ne.s32.totalorder %s99, %s113
    %p115 = scmp.eq.s32.totalorder %s26, 0
    %p116 = por %p114, %p115
    %s118 = sadd.s32 %s117, 1
    %p121 = scmp.eq.s32.totalorder %s20, 1
    %p122 = scmp.ne.s32.totalorder %s117, %s119
    %p123 = scmp.eq.s32.totalorder %s20, 0
    %p124 = por %p122, %p123
    %p125 = scmp.ne.s32.totalorder %s117, %s119
    %p126 = scmp.eq.s32.totalorder %s25, 1
    %p127 = por %p125, %p126
    %p128 = scmp.ne.s32.totalorder %s119, %s120
    %p129 = scmp.eq.s32.totalorder %s25, 0
    %p130 = por %p128, %p129
    %p131 = scmp.ne.s32.totalorder %s119, %s120
    %p132 = scmp.eq.s32.totalorder %s26, 1
    %p133 = por %p131, %p132
    %p135 = scmp.ne.s32.totalorder %s120, %s134
    %p136 = scmp.eq.s32.totalorder %s26, 0
    %p137 = por %p135, %p136
    %s139 = sadd.s32 %s138, 1
    %p142 = scmp.eq.s32.totalorder %s20, 1
    %p143 = scmp.ne.s32.totalorder %s138, %s140
    %p144 = scmp.eq.s32.totalorder %s20, 0
    %p145 = por %p143, %p144
    %p146 = scmp.ne.s32.totalorder %s138, %s140
    %p147 = scmp.eq.s32.totalorder %s25, 1
    %p148 = por %p146, %p147
    %p149 = scmp.ne.s32.totalorder %s140, %s141
    %p150 = scmp.eq.s32.totalorder %s25, 0
    %p151 = por %p149, %p150
    %p152 = scmp.ne.s32.totalorder %s140, %s141
    %p153 = scmp.eq.s32.totalorder %s26, 1
    %p154 = por %p152, %p153
    %p156 = scmp.ne.s32.totalorder %s141, %s155
    %p157 = scmp.eq.s32.totalorder %s26, 0
    %p158 = por %p156, %p157
    %s160 = sadd.s32 %s159, 1
    %p163 = scmp.eq.s32.totalorder %s20, 1
    %p164 = scmp.ne.s32.totalorder %s159, %s161
    %p165 = scmp.eq.s32.totalorder %s20, 0
    %p166 = por %p164, %p165
    %p167 = scmp.ne.s32.totalorder %s159, %s161
    %p168 = scmp.eq.s32.totalorder %s25, 1
    %p169 = por %p167, %p168
    %p170 = scmp.ne.s32.totalorder %s161, %s162
    %p171 = scmp.eq.s32.totalorder %s25, 0
    %p172 = por %p170, %p171
    %p173 = scmp.ne.s32.totalorder %s161, %s162
    %p174 = scmp.eq.s32.totalorder %s26, 1
    %p175 = por %p173, %p174
    %p177 = scmp.ne.s32.totalorder %s162, %s176
    %p178 = scmp.eq.s32.totalorder %s26, 0
    %p179 = por %p177, %p178
    %s181 = sadd.s32 %s180, 1
    %p184 = scmp.eq.s32.totalorder %s20, 1
    %p185 = scmp.ne.s32.totalorder %s180, %s182
    %p186 = scmp.eq.s32.totalorder %s20, 0
    %p187 = por %p185, %p186
    %p188 = scmp.ne.s32.totalorder %s180, %s182
    %p189 = scmp.eq.s32.totalorder %s25, 1
    %p190 = por %p188, %p189
    %p191 = scmp.ne.s32.totalorder %s182, %s183
    %p192 = scmp.eq.s32.totalorder %s25, 0
    %p193 = por %p191, %p192
    %p194 = scmp.ne.s32.totalorder %s182, %s183
    %p195 = scmp.eq.s32.totalorder %s26, 1
    %p196 = por %p194, %p195
    %p198 = scmp.ne.s32.totalorder %s183, %s197
    %p199 = scmp.eq.s32.totalorder %s26, 0
    %p200 = por %p198, %p199
    %s202 = sadd.s32 %s201, 1
    %p205 = scmp.eq.s32.totalorder %s20, 1
    %p206 = scmp.ne.s32.totalorder %s201, %s203
    %p207 = scmp.eq.s32.totalorder %s20, 0
    %p208 = por %p206, %p207
    %p209 = scmp.ne.s32.totalorder %s201, %s203
    %p210 = scmp.eq.s32.totalorder %s25, 1
    %p211 = por %p209, %p210
    %p212 = scmp.ne.s32.totalorder %s203, %s204
    %p213 = scmp.eq.s32.totalorder %s25, 0
    %p214 = por %p212, %p213
    %p215 = scmp.ne.s32.totalorder %s203, %s204
    %p216 = scmp.eq.s32.totalorder %s26, 1
    %p217 = por %p215, %p216
    %p219 = scmp.ne.s32.totalorder %s204, %s218
    %p220 = scmp.eq.s32.totalorder %s26, 0
    %p221 = por %p219, %p220
    %s223 = sadd.s32 %s222, 1
    %p226 = scmp.eq.s32.totalorder %s20, 1
    %p227 = scmp.ne.s32.totalorder %s222, %s224
    %p228 = scmp.eq.s32.totalorder %s20, 0
    %p229 = por %p227, %p228
    %p230 = scmp.ne.s32.totalorder %s222, %s224
    %p231 = scmp.eq.s32.totalorder %s25, 1
    %p232 = por %p230, %p231
    %p233 = scmp.ne.s32.totalorder %s224, %s225
    %p234 = scmp.eq.s32.totalorder %s25, 0
    %p235 = por %p233, %p234
    %p236 = scmp.ne.s32.totalorder %s224, %s225
    %p237 = scmp.eq.s32.totalorder %s26, 1
    %p238 = por %p236, %p237
    %p240 = scmp.ne.s32.totalorder %s225, %s239
    %p241 = scmp.eq.s32.totalorder %s26, 0
    %p242 = por %p240, %p241
    %s244 = sadd.s32 %s243, 1
    %p247 = scmp.eq.s32.totalorder %s20, 1
    %p248 = scmp.ne.s32.totalorder %s243, %s245
    %p249 = scmp.eq.s32.totalorder %s20, 0
    %p250 = por %p248, %p249
    %p251 = scmp.ne.s32.totalorder %s243, %s245
    %p252 = scmp.eq.s32.totalorder %s25, 1
    %p253 = por %p251, %p252
    %p254 = scmp.ne.s32.totalorder %s245, %s246
    %p255 = scmp.eq.s32.totalorder %s25, 0
    %p256 = por %p254, %p255
    %p257 = scmp.ne.s32.totalorder %s245, %s246
    %p258 = scmp.eq.s32.totalorder %s26, 1
    %p259 = por %p257, %p258
    %p261 = scmp.ne.s32.totalorder %s246, %s260
    %p262 = scmp.eq.s32.totalorder %s26, 0
    %p263 = por %p261, %p262
    %s265 = sadd.s32 %s264, 1
    %p268 = scmp.eq.s32.totalorder %s20, 1
    %p269 = scmp.ne.s32.totalorder %s264, %s266
    %p270 = scmp.eq.s32.totalorder %s20, 0
    %p271 = por %p269, %p270
    %p272 = scmp.ne.s32.totalorder %s264, %s266
    %p273 = scmp.eq.s32.totalorder %s25, 1
    %p274 = por %p272, %p273
    %p275 = scmp.ne.s32.totalorder %s266, %s267
    %p276 = scmp.eq.s32.totalorder %s25, 0
    %p277 = por %p275, %p276
    %p278 = scmp.ne.s32.totalorder %s266, %s267
    %p279 = scmp.eq.s32.totalorder %s26, 1
    %p280 = por %p278, %p279
    %p282 = scmp.ne.s32.totalorder %s267, %s281
    %p283 = scmp.eq.s32.totalorder %s26, 0
    %p284 = por %p282, %p283
    %s285 = ssub.s32 %s20, %s27
    %p286 = scmp.eq.s32.totalorder %s285, 0
    %s288 = sadd.s32 %s287, 1
    %s289 = scalar_select %p286, %s287, %s288
    %p292 = pneg %p286
    %p293 = scmp.eq.s32.totalorder %s20, 1
    %p294 = por %p292, %p293
    %p295 = scmp.ne.s32.totalorder %s287, %s290
    %p296 = scmp.eq.s32.totalorder %s20, 0
    %p297 = por %p295, %p296
    %p298 = scmp.ne.s32.totalorder %s287, %s290
    %p299 = scmp.eq.s32.totalorder %s25, 1
    %p300 = por %p298, %p299
    %p301 = scmp.ne.s32.totalorder %s290, %s291
    %p302 = scmp.eq.s32.totalorder %s25, 0
    %p303 = por %p301, %p302
    %p304 = scmp.ne.s32.totalorder %s290, %s291
    %p305 = scmp.eq.s32.totalorder %s26, 1
    %p306 = por %p304, %p305
    %p308 = scmp.ne.s32.totalorder %s291, %s307
    %p309 = scmp.eq.s32.totalorder %s26, 0
    %p310 = por %p308, %p309
    %p311 = scmp.le.s32.totalorder 1, %s20
    %p312 = scmp.lt.s32.totalorder %s20, 3
    %p313 = pnand %p311, %p312
    %p314 = pneg %p313
    // Predicated region
    $region9: #{brain_tumor_cnn_forward.1} parent=5 // pred_check
      _
    $region10: #{brain_tumor_cnn_forward.1} parent=5 // pred_check_branch
      %316 = sbr.rel (%p313) target = $region12
    $region11: #{brain_tumor_cnn_forward.1} parent=5 // pred_region
      %s317 = ssub.s32 %s20, 1
      // Predicated region
      $region13: #{brain_tumor_cnn_forward.1} parent=11 // pred_check
        %p318 = pneg %p67
      $region14: #{brain_tumor_cnn_forward.1} parent=11 // pred_check_branch
        %320 = sbr.rel (%p318) target = $region16
      $region15: #{brain_tumor_cnn_forward.1} parent=11 // pred_region
        _
      $region16: #{brain_tumor_cnn_forward.1} parent=11 // pred_fallthru
        _
      // Predicated region
      $region17: #{brain_tumor_cnn_forward.1} parent=11 // pred_check
        %p321 = pneg %p88
      $region18: #{brain_tumor_cnn_forward.1} parent=11 // pred_check_branch
        %323 = sbr.rel (%p321) target = $region20
      $region19: #{brain_tumor_cnn_forward.1} parent=11 // pred_region
        _
      $region20: #{brain_tumor_cnn_forward.1} parent=11 // pred_fallthru
        _
      // Predicated region
      $region21: #{brain_tumor_cnn_forward.1} parent=11 // pred_check
        %p324 = pneg %p109
      $region22: #{brain_tumor_cnn_forward.1} parent=11 // pred_check_branch
        %326 = sbr.rel (%p324) target = $region24
      $region23: #{brain_tumor_cnn_forward.1} parent=11 // pred_region
        _
      $region24: #{brain_tumor_cnn_forward.1} parent=11 // pred_fallthru
        _
      // Predicated region
      $region25: #{brain_tumor_cnn_forward.1} parent=11 // pred_check
        %p327 = pneg %p130
      $region26: #{brain_tumor_cnn_forward.1} parent=11 // pred_check_branch
        %329 = sbr.rel (%p327) target = $region28
      $region27: #{brain_tumor_cnn_forward.1} parent=11 // pred_region
        _
      $region28: #{brain_tumor_cnn_forward.1} parent=11 // pred_fallthru
        _
      // Predicated region
      $region29: #{brain_tumor_cnn_forward.1} parent=11 // pred_check
        %p330 = pneg %p151
      $region30: #{brain_tumor_cnn_forward.1} parent=11 // pred_check_branch
        %332 = sbr.rel (%p330) target = $region32
      $region31: #{brain_tumor_cnn_forward.1} parent=11 // pred_region
        _
      $region32: #{brain_tumor_cnn_forward.1} parent=11 // pred_fallthru
        _
      // Predicated region
      $region33: #{brain_tumor_cnn_forward.1} parent=11 // pred_check
        %p333 = pneg %p172
      $region34: #{brain_tumor_cnn_forward.1} parent=11 // pred_check_branch
        %335 = sbr.rel (%p333) target = $region36
      $region35: #{brain_tumor_cnn_forward.1} parent=11 // pred_region
        _
      $region36: #{brain_tumor_cnn_forward.1} parent=11 // pred_fallthru
        _
      // Predicated region
      $region37: #{brain_tumor_cnn_forward.1} parent=11 // pred_check
        %p336 = pneg %p193
      $region38: #{brain_tumor_cnn_forward.1} parent=11 // pred_check_branch
        %338 = sbr.rel (%p336) target = $region40
      $region39: #{brain_tumor_cnn_forward.1} parent=11 // pred_region
        _
      $region40: #{brain_tumor_cnn_forward.1} parent=11 // pred_fallthru
        _
      // Predicated region
      $region41: #{brain_tumor_cnn_forward.1} parent=11 // pred_check
        %p339 = pneg %p214
      $region42: #{brain_tumor_cnn_forward.1} parent=11 // pred_check_branch
        %341 = sbr.rel (%p339) target = $region44
      $region43: #{brain_tumor_cnn_forward.1} parent=11 // pred_region
        _
      $region44: #{brain_tumor_cnn_forward.1} parent=11 // pred_fallthru
        _
      // Predicated region
      $region45: #{brain_tumor_cnn_forward.1} parent=11 // pred_check
        %p342 = pneg %p235
      $region46: #{brain_tumor_cnn_forward.1} parent=11 // pred_check_branch
        %344 = sbr.rel (%p342) target = $region48
      $region47: #{brain_tumor_cnn_forward.1} parent=11 // pred_region
        _
      $region48: #{brain_tumor_cnn_forward.1} parent=11 // pred_fallthru
        _
      // Predicated region
      $region49: #{brain_tumor_cnn_forward.1} parent=11 // pred_check
        %p345 = pneg %p256
      $region50: #{brain_tumor_cnn_forward.1} parent=11 // pred_check_branch
        %347 = sbr.rel (%p345) target = $region52
      $region51: #{brain_tumor_cnn_forward.1} parent=11 // pred_region
        _
      $region52: #{brain_tumor_cnn_forward.1} parent=11 // pred_fallthru
        _
      // Predicated region
      $region53: #{brain_tumor_cnn_forward.1} parent=11 // pred_check
        %p348 = pneg %p277
      $region54: #{brain_tumor_cnn_forward.1} parent=11 // pred_check_branch
        %350 = sbr.rel (%p348) target = $region56
      $region55: #{brain_tumor_cnn_forward.1} parent=11 // pred_region
        _
      $region56: #{brain_tumor_cnn_forward.1} parent=11 // pred_fallthru
        _
    $region12: #{brain_tumor_cnn_forward.1} parent=5 // pred_fallthru
      _
    %p351 = scmp.lt.s32.totalorder %s20, 2
    // Predicated region
    $region57: #{brain_tumor_cnn_forward.1} parent=5 // pred_check
      %p352 = pneg %p351
    $region58: #{brain_tumor_cnn_forward.1} parent=5 // pred_check_branch
      %354 = sbr.rel (%p352) target = $region60
    $region59: #{brain_tumor_cnn_forward.1} parent=5 // pred_region
      // Predicated region
      $region61: #{brain_tumor_cnn_forward.1} parent=59 // pred_check
        %p355 = pneg %p40
      $region62: #{brain_tumor_cnn_forward.1} parent=59 // pred_check_branch
        %357 = sbr.rel (%p355) target = $region64
      $region63: #{brain_tumor_cnn_forward.1} parent=59 // pred_region
        %p358 = scmp.lt.s32.totalorder %s20, 1
        %s359 = scalar_select %p358, %s20, 1
        %s360 = smul.addr %s359, 79
        %s361 = smul.addr %s360, 8
        %s362 = scalar_lea.vmem %s0, %s361
      $region64: #{brain_tumor_cnn_forward.1} parent=59 // pred_fallthru
        _
    $region60: #{brain_tumor_cnn_forward.1} parent=5 // pred_fallthru
      _
    %p363 = scmp.le.s32.totalorder 1, %s20
    %p364 = scmp.lt.s32.totalorder %s20, 3
    %p365 = pnand %p363, %p364
    %p366 = pneg %p365
    // Predicated region
    $region65: #{brain_tumor_cnn_forward.1} parent=5 // pred_check
      _
    $region66: #{brain_tumor_cnn_forward.1} parent=5 // pred_check_branch
      %368 = sbr.rel (%p365) target = $region68
    $region67: #{brain_tumor_cnn_forward.1} parent=5 // pred_region
      %s369 = ssub.s32 %s20, 1
      %p370 = scmp.lt.s32.totalorder %s25, 1
      %s371 = scalar_select %p370, %s25, 1
      %s372 = smul.addr %s371, 79
      %s373 = smul.addr %s372, 8
      %s374 = scalar_lea.vmem %s0, %s373
      %p375 = pneg %p46
      %p376 = pneg %p43
      %p377 = pneg %p67
      %p378 = pneg %p64
      %p379 = pneg %p88
      %p380 = pneg %p85
      %p381 = pneg %p109
      %p382 = pneg %p106
      %p383 = pneg %p130
      %p384 = pneg %p127
      %p385 = pneg %p151
      %p386 = pneg %p148
      %p387 = pneg %p172
      %p388 = pneg %p169
      %p389 = pneg %p193
      %p390 = pneg %p190
      %p391 = pneg %p214
      %p392 = pneg %p211
      %p393 = pneg %p235
      %p394 = pneg %p232
      %p395 = pneg %p256
      %p396 = pneg %p253
      %p397 = pneg %p277
      %p398 = pneg %p274
      %p399 = pneg %p303
      %p400 = pneg %p300
      %p401 = scmp.lt.s32.totalorder %s25, 1
      %s402 = scalar_select %p401, %s25, 1
      %s403 = scalar_lea.vmem %s12, %s402
      %p404 = scmp.lt.s32.totalorder %s25, 1
      %s405 = scalar_select %p404, %s25, 1
      %s406 = smul.addr %s405, 79
      %s407 = smul.addr %s406, 8
      %s408 = scalar_lea.vmem %s0, %s407
      %p409 = scmp.lt.s32.totalorder %s25, 1
      %s410 = scalar_select %p409, %s25, 1
      %s411 = scalar_lea.vmem %s12, %s410
      %v412 = vld [vmem:[%s408] sm:$0xff]
      %v413 = vld [vmem:[%s408 + $0x8] sm:$0xff]
      %v414 = vld [vmem:[%s408 + $0x10] sm:$0xff]
      %v415 = vld [vmem:[%s408 + $0x18] sm:$0xff]
      %v416 = vld [vmem:[%s408 + $0x20] sm:$0xff]
      %v417 = vld [vmem:[%s408 + $0x28] sm:$0xff]
      %v418 = vld [vmem:[%s408 + $0x30] sm:$0xff]
      %v419 = vld [vmem:[%s408 + $0x38] sm:$0xff]
      %v420 = vld [vmem:[%s408 + $0x40] sm:$0xff]
      %v421 = vld [vmem:[%s408 + $0x48] sm:$0xff]
      %v422 = vld [vmem:[%s408 + $0x50] sm:$0xff]
      %v423 = vld [vmem:[%s408 + $0x58] sm:$0xff]
      %v424 = vld [vmem:[%s408 + $0x60] sm:$0xff]
      %v425 = vld [vmem:[%s408 + $0x68] sm:$0xff]
      %v426 = vld [vmem:[%s408 + $0x70] sm:$0xff]
      %v427 = vld [vmem:[%s408 + $0x78] sm:$0xff]
      %v428 = vld [vmem:[%s408 + $0x80] sm:$0xff]
      %v429 = vld [vmem:[%s408 + $0x88] sm:$0xff]
      %v430 = vld [vmem:[%s408 + $0x90] sm:$0xff]
      %v431 = vld [vmem:[%s408 + $0x98] sm:$0xff]
      %v432 = vld [vmem:[%s408 + $0xa0] sm:$0xff]
      %v433 = vld [vmem:[%s408 + $0xa8] sm:$0xff]
      %v434 = vld [vmem:[%s408 + $0xb0] sm:$0xff]
      %v435 = vld [vmem:[%s408 + $0xb8] sm:$0xff]
      %v436 = vld [vmem:[%s408 + $0xc0] sm:$0xff]
      %v437 = vld [vmem:[%s408 + $0xc8] sm:$0xff]
      %v438 = vld [vmem:[%s408 + $0xd0] sm:$0xff]
      %v439 = vld [vmem:[%s408 + $0xd8] sm:$0xff]
      %v440 = vld [vmem:[%s408 + $0xe0] sm:$0xff]
      %v441 = vld [vmem:[%s408 + $0xe8] sm:$0xff]
      %v442 = vld [vmem:[%s408 + $0xf0] sm:$0xff]
      %v443 = vld [vmem:[%s408 + $0xf8] sm:$0xff]
      %v444 = vld [vmem:[%s408 + $0x100] sm:$0xff]
      %v445 = vld [vmem:[%s408 + $0x108] sm:$0xff]
      %v446 = vld [vmem:[%s408 + $0x110] sm:$0xff]
      %v447 = vld [vmem:[%s408 + $0x118] sm:$0xff]
      %v448 = vld [vmem:[%s408 + $0x120] sm:$0xff]
      %v449 = vld [vmem:[%s408 + $0x128] sm:$0xff]
      %v450 = vld [vmem:[%s408 + $0x130] sm:$0xff]
      %v451 = vld [vmem:[%s408 + $0x138] sm:$0xff]
      %v452 = vld [vmem:[%s408 + $0x140] sm:$0xff]
      %v453 = vld [vmem:[%s408 + $0x148] sm:$0xff]
      %v454 = vld [vmem:[%s408 + $0x150] sm:$0xff]
      %v455 = vld [vmem:[%s408 + $0x158] sm:$0xff]
      %v456 = vld [vmem:[%s408 + $0x160] sm:$0xff]
      %v457 = vld [vmem:[%s408 + $0x168] sm:$0xff]
      %v458 = vld [vmem:[%s408 + $0x170] sm:$0xff]
      %v459 = vld [vmem:[%s408 + $0x178] sm:$0xff]
      %v460 = vld [vmem:[%s408 + $0x180] sm:$0xff]
      %v461 = vld [vmem:[%s408 + $0x188] sm:$0xff]
      %v462 = vld [vmem:[%s408 + $0x190] sm:$0xff]
      %v463 = vld [vmem:[%s408 + $0x198] sm:$0xff]
      %v464 = vld [vmem:[%s408 + $0x1a0] sm:$0xff]
      %v465 = vld [vmem:[%s408 + $0x1a8] sm:$0xff]
      %v466 = vld [vmem:[%s408 + $0x1b0] sm:$0xff]
      %v467 = vld [vmem:[%s408 + $0x1b8] sm:$0xff]
      %v468 = vld [vmem:[%s408 + $0x1c0] sm:$0xff]
      %v469 = vld [vmem:[%s408 + $0x1c8] sm:$0xff]
      %v470 = vld [vmem:[%s408 + $0x1d0] sm:$0xff]
      %v471 = vld [vmem:[%s408 + $0x1d8] sm:$0xff]
      %v472 = vld [vmem:[%s408 + $0x1e0] sm:$0xff]
      %v473 = vld [vmem:[%s408 + $0x1e8] sm:$0xff]
      %v474 = vld [vmem:[%s408 + $0x1f0] sm:$0xff]
      %v475 = vld [vmem:[%s408 + $0x1f8] sm:$0xff]
      %v476 = vld [vmem:[%s408 + $0x200] sm:$0xff]
      %v477 = vld [vmem:[%s408 + $0x208] sm:$0xff]
      %v478 = vld [vmem:[%s408 + $0x210] sm:$0xff]
      %v479 = vld [vmem:[%s408 + $0x218] sm:$0xff]
      %v480 = vld [vmem:[%s408 + $0x220] sm:$0xff]
      %v481 = vld [vmem:[%s408 + $0x228] sm:$0xff]
      %v482 = vld [vmem:[%s408 + $0x230] sm:$0xff]
      %v483 = vld [vmem:[%s408 + $0x238] sm:$0xff]
      %v484 = vld [vmem:[%s408 + $0x240] sm:$0xff]
      %v485 = vld [vmem:[%s408 + $0x248] sm:$0xff]
      %v486 = vld [vmem:[%s408 + $0x250] sm:$0xff]
      %v487 = vld [vmem:[%s408 + $0x258] sm:$0xff]
      %v488 = vld [vmem:[%s408 + $0x260] sm:$0xff]
      %v489 = vld [vmem:[%s408 + $0x268] sm:$0xff]
      %v490 = vld [vmem:[%s408 + $0x270] sm:$0x1]
      %v491 = vld [vmem:[%s2] sm:$0x1]
      %v492 = vld [vmem:[%s1] sm:$0xff]
      %v493 = vld [vmem:[%s1 + $0x8] sm:$0xff]
      %v494 = vld [vmem:[%s1 + $0x10] sm:$0xff]
      %v495 = vld [vmem:[%s1 + $0x18] sm:$0xff]
      %v496 = vld [vmem:[%s1 + $0x20] sm:$0xff]
      %v497 = vld [vmem:[%s1 + $0x28] sm:$0xff]
      %v498 = vld [vmem:[%s1 + $0x30] sm:$0xff]
      %v499 = vld [vmem:[%s1 + $0x38] sm:$0xff]
      %v500 = vld [vmem:[%s1 + $0x40] sm:$0xff]
      %v501 = vld [vmem:[%s1 + $0x48] sm:$0xff]
      %v502 = vld [vmem:[%s1 + $0x50] sm:$0xff]
      %v503 = vld [vmem:[%s1 + $0x58] sm:$0xff]
      %v504 = vld [vmem:[%s1 + $0x60] sm:$0xff]
      %v505 = vld [vmem:[%s1 + $0x68] sm:$0xf]
      %v507 = vperm.slane %v491, 0
      %vm509 = vcmask 883712
      %v511 = vsel %vm509, %v412, 0
      %v514 = vsel %vm509, %v413, 0
      %v517 = vsel %vm509, %v414, 0
      %v520 = vsel %vm509, %v415, 0
      %v523 = vsel %vm509, %v416, 0
      %v526 = vsel %vm509, %v417, 0
      %v529 = vsel %vm509, %v418, 0
      %v532 = vsel %vm509, %v419, 0
      %v535 = vsel %vm509, %v420, 0
      %v538 = vsel %vm509, %v421, 0
      %v541 = vsel %vm509, %v422, 0
      %v544 = vsel %vm509, %v423, 0
      %v547 = vsel %vm509, %v424, 0
      %v550 = vsel %vm509, %v425, 0
      %v553 = vsel %vm509, %v426, 0
      %v556 = vsel %vm509, %v427, 0
      %v559 = vsel %vm509, %v428, 0
      %v562 = vsel %vm509, %v429, 0
      %v565 = vsel %vm509, %v430, 0
      %v568 = vsel %vm509, %v431, 0
      %v571 = vsel %vm509, %v432, 0
      %v574 = vsel %vm509, %v433, 0
      %v577 = vsel %vm509, %v434, 0
      %v580 = vsel %vm509, %v435, 0
      %v583 = vsel %vm509, %v436, 0
      %v586 = vsel %vm509, %v437, 0
      %v589 = vsel %vm509, %v438, 0
      %v592 = vsel %vm509, %v439, 0
      %v595 = vsel %vm509, %v440, 0
      %v598 = vsel %vm509, %v441, 0
      %v601 = vsel %vm509, %v442, 0
      %v604 = vsel %vm509, %v443, 0
      %v607 = vsel %vm509, %v444, 0
      %v610 = vsel %vm509, %v445, 0
      %v613 = vsel %vm509, %v446, 0
      %v616 = vsel %vm509, %v447, 0
      %v619 = vsel %vm509, %v448, 0
      %v622 = vsel %vm509, %v449, 0
      %v625 = vsel %vm509, %v450, 0
      %v628 = vsel %vm509, %v451, 0
      %v631 = vsel %vm509, %v452, 0
      %v634 = vsel %vm509, %v453, 0
      %v637 = vsel %vm509, %v454, 0
      %v640 = vsel %vm509, %v455, 0
      %v643 = vsel %vm509, %v456, 0
      %v646 = vsel %vm509, %v457, 0
      %v649 = vsel %vm509, %v458, 0
      %v652 = vsel %vm509, %v459, 0
      %v655 = vsel %vm509, %v460, 0
      %v658 = vsel %vm509, %v461, 0
      %v661 = vsel %vm509, %v462, 0
      %v664 = vsel %vm509, %v463, 0
      %v667 = vsel %vm509, %v464, 0
      %v670 = vsel %vm509, %v465, 0
      %v673 = vsel %vm509, %v466, 0
      %v676 = vsel %vm509, %v467, 0
      %v679 = vsel %vm509, %v468, 0
      %v682 = vsel %vm509, %v469, 0
      %v685 = vsel %vm509, %v470, 0
      %v688 = vsel %vm509, %v471, 0
      %v691 = vsel %vm509, %v472, 0
      %v694 = vsel %vm509, %v473, 0
      %v697 = vsel %vm509, %v474, 0
      %v700 = vsel %vm509, %v475, 0
      %v703 = vsel %vm509, %v476, 0
      %v706 = vsel %vm509, %v477, 0
      %v709 = vsel %vm509, %v478, 0
      %v712 = vsel %vm509, %v479, 0
      %v715 = vsel %vm509, %v480, 0
      %v718 = vsel %vm509, %v481, 0
      %v721 = vsel %vm509, %v482, 0
      %v724 = vsel %vm509, %v483, 0
      %v727 = vsel %vm509, %v484, 0
      %v730 = vsel %vm509, %v485, 0
      %v733 = vsel %vm509, %v486, 0
      %v736 = vsel %vm509, %v487, 0
      %v739 = vsel %vm509, %v488, 0
      %v742 = vsel %vm509, %v489, 0
      %v745 = vsel %vm509, %v490, 0
      %vm747 = vcmask 1043456
      %v749 = vsel %vm747, %v505, 0
      %751 = vmatpush.msra.mxu0 0.0
      %752 = vmatpush.msra.mxu0 0.0
      %753 = vmatpush.msra.mxu0 %v749
      %754 = vmatpush.msra.mxu0 %v504
      %755 = vmatpush.msra.mxu0 %v503
      %756 = vmatpush.msra.mxu0 %v502
      %757 = vmatpush.msra.mxu0 %v501
      %758 = vmatpush.msra.mxu0 %v500
      %759 = vmatpush.msra.mxu0 %v499
      %760 = vmatpush.msra.mxu0 %v498
      %761 = vmatpush.msra.mxu0 %v497
      %762 = vmatpush.msra.mxu0 %v496
      %763 = vmatpush.msra.mxu0 %v495
      %764 = vmatpush.msra.mxu0 %v494
      %765 = vmatpush.msra.mxu0 %v493
      %766 = vmatpush.msra.mxu0 %v492
      %767 = vmatmul.f32.gmra.mxu0 %v511
      %v768 = vpop.f32.mrf.mxu0
      %v769 = vadd.f32 %v507, %v768
      %770 = vmatmul.f32.gmra.mxu0 %v514
      %v771 = vpop.f32.mrf.mxu0
      %v772 = vadd.f32 %v507, %v771
      %773 = vmatmul.f32.gmra.mxu0 %v517
      %v774 = vpop.f32.mrf.mxu0
      %v775 = vadd.f32 %v507, %v774
      %776 = vmatmul.f32.gmra.mxu0 %v520
      %v777 = vpop.f32.mrf.mxu0
      %v778 = vadd.f32 %v507, %v777
      %779 = vmatmul.f32.gmra.mxu0 %v523
      %v780 = vpop.f32.mrf.mxu0
      %v781 = vadd.f32 %v507, %v780
      %782 = vmatmul.f32.gmra.mxu0 %v526
      %v783 = vpop.f32.mrf.mxu0
      %v784 = vadd.f32 %v507, %v783
      %785 = vmatmul.f32.gmra.mxu0 %v529
      %v786 = vpop.f32.mrf.mxu0
      %v787 = vadd.f32 %v507, %v786
      %788 = vmatmul.f32.gmra.mxu0 %v532
      %v789 = vpop.f32.mrf.mxu0
      %v790 = vadd.f32 %v507, %v789
      %791 = vmatmul.f32.gmra.mxu0 %v535
      %v792 = vpop.f32.mrf.mxu0
      %v793 = vadd.f32 %v507, %v792
      %794 = vmatmul.f32.gmra.mxu0 %v538
      %v795 = vpop.f32.mrf.mxu0
      %v796 = vadd.f32 %v507, %v795
      %797 = vmatmul.f32.gmra.mxu0 %v541
      %v798 = vpop.f32.mrf.mxu0
      %v799 = vadd.f32 %v507, %v798
      %800 = vmatmul.f32.gmra.mxu0 %v544
      %v801 = vpop.f32.mrf.mxu0
      %v802 = vadd.f32 %v507, %v801
      %803 = vmatmul.f32.gmra.mxu0 %v547
      %v804 = vpop.f32.mrf.mxu0
      %v805 = vadd.f32 %v507, %v804
      %806 = vmatmul.f32.gmra.mxu0 %v550
      %v807 = vpop.f32.mrf.mxu0
      %v808 = vadd.f32 %v507, %v807
      %809 = vmatmul.f32.gmra.mxu0 %v553
      %v810 = vpop.f32.mrf.mxu0
      %v811 = vadd.f32 %v507, %v810
      %812 = vmatmul.f32.gmra.mxu0 %v556
      %v813 = vpop.f32.mrf.mxu0
      %v814 = vadd.f32 %v507, %v813
      %815 = vmatmul.f32.gmra.mxu0 %v559
      %v816 = vpop.f32.mrf.mxu0
      %v817 = vadd.f32 %v507, %v816
      %818 = vmatmul.f32.gmra.mxu0 %v562
      %v819 = vpop.f32.mrf.mxu0
      %v820 = vadd.f32 %v507, %v819
      %821 = vmatmul.f32.gmra.mxu0 %v565
      %v822 = vpop.f32.mrf.mxu0
      %v823 = vadd.f32 %v507, %v822
      %824 = vmatmul.f32.gmra.mxu0 %v568
      %v825 = vpop.f32.mrf.mxu0
      %v826 = vadd.f32 %v507, %v825
      %827 = vmatmul.f32.gmra.mxu0 %v571
      %v828 = vpop.f32.mrf.mxu0
      %v829 = vadd.f32 %v507, %v828
      %830 = vmatmul.f32.gmra.mxu0 %v574
      %v831 = vpop.f32.mrf.mxu0
      %v832 = vadd.f32 %v507, %v831
      %833 = vmatmul.f32.gmra.mxu0 %v577
      %v834 = vpop.f32.mrf.mxu0
      %v835 = vadd.f32 %v507, %v834
      %836 = vmatmul.f32.gmra.mxu0 %v580
      %v837 = vpop.f32.mrf.mxu0
      %v838 = vadd.f32 %v507, %v837
      %839 = vmatmul.f32.gmra.mxu0 %v583
      %v840 = vpop.f32.mrf.mxu0
      %v841 = vadd.f32 %v507, %v840
      %842 = vmatmul.f32.gmra.mxu0 %v586
      %v843 = vpop.f32.mrf.mxu0
      %v844 = vadd.f32 %v507, %v843
      %845 = vmatmul.f32.gmra.mxu0 %v589
      %v846 = vpop.f32.mrf.mxu0
      %v847 = vadd.f32 %v507, %v846
      %848 = vmatmul.f32.gmra.mxu0 %v592
      %v849 = vpop.f32.mrf.mxu0
      %v850 = vadd.f32 %v507, %v849
      %851 = vmatmul.f32.gmra.mxu0 %v595
      %v852 = vpop.f32.mrf.mxu0
      %v853 = vadd.f32 %v507, %v852
      %854 = vmatmul.f32.gmra.mxu0 %v598
      %v855 = vpop.f32.mrf.mxu0
      %v856 = vadd.f32 %v507, %v855
      %857 = vmatmul.f32.gmra.mxu0 %v601
      %v858 = vpop.f32.mrf.mxu0
      %v859 = vadd.f32 %v507, %v858
      %860 = vmatmul.f32.gmra.mxu0 %v604
      %v861 = vpop.f32.mrf.mxu0
      %v862 = vadd.f32 %v507, %v861
      %863 = vmatmul.f32.gmra.mxu0 %v607
      %v864 = vpop.f32.mrf.mxu0
      %v865 = vadd.f32 %v507, %v864
      %866 = vmatmul.f32.gmra.mxu0 %v610
      %v867 = vpop.f32.mrf.mxu0
      %v868 = vadd.f32 %v507, %v867
      %869 = vmatmul.f32.gmra.mxu0 %v613
      %v870 = vpop.f32.mrf.mxu0
      %v871 = vadd.f32 %v507, %v870
      %872 = vmatmul.f32.gmra.mxu0 %v616
      %v873 = vpop.f32.mrf.mxu0
      %v874 = vadd.f32 %v507, %v873
      %875 = vmatmul.f32.gmra.mxu0 %v619
      %v876 = vpop.f32.mrf.mxu0
      %v877 = vadd.f32 %v507, %v876
      %878 = vmatmul.f32.gmra.mxu0 %v622
      %v879 = vpop.f32.mrf.mxu0
      %v880 = vadd.f32 %v507, %v879
      %881 = vmatmul.f32.gmra.mxu0 %v625
      %v882 = vpop.f32.mrf.mxu0
      %v883 = vadd.f32 %v507, %v882
      %884 = vmatmul.f32.gmra.mxu0 %v628
      %v885 = vpop.f32.mrf.mxu0
      %v886 = vadd.f32 %v507, %v885
      %887 = vmatmul.f32.gmra.mxu0 %v631
      %v888 = vpop.f32.mrf.mxu0
      %v889 = vadd.f32 %v507, %v888
      %890 = vmatmul.f32.gmra.mxu0 %v634
      %v891 = vpop.f32.mrf.mxu0
      %v892 = vadd.f32 %v507, %v891
      %893 = vmatmul.f32.gmra.mxu0 %v637
      %v894 = vpop.f32.mrf.mxu0
      %v895 = vadd.f32 %v507, %v894
      %896 = vmatmul.f32.gmra.mxu0 %v640
      %v897 = vpop.f32.mrf.mxu0
      %v898 = vadd.f32 %v507, %v897
      %899 = vmatmul.f32.gmra.mxu0 %v643
      %v900 = vpop.f32.mrf.mxu0
      %v901 = vadd.f32 %v507, %v900
      %902 = vmatmul.f32.gmra.mxu0 %v646
      %v903 = vpop.f32.mrf.mxu0
      %v904 = vadd.f32 %v507, %v903
      %905 = vmatmul.f32.gmra.mxu0 %v649
      %v906 = vpop.f32.mrf.mxu0
      %v907 = vadd.f32 %v507, %v906
      %908 = vmatmul.f32.gmra.mxu0 %v652
      %v909 = vpop.f32.mrf.mxu0
      %v910 = vadd.f32 %v507, %v909
      %911 = vmatmul.f32.gmra.mxu0 %v655
      %v912 = vpop.f32.mrf.mxu0
      %v913 = vadd.f32 %v507, %v912
      %914 = vmatmul.f32.gmra.mxu0 %v658
      %v915 = vpop.f32.mrf.mxu0
      %v916 = vadd.f32 %v507, %v915
      %917 = vmatmul.f32.gmra.mxu0 %v661
      %v918 = vpop.f32.mrf.mxu0
      %v919 = vadd.f32 %v507, %v918
      %920 = vmatmul.f32.gmra.mxu0 %v664
      %v921 = vpop.f32.mrf.mxu0
      %v922 = vadd.f32 %v507, %v921
      %923 = vmatmul.f32.gmra.mxu0 %v667
      %v924 = vpop.f32.mrf.mxu0
      %v925 = vadd.f32 %v507, %v924
      %926 = vmatmul.f32.gmra.mxu0 %v670
      %v927 = vpop.f32.mrf.mxu0
      %v928 = vadd.f32 %v507, %v927
      %929 = vmatmul.f32.gmra.mxu0 %v673
      %v930 = vpop.f32.mrf.mxu0
      %v931 = vadd.f32 %v507, %v930
      %932 = vmatmul.f32.gmra.mxu0 %v676
      %v933 = vpop.f32.mrf.mxu0
      %v934 = vadd.f32 %v507, %v933
      %935 = vmatmul.f32.gmra.mxu0 %v679
      %v936 = vpop.f32.mrf.mxu0
      %v937 = vadd.f32 %v507, %v936
      %938 = vmatmul.f32.gmra.mxu0 %v682
      %v939 = vpop.f32.mrf.mxu0
      %v940 = vadd.f32 %v507, %v939
      %941 = vmatmul.f32.gmra.mxu0 %v685
      %v942 = vpop.f32.mrf.mxu0
      %v943 = vadd.f32 %v507, %v942
      %944 = vmatmul.f32.gmra.mxu0 %v688
      %v945 = vpop.f32.mrf.mxu0
      %v946 = vadd.f32 %v507, %v945
      %947 = vmatmul.f32.gmra.mxu0 %v691
      %v948 = vpop.f32.mrf.mxu0
      %v949 = vadd.f32 %v507, %v948
      %950 = vmatmul.f32.gmra.mxu0 %v694
      %v951 = vpop.f32.mrf.mxu0
      %v952 = vadd.f32 %v507, %v951
      %953 = vmatmul.f32.gmra.mxu0 %v697
      %v954 = vpop.f32.mrf.mxu0
      %v955 = vadd.f32 %v507, %v954
      %956 = vmatmul.f32.gmra.mxu0 %v700
      %v957 = vpop.f32.mrf.mxu0
      %v958 = vadd.f32 %v507, %v957
      %959 = vmatmul.f32.gmra.mxu0 %v703
      %v960 = vpop.f32.mrf.mxu0
      %v961 = vadd.f32 %v507, %v960
      %962 = vmatmul.f32.gmra.mxu0 %v706
      %v963 = vpop.f32.mrf.mxu0
      %v964 = vadd.f32 %v507, %v963
      %965 = vmatmul.f32.gmra.mxu0 %v709
      %v966 = vpop.f32.mrf.mxu0
      %v967 = vadd.f32 %v507, %v966
      %968 = vmatmul.f32.gmra.mxu0 %v712
      %v969 = vpop.f32.mrf.mxu0
      %v970 = vadd.f32 %v507, %v969
      %971 = vmatmul.f32.gmra.mxu0 %v715
      %v972 = vpop.f32.mrf.mxu0
      %v973 = vadd.f32 %v507, %v972
      %974 = vmatmul.f32.gmra.mxu0 %v718
      %v975 = vpop.f32.mrf.mxu0
      %v976 = vadd.f32 %v507, %v975
      %977 = vmatmul.f32.gmra.mxu0 %v721
      %v978 = vpop.f32.mrf.mxu0
      %v979 = vadd.f32 %v507, %v978
      %980 = vmatmul.f32.gmra.mxu0 %v724
      %v981 = vpop.f32.mrf.mxu0
      %v982 = vadd.f32 %v507, %v981
      %983 = vmatmul.f32.gmra.mxu0 %v727
      %v984 = vpop.f32.mrf.mxu0
      %v985 = vadd.f32 %v507, %v984
      %986 = vmatmul.f32.gmra.mxu0 %v730
      %v987 = vpop.f32.mrf.mxu0
      %v988 = vadd.f32 %v507, %v987
      %989 = vmatmul.f32.gmra.mxu0 %v733
      %v990 = vpop.f32.mrf.mxu0
      %v991 = vadd.f32 %v507, %v990
      %992 = vmatmul.f32.gmra.mxu0 %v736
      %v993 = vpop.f32.mrf.mxu0
      %v994 = vadd.f32 %v507, %v993
      %995 = vmatmul.f32.gmra.mxu0 %v739
      %v996 = vpop.f32.mrf.mxu0
      %v997 = vadd.f32 %v507, %v996
      %998 = vmatmul.f32.gmra.mxu0 %v742
      %v999 = vpop.f32.mrf.mxu0
      %v1000 = vadd.f32 %v507, %v999
      %1001 = vmatmul.f32.gmra.mxu0 %v745
      %v1002 = vpop.f32.mrf.mxu0
      %v1003 = vadd.f32 %v507, %v1002
      %1004 = vdwg.mxu0
      %v1005 = vtanh.pop %v769
      %v1006 = vtanh.pop %v772
      %v1007 = vtanh.pop %v775
      %v1008 = vtanh.pop %v778
      %v1009 = vtanh.pop %v781
      %v1010 = vtanh.pop %v784
      %v1011 = vtanh.pop %v787
      %v1012 = vtanh.pop %v790
      %v1013 = vtanh.pop %v793
      %v1014 = vtanh.pop %v796
      %v1015 = vtanh.pop %v799
      %v1016 = vtanh.pop %v802
      %v1017 = vtanh.pop %v805
      %v1018 = vtanh.pop %v808
      %v1019 = vtanh.pop %v811
      %v1020 = vtanh.pop %v814
      %v1021 = vtanh.pop %v817
      %v1022 = vtanh.pop %v820
      %v1023 = vtanh.pop %v823
      %v1024 = vtanh.pop %v826
      %v1025 = vtanh.pop %v829
      %v1026 = vtanh.pop %v832
      %v1027 = vtanh.pop %v835
      %v1028 = vtanh.pop %v838
      %v1029 = vtanh.pop %v841
      %v1030 = vtanh.pop %v844
      %v1031 = vtanh.pop %v847
      %v1032 = vtanh.pop %v850
      %v1033 = vtanh.pop %v853
      %v1034 = vtanh.pop %v856
      %v1035 = vtanh.pop %v859
      %v1036 = vtanh.pop %v862
      %v1037 = vtanh.pop %v865
      %v1038 = vtanh.pop %v868
      %v1039 = vtanh.pop %v871
      %v1040 = vtanh.pop %v874
      %v1041 = vtanh.pop %v877
      %v1042 = vtanh.pop %v880
      %v1043 = vtanh.pop %v883
      %v1044 = vtanh.pop %v886
      %v1045 = vtanh.pop %v889
      %v1046 = vtanh.pop %v892
      %v1047 = vtanh.pop %v895
      %v1048 = vtanh.pop %v898
      %v1049 = vtanh.pop %v901
      %v1050 = vtanh.pop %v904
      %v1051 = vtanh.pop %v907
      %v1052 = vtanh.pop %v910
      %v1053 = vtanh.pop %v913
      %v1054 = vtanh.pop %v916
      %v1055 = vtanh.pop %v919
      %v1056 = vtanh.pop %v922
      %v1057 = vtanh.pop %v925
      %v1058 = vtanh.pop %v928
      %v1059 = vtanh.pop %v931
      %v1060 = vtanh.pop %v934
      %v1061 = vtanh.pop %v937
      %v1062 = vtanh.pop %v940
      %v1063 = vtanh.pop %v943
      %v1064 = vtanh.pop %v946
      %v1065 = vtanh.pop %v949
      %v1066 = vtanh.pop %v952
      %v1067 = vtanh.pop %v955
      %v1068 = vtanh.pop %v958
      %v1069 = vtanh.pop %v961
      %v1070 = vtanh.pop %v964
      %v1071 = vtanh.pop %v967
      %v1072 = vtanh.pop %v970
      %v1073 = vtanh.pop %v973
      %v1074 = vtanh.pop %v976
      %v1075 = vtanh.pop %v979
      %v1076 = vtanh.pop %v982
      %v1077 = vtanh.pop %v985
      %v1078 = vtanh.pop %v988
      %v1079 = vtanh.pop %v991
      %v1080 = vtanh.pop %v994
      %v1081 = vtanh.pop %v997
      %v1082 = vtanh.pop %v1000
      %v1083 = vtanh.pop %v1003
      %v1084 = vadd.f32 %v1005, 0.0
      %v1085 = vadd.f32 %v1006, 0.0
      %v1086 = vadd.f32 %v1007, 0.0
      %v1087 = vadd.f32 %v1008, 0.0
      %v1088 = vadd.f32 %v1009, 0.0
      %v1089 = vadd.f32 %v1010, 0.0
      %v1090 = vadd.f32 %v1011, 0.0
      %v1091 = vadd.f32 %v1012, 0.0
      %v1092 = vadd.f32 %v1013, 0.0
      %v1093 = vadd.f32 %v1014, 0.0
      %v1094 = vadd.f32 %v1015, 0.0
      %v1095 = vadd.f32 %v1016, 0.0
      %v1096 = vadd.f32 %v1017, 0.0
      %v1097 = vadd.f32 %v1018, 0.0
      %v1098 = vadd.f32 %v1019, 0.0
      %v1099 = vadd.f32 %v1020, 0.0
      %v1100 = vadd.f32 %v1021, 0.0
      %v1101 = vadd.f32 %v1022, 0.0
      %v1102 = vadd.f32 %v1023, 0.0
      %v1103 = vadd.f32 %v1024, 0.0
      %v1104 = vadd.f32 %v1025, 0.0
      %v1105 = vadd.f32 %v1026, 0.0
      %v1106 = vadd.f32 %v1027, 0.0
      %v1107 = vadd.f32 %v1028, 0.0
      %v1108 = vadd.f32 %v1029, 0.0
      %v1109 = vadd.f32 %v1030, 0.0
      %v1110 = vadd.f32 %v1031, 0.0
      %v1111 = vadd.f32 %v1032, 0.0
      %v1112 = vadd.f32 %v1033, 0.0
      %v1113 = vadd.f32 %v1034, 0.0
      %v1114 = vadd.f32 %v1035, 0.0
      %v1115 = vadd.f32 %v1036, 0.0
      %v1116 = vadd.f32 %v1037, 0.0
      %v1117 = vadd.f32 %v1038, 0.0
      %v1118 = vadd.f32 %v1039, 0.0
      %v1119 = vadd.f32 %v1040, 0.0
      %v1120 = vadd.f32 %v1041, 0.0
      %v1121 = vadd.f32 %v1042, 0.0
      %v1122 = vadd.f32 %v1043, 0.0
      %v1123 = vadd.f32 %v1044, 0.0
      %v1124 = vadd.f32 %v1045, 0.0
      %v1125 = vadd.f32 %v1046, 0.0
      %v1126 = vadd.f32 %v1047, 0.0
      %v1127 = vadd.f32 %v1048, 0.0
      %v1128 = vadd.f32 %v1049, 0.0
      %v1129 = vadd.f32 %v1050, 0.0
      %v1130 = vadd.f32 %v1051, 0.0
      %v1131 = vadd.f32 %v1052, 0.0
      %v1132 = vadd.f32 %v1053, 0.0
      %v1133 = vadd.f32 %v1054, 0.0
      %v1134 = vadd.f32 %v1055, 0.0
      %v1135 = vadd.f32 %v1056, 0.0
      %v1136 = vadd.f32 %v1057, 0.0
      %v1137 = vadd.f32 %v1058, 0.0
      %v1138 = vadd.f32 %v1059, 0.0
      %v1139 = vadd.f32 %v1060, 0.0
      %v1140 = vadd.f32 %v1061, 0.0
      %v1141 = vadd.f32 %v1062, 0.0
      %v1142 = vadd.f32 %v1063, 0.0
      %v1143 = vadd.f32 %v1064, 0.0
      %v1144 = vadd.f32 %v1065, 0.0
      %v1145 = vadd.f32 %v1066, 0.0
      %v1146 = vadd.f32 %v1067, 0.0
      %v1147 = vadd.f32 %v1068, 0.0
      %v1148 = vadd.f32 %v1069, 0.0
      %v1149 = vadd.f32 %v1070, 0.0
      %v1150 = vadd.f32 %v1071, 0.0
      %v1151 = vadd.f32 %v1072, 0.0
      %v1152 = vadd.f32 %v1073, 0.0
      %v1153 = vadd.f32 %v1074, 0.0
      %v1154 = vadd.f32 %v1075, 0.0
      %v1155 = vadd.f32 %v1076, 0.0
      %v1156 = vadd.f32 %v1077, 0.0
      %v1157 = vadd.f32 %v1078, 0.0
      %v1158 = vadd.f32 %v1079, 0.0
      %v1159 = vadd.f32 %v1080, 0.0
      %v1160 = vadd.f32 %v1081, 0.0
      %v1161 = vadd.f32 %v1082, 0.0
      %v1162 = vadd.f32 %v1083, 0.0
      %s1163 = scalar_lea.vmem %s1, 112
      %v1164 = vld [vmem:[%s1163] sm:$0xff]
      %v1165 = vld [vmem:[%s1163 + $0x8] sm:$0xff]
      %v1166 = vld [vmem:[%s1163 + $0x10] sm:$0xff]
      %v1167 = vld [vmem:[%s1163 + $0x18] sm:$0xff]
      %v1168 = vld [vmem:[%s1163 + $0x20] sm:$0xff]
      %v1169 = vld [vmem:[%s1163 + $0x28] sm:$0xff]
      %v1170 = vld [vmem:[%s1163 + $0x30] sm:$0xff]
      %v1171 = vld [vmem:[%s1163 + $0x38] sm:$0xff]
      %v1172 = vld [vmem:[%s1163 + $0x40] sm:$0xff]
      %v1173 = vld [vmem:[%s1163 + $0x48] sm:$0xff]
      %v1174 = vld [vmem:[%s1163 + $0x50] sm:$0xff]
      %v1175 = vld [vmem:[%s1163 + $0x58] sm:$0xff]
      %v1176 = vld [vmem:[%s1163 + $0x60] sm:$0xff]
      %v1177 = vld [vmem:[%s1163 + $0x68] sm:$0xf]
      %v1179 = vsel %vm747, %v1177, 0
      %1181 = vmatpush.msra.mxu0 0.0
      %1182 = vmatpush.msra.mxu0 0.0
      %1183 = vmatpush.msra.mxu0 %v1179
      %1184 = vmatpush.msra.mxu0 %v1176
      %1185 = vmatpush.msra.mxu0 %v1175
      %1186 = vmatpush.msra.mxu0 %v1174
      %1187 = vmatpush.msra.mxu0 %v1173
      %1188 = vmatpush.msra.mxu0 %v1172
      %1189 = vmatpush.msra.mxu0 %v1171
      %1190 = vmatpush.msra.mxu0 %v1170
      %1191 = vmatpush.msra.mxu0 %v1169
      %1192 = vmatpush.msra.mxu0 %v1168
      %1193 = vmatpush.msra.mxu0 %v1167
      %1194 = vmatpush.msra.mxu0 %v1166
      %1195 = vmatpush.msra.mxu0 %v1165
      %1196 = vmatpush.msra.mxu0 %v1164
      %1197 = vmatmul.f32.gmra.mxu0 %v511
      %v1198 = vpop.f32.mrf.mxu0
      %v1199 = vadd.f32 %v507, %v1198
      %1200 = vmatmul.f32.gmra.mxu0 %v514
      %v1201 = vpop.f32.mrf.mxu0
      %v1202 = vadd.f32 %v507, %v1201
      %1203 = vmatmul.f32.gmra.mxu0 %v517
      %v1204 = vpop.f32.mrf.mxu0
      %v1205 = vadd.f32 %v507, %v1204
      %1206 = vmatmul.f32.gmra.mxu0 %v520
      %v1207 = vpop.f32.mrf.mxu0
      %v1208 = vadd.f32 %v507, %v1207
      %1209 = vmatmul.f32.gmra.mxu0 %v523
      %v1210 = vpop.f32.mrf.mxu0
      %v1211 = vadd.f32 %v507, %v1210
      %1212 = vmatmul.f32.gmra.mxu0 %v526
      %v1213 = vpop.f32.mrf.mxu0
      %v1214 = vadd.f32 %v507, %v1213
      %1215 = vmatmul.f32.gmra.mxu0 %v529
      %v1216 = vpop.f32.mrf.mxu0
      %v1217 = vadd.f32 %v507, %v1216
      %1218 = vmatmul.f32.gmra.mxu0 %v532
      %v1219 = vpop.f32.mrf.mxu0
      %v1220 = vadd.f32 %v507, %v1219
      %1221 = vmatmul.f32.gmra.mxu0 %v535
      %v1222 = vpop.f32.mrf.mxu0
      %v1223 = vadd.f32 %v507, %v1222
      %1224 = vmatmul.f32.gmra.mxu0 %v538
      %v1225 = vpop.f32.mrf.mxu0
      %v1226 = vadd.f32 %v507, %v1225
      %1227 = vmatmul.f32.gmra.mxu0 %v541
      %v1228 = vpop.f32.mrf.mxu0
      %v1229 = vadd.f32 %v507, %v1228
      %1230 = vmatmul.f32.gmra.mxu0 %v544
      %v1231 = vpop.f32.mrf.mxu0
      %v1232 = vadd.f32 %v507, %v1231
      %1233 = vmatmul.f32.gmra.mxu0 %v547
      %v1234 = vpop.f32.mrf.mxu0
      %v1235 = vadd.f32 %v507, %v1234
      %1236 = vmatmul.f32.gmra.mxu0 %v550
      %v1237 = vpop.f32.mrf.mxu0
      %v1238 = vadd.f32 %v507, %v1237
      %1239 = vmatmul.f32.gmra.mxu0 %v553
      %v1240 = vpop.f32.mrf.mxu0
      %v1241 = vadd.f32 %v507, %v1240
      %1242 = vmatmul.f32.gmra.mxu0 %v556
      %v1243 = vpop.f32.mrf.mxu0
      %v1244 = vadd.f32 %v507, %v1243
      %1245 = vmatmul.f32.gmra.mxu0 %v559
      %v1246 = vpop.f32.mrf.mxu0
      %v1247 = vadd.f32 %v507, %v1246
      %1248 = vmatmul.f32.gmra.mxu0 %v562
      %v1249 = vpop.f32.mrf.mxu0
      %v1250 = vadd.f32 %v507, %v1249
      %1251 = vmatmul.f32.gmra.mxu0 %v565
      %v1252 = vpop.f32.mrf.mxu0
      %v1253 = vadd.f32 %v507, %v1252
      %1254 = vmatmul.f32.gmra.mxu0 %v568
      %v1255 = vpop.f32.mrf.mxu0
      %v1256 = vadd.f32 %v507, %v1255
      %1257 = vmatmul.f32.gmra.mxu0 %v571
      %v1258 = vpop.f32.mrf.mxu0
      %v1259 = vadd.f32 %v507, %v1258
      %1260 = vmatmul.f32.gmra.mxu0 %v574
      %v1261 = vpop.f32.mrf.mxu0
      %v1262 = vadd.f32 %v507, %v1261
      %1263 = vmatmul.f32.gmra.mxu0 %v577
      %v1264 = vpop.f32.mrf.mxu0
      %v1265 = vadd.f32 %v507, %v1264
      %1266 = vmatmul.f32.gmra.mxu0 %v580
      %v1267 = vpop.f32.mrf.mxu0
      %v1268 = vadd.f32 %v507, %v1267
      %1269 = vmatmul.f32.gmra.mxu0 %v583
      %v1270 = vpop.f32.mrf.mxu0
      %v1271 = vadd.f32 %v507, %v1270
      %1272 = vmatmul.f32.gmra.mxu0 %v586
      %v1273 = vpop.f32.mrf.mxu0
      %v1274 = vadd.f32 %v507, %v1273
      %1275 = vmatmul.f32.gmra.mxu0 %v589
      %v1276 = vpop.f32.mrf.mxu0
      %v1277 = vadd.f32 %v507, %v1276
      %1278 = vmatmul.f32.gmra.mxu0 %v592
      %v1279 = vpop.f32.mrf.mxu0
      %v1280 = vadd.f32 %v507, %v1279
      %1281 = vmatmul.f32.gmra.mxu0 %v595
      %v1282 = vpop.f32.mrf.mxu0
      %v1283 = vadd.f32 %v507, %v1282
      %1284 = vmatmul.f32.gmra.mxu0 %v598
      %v1285 = vpop.f32.mrf.mxu0
      %v1286 = vadd.f32 %v507, %v1285
      %1287 = vmatmul.f32.gmra.mxu0 %v601
      %v1288 = vpop.f32.mrf.mxu0
      %v1289 = vadd.f32 %v507, %v1288
      %1290 = vmatmul.f32.gmra.mxu0 %v604
      %v1291 = vpop.f32.mrf.mxu0
      %v1292 = vadd.f32 %v507, %v1291
      %1293 = vmatmul.f32.gmra.mxu0 %v607
      %v1294 = vpop.f32.mrf.mxu0
      %v1295 = vadd.f32 %v507, %v1294
      %1296 = vmatmul.f32.gmra.mxu0 %v610
      %v1297 = vpop.f32.mrf.mxu0
      %v1298 = vadd.f32 %v507, %v1297
      %1299 = vmatmul.f32.gmra.mxu0 %v613
      %v1300 = vpop.f32.mrf.mxu0
      %v1301 = vadd.f32 %v507, %v1300
      %1302 = vmatmul.f32.gmra.mxu0 %v616
      %v1303 = vpop.f32.mrf.mxu0
      %v1304 = vadd.f32 %v507, %v1303
      %1305 = vmatmul.f32.gmra.mxu0 %v619
      %v1306 = vpop.f32.mrf.mxu0
      %v1307 = vadd.f32 %v507, %v1306
      %1308 = vmatmul.f32.gmra.mxu0 %v622
      %v1309 = vpop.f32.mrf.mxu0
      %v1310 = vadd.f32 %v507, %v1309
      %1311 = vmatmul.f32.gmra.mxu0 %v625
      %v1312 = vpop.f32.mrf.mxu0
      %v1313 = vadd.f32 %v507, %v1312
      %1314 = vmatmul.f32.gmra.mxu0 %v628
      %v1315 = vpop.f32.mrf.mxu0
      %v1316 = vadd.f32 %v507, %v1315
      %1317 = vmatmul.f32.gmra.mxu0 %v631
      %v1318 = vpop.f32.mrf.mxu0
      %v1319 = vadd.f32 %v507, %v1318
      %1320 = vmatmul.f32.gmra.mxu0 %v634
      %v1321 = vpop.f32.mrf.mxu0
      %v1322 = vadd.f32 %v507, %v1321
      %1323 = vmatmul.f32.gmra.mxu0 %v637
      %v1324 = vpop.f32.mrf.mxu0
      %v1325 = vadd.f32 %v507, %v1324
      %1326 = vmatmul.f32.gmra.mxu0 %v640
      %v1327 = vpop.f32.mrf.mxu0
      %v1328 = vadd.f32 %v507, %v1327
      %1329 = vmatmul.f32.gmra.mxu0 %v643
      %v1330 = vpop.f32.mrf.mxu0
      %v1331 = vadd.f32 %v507, %v1330
      %1332 = vmatmul.f32.gmra.mxu0 %v646
      %v1333 = vpop.f32.mrf.mxu0
      %v1334 = vadd.f32 %v507, %v1333
      %1335 = vmatmul.f32.gmra.mxu0 %v649
      %v1336 = vpop.f32.mrf.mxu0
      %v1337 = vadd.f32 %v507, %v1336
      %1338 = vmatmul.f32.gmra.mxu0 %v652
      %v1339 = vpop.f32.mrf.mxu0
      %v1340 = vadd.f32 %v507, %v1339
      %1341 = vmatmul.f32.gmra.mxu0 %v655
      %v1342 = vpop.f32.mrf.mxu0
      %v1343 = vadd.f32 %v507, %v1342
      %1344 = vmatmul.f32.gmra.mxu0 %v658
      %v1345 = vpop.f32.mrf.mxu0
      %v1346 = vadd.f32 %v507, %v1345
      %1347 = vmatmul.f32.gmra.mxu0 %v661
      %v1348 = vpop.f32.mrf.mxu0
      %v1349 = vadd.f32 %v507, %v1348
      %1350 = vmatmul.f32.gmra.mxu0 %v664
      %v1351 = vpop.f32.mrf.mxu0
      %v1352 = vadd.f32 %v507, %v1351
      %1353 = vmatmul.f32.gmra.mxu0 %v667
      %v1354 = vpop.f32.mrf.mxu0
      %v1355 = vadd.f32 %v507, %v1354
      %1356 = vmatmul.f32.gmra.mxu0 %v670
      %v1357 = vpop.f32.mrf.mxu0
      %v1358 = vadd.f32 %v507, %v1357
      %1359 = vmatmul.f32.gmra.mxu0 %v673
      %v1360 = vpop.f32.mrf.mxu0
      %v1361 = vadd.f32 %v507, %v1360
      %1362 = vmatmul.f32.gmra.mxu0 %v676
      %v1363 = vpop.f32.mrf.mxu0
      %v1364 = vadd.f32 %v507, %v1363
      %1365 = vmatmul.f32.gmra.mxu0 %v679
      %v1366 = vpop.f32.mrf.mxu0
      %v1367 = vadd.f32 %v507, %v1366
      %1368 = vmatmul.f32.gmra.mxu0 %v682
      %v1369 = vpop.f32.mrf.mxu0
      %v1370 = vadd.f32 %v507, %v1369
      %1371 = vmatmul.f32.gmra.mxu0 %v685
      %v1372 = vpop.f32.mrf.mxu0
      %v1373 = vadd.f32 %v507, %v1372
      %1374 = vmatmul.f32.gmra.mxu0 %v688
      %v1375 = vpop.f32.mrf.mxu0
      %v1376 = vadd.f32 %v507, %v1375
      %1377 = vmatmul.f32.gmra.mxu0 %v691
      %v1378 = vpop.f32.mrf.mxu0
      %v1379 = vadd.f32 %v507, %v1378
      %1380 = vmatmul.f32.gmra.mxu0 %v694
      %v1381 = vpop.f32.mrf.mxu0
      %v1382 = vadd.f32 %v507, %v1381
      %1383 = vmatmul.f32.gmra.mxu0 %v697
      %v1384 = vpop.f32.mrf.mxu0
      %v1385 = vadd.f32 %v507, %v1384
      %1386 = vmatmul.f32.gmra.mxu0 %v700
      %v1387 = vpop.f32.mrf.mxu0
      %v1388 = vadd.f32 %v507, %v1387
      %1389 = vmatmul.f32.gmra.mxu0 %v703
      %v1390 = vpop.f32.mrf.mxu0
      %v1391 = vadd.f32 %v507, %v1390
      %1392 = vmatmul.f32.gmra.mxu0 %v706
      %v1393 = vpop.f32.mrf.mxu0
      %v1394 = vadd.f32 %v507, %v1393
      %1395 = vmatmul.f32.gmra.mxu0 %v709
      %v1396 = vpop.f32.mrf.mxu0
      %v1397 = vadd.f32 %v507, %v1396
      %1398 = vmatmul.f32.gmra.mxu0 %v712
      %v1399 = vpop.f32.mrf.mxu0
      %v1400 = vadd.f32 %v507, %v1399
      %1401 = vmatmul.f32.gmra.mxu0 %v715
      %v1402 = vpop.f32.mrf.mxu0
      %v1403 = vadd.f32 %v507, %v1402
      %1404 = vmatmul.f32.gmra.mxu0 %v718
      %v1405 = vpop.f32.mrf.mxu0
      %v1406 = vadd.f32 %v507, %v1405
      %1407 = vmatmul.f32.gmra.mxu0 %v721
      %v1408 = vpop.f32.mrf.mxu0
      %v1409 = vadd.f32 %v507, %v1408
      %1410 = vmatmul.f32.gmra.mxu0 %v724
      %v1411 = vpop.f32.mrf.mxu0
      %v1412 = vadd.f32 %v507, %v1411
      %1413 = vmatmul.f32.gmra.mxu0 %v727
      %v1414 = vpop.f32.mrf.mxu0
      %v1415 = vadd.f32 %v507, %v1414
      %1416 = vmatmul.f32.gmra.mxu0 %v730
      %v1417 = vpop.f32.mrf.mxu0
      %v1418 = vadd.f32 %v507, %v1417
      %1419 = vmatmul.f32.gmra.mxu0 %v733
      %v1420 = vpop.f32.mrf.mxu0
      %v1421 = vadd.f32 %v507, %v1420
      %1422 = vmatmul.f32.gmra.mxu0 %v736
      %v1423 = vpop.f32.mrf.mxu0
      %v1424 = vadd.f32 %v507, %v1423
      %1425 = vmatmul.f32.gmra.mxu0 %v739
      %v1426 = vpop.f32.mrf.mxu0
      %v1427 = vadd.f32 %v507, %v1426
      %1428 = vmatmul.f32.gmra.mxu0 %v742
      %v1429 = vpop.f32.mrf.mxu0
      %v1430 = vadd.f32 %v507, %v1429
      %1431 = vmatmul.f32.gmra.mxu0 %v745
      %v1432 = vpop.f32.mrf.mxu0
      %v1433 = vadd.f32 %v507, %v1432
      %1434 = vdwg.mxu0
      %v1435 = vtanh.pop %v1199
      %v1436 = vtanh.pop %v1202
      %v1437 = vtanh.pop %v1205
      %v1438 = vtanh.pop %v1208
      %v1439 = vtanh.pop %v1211
      %v1440 = vtanh.pop %v1214
      %v1441 = vtanh.pop %v1217
      %v1442 = vtanh.pop %v1220
      %v1443 = vtanh.pop %v1223
      %v1444 = vtanh.pop %v1226
      %v1445 = vtanh.pop %v1229
      %v1446 = vtanh.pop %v1232
      %v1447 = vtanh.pop %v1235
      %v1448 = vtanh.pop %v1238
      %v1449 = vtanh.pop %v1241
      %v1450 = vtanh.pop %v1244
      %v1451 = vtanh.pop %v1247
      %v1452 = vtanh.pop %v1250
      %v1453 = vtanh.pop %v1253
      %v1454 = vtanh.pop %v1256
      %v1455 = vtanh.pop %v1259
      %v1456 = vtanh.pop %v1262
      %v1457 = vtanh.pop %v1265
      %v1458 = vtanh.pop %v1268
      %v1459 = vtanh.pop %v1271
      %v1460 = vtanh.pop %v1274
      %v1461 = vtanh.pop %v1277
      %v1462 = vtanh.pop %v1280
      %v1463 = vtanh.pop %v1283
      %v1464 = vtanh.pop %v1286
      %v1465 = vtanh.pop %v1289
      %v1466 = vtanh.pop %v1292
      %v1467 = vtanh.pop %v1295
      %v1468 = vtanh.pop %v1298
      %v1469 = vtanh.pop %v1301
      %v1470 = vtanh.pop %v1304
      %v1471 = vtanh.pop %v1307
      %v1472 = vtanh.pop %v1310
      %v1473 = vtanh.pop %v1313
      %v1474 = vtanh.pop %v1316
      %v1475 = vtanh.pop %v1319
      %v1476 = vtanh.pop %v1322
      %v1477 = vtanh.pop %v1325
      %v1478 = vtanh.pop %v1328
      %v1479 = vtanh.pop %v1331
      %v1480 = vtanh.pop %v1334
      %v1481 = vtanh.pop %v1337
      %v1482 = vtanh.pop %v1340
      %v1483 = vtanh.pop %v1343
      %v1484 = vtanh.pop %v1346
      %v1485 = vtanh.pop %v1349
      %v1486 = vtanh.pop %v1352
      %v1487 = vtanh.pop %v1355
      %v1488 = vtanh.pop %v1358
      %v1489 = vtanh.pop %v1361
      %v1490 = vtanh.pop %v1364
      %v1491 = vtanh.pop %v1367
      %v1492 = vtanh.pop %v1370
      %v1493 = vtanh.pop %v1373
      %v1494 = vtanh.pop %v1376
      %v1495 = vtanh.pop %v1379
      %v1496 = vtanh.pop %v1382
      %v1497 = vtanh.pop %v1385
      %v1498 = vtanh.pop %v1388
      %v1499 = vtanh.pop %v1391
      %v1500 = vtanh.pop %v1394
      %v1501 = vtanh.pop %v1397
      %v1502 = vtanh.pop %v1400
      %v1503 = vtanh.pop %v1403
      %v1504 = vtanh.pop %v1406
      %v1505 = vtanh.pop %v1409
      %v1506 = vtanh.pop %v1412
      %v1507 = vtanh.pop %v1415
      %v1508 = vtanh.pop %v1418
      %v1509 = vtanh.pop %v1421
      %v1510 = vtanh.pop %v1424
      %v1511 = vtanh.pop %v1427
      %v1512 = vtanh.pop %v1430
      %v1513 = vtanh.pop %v1433
      %v1514 = vadd.f32 %v1084, %v1435
      %v1515 = vadd.f32 %v1085, %v1436
      %v1516 = vadd.f32 %v1086, %v1437
      %v1517 = vadd.f32 %v1087, %v1438
      %v1518 = vadd.f32 %v1088, %v1439
      %v1519 = vadd.f32 %v1089, %v1440
      %v1520 = vadd.f32 %v1090, %v1441
      %v1521 = vadd.f32 %v1091, %v1442
      %v1522 = vadd.f32 %v1092, %v1443
      %v1523 = vadd.f32 %v1093, %v1444
      %v1524 = vadd.f32 %v1094, %v1445
      %v1525 = vadd.f32 %v1095, %v1446
      %v1526 = vadd.f32 %v1096, %v1447
      %v1527 = vadd.f32 %v1097, %v1448
      %v1528 = vadd.f32 %v1098, %v1449
      %v1529 = vadd.f32 %v1099, %v1450
      %v1530 = vadd.f32 %v1100, %v1451
      %v1531 = vadd.f32 %v1101, %v1452
      %v1532 = vadd.f32 %v1102, %v1453
      %v1533 = vadd.f32 %v1103, %v1454
      %v1534 = vadd.f32 %v1104, %v1455
      %v1535 = vadd.f32 %v1105, %v1456
      %v1536 = vadd.f32 %v1106, %v1457
      %v1537 = vadd.f32 %v1107, %v1458
      %v1538 = vadd.f32 %v1108, %v1459
      %v1539 = vadd.f32 %v1109, %v1460
      %v1540 = vadd.f32 %v1110, %v1461
      %v1541 = vadd.f32 %v1111, %v1462
      %v1542 = vadd.f32 %v1112, %v1463
      %v1543 = vadd.f32 %v1113, %v1464
      %v1544 = vadd.f32 %v1114, %v1465
      %v1545 = vadd.f32 %v1115, %v1466
      %v1546 = vadd.f32 %v1116, %v1467
      %v1547 = vadd.f32 %v1117, %v1468
      %v1548 = vadd.f32 %v1118, %v1469
      %v1549 = vadd.f32 %v1119, %v1470
      %v1550 = vadd.f32 %v1120, %v1471
      %v1551 = vadd.f32 %v1121, %v1472
      %v1552 = vadd.f32 %v1122, %v1473
      %v1553 = vadd.f32 %v1123, %v1474
      %v1554 = vadd.f32 %v1124, %v1475
      %v1555 = vadd.f32 %v1125, %v1476
      %v1556 = vadd.f32 %v1126, %v1477
      %v1557 = vadd.f32 %v1127, %v1478
      %v1558 = vadd.f32 %v1128, %v1479
      %v1559 = vadd.f32 %v1129, %v1480
      %v1560 = vadd.f32 %v1130, %v1481
      %v1561 = vadd.f32 %v1131, %v1482
      %v1562 = vadd.f32 %v1132, %v1483
      %v1563 = vadd.f32 %v1133, %v1484
      %v1564 = vadd.f32 %v1134, %v1485
      %v1565 = vadd.f32 %v1135, %v1486
      %v1566 = vadd.f32 %v1136, %v1487
      %v1567 = vadd.f32 %v1137, %v1488
      %v1568 = vadd.f32 %v1138, %v1489
      %v1569 = vadd.f32 %v1139, %v1490
      %v1570 = vadd.f32 %v1140, %v1491
      %v1571 = vadd.f32 %v1141, %v1492
      %v1572 = vadd.f32 %v1142, %v1493
      %v1573 = vadd.f32 %v1143, %v1494
      %v1574 = vadd.f32 %v1144, %v1495
      %v1575 = vadd.f32 %v1145, %v1496
      %v1576 = vadd.f32 %v1146, %v1497
      %v1577 = vadd.f32 %v1147, %v1498
      %v1578 = vadd.f32 %v1148, %v1499
      %v1579 = vadd.f32 %v1149, %v1500
      %v1580 = vadd.f32 %v1150, %v1501
      %v1581 = vadd.f32 %v1151, %v1502
      %v1582 = vadd.f32 %v1152, %v1503
      %v1583 = vadd.f32 %v1153, %v1504
      %v1584 = vadd.f32 %v1154, %v1505
      %v1585 = vadd.f32 %v1155, %v1506
      %v1586 = vadd.f32 %v1156, %v1507
      %v1587 = vadd.f32 %v1157, %v1508
      %v1588 = vadd.f32 %v1158, %v1509
      %v1589 = vadd.f32 %v1159, %v1510
      %v1590 = vadd.f32 %v1160, %v1511
      %v1591 = vadd.f32 %v1161, %v1512
      %v1592 = vadd.f32 %v1162, %v1513
      %s1593 = scalar_lea.vmem %s1, 224
      %v1594 = vld [vmem:[%s1593] sm:$0xff]
      %v1595 = vld [vmem:[%s1593 + $0x8] sm:$0xff]
      %v1596 = vld [vmem:[%s1593 + $0x10] sm:$0xff]
      %v1597 = vld [vmem:[%s1593 + $0x18] sm:$0xff]
      %v1598 = vld [vmem:[%s1593 + $0x20] sm:$0xff]
      %v1599 = vld [vmem:[%s1593 + $0x28] sm:$0xff]
      %v1600 = vld [vmem:[%s1593 + $0x30] sm:$0xff]
      %v1601 = vld [vmem:[%s1593 + $0x38] sm:$0xff]
      %v1602 = vld [vmem:[%s1593 + $0x40] sm:$0xff]
      %v1603 = vld [vmem:[%s1593 + $0x48] sm:$0xff]
      %v1604 = vld [vmem:[%s1593 + $0x50] sm:$0xff]
      %v1605 = vld [vmem:[%s1593 + $0x58] sm:$0xff]
      %v1606 = vld [vmem:[%s1593 + $0x60] sm:$0xff]
      %v1607 = vld [vmem:[%s1593 + $0x68] sm:$0xf]
      %v1609 = vsel %vm747, %v1607, 0
      %1611 = vmatpush.msra.mxu0 0.0
      %1612 = vmatpush.msra.mxu0 0.0
      %1613 = vmatpush.msra.mxu0 %v1609
      %1614 = vmatpush.msra.mxu0 %v1606
      %1615 = vmatpush.msra.mxu0 %v1605
      %1616 = vmatpush.msra.mxu0 %v1604
      %1617 = vmatpush.msra.mxu0 %v1603
      %1618 = vmatpush.msra.mxu0 %v1602
      %1619 = vmatpush.msra.mxu0 %v1601
      %1620 = vmatpush.msra.mxu0 %v1600
      %1621 = vmatpush.msra.mxu0 %v1599
      %1622 = vmatpush.msra.mxu0 %v1598
      %1623 = vmatpush.msra.mxu0 %v1597
      %1624 = vmatpush.msra.mxu0 %v1596
      %1625 = vmatpush.msra.mxu0 %v1595
      %1626 = vmatpush.msra.mxu0 %v1594
      %1627 = vmatmul.f32.gmra.mxu0 %v511
      %v1628 = vpop.f32.mrf.mxu0
      %v1629 = vadd.f32 %v507, %v1628
      %1630 = vmatmul.f32.gmra.mxu0 %v514
      %v1631 = vpop.f32.mrf.mxu0
      %v1632 = vadd.f32 %v507, %v1631
      %1633 = vmatmul.f32.gmra.mxu0 %v517
      %v1634 = vpop.f32.mrf.mxu0
      %v1635 = vadd.f32 %v507, %v1634
      %1636 = vmatmul.f32.gmra.mxu0 %v520
      %v1637 = vpop.f32.mrf.mxu0
      %v1638 = vadd.f32 %v507, %v1637
      %1639 = vmatmul.f32.gmra.mxu0 %v523
      %v1640 = vpop.f32.mrf.mxu0
      %v1641 = vadd.f32 %v507, %v1640
      %1642 = vmatmul.f32.gmra.mxu0 %v526
      %v1643 = vpop.f32.mrf.mxu0
      %v1644 = vadd.f32 %v507, %v1643
      %1645 = vmatmul.f32.gmra.mxu0 %v529
      %v1646 = vpop.f32.mrf.mxu0
      %v1647 = vadd.f32 %v507, %v1646
      %1648 = vmatmul.f32.gmra.mxu0 %v532
      %v1649 = vpop.f32.mrf.mxu0
      %v1650 = vadd.f32 %v507, %v1649
      %1651 = vmatmul.f32.gmra.mxu0 %v535
      %v1652 = vpop.f32.mrf.mxu0
      %v1653 = vadd.f32 %v507, %v1652
      %1654 = vmatmul.f32.gmra.mxu0 %v538
      %v1655 = vpop.f32.mrf.mxu0
      %v1656 = vadd.f32 %v507, %v1655
      %1657 = vmatmul.f32.gmra.mxu0 %v541
      %v1658 = vpop.f32.mrf.mxu0
      %v1659 = vadd.f32 %v507, %v1658
      %1660 = vmatmul.f32.gmra.mxu0 %v544
      %v1661 = vpop.f32.mrf.mxu0
      %v1662 = vadd.f32 %v507, %v1661
      %1663 = vmatmul.f32.gmra.mxu0 %v547
      %v1664 = vpop.f32.mrf.mxu0
      %v1665 = vadd.f32 %v507, %v1664
      %1666 = vmatmul.f32.gmra.mxu0 %v550
      %v1667 = vpop.f32.mrf.mxu0
      %v1668 = vadd.f32 %v507, %v1667
      %1669 = vmatmul.f32.gmra.mxu0 %v553
      %v1670 = vpop.f32.mrf.mxu0
      %v1671 = vadd.f32 %v507, %v1670
      %1672 = vmatmul.f32.gmra.mxu0 %v556
      %v1673 = vpop.f32.mrf.mxu0
      %v1674 = vadd.f32 %v507, %v1673
      %1675 = vmatmul.f32.gmra.mxu0 %v559
      %v1676 = vpop.f32.mrf.mxu0
      %v1677 = vadd.f32 %v507, %v1676
      %1678 = vmatmul.f32.gmra.mxu0 %v562
      %v1679 = vpop.f32.mrf.mxu0
      %v1680 = vadd.f32 %v507, %v1679
      %1681 = vmatmul.f32.gmra.mxu0 %v565
      %v1682 = vpop.f32.mrf.mxu0
      %v1683 = vadd.f32 %v507, %v1682
      %1684 = vmatmul.f32.gmra.mxu0 %v568
      %v1685 = vpop.f32.mrf.mxu0
      %v1686 = vadd.f32 %v507, %v1685
      %1687 = vmatmul.f32.gmra.mxu0 %v571
      %v1688 = vpop.f32.mrf.mxu0
      %v1689 = vadd.f32 %v507, %v1688
      %1690 = vmatmul.f32.gmra.mxu0 %v574
      %v1691 = vpop.f32.mrf.mxu0
      %v1692 = vadd.f32 %v507, %v1691
      %1693 = vmatmul.f32.gmra.mxu0 %v577
      %v1694 = vpop.f32.mrf.mxu0
      %v1695 = vadd.f32 %v507, %v1694
      %1696 = vmatmul.f32.gmra.mxu0 %v580
      %v1697 = vpop.f32.mrf.mxu0
      %v1698 = vadd.f32 %v507, %v1697
      %1699 = vmatmul.f32.gmra.mxu0 %v583
      %v1700 = vpop.f32.mrf.mxu0
      %v1701 = vadd.f32 %v507, %v1700
      %1702 = vmatmul.f32.gmra.mxu0 %v586
      %v1703 = vpop.f32.mrf.mxu0
      %v1704 = vadd.f32 %v507, %v1703
      %1705 = vmatmul.f32.gmra.mxu0 %v589
      %v1706 = vpop.f32.mrf.mxu0
      %v1707 = vadd.f32 %v507, %v1706
      %1708 = vmatmul.f32.gmra.mxu0 %v592
      %v1709 = vpop.f32.mrf.mxu0
      %v1710 = vadd.f32 %v507, %v1709
      %1711 = vmatmul.f32.gmra.mxu0 %v595
      %v1712 = vpop.f32.mrf.mxu0
      %v1713 = vadd.f32 %v507, %v1712
      %1714 = vmatmul.f32.gmra.mxu0 %v598
      %v1715 = vpop.f32.mrf.mxu0
      %v1716 = vadd.f32 %v507, %v1715
      %1717 = vmatmul.f32.gmra.mxu0 %v601
      %v1718 = vpop.f32.mrf.mxu0
      %v1719 = vadd.f32 %v507, %v1718
      %1720 = vmatmul.f32.gmra.mxu0 %v604
      %v1721 = vpop.f32.mrf.mxu0
      %v1722 = vadd.f32 %v507, %v1721
      %1723 = vmatmul.f32.gmra.mxu0 %v607
      %v1724 = vpop.f32.mrf.mxu0
      %v1725 = vadd.f32 %v507, %v1724
      %1726 = vmatmul.f32.gmra.mxu0 %v610
      %v1727 = vpop.f32.mrf.mxu0
      %v1728 = vadd.f32 %v507, %v1727
      %1729 = vmatmul.f32.gmra.mxu0 %v613
      %v1730 = vpop.f32.mrf.mxu0
      %v1731 = vadd.f32 %v507, %v1730
      %1732 = vmatmul.f32.gmra.mxu0 %v616
      %v1733 = vpop.f32.mrf.mxu0
      %v1734 = vadd.f32 %v507, %v1733
      %1735 = vmatmul.f32.gmra.mxu0 %v619
      %v1736 = vpop.f32.mrf.mxu0
      %v1737 = vadd.f32 %v507, %v1736
      %1738 = vmatmul.f32.gmra.mxu0 %v622
      %v1739 = vpop.f32.mrf.mxu0
      %v1740 = vadd.f32 %v507, %v1739
      %1741 = vmatmul.f32.gmra.mxu0 %v625
      %v1742 = vpop.f32.mrf.mxu0
      %v1743 = vadd.f32 %v507, %v1742
      %1744 = vmatmul.f32.gmra.mxu0 %v628
      %v1745 = vpop.f32.mrf.mxu0
      %v1746 = vadd.f32 %v507, %v1745
      %1747 = vmatmul.f32.gmra.mxu0 %v631
      %v1748 = vpop.f32.mrf.mxu0
      %v1749 = vadd.f32 %v507, %v1748
      %1750 = vmatmul.f32.gmra.mxu0 %v634
      %v1751 = vpop.f32.mrf.mxu0
      %v1752 = vadd.f32 %v507, %v1751
      %1753 = vmatmul.f32.gmra.mxu0 %v637
      %v1754 = vpop.f32.mrf.mxu0
      %v1755 = vadd.f32 %v507, %v1754
      %1756 = vmatmul.f32.gmra.mxu0 %v640
      %v1757 = vpop.f32.mrf.mxu0
      %v1758 = vadd.f32 %v507, %v1757
      %1759 = vmatmul.f32.gmra.mxu0 %v643
      %v1760 = vpop.f32.mrf.mxu0
      %v1761 = vadd.f32 %v507, %v1760
      %1762 = vmatmul.f32.gmra.mxu0 %v646
      %v1763 = vpop.f32.mrf.mxu0
      %v1764 = vadd.f32 %v507, %v1763
      %1765 = vmatmul.f32.gmra.mxu0 %v649
      %v1766 = vpop.f32.mrf.mxu0
      %v1767 = vadd.f32 %v507, %v1766
      %1768 = vmatmul.f32.gmra.mxu0 %v652
      %v1769 = vpop.f32.mrf.mxu0
      %v1770 = vadd.f32 %v507, %v1769
      %1771 = vmatmul.f32.gmra.mxu0 %v655
      %v1772 = vpop.f32.mrf.mxu0
      %v1773 = vadd.f32 %v507, %v1772
      %1774 = vmatmul.f32.gmra.mxu0 %v658
      %v1775 = vpop.f32.mrf.mxu0
      %v1776 = vadd.f32 %v507, %v1775
      %1777 = vmatmul.f32.gmra.mxu0 %v661
      %v1778 = vpop.f32.mrf.mxu0
      %v1779 = vadd.f32 %v507, %v1778
      %1780 = vmatmul.f32.gmra.mxu0 %v664
      %v1781 = vpop.f32.mrf.mxu0
      %v1782 = vadd.f32 %v507, %v1781
      %1783 = vmatmul.f32.gmra.mxu0 %v667
      %v1784 = vpop.f32.mrf.mxu0
      %v1785 = vadd.f32 %v507, %v1784
      %1786 = vmatmul.f32.gmra.mxu0 %v670
      %v1787 = vpop.f32.mrf.mxu0
      %v1788 = vadd.f32 %v507, %v1787
      %1789 = vmatmul.f32.gmra.mxu0 %v673
      %v1790 = vpop.f32.mrf.mxu0
      %v1791 = vadd.f32 %v507, %v1790
      %1792 = vmatmul.f32.gmra.mxu0 %v676
      %v1793 = vpop.f32.mrf.mxu0
      %v1794 = vadd.f32 %v507, %v1793
      %1795 = vmatmul.f32.gmra.mxu0 %v679
      %v1796 = vpop.f32.mrf.mxu0
      %v1797 = vadd.f32 %v507, %v1796
      %1798 = vmatmul.f32.gmra.mxu0 %v682
      %v1799 = vpop.f32.mrf.mxu0
      %v1800 = vadd.f32 %v507, %v1799
      %1801 = vmatmul.f32.gmra.mxu0 %v685
      %v1802 = vpop.f32.mrf.mxu0
      %v1803 = vadd.f32 %v507, %v1802
      %1804 = vmatmul.f32.gmra.mxu0 %v688
      %v1805 = vpop.f32.mrf.mxu0
      %v1806 = vadd.f32 %v507, %v1805
      %1807 = vmatmul.f32.gmra.mxu0 %v691
      %v1808 = vpop.f32.mrf.mxu0
      %v1809 = vadd.f32 %v507, %v1808
      %1810 = vmatmul.f32.gmra.mxu0 %v694
      %v1811 = vpop.f32.mrf.mxu0
      %v1812 = vadd.f32 %v507, %v1811
      %1813 = vmatmul.f32.gmra.mxu0 %v697
      %v1814 = vpop.f32.mrf.mxu0
      %v1815 = vadd.f32 %v507, %v1814
      %1816 = vmatmul.f32.gmra.mxu0 %v700
      %v1817 = vpop.f32.mrf.mxu0
      %v1818 = vadd.f32 %v507, %v1817
      %1819 = vmatmul.f32.gmra.mxu0 %v703
      %v1820 = vpop.f32.mrf.mxu0
      %v1821 = vadd.f32 %v507, %v1820
      %1822 = vmatmul.f32.gmra.mxu0 %v706
      %v1823 = vpop.f32.mrf.mxu0
      %v1824 = vadd.f32 %v507, %v1823
      %1825 = vmatmul.f32.gmra.mxu0 %v709
      %v1826 = vpop.f32.mrf.mxu0
      %v1827 = vadd.f32 %v507, %v1826
      %1828 = vmatmul.f32.gmra.mxu0 %v712
      %v1829 = vpop.f32.mrf.mxu0
      %v1830 = vadd.f32 %v507, %v1829
      %1831 = vmatmul.f32.gmra.mxu0 %v715
      %v1832 = vpop.f32.mrf.mxu0
      %v1833 = vadd.f32 %v507, %v1832
      %1834 = vmatmul.f32.gmra.mxu0 %v718
      %v1835 = vpop.f32.mrf.mxu0
      %v1836 = vadd.f32 %v507, %v1835
      %1837 = vmatmul.f32.gmra.mxu0 %v721
      %v1838 = vpop.f32.mrf.mxu0
      %v1839 = vadd.f32 %v507, %v1838
      %1840 = vmatmul.f32.gmra.mxu0 %v724
      %v1841 = vpop.f32.mrf.mxu0
      %v1842 = vadd.f32 %v507, %v1841
      %1843 = vmatmul.f32.gmra.mxu0 %v727
      %v1844 = vpop.f32.mrf.mxu0
      %v1845 = vadd.f32 %v507, %v1844
      %1846 = vmatmul.f32.gmra.mxu0 %v730
      %v1847 = vpop.f32.mrf.mxu0
      %v1848 = vadd.f32 %v507, %v1847
      %1849 = vmatmul.f32.gmra.mxu0 %v733
      %v1850 = vpop.f32.mrf.mxu0
      %v1851 = vadd.f32 %v507, %v1850
      %1852 = vmatmul.f32.gmra.mxu0 %v736
      %v1853 = vpop.f32.mrf.mxu0
      %v1854 = vadd.f32 %v507, %v1853
      %1855 = vmatmul.f32.gmra.mxu0 %v739
      %v1856 = vpop.f32.mrf.mxu0
      %v1857 = vadd.f32 %v507, %v1856
      %1858 = vmatmul.f32.gmra.mxu0 %v742
      %v1859 = vpop.f32.mrf.mxu0
      %v1860 = vadd.f32 %v507, %v1859
      %1861 = vmatmul.f32.gmra.mxu0 %v745
      %v1862 = vpop.f32.mrf.mxu0
      %v1863 = vadd.f32 %v507, %v1862
      %1864 = vdwg.mxu0
      %v1865 = vtanh.pop %v1629
      %v1866 = vtanh.pop %v1632
      %v1867 = vtanh.pop %v1635
      %v1868 = vtanh.pop %v1638
      %v1869 = vtanh.pop %v1641
      %v1870 = vtanh.pop %v1644
      %v1871 = vtanh.pop %v1647
      %v1872 = vtanh.pop %v1650
      %v1873 = vtanh.pop %v1653
      %v1874 = vtanh.pop %v1656
      %v1875 = vtanh.pop %v1659
      %v1876 = vtanh.pop %v1662
      %v1877 = vtanh.pop %v1665
      %v1878 = vtanh.pop %v1668
      %v1879 = vtanh.pop %v1671
      %v1880 = vtanh.pop %v1674
      %v1881 = vtanh.pop %v1677
      %v1882 = vtanh.pop %v1680
      %v1883 = vtanh.pop %v1683
      %v1884 = vtanh.pop %v1686
      %v1885 = vtanh.pop %v1689
      %v1886 = vtanh.pop %v1692
      %v1887 = vtanh.pop %v1695
      %v1888 = vtanh.pop %v1698
      %v1889 = vtanh.pop %v1701
      %v1890 = vtanh.pop %v1704
      %v1891 = vtanh.pop %v1707
      %v1892 = vtanh.pop %v1710
      %v1893 = vtanh.pop %v1713
      %v1894 = vtanh.pop %v1716
      %v1895 = vtanh.pop %v1719
      %v1896 = vtanh.pop %v1722
      %v1897 = vtanh.pop %v1725
      %v1898 = vtanh.pop %v1728
      %v1899 = vtanh.pop %v1731
      %v1900 = vtanh.pop %v1734
      %v1901 = vtanh.pop %v1737
      %v1902 = vtanh.pop %v1740
      %v1903 = vtanh.pop %v1743
      %v1904 = vtanh.pop %v1746
      %v1905 = vtanh.pop %v1749
      %v1906 = vtanh.pop %v1752
      %v1907 = vtanh.pop %v1755
      %v1908 = vtanh.pop %v1758
      %v1909 = vtanh.pop %v1761
      %v1910 = vtanh.pop %v1764
      %v1911 = vtanh.pop %v1767
      %v1912 = vtanh.pop %v1770
      %v1913 = vtanh.pop %v1773
      %v1914 = vtanh.pop %v1776
      %v1915 = vtanh.pop %v1779
      %v1916 = vtanh.pop %v1782
      %v1917 = vtanh.pop %v1785
      %v1918 = vtanh.pop %v1788
      %v1919 = vtanh.pop %v1791
      %v1920 = vtanh.pop %v1794
      %v1921 = vtanh.pop %v1797
      %v1922 = vtanh.pop %v1800
      %v1923 = vtanh.pop %v1803
      %v1924 = vtanh.pop %v1806
      %v1925 = vtanh.pop %v1809
      %v1926 = vtanh.pop %v1812
      %v1927 = vtanh.pop %v1815
      %v1928 = vtanh.pop %v1818
      %v1929 = vtanh.pop %v1821
      %v1930 = vtanh.pop %v1824
      %v1931 = vtanh.pop %v1827
      %v1932 = vtanh.pop %v1830
      %v1933 = vtanh.pop %v1833
      %v1934 = vtanh.pop %v1836
      %v1935 = vtanh.pop %v1839
      %v1936 = vtanh.pop %v1842
      %v1937 = vtanh.pop %v1845
      %v1938 = vtanh.pop %v1848
      %v1939 = vtanh.pop %v1851
      %v1940 = vtanh.pop %v1854
      %v1941 = vtanh.pop %v1857
      %v1942 = vtanh.pop %v1860
      %v1943 = vtanh.pop %v1863
      %v1944 = vadd.f32 %v1514, %v1865
      %v1945 = vadd.f32 %v1515, %v1866
      %v1946 = vadd.f32 %v1516, %v1867
      %v1947 = vadd.f32 %v1517, %v1868
      %v1948 = vadd.f32 %v1518, %v1869
      %v1949 = vadd.f32 %v1519, %v1870
      %v1950 = vadd.f32 %v1520, %v1871
      %v1951 = vadd.f32 %v1521, %v1872
      %v1952 = vadd.f32 %v1522, %v1873
      %v1953 = vadd.f32 %v1523, %v1874
      %v1954 = vadd.f32 %v1524, %v1875
      %v1955 = vadd.f32 %v1525, %v1876
      %v1956 = vadd.f32 %v1526, %v1877
      %v1957 = vadd.f32 %v1527, %v1878
      %v1958 = vadd.f32 %v1528, %v1879
      %v1959 = vadd.f32 %v1529, %v1880
      %v1960 = vadd.f32 %v1530, %v1881
      %v1961 = vadd.f32 %v1531, %v1882
      %v1962 = vadd.f32 %v1532, %v1883
      %v1963 = vadd.f32 %v1533, %v1884
      %v1964 = vadd.f32 %v1534, %v1885
      %v1965 = vadd.f32 %v1535, %v1886
      %v1966 = vadd.f32 %v1536, %v1887
      %v1967 = vadd.f32 %v1537, %v1888
      %v1968 = vadd.f32 %v1538, %v1889
      %v1969 = vadd.f32 %v1539, %v1890
      %v1970 = vadd.f32 %v1540, %v1891
      %v1971 = vadd.f32 %v1541, %v1892
      %v1972 = vadd.f32 %v1542, %v1893
      %v1973 = vadd.f32 %v1543, %v1894
      %v1974 = vadd.f32 %v1544, %v1895
      %v1975 = vadd.f32 %v1545, %v1896
      %v1976 = vadd.f32 %v1546, %v1897
      %v1977 = vadd.f32 %v1547, %v1898
      %v1978 = vadd.f32 %v1548, %v1899
      %v1979 = vadd.f32 %v1549, %v1900
      %v1980 = vadd.f32 %v1550, %v1901
      %v1981 = vadd.f32 %v1551, %v1902
      %v1982 = vadd.f32 %v1552, %v1903
      %v1983 = vadd.f32 %v1553, %v1904
      %v1984 = vadd.f32 %v1554, %v1905
      %v1985 = vadd.f32 %v1555, %v1906
      %v1986 = vadd.f32 %v1556, %v1907
      %v1987 = vadd.f32 %v1557, %v1908
      %v1988 = vadd.f32 %v1558, %v1909
      %v1989 = vadd.f32 %v1559, %v1910
      %v1990 = vadd.f32 %v1560, %v1911
      %v1991 = vadd.f32 %v1561, %v1912
      %v1992 = vadd.f32 %v1562, %v1913
      %v1993 = vadd.f32 %v1563, %v1914
      %v1994 = vadd.f32 %v1564, %v1915
      %v1995 = vadd.f32 %v1565, %v1916
      %v1996 = vadd.f32 %v1566, %v1917
      %v1997 = vadd.f32 %v1567, %v1918
      %v1998 = vadd.f32 %v1568, %v1919
      %v1999 = vadd.f32 %v1569, %v1920
      %v2000 = vadd.f32 %v1570, %v1921
      %v2001 = vadd.f32 %v1571, %v1922
      %v2002 = vadd.f32 %v1572, %v1923
      %v2003 = vadd.f32 %v1573, %v1924
      %v2004 = vadd.f32 %v1574, %v1925
      %v2005 = vadd.f32 %v1575, %v1926
      %v2006 = vadd.f32 %v1576, %v1927
      %v2007 = vadd.f32 %v1577, %v1928
      %v2008 = vadd.f32 %v1578, %v1929
      %v2009 = vadd.f32 %v1579, %v1930
      %v2010 = vadd.f32 %v1580, %v1931
      %v2011 = vadd.f32 %v1581, %v1932
      %v2012 = vadd.f32 %v1582, %v1933
      %v2013 = vadd.f32 %v1583, %v1934
      %v2014 = vadd.f32 %v1584, %v1935
      %v2015 = vadd.f32 %v1585, %v1936
      %v2016 = vadd.f32 %v1586, %v1937
      %v2017 = vadd.f32 %v1587, %v1938
      %v2018 = vadd.f32 %v1588, %v1939
      %v2019 = vadd.f32 %v1589, %v1940
      %v2020 = vadd.f32 %v1590, %v1941
      %v2021 = vadd.f32 %v1591, %v1942
      %v2022 = vadd.f32 %v1592, %v1943
      %s2023 = scalar_lea.vmem %s1, 336
      %v2024 = vld [vmem:[%s2023] sm:$0xff]
      %v2025 = vld [vmem:[%s2023 + $0x8] sm:$0xff]
      %v2026 = vld [vmem:[%s2023 + $0x10] sm:$0xff]
      %v2027 = vld [vmem:[%s2023 + $0x18] sm:$0xff]
      %v2028 = vld [vmem:[%s2023 + $0x20] sm:$0xff]
      %v2029 = vld [vmem:[%s2023 + $0x28] sm:$0xff]
      %v2030 = vld [vmem:[%s2023 + $0x30] sm:$0xff]
      %v2031 = vld [vmem:[%s2023 + $0x38] sm:$0xff]
      %v2032 = vld [vmem:[%s2023 + $0x40] sm:$0xff]
      %v2033 = vld [vmem:[%s2023 + $0x48] sm:$0xff]
      %v2034 = vld [vmem:[%s2023 + $0x50] sm:$0xff]
      %v2035 = vld [vmem:[%s2023 + $0x58] sm:$0xff]
      %v2036 = vld [vmem:[%s2023 + $0x60] sm:$0xff]
      %v2037 = vld [vmem:[%s2023 + $0x68] sm:$0xf]
      %v2039 = vsel %vm747, %v2037, 0
      %2041 = vmatpush.msra.mxu0 0.0
      %2042 = vmatpush.msra.mxu0 0.0
      %2043 = vmatpush.msra.mxu0 %v2039
      %2044 = vmatpush.msra.mxu0 %v2036
      %2045 = vmatpush.msra.mxu0 %v2035
      %2046 = vmatpush.msra.mxu0 %v2034
      %2047 = vmatpush.msra.mxu0 %v2033
      %2048 = vmatpush.msra.mxu0 %v2032
      %2049 = vmatpush.msra.mxu0 %v2031
      %2050 = vmatpush.msra.mxu0 %v2030
      %2051 = vmatpush.msra.mxu0 %v2029
      %2052 = vmatpush.msra.mxu0 %v2028
      %2053 = vmatpush.msra.mxu0 %v2027
      %2054 = vmatpush.msra.mxu0 %v2026
      %2055 = vmatpush.msra.mxu0 %v2025
      %2056 = vmatpush.msra.mxu0 %v2024
      %2057 = vmatmul.f32.gmra.mxu0 %v511
      %v2058 = vpop.f32.mrf.mxu0
      %v2059 = vadd.f32 %v507, %v2058
      %2060 = vmatmul.f32.gmra.mxu0 %v514
      %v2061 = vpop.f32.mrf.mxu0
      %v2062 = vadd.f32 %v507, %v2061
      %2063 = vmatmul.f32.gmra.mxu0 %v517
      %v2064 = vpop.f32.mrf.mxu0
      %v2065 = vadd.f32 %v507, %v2064
      %2066 = vmatmul.f32.gmra.mxu0 %v520
      %v2067 = vpop.f32.mrf.mxu0
      %v2068 = vadd.f32 %v507, %v2067
      %2069 = vmatmul.f32.gmra.mxu0 %v523
      %v2070 = vpop.f32.mrf.mxu0
      %v2071 = vadd.f32 %v507, %v2070
      %2072 = vmatmul.f32.gmra.mxu0 %v526
      %v2073 = vpop.f32.mrf.mxu0
      %v2074 = vadd.f32 %v507, %v2073
      %2075 = vmatmul.f32.gmra.mxu0 %v529
      %v2076 = vpop.f32.mrf.mxu0
      %v2077 = vadd.f32 %v507, %v2076
      %2078 = vmatmul.f32.gmra.mxu0 %v532
      %v2079 = vpop.f32.mrf.mxu0
      %v2080 = vadd.f32 %v507, %v2079
      %2081 = vmatmul.f32.gmra.mxu0 %v535
      %v2082 = vpop.f32.mrf.mxu0
      %v2083 = vadd.f32 %v507, %v2082
      %2084 = vmatmul.f32.gmra.mxu0 %v538
      %v2085 = vpop.f32.mrf.mxu0
      %v2086 = vadd.f32 %v507, %v2085
      %2087 = vmatmul.f32.gmra.mxu0 %v541
      %v2088 = vpop.f32.mrf.mxu0
      %v2089 = vadd.f32 %v507, %v2088
      %2090 = vmatmul.f32.gmra.mxu0 %v544
      %v2091 = vpop.f32.mrf.mxu0
      %v2092 = vadd.f32 %v507, %v2091
      %2093 = vmatmul.f32.gmra.mxu0 %v547
      %v2094 = vpop.f32.mrf.mxu0
      %v2095 = vadd.f32 %v507, %v2094
      %2096 = vmatmul.f32.gmra.mxu0 %v550
      %v2097 = vpop.f32.mrf.mxu0
      %v2098 = vadd.f32 %v507, %v2097
      %2099 = vmatmul.f32.gmra.mxu0 %v553
      %v2100 = vpop.f32.mrf.mxu0
      %v2101 = vadd.f32 %v507, %v2100
      %2102 = vmatmul.f32.gmra.mxu0 %v556
      %v2103 = vpop.f32.mrf.mxu0
      %v2104 = vadd.f32 %v507, %v2103
      %2105 = vmatmul.f32.gmra.mxu0 %v559
      %v2106 = vpop.f32.mrf.mxu0
      %v2107 = vadd.f32 %v507, %v2106
      %2108 = vmatmul.f32.gmra.mxu0 %v562
      %v2109 = vpop.f32.mrf.mxu0
      %v2110 = vadd.f32 %v507, %v2109
      %2111 = vmatmul.f32.gmra.mxu0 %v565
      %v2112 = vpop.f32.mrf.mxu0
      %v2113 = vadd.f32 %v507, %v2112
      %2114 = vmatmul.f32.gmra.mxu0 %v568
      %v2115 = vpop.f32.mrf.mxu0
      %v2116 = vadd.f32 %v507, %v2115
      %2117 = vmatmul.f32.gmra.mxu0 %v571
      %v2118 = vpop.f32.mrf.mxu0
      %v2119 = vadd.f32 %v507, %v2118
      %2120 = vmatmul.f32.gmra.mxu0 %v574
      %v2121 = vpop.f32.mrf.mxu0
      %v2122 = vadd.f32 %v507, %v2121
      %2123 = vmatmul.f32.gmra.mxu0 %v577
      %v2124 = vpop.f32.mrf.mxu0
      %v2125 = vadd.f32 %v507, %v2124
      %2126 = vmatmul.f32.gmra.mxu0 %v580
      %v2127 = vpop.f32.mrf.mxu0
      %v2128 = vadd.f32 %v507, %v2127
      %2129 = vmatmul.f32.gmra.mxu0 %v583
      %v2130 = vpop.f32.mrf.mxu0
      %v2131 = vadd.f32 %v507, %v2130
      %2132 = vmatmul.f32.gmra.mxu0 %v586
      %v2133 = vpop.f32.mrf.mxu0
      %v2134 = vadd.f32 %v507, %v2133
      %2135 = vmatmul.f32.gmra.mxu0 %v589
      %v2136 = vpop.f32.mrf.mxu0
      %v2137 = vadd.f32 %v507, %v2136
      %2138 = vmatmul.f32.gmra.mxu0 %v592
      %v2139 = vpop.f32.mrf.mxu0
      %v2140 = vadd.f32 %v507, %v2139
      %2141 = vmatmul.f32.gmra.mxu0 %v595
      %v2142 = vpop.f32.mrf.mxu0
      %v2143 = vadd.f32 %v507, %v2142
      %2144 = vmatmul.f32.gmra.mxu0 %v598
      %v2145 = vpop.f32.mrf.mxu0
      %v2146 = vadd.f32 %v507, %v2145
      %2147 = vmatmul.f32.gmra.mxu0 %v601
      %v2148 = vpop.f32.mrf.mxu0
      %v2149 = vadd.f32 %v507, %v2148
      %2150 = vmatmul.f32.gmra.mxu0 %v604
      %v2151 = vpop.f32.mrf.mxu0
      %v2152 = vadd.f32 %v507, %v2151
      %2153 = vmatmul.f32.gmra.mxu0 %v607
      %v2154 = vpop.f32.mrf.mxu0
      %v2155 = vadd.f32 %v507, %v2154
      %2156 = vmatmul.f32.gmra.mxu0 %v610
      %v2157 = vpop.f32.mrf.mxu0
      %v2158 = vadd.f32 %v507, %v2157
      %2159 = vmatmul.f32.gmra.mxu0 %v613
      %v2160 = vpop.f32.mrf.mxu0
      %v2161 = vadd.f32 %v507, %v2160
      %2162 = vmatmul.f32.gmra.mxu0 %v616
      %v2163 = vpop.f32.mrf.mxu0
      %v2164 = vadd.f32 %v507, %v2163
      %2165 = vmatmul.f32.gmra.mxu0 %v619
      %v2166 = vpop.f32.mrf.mxu0
      %v2167 = vadd.f32 %v507, %v2166
      %2168 = vmatmul.f32.gmra.mxu0 %v622
      %v2169 = vpop.f32.mrf.mxu0
      %v2170 = vadd.f32 %v507, %v2169
      %2171 = vmatmul.f32.gmra.mxu0 %v625
      %v2172 = vpop.f32.mrf.mxu0
      %v2173 = vadd.f32 %v507, %v2172
      %2174 = vmatmul.f32.gmra.mxu0 %v628
      %v2175 = vpop.f32.mrf.mxu0
      %v2176 = vadd.f32 %v507, %v2175
      %2177 = vmatmul.f32.gmra.mxu0 %v631
      %v2178 = vpop.f32.mrf.mxu0
      %v2179 = vadd.f32 %v507, %v2178
      %2180 = vmatmul.f32.gmra.mxu0 %v634
      %v2181 = vpop.f32.mrf.mxu0
      %v2182 = vadd.f32 %v507, %v2181
      %2183 = vmatmul.f32.gmra.mxu0 %v637
      %v2184 = vpop.f32.mrf.mxu0
      %v2185 = vadd.f32 %v507, %v2184
      %2186 = vmatmul.f32.gmra.mxu0 %v640
      %v2187 = vpop.f32.mrf.mxu0
      %v2188 = vadd.f32 %v507, %v2187
      %2189 = vmatmul.f32.gmra.mxu0 %v643
      %v2190 = vpop.f32.mrf.mxu0
      %v2191 = vadd.f32 %v507, %v2190
      %2192 = vmatmul.f32.gmra.mxu0 %v646
      %v2193 = vpop.f32.mrf.mxu0
      %v2194 = vadd.f32 %v507, %v2193
      %2195 = vmatmul.f32.gmra.mxu0 %v649
      %v2196 = vpop.f32.mrf.mxu0
      %v2197 = vadd.f32 %v507, %v2196
      %2198 = vmatmul.f32.gmra.mxu0 %v652
      %v2199 = vpop.f32.mrf.mxu0
      %v2200 = vadd.f32 %v507, %v2199
      %2201 = vmatmul.f32.gmra.mxu0 %v655
      %v2202 = vpop.f32.mrf.mxu0
      %v2203 = vadd.f32 %v507, %v2202
      %2204 = vmatmul.f32.gmra.mxu0 %v658
      %v2205 = vpop.f32.mrf.mxu0
      %v2206 = vadd.f32 %v507, %v2205
      %2207 = vmatmul.f32.gmra.mxu0 %v661
      %v2208 = vpop.f32.mrf.mxu0
      %v2209 = vadd.f32 %v507, %v2208
      %2210 = vmatmul.f32.gmra.mxu0 %v664
      %v2211 = vpop.f32.mrf.mxu0
      %v2212 = vadd.f32 %v507, %v2211
      %2213 = vmatmul.f32.gmra.mxu0 %v667
      %v2214 = vpop.f32.mrf.mxu0
      %v2215 = vadd.f32 %v507, %v2214
      %2216 = vmatmul.f32.gmra.mxu0 %v670
      %v2217 = vpop.f32.mrf.mxu0
      %v2218 = vadd.f32 %v507, %v2217
      %2219 = vmatmul.f32.gmra.mxu0 %v673
      %v2220 = vpop.f32.mrf.mxu0
      %v2221 = vadd.f32 %v507, %v2220
      %2222 = vmatmul.f32.gmra.mxu0 %v676
      %v2223 = vpop.f32.mrf.mxu0
      %v2224 = vadd.f32 %v507, %v2223
      %2225 = vmatmul.f32.gmra.mxu0 %v679
      %v2226 = vpop.f32.mrf.mxu0
      %v2227 = vadd.f32 %v507, %v2226
      %2228 = vmatmul.f32.gmra.mxu0 %v682
      %v2229 = vpop.f32.mrf.mxu0
      %v2230 = vadd.f32 %v507, %v2229
      %2231 = vmatmul.f32.gmra.mxu0 %v685
      %v2232 = vpop.f32.mrf.mxu0
      %v2233 = vadd.f32 %v507, %v2232
      %2234 = vmatmul.f32.gmra.mxu0 %v688
      %v2235 = vpop.f32.mrf.mxu0
      %v2236 = vadd.f32 %v507, %v2235
      %2237 = vmatmul.f32.gmra.mxu0 %v691
      %v2238 = vpop.f32.mrf.mxu0
      %v2239 = vadd.f32 %v507, %v2238
      %2240 = vmatmul.f32.gmra.mxu0 %v694
      %v2241 = vpop.f32.mrf.mxu0
      %v2242 = vadd.f32 %v507, %v2241
      %2243 = vmatmul.f32.gmra.mxu0 %v697
      %v2244 = vpop.f32.mrf.mxu0
      %v2245 = vadd.f32 %v507, %v2244
      %2246 = vmatmul.f32.gmra.mxu0 %v700
      %v2247 = vpop.f32.mrf.mxu0
      %v2248 = vadd.f32 %v507, %v2247
      %2249 = vmatmul.f32.gmra.mxu0 %v703
      %v2250 = vpop.f32.mrf.mxu0
      %v2251 = vadd.f32 %v507, %v2250
      %2252 = vmatmul.f32.gmra.mxu0 %v706
      %v2253 = vpop.f32.mrf.mxu0
      %v2254 = vadd.f32 %v507, %v2253
      %2255 = vmatmul.f32.gmra.mxu0 %v709
      %v2256 = vpop.f32.mrf.mxu0
      %v2257 = vadd.f32 %v507, %v2256
      %2258 = vmatmul.f32.gmra.mxu0 %v712
      %v2259 = vpop.f32.mrf.mxu0
      %v2260 = vadd.f32 %v507, %v2259
      %2261 = vmatmul.f32.gmra.mxu0 %v715
      %v2262 = vpop.f32.mrf.mxu0
      %v2263 = vadd.f32 %v507, %v2262
      %2264 = vmatmul.f32.gmra.mxu0 %v718
      %v2265 = vpop.f32.mrf.mxu0
      %v2266 = vadd.f32 %v507, %v2265
      %2267 = vmatmul.f32.gmra.mxu0 %v721
      %v2268 = vpop.f32.mrf.mxu0
      %v2269 = vadd.f32 %v507, %v2268
      %2270 = vmatmul.f32.gmra.mxu0 %v724
      %v2271 = vpop.f32.mrf.mxu0
      %v2272 = vadd.f32 %v507, %v2271
      %2273 = vmatmul.f32.gmra.mxu0 %v727
      %v2274 = vpop.f32.mrf.mxu0
      %v2275 = vadd.f32 %v507, %v2274
      %2276 = vmatmul.f32.gmra.mxu0 %v730
      %v2277 = vpop.f32.mrf.mxu0
      %v2278 = vadd.f32 %v507, %v2277
      %2279 = vmatmul.f32.gmra.mxu0 %v733
      %v2280 = vpop.f32.mrf.mxu0
      %v2281 = vadd.f32 %v507, %v2280
      %2282 = vmatmul.f32.gmra.mxu0 %v736
      %v2283 = vpop.f32.mrf.mxu0
      %v2284 = vadd.f32 %v507, %v2283
      %2285 = vmatmul.f32.gmra.mxu0 %v739
      %v2286 = vpop.f32.mrf.mxu0
      %v2287 = vadd.f32 %v507, %v2286
      %2288 = vmatmul.f32.gmra.mxu0 %v742
      %v2289 = vpop.f32.mrf.mxu0
      %v2290 = vadd.f32 %v507, %v2289
      %2291 = vmatmul.f32.gmra.mxu0 %v745
      %v2292 = vpop.f32.mrf.mxu0
      %v2293 = vadd.f32 %v507, %v2292
      %2294 = vdwg.mxu0
      %v2295 = vtanh.pop %v2059
      %v2296 = vtanh.pop %v2062
      %v2297 = vtanh.pop %v2065
      %v2298 = vtanh.pop %v2068
      %v2299 = vtanh.pop %v2071
      %v2300 = vtanh.pop %v2074
      %v2301 = vtanh.pop %v2077
      %v2302 = vtanh.pop %v2080
      %v2303 = vtanh.pop %v2083
      %v2304 = vtanh.pop %v2086
      %v2305 = vtanh.pop %v2089
      %v2306 = vtanh.pop %v2092
      %v2307 = vtanh.pop %v2095
      %v2308 = vtanh.pop %v2098
      %v2309 = vtanh.pop %v2101
      %v2310 = vtanh.pop %v2104
      %v2311 = vtanh.pop %v2107
      %v2312 = vtanh.pop %v2110
      %v2313 = vtanh.pop %v2113
      %v2314 = vtanh.pop %v2116
      %v2315 = vtanh.pop %v2119
      %v2316 = vtanh.pop %v2122
      %v2317 = vtanh.pop %v2125
      %v2318 = vtanh.pop %v2128
      %v2319 = vtanh.pop %v2131
      %v2320 = vtanh.pop %v2134
      %v2321 = vtanh.pop %v2137
      %v2322 = vtanh.pop %v2140
      %v2323 = vtanh.pop %v2143
      %v2324 = vtanh.pop %v2146
      %v2325 = vtanh.pop %v2149
      %v2326 = vtanh.pop %v2152
      %v2327 = vtanh.pop %v2155
      %v2328 = vtanh.pop %v2158
      %v2329 = vtanh.pop %v2161
      %v2330 = vtanh.pop %v2164
      %v2331 = vtanh.pop %v2167
      %v2332 = vtanh.pop %v2170
      %v2333 = vtanh.pop %v2173
      %v2334 = vtanh.pop %v2176
      %v2335 = vtanh.pop %v2179
      %v2336 = vtanh.pop %v2182
      %v2337 = vtanh.pop %v2185
      %v2338 = vtanh.pop %v2188
      %v2339 = vtanh.pop %v2191
      %v2340 = vtanh.pop %v2194
      %v2341 = vtanh.pop %v2197
      %v2342 = vtanh.pop %v2200
      %v2343 = vtanh.pop %v2203
      %v2344 = vtanh.pop %v2206
      %v2345 = vtanh.pop %v2209
      %v2346 = vtanh.pop %v2212
      %v2347 = vtanh.pop %v2215
      %v2348 = vtanh.pop %v2218
      %v2349 = vtanh.pop %v2221
      %v2350 = vtanh.pop %v2224
      %v2351 = vtanh.pop %v2227
      %v2352 = vtanh.pop %v2230
      %v2353 = vtanh.pop %v2233
      %v2354 = vtanh.pop %v2236
      %v2355 = vtanh.pop %v2239
      %v2356 = vtanh.pop %v2242
      %v2357 = vtanh.pop %v2245
      %v2358 = vtanh.pop %v2248
      %v2359 = vtanh.pop %v2251
      %v2360 = vtanh.pop %v2254
      %v2361 = vtanh.pop %v2257
      %v2362 = vtanh.pop %v2260
      %v2363 = vtanh.pop %v2263
      %v2364 = vtanh.pop %v2266
      %v2365 = vtanh.pop %v2269
      %v2366 = vtanh.pop %v2272
      %v2367 = vtanh.pop %v2275
      %v2368 = vtanh.pop %v2278
      %v2369 = vtanh.pop %v2281
      %v2370 = vtanh.pop %v2284
      %v2371 = vtanh.pop %v2287
      %v2372 = vtanh.pop %v2290
      %v2373 = vtanh.pop %v2293
      %v2374 = vadd.f32 %v1944, %v2295
      %v2375 = vadd.f32 %v1945, %v2296
      %v2376 = vadd.f32 %v1946, %v2297
      %v2377 = vadd.f32 %v1947, %v2298
      %v2378 = vadd.f32 %v1948, %v2299
      %v2379 = vadd.f32 %v1949, %v2300
      %v2380 = vadd.f32 %v1950, %v2301
      %v2381 = vadd.f32 %v1951, %v2302
      %v2382 = vadd.f32 %v1952, %v2303
      %v2383 = vadd.f32 %v1953, %v2304
      %v2384 = vadd.f32 %v1954, %v2305
      %v2385 = vadd.f32 %v1955, %v2306
      %v2386 = vadd.f32 %v1956, %v2307
      %v2387 = vadd.f32 %v1957, %v2308
      %v2388 = vadd.f32 %v1958, %v2309
      %v2389 = vadd.f32 %v1959, %v2310
      %v2390 = vadd.f32 %v1960, %v2311
      %v2391 = vadd.f32 %v1961, %v2312
      %v2392 = vadd.f32 %v1962, %v2313
      %v2393 = vadd.f32 %v1963, %v2314
      %v2394 = vadd.f32 %v1964, %v2315
      %v2395 = vadd.f32 %v1965, %v2316
      %v2396 = vadd.f32 %v1966, %v2317
      %v2397 = vadd.f32 %v1967, %v2318
      %v2398 = vadd.f32 %v1968, %v2319
      %v2399 = vadd.f32 %v1969, %v2320
      %v2400 = vadd.f32 %v1970, %v2321
      %v2401 = vadd.f32 %v1971, %v2322
      %v2402 = vadd.f32 %v1972, %v2323
      %v2403 = vadd.f32 %v1973, %v2324
      %v2404 = vadd.f32 %v1974, %v2325
      %v2405 = vadd.f32 %v1975, %v2326
      %v2406 = vadd.f32 %v1976, %v2327
      %v2407 = vadd.f32 %v1977, %v2328
      %v2408 = vadd.f32 %v1978, %v2329
      %v2409 = vadd.f32 %v1979, %v2330
      %v2410 = vadd.f32 %v1980, %v2331
      %v2411 = vadd.f32 %v1981, %v2332
      %v2412 = vadd.f32 %v1982, %v2333
      %v2413 = vadd.f32 %v1983, %v2334
      %v2414 = vadd.f32 %v1984, %v2335
      %v2415 = vadd.f32 %v1985, %v2336
      %v2416 = vadd.f32 %v1986, %v2337
      %v2417 = vadd.f32 %v1987, %v2338
      %v2418 = vadd.f32 %v1988, %v2339
      %v2419 = vadd.f32 %v1989, %v2340
      %v2420 = vadd.f32 %v1990, %v2341
      %v2421 = vadd.f32 %v1991, %v2342
      %v2422 = vadd.f32 %v1992, %v2343
      %v2423 = vadd.f32 %v1993, %v2344
      %v2424 = vadd.f32 %v1994, %v2345
      %v2425 = vadd.f32 %v1995, %v2346
      %v2426 = vadd.f32 %v1996, %v2347
      %v2427 = vadd.f32 %v1997, %v2348
      %v2428 = vadd.f32 %v1998, %v2349
      %v2429 = vadd.f32 %v1999, %v2350
      %v2430 = vadd.f32 %v2000, %v2351
      %v2431 = vadd.f32 %v2001, %v2352
      %v2432 = vadd.f32 %v2002, %v2353
      %v2433 = vadd.f32 %v2003, %v2354
      %v2434 = vadd.f32 %v2004, %v2355
      %v2435 = vadd.f32 %v2005, %v2356
      %v2436 = vadd.f32 %v2006, %v2357
      %v2437 = vadd.f32 %v2007, %v2358
      %v2438 = vadd.f32 %v2008, %v2359
      %v2439 = vadd.f32 %v2009, %v2360
      %v2440 = vadd.f32 %v2010, %v2361
      %v2441 = vadd.f32 %v2011, %v2362
      %v2442 = vadd.f32 %v2012, %v2363
      %v2443 = vadd.f32 %v2013, %v2364
      %v2444 = vadd.f32 %v2014, %v2365
      %v2445 = vadd.f32 %v2015, %v2366
      %v2446 = vadd.f32 %v2016, %v2367
      %v2447 = vadd.f32 %v2017, %v2368
      %v2448 = vadd.f32 %v2018, %v2369
      %v2449 = vadd.f32 %v2019, %v2370
      %v2450 = vadd.f32 %v2020, %v2371
      %v2451 = vadd.f32 %v2021, %v2372
      %v2452 = vadd.f32 %v2022, %v2373
      %v2453 = vmul.f32 %v2374, 0.25
      %v2454 = vmul.f32 %v2375, 0.25
      %v2455 = vmul.f32 %v2376, 0.25
      %v2456 = vmul.f32 %v2377, 0.25
      %v2457 = vmul.f32 %v2378, 0.25
      %v2458 = vmul.f32 %v2379, 0.25
      %v2459 = vmul.f32 %v2380, 0.25
      %v2460 = vmul.f32 %v2381, 0.25
      %v2461 = vmul.f32 %v2382, 0.25
      %v2462 = vmul.f32 %v2383, 0.25
      %v2463 = vmul.f32 %v2384, 0.25
      %v2464 = vmul.f32 %v2385, 0.25
      %v2465 = vmul.f32 %v2386, 0.25
      %v2466 = vmul.f32 %v2387, 0.25
      %v2467 = vmul.f32 %v2388, 0.25
      %v2468 = vmul.f32 %v2389, 0.25
      %v2469 = vmul.f32 %v2390, 0.25
      %v2470 = vmul.f32 %v2391, 0.25
      %v2471 = vmul.f32 %v2392, 0.25
      %v2472 = vmul.f32 %v2393, 0.25
      %v2473 = vmul.f32 %v2394, 0.25
      %v2474 = vmul.f32 %v2395, 0.25
      %v2475 = vmul.f32 %v2396, 0.25
      %v2476 = vmul.f32 %v2397, 0.25
      %v2477 = vmul.f32 %v2398, 0.25
      %v2478 = vmul.f32 %v2399, 0.25
      %v2479 = vmul.f32 %v2400, 0.25
      %v2480 = vmul.f32 %v2401, 0.25
      %v2481 = vmul.f32 %v2402, 0.25
      %v2482 = vmul.f32 %v2403, 0.25
      %v2483 = vmul.f32 %v2404, 0.25
      %v2484 = vmul.f32 %v2405, 0.25
      %v2485 = vmul.f32 %v2406, 0.25
      %v2486 = vmul.f32 %v2407, 0.25
      %v2487 = vmul.f32 %v2408, 0.25
      %v2488 = vmul.f32 %v2409, 0.25
      %v2489 = vmul.f32 %v2410, 0.25
      %v2490 = vmul.f32 %v2411, 0.25
      %v2491 = vmul.f32 %v2412, 0.25
      %v2492 = vmul.f32 %v2413, 0.25
      %v2493 = vmul.f32 %v2414, 0.25
      %v2494 = vmul.f32 %v2415, 0.25
      %v2495 = vmul.f32 %v2416, 0.25
      %v2496 = vmul.f32 %v2417, 0.25
      %v2497 = vmul.f32 %v2418, 0.25
      %v2498 = vmul.f32 %v2419, 0.25
      %v2499 = vmul.f32 %v2420, 0.25
      %v2500 = vmul.f32 %v2421, 0.25
      %v2501 = vmul.f32 %v2422, 0.25
      %v2502 = vmul.f32 %v2423, 0.25
      %v2503 = vmul.f32 %v2424, 0.25
      %v2504 = vmul.f32 %v2425, 0.25
      %v2505 = vmul.f32 %v2426, 0.25
      %v2506 = vmul.f32 %v2427, 0.25
      %v2507 = vmul.f32 %v2428, 0.25
      %v2508 = vmul.f32 %v2429, 0.25
      %v2509 = vmul.f32 %v2430, 0.25
      %v2510 = vmul.f32 %v2431, 0.25
      %v2511 = vmul.f32 %v2432, 0.25
      %v2512 = vmul.f32 %v2433, 0.25
      %v2513 = vmul.f32 %v2434, 0.25
      %v2514 = vmul.f32 %v2435, 0.25
      %v2515 = vmul.f32 %v2436, 0.25
      %v2516 = vmul.f32 %v2437, 0.25
      %v2517 = vmul.f32 %v2438, 0.25
      %v2518 = vmul.f32 %v2439, 0.25
      %v2519 = vmul.f32 %v2440, 0.25
      %v2520 = vmul.f32 %v2441, 0.25
      %v2521 = vmul.f32 %v2442, 0.25
      %v2522 = vmul.f32 %v2443, 0.25
      %v2523 = vmul.f32 %v2444, 0.25
      %v2524 = vmul.f32 %v2445, 0.25
      %v2525 = vmul.f32 %v2446, 0.25
      %v2526 = vmul.f32 %v2447, 0.25
      %v2527 = vmul.f32 %v2448, 0.25
      %v2528 = vmul.f32 %v2449, 0.25
      %v2529 = vmul.f32 %v2450, 0.25
      %v2530 = vmul.f32 %v2451, 0.25
      %v2531 = vmul.f32 %v2452, 0.25
      %v2532 = vld [vmem:[%s3] sm:$0x3f]
      %s2533 = scalar_lea.vmem %s3, 8
      %v2534 = vld [vmem:[%s2533] sm:$0x3f]
      %vm2601 = vcmask 1046528
      %v2602 = vrot.slane %v2453, 1
      %v2603 = vrot.slane %v2454, 1
      %v2604 = vsel %vm2601, %v2602, %v2603
      %v2605 = vrot.slane %v2455, 1
      %v2606 = vsel %vm2601, %v2603, %v2605
      %v2607 = vrot.slane %v2456, 1
      %v2608 = vsel %vm2601, %v2605, %v2607
      %v2609 = vrot.slane %v2457, 1
      %v2610 = vsel %vm2601, %v2607, %v2609
      %v2611 = vrot.slane %v2458, 1
      %v2612 = vsel %vm2601, %v2609, %v2611
      %v2613 = vrot.slane %v2459, 1
      %v2614 = vsel %vm2601, %v2611, %v2613
      %v2615 = vrot.slane %v2460, 1
      %v2616 = vsel %vm2601, %v2613, %v2615
      %v2617 = vrot.slane %v2461, 1
      %v2618 = vsel %vm2601, %v2615, %v2617
      %v2619 = vrot.slane %v2462, 1
      %v2620 = vsel %vm2601, %v2617, %v2619
      %v2621 = vrot.slane %v2463, 1
      %v2622 = vsel %vm2601, %v2619, %v2621
      %v2623 = vrot.slane %v2464, 1
      %v2624 = vsel %vm2601, %v2621, %v2623
      %v2625 = vrot.slane %v2465, 1
      %v2626 = vsel %vm2601, %v2623, %v2625
      %v2627 = vrot.slane %v2466, 1
      %v2628 = vsel %vm2601, %v2625, %v2627
      %v2629 = vrot.slane %v2467, 1
      %v2630 = vsel %vm2601, %v2627, %v2629
      %v2631 = vrot.slane %v2468, 1
      %v2632 = vsel %vm2601, %v2629, %v2631
      %v2633 = vrot.slane %v2469, 1
      %v2634 = vsel %vm2601, %v2631, %v2633
      %v2635 = vrot.slane %v2470, 1
      %v2636 = vsel %vm2601, %v2633, %v2635
      %v2637 = vrot.slane %v2471, 1
      %v2638 = vsel %vm2601, %v2635, %v2637
      %v2639 = vrot.slane %v2472, 1
      %v2640 = vsel %vm2601, %v2637, %v2639
      %v2641 = vrot.slane %v2473, 1
      %v2642 = vsel %vm2601, %v2639, %v2641
      %v2643 = vrot.slane %v2474, 1
      %v2644 = vsel %vm2601, %v2641, %v2643
      %v2645 = vrot.slane %v2475, 1
      %v2646 = vsel %vm2601, %v2643, %v2645
      %v2647 = vrot.slane %v2476, 1
      %v2648 = vsel %vm2601, %v2645, %v2647
      %v2649 = vrot.slane %v2477, 1
      %v2650 = vsel %vm2601, %v2647, %v2649
      %v2651 = vrot.slane %v2478, 1
      %v2652 = vsel %vm2601, %v2649, %v2651
      %v2653 = vrot.slane %v2479, 1
      %v2654 = vsel %vm2601, %v2651, %v2653
      %v2655 = vrot.slane %v2480, 1
      %v2656 = vsel %vm2601, %v2653, %v2655
      %v2657 = vrot.slane %v2481, 1
      %v2658 = vsel %vm2601, %v2655, %v2657
      %v2659 = vrot.slane %v2482, 1
      %v2660 = vsel %vm2601, %v2657, %v2659
      %v2661 = vrot.slane %v2483, 1
      %v2662 = vsel %vm2601, %v2659, %v2661
      %v2663 = vrot.slane %v2484, 1
      %v2664 = vsel %vm2601, %v2661, %v2663
      %v2665 = vrot.slane %v2485, 1
      %v2666 = vsel %vm2601, %v2663, %v2665
      %v2667 = vrot.slane %v2486, 1
      %v2668 = vsel %vm2601, %v2665, %v2667
      %v2669 = vrot.slane %v2487, 1
      %v2670 = vsel %vm2601, %v2667, %v2669
      %v2671 = vrot.slane %v2488, 1
      %v2672 = vsel %vm2601, %v2669, %v2671
      %v2673 = vrot.slane %v2489, 1
      %v2674 = vsel %vm2601, %v2671, %v2673
      %v2675 = vrot.slane %v2490, 1
      %v2676 = vsel %vm2601, %v2673, %v2675
      %v2677 = vrot.slane %v2491, 1
      %v2678 = vsel %vm2601, %v2675, %v2677
      %v2679 = vrot.slane %v2492, 1
      %v2680 = vsel %vm2601, %v2677, %v2679
      %v2681 = vrot.slane %v2493, 1
      %v2682 = vsel %vm2601, %v2679, %v2681
      %v2683 = vrot.slane %v2494, 1
      %v2684 = vsel %vm2601, %v2681, %v2683
      %v2685 = vrot.slane %v2495, 1
      %v2686 = vsel %vm2601, %v2683, %v2685
      %v2687 = vrot.slane %v2496, 1
      %v2688 = vsel %vm2601, %v2685, %v2687
      %v2689 = vrot.slane %v2497, 1
      %v2690 = vsel %vm2601, %v2687, %v2689
      %v2691 = vrot.slane %v2498, 1
      %v2692 = vsel %vm2601, %v2689, %v2691
      %v2693 = vrot.slane %v2499, 1
      %v2694 = vsel %vm2601, %v2691, %v2693
      %v2695 = vrot.slane %v2500, 1
      %v2696 = vsel %vm2601, %v2693, %v2695
      %v2697 = vrot.slane %v2501, 1
      %v2698 = vsel %vm2601, %v2695, %v2697
      %v2699 = vrot.slane %v2502, 1
      %v2700 = vsel %vm2601, %v2697, %v2699
      %v2701 = vrot.slane %v2503, 1
      %v2702 = vsel %vm2601, %v2699, %v2701
      %v2703 = vrot.slane %v2504, 1
      %v2704 = vsel %vm2601, %v2701, %v2703
      %v2705 = vrot.slane %v2505, 1
      %v2706 = vsel %vm2601, %v2703, %v2705
      %v2707 = vrot.slane %v2506, 1
      %v2708 = vsel %vm2601, %v2705, %v2707
      %v2709 = vrot.slane %v2507, 1
      %v2710 = vsel %vm2601, %v2707, %v2709
      %v2711 = vrot.slane %v2508, 1
      %v2712 = vsel %vm2601, %v2709, %v2711
      %v2713 = vrot.slane %v2509, 1
      %v2714 = vsel %vm2601, %v2711, %v2713
      %v2715 = vrot.slane %v2510, 1
      %v2716 = vsel %vm2601, %v2713, %v2715
      %v2717 = vrot.slane %v2511, 1
      %v2718 = vsel %vm2601, %v2715, %v2717
      %v2719 = vrot.slane %v2512, 1
      %v2720 = vsel %vm2601, %v2717, %v2719
      %v2721 = vrot.slane %v2513, 1
      %v2722 = vsel %vm2601, %v2719, %v2721
      %v2723 = vrot.slane %v2514, 1
      %v2724 = vsel %vm2601, %v2721, %v2723
      %v2725 = vrot.slane %v2515, 1
      %v2726 = vsel %vm2601, %v2723, %v2725
      %v2727 = vrot.slane %v2516, 1
      %v2728 = vsel %vm2601, %v2725, %v2727
      %v2729 = vrot.slane %v2517, 1
      %v2730 = vsel %vm2601, %v2727, %v2729
      %v2731 = vrot.slane %v2518, 1
      %v2732 = vsel %vm2601, %v2729, %v2731
      %vm2733 = vcmask 48128
      %v2734 = vsel %vm2733, %v2604, 0
      %v2736 = vsel %vm2733, %v2606, 0
      %v2738 = vsel %vm2733, %v2608, 0
      %v2740 = vsel %vm2733, %v2610, 0
      %v2742 = vsel %vm2733, %v2612, 0
      %v2744 = vsel %vm2733, %v2614, 0
      %v2746 = vsel %vm2733, %v2616, 0
      %v2748 = vsel %vm2733, %v2618, 0
      %v2750 = vsel %vm2733, %v2620, 0
      %v2752 = vsel %vm2733, %v2622, 0
      %v2754 = vsel %vm2733, %v2624, 0
      %v2756 = vsel %vm2733, %v2626, 0
      %v2758 = vsel %vm2733, %v2628, 0
      %v2760 = vsel %vm2733, %v2630, 0
      %v2762 = vsel %vm2733, %v2632, 0
      %v2764 = vsel %vm2733, %v2634, 0
      %v2766 = vsel %vm2733, %v2636, 0
      %v2768 = vsel %vm2733, %v2638, 0
      %v2770 = vsel %vm2733, %v2640, 0
      %v2772 = vsel %vm2733, %v2642, 0
      %v2774 = vsel %vm2733, %v2644, 0
      %v2776 = vsel %vm2733, %v2646, 0
      %v2778 = vsel %vm2733, %v2648, 0
      %v2780 = vsel %vm2733, %v2650, 0
      %v2782 = vsel %vm2733, %v2652, 0
      %v2784 = vsel %vm2733, %v2654, 0
      %v2786 = vsel %vm2733, %v2656, 0
      %v2788 = vsel %vm2733, %v2658, 0
      %v2790 = vsel %vm2733, %v2660, 0
      %v2792 = vsel %vm2733, %v2662, 0
      %v2794 = vsel %vm2733, %v2664, 0
      %v2796 = vsel %vm2733, %v2666, 0
      %v2798 = vsel %vm2733, %v2668, 0
      %v2800 = vsel %vm2733, %v2670, 0
      %v2802 = vsel %vm2733, %v2672, 0
      %v2804 = vsel %vm2733, %v2674, 0
      %v2806 = vsel %vm2733, %v2676, 0
      %v2808 = vsel %vm2733, %v2678, 0
      %v2810 = vsel %vm2733, %v2680, 0
      %v2812 = vsel %vm2733, %v2682, 0
      %v2814 = vsel %vm2733, %v2684, 0
      %v2816 = vsel %vm2733, %v2686, 0
      %v2818 = vsel %vm2733, %v2688, 0
      %v2820 = vsel %vm2733, %v2690, 0
      %v2822 = vsel %vm2733, %v2692, 0
      %v2824 = vsel %vm2733, %v2694, 0
      %v2826 = vsel %vm2733, %v2696, 0
      %v2828 = vsel %vm2733, %v2698, 0
      %v2830 = vsel %vm2733, %v2700, 0
      %v2832 = vsel %vm2733, %v2702, 0
      %v2834 = vsel %vm2733, %v2704, 0
      %v2836 = vsel %vm2733, %v2706, 0
      %v2838 = vsel %vm2733, %v2708, 0
      %v2840 = vsel %vm2733, %v2710, 0
      %v2842 = vsel %vm2733, %v2712, 0
      %v2844 = vsel %vm2733, %v2714, 0
      %v2846 = vsel %vm2733, %v2716, 0
      %v2848 = vsel %vm2733, %v2718, 0
      %v2850 = vsel %vm2733, %v2720, 0
      %v2852 = vsel %vm2733, %v2722, 0
      %v2854 = vsel %vm2733, %v2724, 0
      %v2856 = vsel %vm2733, %v2726, 0
      %v2858 = vsel %vm2733, %v2728, 0
      %v2860 = vsel %vm2733, %v2730, 0
      %v2862 = vsel %vm2733, %v2732, 0
      %v2864 = vsel %vm2733, %v2731, 0
      %vm2866 = vcmask 1045504
      %v2868 = vsel %vm2866, %v2534, 0
      %2870 = vmatpush.msra.mxu0 0.0
      %2871 = vmatpush.msra.mxu0 0.0
      %2872 = vmatpush.msra.mxu0 0.0
      %2873 = vmatpush.msra.mxu0 0.0
      %2874 = vmatpush.msra.mxu0 0.0
      %2875 = vmatpush.msra.mxu0 0.0
      %2876 = vmatpush.msra.mxu0 0.0
      %2877 = vmatpush.msra.mxu0 0.0
      %2878 = vmatpush.msra.mxu0 0.0
      %2879 = vmatpush.msra.mxu0 0.0
      %2880 = vmatpush.msra.mxu0 0.0
      %2881 = vmatpush.msra.mxu0 0.0
      %2882 = vmatpush.msra.mxu0 0.0
      %2883 = vmatpush.msra.mxu0 0.0
      %2884 = vmatpush.msra.mxu0 0.0
      %2885 = vmatpush.msra.mxu0 %v2868
      %2886 = vmatmul.f32.gmra.mxu0 %v2734
      %v2887 = vpop.f32.mrf.mxu0
      %v2888 = vadd.f32 0.0, %v2887
      %2889 = vmatmul.f32.gmra.mxu0 %v2736
      %v2890 = vpop.f32.mrf.mxu0
      %v2891 = vadd.f32 0.0, %v2890
      %2892 = vmatmul.f32.gmra.mxu0 %v2738
      %v2893 = vpop.f32.mrf.mxu0
      %v2894 = vadd.f32 0.0, %v2893
      %2895 = vmatmul.f32.gmra.mxu0 %v2740
      %v2896 = vpop.f32.mrf.mxu0
      %v2897 = vadd.f32 0.0, %v2896
      %2898 = vmatmul.f32.gmra.mxu0 %v2742
      %v2899 = vpop.f32.mrf.mxu0
      %v2900 = vadd.f32 0.0, %v2899
      %2901 = vmatmul.f32.gmra.mxu0 %v2744
      %v2902 = vpop.f32.mrf.mxu0
      %v2903 = vadd.f32 0.0, %v2902
      %2904 = vmatmul.f32.gmra.mxu0 %v2746
      %v2905 = vpop.f32.mrf.mxu0
      %v2906 = vadd.f32 0.0, %v2905
      %2907 = vmatmul.f32.gmra.mxu0 %v2748
      %v2908 = vpop.f32.mrf.mxu0
      %v2909 = vadd.f32 0.0, %v2908
      %2910 = vmatmul.f32.gmra.mxu0 %v2750
      %v2911 = vpop.f32.mrf.mxu0
      %v2912 = vadd.f32 0.0, %v2911
      %2913 = vmatmul.f32.gmra.mxu0 %v2752
      %v2914 = vpop.f32.mrf.mxu0
      %v2915 = vadd.f32 0.0, %v2914
      %2916 = vmatmul.f32.gmra.mxu0 %v2754
      %v2917 = vpop.f32.mrf.mxu0
      %v2918 = vadd.f32 0.0, %v2917
      %2919 = vmatmul.f32.gmra.mxu0 %v2756
      %v2920 = vpop.f32.mrf.mxu0
      %v2921 = vadd.f32 0.0, %v2920
      %2922 = vmatmul.f32.gmra.mxu0 %v2758
      %v2923 = vpop.f32.mrf.mxu0
      %v2924 = vadd.f32 0.0, %v2923
      %2925 = vmatmul.f32.gmra.mxu0 %v2760
      %v2926 = vpop.f32.mrf.mxu0
      %v2927 = vadd.f32 0.0, %v2926
      %2928 = vmatmul.f32.gmra.mxu0 %v2762
      %v2929 = vpop.f32.mrf.mxu0
      %v2930 = vadd.f32 0.0, %v2929
      %2931 = vmatmul.f32.gmra.mxu0 %v2764
      %v2932 = vpop.f32.mrf.mxu0
      %v2933 = vadd.f32 0.0, %v2932
      %2934 = vmatmul.f32.gmra.mxu0 %v2766
      %v2935 = vpop.f32.mrf.mxu0
      %v2936 = vadd.f32 0.0, %v2935
      %2937 = vmatmul.f32.gmra.mxu0 %v2768
      %v2938 = vpop.f32.mrf.mxu0
      %v2939 = vadd.f32 0.0, %v2938
      %2940 = vmatmul.f32.gmra.mxu0 %v2770
      %v2941 = vpop.f32.mrf.mxu0
      %v2942 = vadd.f32 0.0, %v2941
      %2943 = vmatmul.f32.gmra.mxu0 %v2772
      %v2944 = vpop.f32.mrf.mxu0
      %v2945 = vadd.f32 0.0, %v2944
      %2946 = vmatmul.f32.gmra.mxu0 %v2774
      %v2947 = vpop.f32.mrf.mxu0
      %v2948 = vadd.f32 0.0, %v2947
      %2949 = vmatmul.f32.gmra.mxu0 %v2776
      %v2950 = vpop.f32.mrf.mxu0
      %v2951 = vadd.f32 0.0, %v2950
      %2952 = vmatmul.f32.gmra.mxu0 %v2778
      %v2953 = vpop.f32.mrf.mxu0
      %v2954 = vadd.f32 0.0, %v2953
      %2955 = vmatmul.f32.gmra.mxu0 %v2780
      %v2956 = vpop.f32.mrf.mxu0
      %v2957 = vadd.f32 0.0, %v2956
      %2958 = vmatmul.f32.gmra.mxu0 %v2782
      %v2959 = vpop.f32.mrf.mxu0
      %v2960 = vadd.f32 0.0, %v2959
      %2961 = vmatmul.f32.gmra.mxu0 %v2784
      %v2962 = vpop.f32.mrf.mxu0
      %v2963 = vadd.f32 0.0, %v2962
      %2964 = vmatmul.f32.gmra.mxu0 %v2786
      %v2965 = vpop.f32.mrf.mxu0
      %v2966 = vadd.f32 0.0, %v2965
      %2967 = vmatmul.f32.gmra.mxu0 %v2788
      %v2968 = vpop.f32.mrf.mxu0
      %v2969 = vadd.f32 0.0, %v2968
      %2970 = vmatmul.f32.gmra.mxu0 %v2790
      %v2971 = vpop.f32.mrf.mxu0
      %v2972 = vadd.f32 0.0, %v2971
      %2973 = vmatmul.f32.gmra.mxu0 %v2792
      %v2974 = vpop.f32.mrf.mxu0
      %v2975 = vadd.f32 0.0, %v2974
      %2976 = vmatmul.f32.gmra.mxu0 %v2794
      %v2977 = vpop.f32.mrf.mxu0
      %v2978 = vadd.f32 0.0, %v2977
      %2979 = vmatmul.f32.gmra.mxu0 %v2796
      %v2980 = vpop.f32.mrf.mxu0
      %v2981 = vadd.f32 0.0, %v2980
      %2982 = vmatmul.f32.gmra.mxu0 %v2798
      %v2983 = vpop.f32.mrf.mxu0
      %v2984 = vadd.f32 0.0, %v2983
      %2985 = vmatmul.f32.gmra.mxu0 %v2800
      %v2986 = vpop.f32.mrf.mxu0
      %v2987 = vadd.f32 0.0, %v2986
      %2988 = vmatmul.f32.gmra.mxu0 %v2802
      %v2989 = vpop.f32.mrf.mxu0
      %v2990 = vadd.f32 0.0, %v2989
      %2991 = vmatmul.f32.gmra.mxu0 %v2804
      %v2992 = vpop.f32.mrf.mxu0
      %v2993 = vadd.f32 0.0, %v2992
      %2994 = vmatmul.f32.gmra.mxu0 %v2806
      %v2995 = vpop.f32.mrf.mxu0
      %v2996 = vadd.f32 0.0, %v2995
      %2997 = vmatmul.f32.gmra.mxu0 %v2808
      %v2998 = vpop.f32.mrf.mxu0
      %v2999 = vadd.f32 0.0, %v2998
      %3000 = vmatmul.f32.gmra.mxu0 %v2810
      %v3001 = vpop.f32.mrf.mxu0
      %v3002 = vadd.f32 0.0, %v3001
      %3003 = vmatmul.f32.gmra.mxu0 %v2812
      %v3004 = vpop.f32.mrf.mxu0
      %v3005 = vadd.f32 0.0, %v3004
      %3006 = vmatmul.f32.gmra.mxu0 %v2814
      %v3007 = vpop.f32.mrf.mxu0
      %v3008 = vadd.f32 0.0, %v3007
      %3009 = vmatmul.f32.gmra.mxu0 %v2816
      %v3010 = vpop.f32.mrf.mxu0
      %v3011 = vadd.f32 0.0, %v3010
      %3012 = vmatmul.f32.gmra.mxu0 %v2818
      %v3013 = vpop.f32.mrf.mxu0
      %v3014 = vadd.f32 0.0, %v3013
      %3015 = vmatmul.f32.gmra.mxu0 %v2820
      %v3016 = vpop.f32.mrf.mxu0
      %v3017 = vadd.f32 0.0, %v3016
      %3018 = vmatmul.f32.gmra.mxu0 %v2822
      %v3019 = vpop.f32.mrf.mxu0
      %v3020 = vadd.f32 0.0, %v3019
      %3021 = vmatmul.f32.gmra.mxu0 %v2824
      %v3022 = vpop.f32.mrf.mxu0
      %v3023 = vadd.f32 0.0, %v3022
      %3024 = vmatmul.f32.gmra.mxu0 %v2826
      %v3025 = vpop.f32.mrf.mxu0
      %v3026 = vadd.f32 0.0, %v3025
      %3027 = vmatmul.f32.gmra.mxu0 %v2828
      %v3028 = vpop.f32.mrf.mxu0
      %v3029 = vadd.f32 0.0, %v3028
      %3030 = vmatmul.f32.gmra.mxu0 %v2830
      %v3031 = vpop.f32.mrf.mxu0
      %v3032 = vadd.f32 0.0, %v3031
      %3033 = vmatmul.f32.gmra.mxu0 %v2832
      %v3034 = vpop.f32.mrf.mxu0
      %v3035 = vadd.f32 0.0, %v3034
      %3036 = vmatmul.f32.gmra.mxu0 %v2834
      %v3037 = vpop.f32.mrf.mxu0
      %v3038 = vadd.f32 0.0, %v3037
      %3039 = vmatmul.f32.gmra.mxu0 %v2836
      %v3040 = vpop.f32.mrf.mxu0
      %v3041 = vadd.f32 0.0, %v3040
      %3042 = vmatmul.f32.gmra.mxu0 %v2838
      %v3043 = vpop.f32.mrf.mxu0
      %v3044 = vadd.f32 0.0, %v3043
      %3045 = vmatmul.f32.gmra.mxu0 %v2840
      %v3046 = vpop.f32.mrf.mxu0
      %v3047 = vadd.f32 0.0, %v3046
      %3048 = vmatmul.f32.gmra.mxu0 %v2842
      %v3049 = vpop.f32.mrf.mxu0
      %v3050 = vadd.f32 0.0, %v3049
      %3051 = vmatmul.f32.gmra.mxu0 %v2844
      %v3052 = vpop.f32.mrf.mxu0
      %v3053 = vadd.f32 0.0, %v3052
      %3054 = vmatmul.f32.gmra.mxu0 %v2846
      %v3055 = vpop.f32.mrf.mxu0
      %v3056 = vadd.f32 0.0, %v3055
      %3057 = vmatmul.f32.gmra.mxu0 %v2848
      %v3058 = vpop.f32.mrf.mxu0
      %v3059 = vadd.f32 0.0, %v3058
      %3060 = vmatmul.f32.gmra.mxu0 %v2850
      %v3061 = vpop.f32.mrf.mxu0
      %v3062 = vadd.f32 0.0, %v3061
      %3063 = vmatmul.f32.gmra.mxu0 %v2852
      %v3064 = vpop.f32.mrf.mxu0
      %v3065 = vadd.f32 0.0, %v3064
      %3066 = vmatmul.f32.gmra.mxu0 %v2854
      %v3067 = vpop.f32.mrf.mxu0
      %v3068 = vadd.f32 0.0, %v3067
      %3069 = vmatmul.f32.gmra.mxu0 %v2856
      %v3070 = vpop.f32.mrf.mxu0
      %v3071 = vadd.f32 0.0, %v3070
      %3072 = vmatmul.f32.gmra.mxu0 %v2858
      %v3073 = vpop.f32.mrf.mxu0
      %v3074 = vadd.f32 0.0, %v3073
      %3075 = vmatmul.f32.gmra.mxu0 %v2860
      %v3076 = vpop.f32.mrf.mxu0
      %v3077 = vadd.f32 0.0, %v3076
      %3078 = vmatmul.f32.gmra.mxu0 %v2862
      %v3079 = vpop.f32.mrf.mxu0
      %v3080 = vadd.f32 0.0, %v3079
      %3081 = vmatmul.f32.gmra.mxu0 %v2864
      %v3082 = vpop.f32.mrf.mxu0
      %v3083 = vadd.f32 0.0, %v3082
      %3084 = vdwg.mxu0
      %v3085 = vsel %vm2733, %v2453, 0
      %v3087 = vsel %vm2733, %v2454, 0
      %v3089 = vsel %vm2733, %v2455, 0
      %v3091 = vsel %vm2733, %v2456, 0
      %v3093 = vsel %vm2733, %v2457, 0
      %v3095 = vsel %vm2733, %v2458, 0
      %v3097 = vsel %vm2733, %v2459, 0
      %v3099 = vsel %vm2733, %v2460, 0
      %v3101 = vsel %vm2733, %v2461, 0
      %v3103 = vsel %vm2733, %v2462, 0
      %v3105 = vsel %vm2733, %v2463, 0
      %v3107 = vsel %vm2733, %v2464, 0
      %v3109 = vsel %vm2733, %v2465, 0
      %v3111 = vsel %vm2733, %v2466, 0
      %v3113 = vsel %vm2733, %v2467, 0
      %v3115 = vsel %vm2733, %v2468, 0
      %v3117 = vsel %vm2733, %v2469, 0
      %v3119 = vsel %vm2733, %v2470, 0
      %v3121 = vsel %vm2733, %v2471, 0
      %v3123 = vsel %vm2733, %v2472, 0
      %v3125 = vsel %vm2733, %v2473, 0
      %v3127 = vsel %vm2733, %v2474, 0
      %v3129 = vsel %vm2733, %v2475, 0
      %v3131 = vsel %vm2733, %v2476, 0
      %v3133 = vsel %vm2733, %v2477, 0
      %v3135 = vsel %vm2733, %v2478, 0
      %v3137 = vsel %vm2733, %v2479, 0
      %v3139 = vsel %vm2733, %v2480, 0
      %v3141 = vsel %vm2733, %v2481, 0
      %v3143 = vsel %vm2733, %v2482, 0
      %v3145 = vsel %vm2733, %v2483, 0
      %v3147 = vsel %vm2733, %v2484, 0
      %v3149 = vsel %vm2733, %v2485, 0
      %v3151 = vsel %vm2733, %v2486, 0
      %v3153 = vsel %vm2733, %v2487, 0
      %v3155 = vsel %vm2733, %v2488, 0
      %v3157 = vsel %vm2733, %v2489, 0
      %v3159 = vsel %vm2733, %v2490, 0
      %v3161 = vsel %vm2733, %v2491, 0
      %v3163 = vsel %vm2733, %v2492, 0
      %v3165 = vsel %vm2733, %v2493, 0
      %v3167 = vsel %vm2733, %v2494, 0
      %v3169 = vsel %vm2733, %v2495, 0
      %v3171 = vsel %vm2733, %v2496, 0
      %v3173 = vsel %vm2733, %v2497, 0
      %v3175 = vsel %vm2733, %v2498, 0
      %v3177 = vsel %vm2733, %v2499, 0
      %v3179 = vsel %vm2733, %v2500, 0
      %v3181 = vsel %vm2733, %v2501, 0
      %v3183 = vsel %vm2733, %v2502, 0
      %v3185 = vsel %vm2733, %v2503, 0
      %v3187 = vsel %vm2733, %v2504, 0
      %v3189 = vsel %vm2733, %v2505, 0
      %v3191 = vsel %vm2733, %v2506, 0
      %v3193 = vsel %vm2733, %v2507, 0
      %v3195 = vsel %vm2733, %v2508, 0
      %v3197 = vsel %vm2733, %v2509, 0
      %v3199 = vsel %vm2733, %v2510, 0
      %v3201 = vsel %vm2733, %v2511, 0
      %v3203 = vsel %vm2733, %v2512, 0
      %v3205 = vsel %vm2733, %v2513, 0
      %v3207 = vsel %vm2733, %v2514, 0
      %v3209 = vsel %vm2733, %v2515, 0
      %v3211 = vsel %vm2733, %v2516, 0
      %v3213 = vsel %vm2733, %v2517, 0
      %v3215 = vsel %vm2733, %v2518, 0
      %v3218 = vsel %vm2866, %v2532, 0
      %3220 = vmatpush.msra.mxu0 0.0
      %3221 = vmatpush.msra.mxu0 0.0
      %3222 = vmatpush.msra.mxu0 0.0
      %3223 = vmatpush.msra.mxu0 0.0
      %3224 = vmatpush.msra.mxu0 0.0
      %3225 = vmatpush.msra.mxu0 0.0
      %3226 = vmatpush.msra.mxu0 0.0
      %3227 = vmatpush.msra.mxu0 0.0
      %3228 = vmatpush.msra.mxu0 0.0
      %3229 = vmatpush.msra.mxu0 0.0
      %3230 = vmatpush.msra.mxu0 0.0
      %3231 = vmatpush.msra.mxu0 0.0
      %3232 = vmatpush.msra.mxu0 0.0
      %3233 = vmatpush.msra.mxu0 0.0
      %3234 = vmatpush.msra.mxu0 0.0
      %3235 = vmatpush.msra.mxu0 %v3218
      %3236 = vmatmul.f32.gmra.mxu0 %v3085
      %v3237 = vpop.f32.mrf.mxu0
      %v3238 = vadd.f32 %v2888, %v3237
      %3239 = vmatmul.f32.gmra.mxu0 %v3087
      %v3240 = vpop.f32.mrf.mxu0
      %v3241 = vadd.f32 %v2891, %v3240
      %3242 = vmatmul.f32.gmra.mxu0 %v3089
      %v3243 = vpop.f32.mrf.mxu0
      %v3244 = vadd.f32 %v2894, %v3243
      %3245 = vmatmul.f32.gmra.mxu0 %v3091
      %v3246 = vpop.f32.mrf.mxu0
      %v3247 = vadd.f32 %v2897, %v3246
      %3248 = vmatmul.f32.gmra.mxu0 %v3093
      %v3249 = vpop.f32.mrf.mxu0
      %v3250 = vadd.f32 %v2900, %v3249
      %3251 = vmatmul.f32.gmra.mxu0 %v3095
      %v3252 = vpop.f32.mrf.mxu0
      %v3253 = vadd.f32 %v2903, %v3252
      %3254 = vmatmul.f32.gmra.mxu0 %v3097
      %v3255 = vpop.f32.mrf.mxu0
      %v3256 = vadd.f32 %v2906, %v3255
      %3257 = vmatmul.f32.gmra.mxu0 %v3099
      %v3258 = vpop.f32.mrf.mxu0
      %v3259 = vadd.f32 %v2909, %v3258
      %3260 = vmatmul.f32.gmra.mxu0 %v3101
      %v3261 = vpop.f32.mrf.mxu0
      %v3262 = vadd.f32 %v2912, %v3261
      %3263 = vmatmul.f32.gmra.mxu0 %v3103
      %v3264 = vpop.f32.mrf.mxu0
      %v3265 = vadd.f32 %v2915, %v3264
      %3266 = vmatmul.f32.gmra.mxu0 %v3105
      %v3267 = vpop.f32.mrf.mxu0
      %v3268 = vadd.f32 %v2918, %v3267
      %3269 = vmatmul.f32.gmra.mxu0 %v3107
      %v3270 = vpop.f32.mrf.mxu0
      %v3271 = vadd.f32 %v2921, %v3270
      %3272 = vmatmul.f32.gmra.mxu0 %v3109
      %v3273 = vpop.f32.mrf.mxu0
      %v3274 = vadd.f32 %v2924, %v3273
      %3275 = vmatmul.f32.gmra.mxu0 %v3111
      %v3276 = vpop.f32.mrf.mxu0
      %v3277 = vadd.f32 %v2927, %v3276
      %3278 = vmatmul.f32.gmra.mxu0 %v3113
      %v3279 = vpop.f32.mrf.mxu0
      %v3280 = vadd.f32 %v2930, %v3279
      %3281 = vmatmul.f32.gmra.mxu0 %v3115
      %v3282 = vpop.f32.mrf.mxu0
      %v3283 = vadd.f32 %v2933, %v3282
      %3284 = vmatmul.f32.gmra.mxu0 %v3117
      %v3285 = vpop.f32.mrf.mxu0
      %v3286 = vadd.f32 %v2936, %v3285
      %3287 = vmatmul.f32.gmra.mxu0 %v3119
      %v3288 = vpop.f32.mrf.mxu0
      %v3289 = vadd.f32 %v2939, %v3288
      %3290 = vmatmul.f32.gmra.mxu0 %v3121
      %v3291 = vpop.f32.mrf.mxu0
      %v3292 = vadd.f32 %v2942, %v3291
      %3293 = vmatmul.f32.gmra.mxu0 %v3123
      %v3294 = vpop.f32.mrf.mxu0
      %v3295 = vadd.f32 %v2945, %v3294
      %3296 = vmatmul.f32.gmra.mxu0 %v3125
      %v3297 = vpop.f32.mrf.mxu0
      %v3298 = vadd.f32 %v2948, %v3297
      %3299 = vmatmul.f32.gmra.mxu0 %v3127
      %v3300 = vpop.f32.mrf.mxu0
      %v3301 = vadd.f32 %v2951, %v3300
      %3302 = vmatmul.f32.gmra.mxu0 %v3129
      %v3303 = vpop.f32.mrf.mxu0
      %v3304 = vadd.f32 %v2954, %v3303
      %3305 = vmatmul.f32.gmra.mxu0 %v3131
      %v3306 = vpop.f32.mrf.mxu0
      %v3307 = vadd.f32 %v2957, %v3306
      %3308 = vmatmul.f32.gmra.mxu0 %v3133
      %v3309 = vpop.f32.mrf.mxu0
      %v3310 = vadd.f32 %v2960, %v3309
      %3311 = vmatmul.f32.gmra.mxu0 %v3135
      %v3312 = vpop.f32.mrf.mxu0
      %v3313 = vadd.f32 %v2963, %v3312
      %3314 = vmatmul.f32.gmra.mxu0 %v3137
      %v3315 = vpop.f32.mrf.mxu0
      %v3316 = vadd.f32 %v2966, %v3315
      %3317 = vmatmul.f32.gmra.mxu0 %v3139
      %v3318 = vpop.f32.mrf.mxu0
      %v3319 = vadd.f32 %v2969, %v3318
      %3320 = vmatmul.f32.gmra.mxu0 %v3141
      %v3321 = vpop.f32.mrf.mxu0
      %v3322 = vadd.f32 %v2972, %v3321
      %3323 = vmatmul.f32.gmra.mxu0 %v3143
      %v3324 = vpop.f32.mrf.mxu0
      %v3325 = vadd.f32 %v2975, %v3324
      %3326 = vmatmul.f32.gmra.mxu0 %v3145
      %v3327 = vpop.f32.mrf.mxu0
      %v3328 = vadd.f32 %v2978, %v3327
      %3329 = vmatmul.f32.gmra.mxu0 %v3147
      %v3330 = vpop.f32.mrf.mxu0
      %v3331 = vadd.f32 %v2981, %v3330
      %3332 = vmatmul.f32.gmra.mxu0 %v3149
      %v3333 = vpop.f32.mrf.mxu0
      %v3334 = vadd.f32 %v2984, %v3333
      %3335 = vmatmul.f32.gmra.mxu0 %v3151
      %v3336 = vpop.f32.mrf.mxu0
      %v3337 = vadd.f32 %v2987, %v3336
      %3338 = vmatmul.f32.gmra.mxu0 %v3153
      %v3339 = vpop.f32.mrf.mxu0
      %v3340 = vadd.f32 %v2990, %v3339
      %3341 = vmatmul.f32.gmra.mxu0 %v3155
      %v3342 = vpop.f32.mrf.mxu0
      %v3343 = vadd.f32 %v2993, %v3342
      %3344 = vmatmul.f32.gmra.mxu0 %v3157
      %v3345 = vpop.f32.mrf.mxu0
      %v3346 = vadd.f32 %v2996, %v3345
      %3347 = vmatmul.f32.gmra.mxu0 %v3159
      %v3348 = vpop.f32.mrf.mxu0
      %v3349 = vadd.f32 %v2999, %v3348
      %3350 = vmatmul.f32.gmra.mxu0 %v3161
      %v3351 = vpop.f32.mrf.mxu0
      %v3352 = vadd.f32 %v3002, %v3351
      %3353 = vmatmul.f32.gmra.mxu0 %v3163
      %v3354 = vpop.f32.mrf.mxu0
      %v3355 = vadd.f32 %v3005, %v3354
      %3356 = vmatmul.f32.gmra.mxu0 %v3165
      %v3357 = vpop.f32.mrf.mxu0
      %v3358 = vadd.f32 %v3008, %v3357
      %3359 = vmatmul.f32.gmra.mxu0 %v3167
      %v3360 = vpop.f32.mrf.mxu0
      %v3361 = vadd.f32 %v3011, %v3360
      %3362 = vmatmul.f32.gmra.mxu0 %v3169
      %v3363 = vpop.f32.mrf.mxu0
      %v3364 = vadd.f32 %v3014, %v3363
      %3365 = vmatmul.f32.gmra.mxu0 %v3171
      %v3366 = vpop.f32.mrf.mxu0
      %v3367 = vadd.f32 %v3017, %v3366
      %3368 = vmatmul.f32.gmra.mxu0 %v3173
      %v3369 = vpop.f32.mrf.mxu0
      %v3370 = vadd.f32 %v3020, %v3369
      %3371 = vmatmul.f32.gmra.mxu0 %v3175
      %v3372 = vpop.f32.mrf.mxu0
      %v3373 = vadd.f32 %v3023, %v3372
      %3374 = vmatmul.f32.gmra.mxu0 %v3177
      %v3375 = vpop.f32.mrf.mxu0
      %v3376 = vadd.f32 %v3026, %v3375
      %3377 = vmatmul.f32.gmra.mxu0 %v3179
      %v3378 = vpop.f32.mrf.mxu0
      %v3379 = vadd.f32 %v3029, %v3378
      %3380 = vmatmul.f32.gmra.mxu0 %v3181
      %v3381 = vpop.f32.mrf.mxu0
      %v3382 = vadd.f32 %v3032, %v3381
      %3383 = vmatmul.f32.gmra.mxu0 %v3183
      %v3384 = vpop.f32.mrf.mxu0
      %v3385 = vadd.f32 %v3035, %v3384
      %3386 = vmatmul.f32.gmra.mxu0 %v3185
      %v3387 = vpop.f32.mrf.mxu0
      %v3388 = vadd.f32 %v3038, %v3387
      %3389 = vmatmul.f32.gmra.mxu0 %v3187
      %v3390 = vpop.f32.mrf.mxu0
      %v3391 = vadd.f32 %v3041, %v3390
      %3392 = vmatmul.f32.gmra.mxu0 %v3189
      %v3393 = vpop.f32.mrf.mxu0
      %v3394 = vadd.f32 %v3044, %v3393
      %3395 = vmatmul.f32.gmra.mxu0 %v3191
      %v3396 = vpop.f32.mrf.mxu0
      %v3397 = vadd.f32 %v3047, %v3396
      %3398 = vmatmul.f32.gmra.mxu0 %v3193
      %v3399 = vpop.f32.mrf.mxu0
      %v3400 = vadd.f32 %v3050, %v3399
      %3401 = vmatmul.f32.gmra.mxu0 %v3195
      %v3402 = vpop.f32.mrf.mxu0
      %v3403 = vadd.f32 %v3053, %v3402
      %3404 = vmatmul.f32.gmra.mxu0 %v3197
      %v3405 = vpop.f32.mrf.mxu0
      %v3406 = vadd.f32 %v3056, %v3405
      %3407 = vmatmul.f32.gmra.mxu0 %v3199
      %v3408 = vpop.f32.mrf.mxu0
      %v3409 = vadd.f32 %v3059, %v3408
      %3410 = vmatmul.f32.gmra.mxu0 %v3201
      %v3411 = vpop.f32.mrf.mxu0
      %v3412 = vadd.f32 %v3062, %v3411
      %3413 = vmatmul.f32.gmra.mxu0 %v3203
      %v3414 = vpop.f32.mrf.mxu0
      %v3415 = vadd.f32 %v3065, %v3414
      %3416 = vmatmul.f32.gmra.mxu0 %v3205
      %v3417 = vpop.f32.mrf.mxu0
      %v3418 = vadd.f32 %v3068, %v3417
      %3419 = vmatmul.f32.gmra.mxu0 %v3207
      %v3420 = vpop.f32.mrf.mxu0
      %v3421 = vadd.f32 %v3071, %v3420
      %3422 = vmatmul.f32.gmra.mxu0 %v3209
      %v3423 = vpop.f32.mrf.mxu0
      %v3424 = vadd.f32 %v3074, %v3423
      %3425 = vmatmul.f32.gmra.mxu0 %v3211
      %v3426 = vpop.f32.mrf.mxu0
      %v3427 = vadd.f32 %v3077, %v3426
      %3428 = vmatmul.f32.gmra.mxu0 %v3213
      %v3429 = vpop.f32.mrf.mxu0
      %v3430 = vadd.f32 %v3080, %v3429
      %3431 = vmatmul.f32.gmra.mxu0 %v3215
      %v3432 = vpop.f32.mrf.mxu0
      %v3433 = vadd.f32 %v3083, %v3432
      %3434 = vdwg.mxu0
      %s3435 = scalar_lea.vmem %s3, 16
      %v3436 = vld [vmem:[%s3435] sm:$0x3f]
      %v3437 = vrot.slane %v2453, 2
      %v3438 = vrot.slane %v2454, 2
      %v3439 = vsel %vm2866, %v3437, %v3438
      %v3440 = vrot.slane %v2455, 2
      %v3441 = vsel %vm2866, %v3438, %v3440
      %v3442 = vrot.slane %v2456, 2
      %v3443 = vsel %vm2866, %v3440, %v3442
      %v3444 = vrot.slane %v2457, 2
      %v3445 = vsel %vm2866, %v3442, %v3444
      %v3446 = vrot.slane %v2458, 2
      %v3447 = vsel %vm2866, %v3444, %v3446
      %v3448 = vrot.slane %v2459, 2
      %v3449 = vsel %vm2866, %v3446, %v3448
      %v3450 = vrot.slane %v2460, 2
      %v3451 = vsel %vm2866, %v3448, %v3450
      %v3452 = vrot.slane %v2461, 2
      %v3453 = vsel %vm2866, %v3450, %v3452
      %v3454 = vrot.slane %v2462, 2
      %v3455 = vsel %vm2866, %v3452, %v3454
      %v3456 = vrot.slane %v2463, 2
      %v3457 = vsel %vm2866, %v3454, %v3456
      %v3458 = vrot.slane %v2464, 2
      %v3459 = vsel %vm2866, %v3456, %v3458
      %v3460 = vrot.slane %v2465, 2
      %v3461 = vsel %vm2866, %v3458, %v3460
      %v3462 = vrot.slane %v2466, 2
      %v3463 = vsel %vm2866, %v3460, %v3462
      %v3464 = vrot.slane %v2467, 2
      %v3465 = vsel %vm2866, %v3462, %v3464
      %v3466 = vrot.slane %v2468, 2
      %v3467 = vsel %vm2866, %v3464, %v3466
      %v3468 = vrot.slane %v2469, 2
      %v3469 = vsel %vm2866, %v3466, %v3468
      %v3470 = vrot.slane %v2470, 2
      %v3471 = vsel %vm2866, %v3468, %v3470
      %v3472 = vrot.slane %v2471, 2
      %v3473 = vsel %vm2866, %v3470, %v3472
      %v3474 = vrot.slane %v2472, 2
      %v3475 = vsel %vm2866, %v3472, %v3474
      %v3476 = vrot.slane %v2473, 2
      %v3477 = vsel %vm2866, %v3474, %v3476
      %v3478 = vrot.slane %v2474, 2
      %v3479 = vsel %vm2866, %v3476, %v3478
      %v3480 = vrot.slane %v2475, 2
      %v3481 = vsel %vm2866, %v3478, %v3480
      %v3482 = vrot.slane %v2476, 2
      %v3483 = vsel %vm2866, %v3480, %v3482
      %v3484 = vrot.slane %v2477, 2
      %v3485 = vsel %vm2866, %v3482, %v3484
      %v3486 = vrot.slane %v2478, 2
      %v3487 = vsel %vm2866, %v3484, %v3486
      %v3488 = vrot.slane %v2479, 2
      %v3489 = vsel %vm2866, %v3486, %v3488
      %v3490 = vrot.slane %v2480, 2
      %v3491 = vsel %vm2866, %v3488, %v3490
      %v3492 = vrot.slane %v2481, 2
      %v3493 = vsel %vm2866, %v3490, %v3492
      %v3494 = vrot.slane %v2482, 2
      %v3495 = vsel %vm2866, %v3492, %v3494
      %v3496 = vrot.slane %v2483, 2
      %v3497 = vsel %vm2866, %v3494, %v3496
      %v3498 = vrot.slane %v2484, 2
      %v3499 = vsel %vm2866, %v3496, %v3498
      %v3500 = vrot.slane %v2485, 2
      %v3501 = vsel %vm2866, %v3498, %v3500
      %v3502 = vrot.slane %v2486, 2
      %v3503 = vsel %vm2866, %v3500, %v3502
      %v3504 = vrot.slane %v2487, 2
      %v3505 = vsel %vm2866, %v3502, %v3504
      %v3506 = vrot.slane %v2488, 2
      %v3507 = vsel %vm2866, %v3504, %v3506
      %v3508 = vrot.slane %v2489, 2
      %v3509 = vsel %vm2866, %v3506, %v3508
      %v3510 = vrot.slane %v2490, 2
      %v3511 = vsel %vm2866, %v3508, %v3510
      %v3512 = vrot.slane %v2491, 2
      %v3513 = vsel %vm2866, %v3510, %v3512
      %v3514 = vrot.slane %v2492, 2
      %v3515 = vsel %vm2866, %v3512, %v3514
      %v3516 = vrot.slane %v2493, 2
      %v3517 = vsel %vm2866, %v3514, %v3516
      %v3518 = vrot.slane %v2494, 2
      %v3519 = vsel %vm2866, %v3516, %v3518
      %v3520 = vrot.slane %v2495, 2
      %v3521 = vsel %vm2866, %v3518, %v3520
      %v3522 = vrot.slane %v2496, 2
      %v3523 = vsel %vm2866, %v3520, %v3522
      %v3524 = vrot.slane %v2497, 2
      %v3525 = vsel %vm2866, %v3522, %v3524
      %v3526 = vrot.slane %v2498, 2
      %v3527 = vsel %vm2866, %v3524, %v3526
      %v3528 = vrot.slane %v2499, 2
      %v3529 = vsel %vm2866, %v3526, %v3528
      %v3530 = vrot.slane %v2500, 2
      %v3531 = vsel %vm2866, %v3528, %v3530
      %v3532 = vrot.slane %v2501, 2
      %v3533 = vsel %vm2866, %v3530, %v3532
      %v3534 = vrot.slane %v2502, 2
      %v3535 = vsel %vm2866, %v3532, %v3534
      %v3536 = vrot.slane %v2503, 2
      %v3537 = vsel %vm2866, %v3534, %v3536
      %v3538 = vrot.slane %v2504, 2
      %v3539 = vsel %vm2866, %v3536, %v3538
      %v3540 = vrot.slane %v2505, 2
      %v3541 = vsel %vm2866, %v3538, %v3540
      %v3542 = vrot.slane %v2506, 2
      %v3543 = vsel %vm2866, %v3540, %v3542
      %v3544 = vrot.slane %v2507, 2
      %v3545 = vsel %vm2866, %v3542, %v3544
      %v3546 = vrot.slane %v2508, 2
      %v3547 = vsel %vm2866, %v3544, %v3546
      %v3548 = vrot.slane %v2509, 2
      %v3549 = vsel %vm2866, %v3546, %v3548
      %v3550 = vrot.slane %v2510, 2
      %v3551 = vsel %vm2866, %v3548, %v3550
      %v3552 = vrot.slane %v2511, 2
      %v3553 = vsel %vm2866, %v3550, %v3552
      %v3554 = vrot.slane %v2512, 2
      %v3555 = vsel %vm2866, %v3552, %v3554
      %v3556 = vrot.slane %v2513, 2
      %v3557 = vsel %vm2866, %v3554, %v3556
      %v3558 = vrot.slane %v2514, 2
      %v3559 = vsel %vm2866, %v3556, %v3558
      %v3560 = vrot.slane %v2515, 2
      %v3561 = vsel %vm2866, %v3558, %v3560
      %v3562 = vrot.slane %v2516, 2
      %v3563 = vsel %vm2866, %v3560, %v3562
      %v3564 = vrot.slane %v2517, 2
      %v3565 = vsel %vm2866, %v3562, %v3564
      %v3566 = vrot.slane %v2518, 2
      %v3567 = vsel %vm2866, %v3564, %v3566
      %v3568 = vsel %vm2733, %v3439, 0
      %v3570 = vsel %vm2733, %v3441, 0
      %v3572 = vsel %vm2733, %v3443, 0
      %v3574 = vsel %vm2733, %v3445, 0
      %v3576 = vsel %vm2733, %v3447, 0
      %v3578 = vsel %vm2733, %v3449, 0
      %v3580 = vsel %vm2733, %v3451, 0
      %v3582 = vsel %vm2733, %v3453, 0
      %v3584 = vsel %vm2733, %v3455, 0
      %v3586 = vsel %vm2733, %v3457, 0
      %v3588 = vsel %vm2733, %v3459, 0
      %v3590 = vsel %vm2733, %v3461, 0
      %v3592 = vsel %vm2733, %v3463, 0
      %v3594 = vsel %vm2733, %v3465, 0
      %v3596 = vsel %vm2733, %v3467, 0
      %v3598 = vsel %vm2733, %v3469, 0
      %v3600 = vsel %vm2733, %v3471, 0
      %v3602 = vsel %vm2733, %v3473, 0
      %v3604 = vsel %vm2733, %v3475, 0
      %v3606 = vsel %vm2733, %v3477, 0
      %v3608 = vsel %vm2733, %v3479, 0
      %v3610 = vsel %vm2733, %v3481, 0
      %v3612 = vsel %vm2733, %v3483, 0
      %v3614 = vsel %vm2733, %v3485, 0
      %v3616 = vsel %vm2733, %v3487, 0
      %v3618 = vsel %vm2733, %v3489, 0
      %v3620 = vsel %vm2733, %v3491, 0
      %v3622 = vsel %vm2733, %v3493, 0
      %v3624 = vsel %vm2733, %v3495, 0
      %v3626 = vsel %vm2733, %v3497, 0
      %v3628 = vsel %vm2733, %v3499, 0
      %v3630 = vsel %vm2733, %v3501, 0
      %v3632 = vsel %vm2733, %v3503, 0
      %v3634 = vsel %vm2733, %v3505, 0
      %v3636 = vsel %vm2733, %v3507, 0
      %v3638 = vsel %vm2733, %v3509, 0
      %v3640 = vsel %vm2733, %v3511, 0
      %v3642 = vsel %vm2733, %v3513, 0
      %v3644 = vsel %vm2733, %v3515, 0
      %v3646 = vsel %vm2733, %v3517, 0
      %v3648 = vsel %vm2733, %v3519, 0
      %v3650 = vsel %vm2733, %v3521, 0
      %v3652 = vsel %vm2733, %v3523, 0
      %v3654 = vsel %vm2733, %v3525, 0
      %v3656 = vsel %vm2733, %v3527, 0
      %v3658 = vsel %vm2733, %v3529, 0
      %v3660 = vsel %vm2733, %v3531, 0
      %v3662 = vsel %vm2733, %v3533, 0
      %v3664 = vsel %vm2733, %v3535, 0
      %v3666 = vsel %vm2733, %v3537, 0
      %v3668 = vsel %vm2733, %v3539, 0
      %v3670 = vsel %vm2733, %v3541, 0
      %v3672 = vsel %vm2733, %v3543, 0
      %v3674 = vsel %vm2733, %v3545, 0
      %v3676 = vsel %vm2733, %v3547, 0
      %v3678 = vsel %vm2733, %v3549, 0
      %v3680 = vsel %vm2733, %v3551, 0
      %v3682 = vsel %vm2733, %v3553, 0
      %v3684 = vsel %vm2733, %v3555, 0
      %v3686 = vsel %vm2733, %v3557, 0
      %v3688 = vsel %vm2733, %v3559, 0
      %v3690 = vsel %vm2733, %v3561, 0
      %v3692 = vsel %vm2733, %v3563, 0
      %v3694 = vsel %vm2733, %v3565, 0
      %v3696 = vsel %vm2733, %v3567, 0
      %v3698 = vsel %vm2733, %v3566, 0
      %v3701 = vsel %vm2866, %v3436, 0
      %3703 = vmatpush.msra.mxu0 0.0
      %3704 = vmatpush.msra.mxu0 0.0
      %3705 = vmatpush.msra.mxu0 0.0
      %3706 = vmatpush.msra.mxu0 0.0
      %3707 = vmatpush.msra.mxu0 0.0
      %3708 = vmatpush.msra.mxu0 0.0
      %3709 = vmatpush.msra.mxu0 0.0
      %3710 = vmatpush.msra.mxu0 0.0
      %3711 = vmatpush.msra.mxu0 0.0
      %3712 = vmatpush.msra.mxu0 0.0
      %3713 = vmatpush.msra.mxu0 0.0
      %3714 = vmatpush.msra.mxu0 0.0
      %3715 = vmatpush.msra.mxu0 0.0
      %3716 = vmatpush.msra.mxu0 0.0
      %3717 = vmatpush.msra.mxu0 0.0
      %3718 = vmatpush.msra.mxu0 %v3701
      %3719 = vmatmul.f32.gmra.mxu0 %v3568
      %v3720 = vpop.f32.mrf.mxu0
      %v3721 = vadd.f32 0.0, %v3720
      %3722 = vmatmul.f32.gmra.mxu0 %v3570
      %v3723 = vpop.f32.mrf.mxu0
      %v3724 = vadd.f32 0.0, %v3723
      %3725 = vmatmul.f32.gmra.mxu0 %v3572
      %v3726 = vpop.f32.mrf.mxu0
      %v3727 = vadd.f32 0.0, %v3726
      %3728 = vmatmul.f32.gmra.mxu0 %v3574
      %v3729 = vpop.f32.mrf.mxu0
      %v3730 = vadd.f32 0.0, %v3729
      %3731 = vmatmul.f32.gmra.mxu0 %v3576
      %v3732 = vpop.f32.mrf.mxu0
      %v3733 = vadd.f32 0.0, %v3732
      %3734 = vmatmul.f32.gmra.mxu0 %v3578
      %v3735 = vpop.f32.mrf.mxu0
      %v3736 = vadd.f32 0.0, %v3735
      %3737 = vmatmul.f32.gmra.mxu0 %v3580
      %v3738 = vpop.f32.mrf.mxu0
      %v3739 = vadd.f32 0.0, %v3738
      %3740 = vmatmul.f32.gmra.mxu0 %v3582
      %v3741 = vpop.f32.mrf.mxu0
      %v3742 = vadd.f32 0.0, %v3741
      %3743 = vmatmul.f32.gmra.mxu0 %v3584
      %v3744 = vpop.f32.mrf.mxu0
      %v3745 = vadd.f32 0.0, %v3744
      %3746 = vmatmul.f32.gmra.mxu0 %v3586
      %v3747 = vpop.f32.mrf.mxu0
      %v3748 = vadd.f32 0.0, %v3747
      %3749 = vmatmul.f32.gmra.mxu0 %v3588
      %v3750 = vpop.f32.mrf.mxu0
      %v3751 = vadd.f32 0.0, %v3750
      %3752 = vmatmul.f32.gmra.mxu0 %v3590
      %v3753 = vpop.f32.mrf.mxu0
      %v3754 = vadd.f32 0.0, %v3753
      %3755 = vmatmul.f32.gmra.mxu0 %v3592
      %v3756 = vpop.f32.mrf.mxu0
      %v3757 = vadd.f32 0.0, %v3756
      %3758 = vmatmul.f32.gmra.mxu0 %v3594
      %v3759 = vpop.f32.mrf.mxu0
      %v3760 = vadd.f32 0.0, %v3759
      %3761 = vmatmul.f32.gmra.mxu0 %v3596
      %v3762 = vpop.f32.mrf.mxu0
      %v3763 = vadd.f32 0.0, %v3762
      %3764 = vmatmul.f32.gmra.mxu0 %v3598
      %v3765 = vpop.f32.mrf.mxu0
      %v3766 = vadd.f32 0.0, %v3765
      %3767 = vmatmul.f32.gmra.mxu0 %v3600
      %v3768 = vpop.f32.mrf.mxu0
      %v3769 = vadd.f32 0.0, %v3768
      %3770 = vmatmul.f32.gmra.mxu0 %v3602
      %v3771 = vpop.f32.mrf.mxu0
      %v3772 = vadd.f32 0.0, %v3771
      %3773 = vmatmul.f32.gmra.mxu0 %v3604
      %v3774 = vpop.f32.mrf.mxu0
      %v3775 = vadd.f32 0.0, %v3774
      %3776 = vmatmul.f32.gmra.mxu0 %v3606
      %v3777 = vpop.f32.mrf.mxu0
      %v3778 = vadd.f32 0.0, %v3777
      %3779 = vmatmul.f32.gmra.mxu0 %v3608
      %v3780 = vpop.f32.mrf.mxu0
      %v3781 = vadd.f32 0.0, %v3780
      %3782 = vmatmul.f32.gmra.mxu0 %v3610
      %v3783 = vpop.f32.mrf.mxu0
      %v3784 = vadd.f32 0.0, %v3783
      %3785 = vmatmul.f32.gmra.mxu0 %v3612
      %v3786 = vpop.f32.mrf.mxu0
      %v3787 = vadd.f32 0.0, %v3786
      %3788 = vmatmul.f32.gmra.mxu0 %v3614
      %v3789 = vpop.f32.mrf.mxu0
      %v3790 = vadd.f32 0.0, %v3789
      %3791 = vmatmul.f32.gmra.mxu0 %v3616
      %v3792 = vpop.f32.mrf.mxu0
      %v3793 = vadd.f32 0.0, %v3792
      %3794 = vmatmul.f32.gmra.mxu0 %v3618
      %v3795 = vpop.f32.mrf.mxu0
      %v3796 = vadd.f32 0.0, %v3795
      %3797 = vmatmul.f32.gmra.mxu0 %v3620
      %v3798 = vpop.f32.mrf.mxu0
      %v3799 = vadd.f32 0.0, %v3798
      %3800 = vmatmul.f32.gmra.mxu0 %v3622
      %v3801 = vpop.f32.mrf.mxu0
      %v3802 = vadd.f32 0.0, %v3801
      %3803 = vmatmul.f32.gmra.mxu0 %v3624
      %v3804 = vpop.f32.mrf.mxu0
      %v3805 = vadd.f32 0.0, %v3804
      %3806 = vmatmul.f32.gmra.mxu0 %v3626
      %v3807 = vpop.f32.mrf.mxu0
      %v3808 = vadd.f32 0.0, %v3807
      %3809 = vmatmul.f32.gmra.mxu0 %v3628
      %v3810 = vpop.f32.mrf.mxu0
      %v3811 = vadd.f32 0.0, %v3810
      %3812 = vmatmul.f32.gmra.mxu0 %v3630
      %v3813 = vpop.f32.mrf.mxu0
      %v3814 = vadd.f32 0.0, %v3813
      %3815 = vmatmul.f32.gmra.mxu0 %v3632
      %v3816 = vpop.f32.mrf.mxu0
      %v3817 = vadd.f32 0.0, %v3816
      %3818 = vmatmul.f32.gmra.mxu0 %v3634
      %v3819 = vpop.f32.mrf.mxu0
      %v3820 = vadd.f32 0.0, %v3819
      %3821 = vmatmul.f32.gmra.mxu0 %v3636
      %v3822 = vpop.f32.mrf.mxu0
      %v3823 = vadd.f32 0.0, %v3822
      %3824 = vmatmul.f32.gmra.mxu0 %v3638
      %v3825 = vpop.f32.mrf.mxu0
      %v3826 = vadd.f32 0.0, %v3825
      %3827 = vmatmul.f32.gmra.mxu0 %v3640
      %v3828 = vpop.f32.mrf.mxu0
      %v3829 = vadd.f32 0.0, %v3828
      %3830 = vmatmul.f32.gmra.mxu0 %v3642
      %v3831 = vpop.f32.mrf.mxu0
      %v3832 = vadd.f32 0.0, %v3831
      %3833 = vmatmul.f32.gmra.mxu0 %v3644
      %v3834 = vpop.f32.mrf.mxu0
      %v3835 = vadd.f32 0.0, %v3834
      %3836 = vmatmul.f32.gmra.mxu0 %v3646
      %v3837 = vpop.f32.mrf.mxu0
      %v3838 = vadd.f32 0.0, %v3837
      %3839 = vmatmul.f32.gmra.mxu0 %v3648
      %v3840 = vpop.f32.mrf.mxu0
      %v3841 = vadd.f32 0.0, %v3840
      %3842 = vmatmul.f32.gmra.mxu0 %v3650
      %v3843 = vpop.f32.mrf.mxu0
      %v3844 = vadd.f32 0.0, %v3843
      %3845 = vmatmul.f32.gmra.mxu0 %v3652
      %v3846 = vpop.f32.mrf.mxu0
      %v3847 = vadd.f32 0.0, %v3846
      %3848 = vmatmul.f32.gmra.mxu0 %v3654
      %v3849 = vpop.f32.mrf.mxu0
      %v3850 = vadd.f32 0.0, %v3849
      %3851 = vmatmul.f32.gmra.mxu0 %v3656
      %v3852 = vpop.f32.mrf.mxu0
      %v3853 = vadd.f32 0.0, %v3852
      %3854 = vmatmul.f32.gmra.mxu0 %v3658
      %v3855 = vpop.f32.mrf.mxu0
      %v3856 = vadd.f32 0.0, %v3855
      %3857 = vmatmul.f32.gmra.mxu0 %v3660
      %v3858 = vpop.f32.mrf.mxu0
      %v3859 = vadd.f32 0.0, %v3858
      %3860 = vmatmul.f32.gmra.mxu0 %v3662
      %v3861 = vpop.f32.mrf.mxu0
      %v3862 = vadd.f32 0.0, %v3861
      %3863 = vmatmul.f32.gmra.mxu0 %v3664
      %v3864 = vpop.f32.mrf.mxu0
      %v3865 = vadd.f32 0.0, %v3864
      %3866 = vmatmul.f32.gmra.mxu0 %v3666
      %v3867 = vpop.f32.mrf.mxu0
      %v3868 = vadd.f32 0.0, %v3867
      %3869 = vmatmul.f32.gmra.mxu0 %v3668
      %v3870 = vpop.f32.mrf.mxu0
      %v3871 = vadd.f32 0.0, %v3870
      %3872 = vmatmul.f32.gmra.mxu0 %v3670
      %v3873 = vpop.f32.mrf.mxu0
      %v3874 = vadd.f32 0.0, %v3873
      %3875 = vmatmul.f32.gmra.mxu0 %v3672
      %v3876 = vpop.f32.mrf.mxu0
      %v3877 = vadd.f32 0.0, %v3876
      %3878 = vmatmul.f32.gmra.mxu0 %v3674
      %v3879 = vpop.f32.mrf.mxu0
      %v3880 = vadd.f32 0.0, %v3879
      %3881 = vmatmul.f32.gmra.mxu0 %v3676
      %v3882 = vpop.f32.mrf.mxu0
      %v3883 = vadd.f32 0.0, %v3882
      %3884 = vmatmul.f32.gmra.mxu0 %v3678
      %v3885 = vpop.f32.mrf.mxu0
      %v3886 = vadd.f32 0.0, %v3885
      %3887 = vmatmul.f32.gmra.mxu0 %v3680
      %v3888 = vpop.f32.mrf.mxu0
      %v3889 = vadd.f32 0.0, %v3888
      %3890 = vmatmul.f32.gmra.mxu0 %v3682
      %v3891 = vpop.f32.mrf.mxu0
      %v3892 = vadd.f32 0.0, %v3891
      %3893 = vmatmul.f32.gmra.mxu0 %v3684
      %v3894 = vpop.f32.mrf.mxu0
      %v3895 = vadd.f32 0.0, %v3894
      %3896 = vmatmul.f32.gmra.mxu0 %v3686
      %v3897 = vpop.f32.mrf.mxu0
      %v3898 = vadd.f32 0.0, %v3897
      %3899 = vmatmul.f32.gmra.mxu0 %v3688
      %v3900 = vpop.f32.mrf.mxu0
      %v3901 = vadd.f32 0.0, %v3900
      %3902 = vmatmul.f32.gmra.mxu0 %v3690
      %v3903 = vpop.f32.mrf.mxu0
      %v3904 = vadd.f32 0.0, %v3903
      %3905 = vmatmul.f32.gmra.mxu0 %v3692
      %v3906 = vpop.f32.mrf.mxu0
      %v3907 = vadd.f32 0.0, %v3906
      %3908 = vmatmul.f32.gmra.mxu0 %v3694
      %v3909 = vpop.f32.mrf.mxu0
      %v3910 = vadd.f32 0.0, %v3909
      %3911 = vmatmul.f32.gmra.mxu0 %v3696
      %v3912 = vpop.f32.mrf.mxu0
      %v3913 = vadd.f32 0.0, %v3912
      %3914 = vmatmul.f32.gmra.mxu0 %v3698
      %v3915 = vpop.f32.mrf.mxu0
      %v3916 = vadd.f32 0.0, %v3915
      %3917 = vdwg.mxu0
      %v3918 = vadd.f32 %v3238, %v3721
      %v3919 = vadd.f32 %v3241, %v3724
      %v3920 = vadd.f32 %v3244, %v3727
      %v3921 = vadd.f32 %v3247, %v3730
      %v3922 = vadd.f32 %v3250, %v3733
      %v3923 = vadd.f32 %v3253, %v3736
      %v3924 = vadd.f32 %v3256, %v3739
      %v3925 = vadd.f32 %v3259, %v3742
      %v3926 = vadd.f32 %v3262, %v3745
      %v3927 = vadd.f32 %v3265, %v3748
      %v3928 = vadd.f32 %v3268, %v3751
      %v3929 = vadd.f32 %v3271, %v3754
      %v3930 = vadd.f32 %v3274, %v3757
      %v3931 = vadd.f32 %v3277, %v3760
      %v3932 = vadd.f32 %v3280, %v3763
      %v3933 = vadd.f32 %v3283, %v3766
      %v3934 = vadd.f32 %v3286, %v3769
      %v3935 = vadd.f32 %v3289, %v3772
      %v3936 = vadd.f32 %v3292, %v3775
      %v3937 = vadd.f32 %v3295, %v3778
      %v3938 = vadd.f32 %v3298, %v3781
      %v3939 = vadd.f32 %v3301, %v3784
      %v3940 = vadd.f32 %v3304, %v3787
      %v3941 = vadd.f32 %v3307, %v3790
      %v3942 = vadd.f32 %v3310, %v3793
      %v3943 = vadd.f32 %v3313, %v3796
      %v3944 = vadd.f32 %v3316, %v3799
      %v3945 = vadd.f32 %v3319, %v3802
      %v3946 = vadd.f32 %v3322, %v3805
      %v3947 = vadd.f32 %v3325, %v3808
      %v3948 = vadd.f32 %v3328, %v3811
      %v3949 = vadd.f32 %v3331, %v3814
      %v3950 = vadd.f32 %v3334, %v3817
      %v3951 = vadd.f32 %v3337, %v3820
      %v3952 = vadd.f32 %v3340, %v3823
      %v3953 = vadd.f32 %v3343, %v3826
      %v3954 = vadd.f32 %v3346, %v3829
      %v3955 = vadd.f32 %v3349, %v3832
      %v3956 = vadd.f32 %v3352, %v3835
      %v3957 = vadd.f32 %v3355, %v3838
      %v3958 = vadd.f32 %v3358, %v3841
      %v3959 = vadd.f32 %v3361, %v3844
      %v3960 = vadd.f32 %v3364, %v3847
      %v3961 = vadd.f32 %v3367, %v3850
      %v3962 = vadd.f32 %v3370, %v3853
      %v3963 = vadd.f32 %v3373, %v3856
      %v3964 = vadd.f32 %v3376, %v3859
      %v3965 = vadd.f32 %v3379, %v3862
      %v3966 = vadd.f32 %v3382, %v3865
      %v3967 = vadd.f32 %v3385, %v3868
      %v3968 = vadd.f32 %v3388, %v3871
      %v3969 = vadd.f32 %v3391, %v3874
      %v3970 = vadd.f32 %v3394, %v3877
      %v3971 = vadd.f32 %v3397, %v3880
      %v3972 = vadd.f32 %v3400, %v3883
      %v3973 = vadd.f32 %v3403, %v3886
      %v3974 = vadd.f32 %v3406, %v3889
      %v3975 = vadd.f32 %v3409, %v3892
      %v3976 = vadd.f32 %v3412, %v3895
      %v3977 = vadd.f32 %v3415, %v3898
      %v3978 = vadd.f32 %v3418, %v3901
      %v3979 = vadd.f32 %v3421, %v3904
      %v3980 = vadd.f32 %v3424, %v3907
      %v3981 = vadd.f32 %v3427, %v3910
      %v3982 = vadd.f32 %v3430, %v3913
      %v3983 = vadd.f32 %v3433, %v3916
      %s3984 = scalar_lea.vmem %s3, 24
      %v3985 = vld [vmem:[%s3984] sm:$0x3f]
      %vm3986 = vcmask 1044480
      %v3987 = vrot.slane %v2453, 3
      %v3988 = vrot.slane %v2454, 3
      %v3989 = vsel %vm3986, %v3987, %v3988
      %v3990 = vrot.slane %v2455, 3
      %v3991 = vsel %vm3986, %v3988, %v3990
      %v3992 = vrot.slane %v2456, 3
      %v3993 = vsel %vm3986, %v3990, %v3992
      %v3994 = vrot.slane %v2457, 3
      %v3995 = vsel %vm3986, %v3992, %v3994
      %v3996 = vrot.slane %v2458, 3
      %v3997 = vsel %vm3986, %v3994, %v3996
      %v3998 = vrot.slane %v2459, 3
      %v3999 = vsel %vm3986, %v3996, %v3998
      %v4000 = vrot.slane %v2460, 3
      %v4001 = vsel %vm3986, %v3998, %v4000
      %v4002 = vrot.slane %v2461, 3
      %v4003 = vsel %vm3986, %v4000, %v4002
      %v4004 = vrot.slane %v2462, 3
      %v4005 = vsel %vm3986, %v4002, %v4004
      %v4006 = vrot.slane %v2463, 3
      %v4007 = vsel %vm3986, %v4004, %v4006
      %v4008 = vrot.slane %v2464, 3
      %v4009 = vsel %vm3986, %v4006, %v4008
      %v4010 = vrot.slane %v2465, 3
      %v4011 = vsel %vm3986, %v4008, %v4010
      %v4012 = vrot.slane %v2466, 3
      %v4013 = vsel %vm3986, %v4010, %v4012
      %v4014 = vrot.slane %v2467, 3
      %v4015 = vsel %vm3986, %v4012, %v4014
      %v4016 = vrot.slane %v2468, 3
      %v4017 = vsel %vm3986, %v4014, %v4016
      %v4018 = vrot.slane %v2469, 3
      %v4019 = vsel %vm3986, %v4016, %v4018
      %v4020 = vrot.slane %v2470, 3
      %v4021 = vsel %vm3986, %v4018, %v4020
      %v4022 = vrot.slane %v2471, 3
      %v4023 = vsel %vm3986, %v4020, %v4022
      %v4024 = vrot.slane %v2472, 3
      %v4025 = vsel %vm3986, %v4022, %v4024
      %v4026 = vrot.slane %v2473, 3
      %v4027 = vsel %vm3986, %v4024, %v4026
      %v4028 = vrot.slane %v2474, 3
      %v4029 = vsel %vm3986, %v4026, %v4028
      %v4030 = vrot.slane %v2475, 3
      %v4031 = vsel %vm3986, %v4028, %v4030
      %v4032 = vrot.slane %v2476, 3
      %v4033 = vsel %vm3986, %v4030, %v4032
      %v4034 = vrot.slane %v2477, 3
      %v4035 = vsel %vm3986, %v4032, %v4034
      %v4036 = vrot.slane %v2478, 3
      %v4037 = vsel %vm3986, %v4034, %v4036
      %v4038 = vrot.slane %v2479, 3
      %v4039 = vsel %vm3986, %v4036, %v4038
      %v4040 = vrot.slane %v2480, 3
      %v4041 = vsel %vm3986, %v4038, %v4040
      %v4042 = vrot.slane %v2481, 3
      %v4043 = vsel %vm3986, %v4040, %v4042
      %v4044 = vrot.slane %v2482, 3
      %v4045 = vsel %vm3986, %v4042, %v4044
      %v4046 = vrot.slane %v2483, 3
      %v4047 = vsel %vm3986, %v4044, %v4046
      %v4048 = vrot.slane %v2484, 3
      %v4049 = vsel %vm3986, %v4046, %v4048
      %v4050 = vrot.slane %v2485, 3
      %v4051 = vsel %vm3986, %v4048, %v4050
      %v4052 = vrot.slane %v2486, 3
      %v4053 = vsel %vm3986, %v4050, %v4052
      %v4054 = vrot.slane %v2487, 3
      %v4055 = vsel %vm3986, %v4052, %v4054
      %v4056 = vrot.slane %v2488, 3
      %v4057 = vsel %vm3986, %v4054, %v4056
      %v4058 = vrot.slane %v2489, 3
      %v4059 = vsel %vm3986, %v4056, %v4058
      %v4060 = vrot.slane %v2490, 3
      %v4061 = vsel %vm3986, %v4058, %v4060
      %v4062 = vrot.slane %v2491, 3
      %v4063 = vsel %vm3986, %v4060, %v4062
      %v4064 = vrot.slane %v2492, 3
      %v4065 = vsel %vm3986, %v4062, %v4064
      %v4066 = vrot.slane %v2493, 3
      %v4067 = vsel %vm3986, %v4064, %v4066
      %v4068 = vrot.slane %v2494, 3
      %v4069 = vsel %vm3986, %v4066, %v4068
      %v4070 = vrot.slane %v2495, 3
      %v4071 = vsel %vm3986, %v4068, %v4070
      %v4072 = vrot.slane %v2496, 3
      %v4073 = vsel %vm3986, %v4070, %v4072
      %v4074 = vrot.slane %v2497, 3
      %v4075 = vsel %vm3986, %v4072, %v4074
      %v4076 = vrot.slane %v2498, 3
      %v4077 = vsel %vm3986, %v4074, %v4076
      %v4078 = vrot.slane %v2499, 3
      %v4079 = vsel %vm3986, %v4076, %v4078
      %v4080 = vrot.slane %v2500, 3
      %v4081 = vsel %vm3986, %v4078, %v4080
      %v4082 = vrot.slane %v2501, 3
      %v4083 = vsel %vm3986, %v4080, %v4082
      %v4084 = vrot.slane %v2502, 3
      %v4085 = vsel %vm3986, %v4082, %v4084
      %v4086 = vrot.slane %v2503, 3
      %v4087 = vsel %vm3986, %v4084, %v4086
      %v4088 = vrot.slane %v2504, 3
      %v4089 = vsel %vm3986, %v4086, %v4088
      %v4090 = vrot.slane %v2505, 3
      %v4091 = vsel %vm3986, %v4088, %v4090
      %v4092 = vrot.slane %v2506, 3
      %v4093 = vsel %vm3986, %v4090, %v4092
      %v4094 = vrot.slane %v2507, 3
      %v4095 = vsel %vm3986, %v4092, %v4094
      %v4096 = vrot.slane %v2508, 3
      %v4097 = vsel %vm3986, %v4094, %v4096
      %v4098 = vrot.slane %v2509, 3
      %v4099 = vsel %vm3986, %v4096, %v4098
      %v4100 = vrot.slane %v2510, 3
      %v4101 = vsel %vm3986, %v4098, %v4100
      %v4102 = vrot.slane %v2511, 3
      %v4103 = vsel %vm3986, %v4100, %v4102
      %v4104 = vrot.slane %v2512, 3
      %v4105 = vsel %vm3986, %v4102, %v4104
      %v4106 = vrot.slane %v2513, 3
      %v4107 = vsel %vm3986, %v4104, %v4106
      %v4108 = vrot.slane %v2514, 3
      %v4109 = vsel %vm3986, %v4106, %v4108
      %v4110 = vrot.slane %v2515, 3
      %v4111 = vsel %vm3986, %v4108, %v4110
      %v4112 = vrot.slane %v2516, 3
      %v4113 = vsel %vm3986, %v4110, %v4112
      %v4114 = vrot.slane %v2517, 3
      %v4115 = vsel %vm3986, %v4112, %v4114
      %v4116 = vrot.slane %v2518, 3
      %v4117 = vsel %vm3986, %v4114, %v4116
      %v4118 = vsel %vm2733, %v3989, 0
      %v4120 = vsel %vm2733, %v3991, 0
      %v4122 = vsel %vm2733, %v3993, 0
      %v4124 = vsel %vm2733, %v3995, 0
      %v4126 = vsel %vm2733, %v3997, 0
      %v4128 = vsel %vm2733, %v3999, 0
      %v4130 = vsel %vm2733, %v4001, 0
      %v4132 = vsel %vm2733, %v4003, 0
      %v4134 = vsel %vm2733, %v4005, 0
      %v4136 = vsel %vm2733, %v4007, 0
      %v4138 = vsel %vm2733, %v4009, 0
      %v4140 = vsel %vm2733, %v4011, 0
      %v4142 = vsel %vm2733, %v4013, 0
      %v4144 = vsel %vm2733, %v4015, 0
      %v4146 = vsel %vm2733, %v4017, 0
      %v4148 = vsel %vm2733, %v4019, 0
      %v4150 = vsel %vm2733, %v4021, 0
      %v4152 = vsel %vm2733, %v4023, 0
      %v4154 = vsel %vm2733, %v4025, 0
      %v4156 = vsel %vm2733, %v4027, 0
      %v4158 = vsel %vm2733, %v4029, 0
      %v4160 = vsel %vm2733, %v4031, 0
      %v4162 = vsel %vm2733, %v4033, 0
      %v4164 = vsel %vm2733, %v4035, 0
      %v4166 = vsel %vm2733, %v4037, 0
      %v4168 = vsel %vm2733, %v4039, 0
      %v4170 = vsel %vm2733, %v4041, 0
      %v4172 = vsel %vm2733, %v4043, 0
      %v4174 = vsel %vm2733, %v4045, 0
      %v4176 = vsel %vm2733, %v4047, 0
      %v4178 = vsel %vm2733, %v4049, 0
      %v4180 = vsel %vm2733, %v4051, 0
      %v4182 = vsel %vm2733, %v4053, 0
      %v4184 = vsel %vm2733, %v4055, 0
      %v4186 = vsel %vm2733, %v4057, 0
      %v4188 = vsel %vm2733, %v4059, 0
      %v4190 = vsel %vm2733, %v4061, 0
      %v4192 = vsel %vm2733, %v4063, 0
      %v4194 = vsel %vm2733, %v4065, 0
      %v4196 = vsel %vm2733, %v4067, 0
      %v4198 = vsel %vm2733, %v4069, 0
      %v4200 = vsel %vm2733, %v4071, 0
      %v4202 = vsel %vm2733, %v4073, 0
      %v4204 = vsel %vm2733, %v4075, 0
      %v4206 = vsel %vm2733, %v4077, 0
      %v4208 = vsel %vm2733, %v4079, 0
      %v4210 = vsel %vm2733, %v4081, 0
      %v4212 = vsel %vm2733, %v4083, 0
      %v4214 = vsel %vm2733, %v4085, 0
      %v4216 = vsel %vm2733, %v4087, 0
      %v4218 = vsel %vm2733, %v4089, 0
      %v4220 = vsel %vm2733, %v4091, 0
      %v4222 = vsel %vm2733, %v4093, 0
      %v4224 = vsel %vm2733, %v4095, 0
      %v4226 = vsel %vm2733, %v4097, 0
      %v4228 = vsel %vm2733, %v4099, 0
      %v4230 = vsel %vm2733, %v4101, 0
      %v4232 = vsel %vm2733, %v4103, 0
      %v4234 = vsel %vm2733, %v4105, 0
      %v4236 = vsel %vm2733, %v4107, 0
      %v4238 = vsel %vm2733, %v4109, 0
      %v4240 = vsel %vm2733, %v4111, 0
      %v4242 = vsel %vm2733, %v4113, 0
      %v4244 = vsel %vm2733, %v4115, 0
      %v4246 = vsel %vm2733, %v4117, 0
      %v4248 = vsel %vm2733, %v4116, 0
      %v4251 = vsel %vm2866, %v3985, 0
      %4253 = vmatpush.msra.mxu0 0.0
      %4254 = vmatpush.msra.mxu0 0.0
      %4255 = vmatpush.msra.mxu0 0.0
      %4256 = vmatpush.msra.mxu0 0.0
      %4257 = vmatpush.msra.mxu0 0.0
      %4258 = vmatpush.msra.mxu0 0.0
      %4259 = vmatpush.msra.mxu0 0.0
      %4260 = vmatpush.msra.mxu0 0.0
      %4261 = vmatpush.msra.mxu0 0.0
      %4262 = vmatpush.msra.mxu0 0.0
      %4263 = vmatpush.msra.mxu0 0.0
      %4264 = vmatpush.msra.mxu0 0.0
      %4265 = vmatpush.msra.mxu0 0.0
      %4266 = vmatpush.msra.mxu0 0.0
      %4267 = vmatpush.msra.mxu0 0.0
      %4268 = vmatpush.msra.mxu0 %v4251
      %4269 = vmatmul.f32.gmra.mxu0 %v4118
      %v4270 = vpop.f32.mrf.mxu0
      %v4271 = vadd.f32 0.0, %v4270
      %4272 = vmatmul.f32.gmra.mxu0 %v4120
      %v4273 = vpop.f32.mrf.mxu0
      %v4274 = vadd.f32 0.0, %v4273
      %4275 = vmatmul.f32.gmra.mxu0 %v4122
      %v4276 = vpop.f32.mrf.mxu0
      %v4277 = vadd.f32 0.0, %v4276
      %4278 = vmatmul.f32.gmra.mxu0 %v4124
      %v4279 = vpop.f32.mrf.mxu0
      %v4280 = vadd.f32 0.0, %v4279
      %4281 = vmatmul.f32.gmra.mxu0 %v4126
      %v4282 = vpop.f32.mrf.mxu0
      %v4283 = vadd.f32 0.0, %v4282
      %4284 = vmatmul.f32.gmra.mxu0 %v4128
      %v4285 = vpop.f32.mrf.mxu0
      %v4286 = vadd.f32 0.0, %v4285
      %4287 = vmatmul.f32.gmra.mxu0 %v4130
      %v4288 = vpop.f32.mrf.mxu0
      %v4289 = vadd.f32 0.0, %v4288
      %4290 = vmatmul.f32.gmra.mxu0 %v4132
      %v4291 = vpop.f32.mrf.mxu0
      %v4292 = vadd.f32 0.0, %v4291
      %4293 = vmatmul.f32.gmra.mxu0 %v4134
      %v4294 = vpop.f32.mrf.mxu0
      %v4295 = vadd.f32 0.0, %v4294
      %4296 = vmatmul.f32.gmra.mxu0 %v4136
      %v4297 = vpop.f32.mrf.mxu0
      %v4298 = vadd.f32 0.0, %v4297
      %4299 = vmatmul.f32.gmra.mxu0 %v4138
      %v4300 = vpop.f32.mrf.mxu0
      %v4301 = vadd.f32 0.0, %v4300
      %4302 = vmatmul.f32.gmra.mxu0 %v4140
      %v4303 = vpop.f32.mrf.mxu0
      %v4304 = vadd.f32 0.0, %v4303
      %4305 = vmatmul.f32.gmra.mxu0 %v4142
      %v4306 = vpop.f32.mrf.mxu0
      %v4307 = vadd.f32 0.0, %v4306
      %4308 = vmatmul.f32.gmra.mxu0 %v4144
      %v4309 = vpop.f32.mrf.mxu0
      %v4310 = vadd.f32 0.0, %v4309
      %4311 = vmatmul.f32.gmra.mxu0 %v4146
      %v4312 = vpop.f32.mrf.mxu0
      %v4313 = vadd.f32 0.0, %v4312
      %4314 = vmatmul.f32.gmra.mxu0 %v4148
      %v4315 = vpop.f32.mrf.mxu0
      %v4316 = vadd.f32 0.0, %v4315
      %4317 = vmatmul.f32.gmra.mxu0 %v4150
      %v4318 = vpop.f32.mrf.mxu0
      %v4319 = vadd.f32 0.0, %v4318
      %4320 = vmatmul.f32.gmra.mxu0 %v4152
      %v4321 = vpop.f32.mrf.mxu0
      %v4322 = vadd.f32 0.0, %v4321
      %4323 = vmatmul.f32.gmra.mxu0 %v4154
      %v4324 = vpop.f32.mrf.mxu0
      %v4325 = vadd.f32 0.0, %v4324
      %4326 = vmatmul.f32.gmra.mxu0 %v4156
      %v4327 = vpop.f32.mrf.mxu0
      %v4328 = vadd.f32 0.0, %v4327
      %4329 = vmatmul.f32.gmra.mxu0 %v4158
      %v4330 = vpop.f32.mrf.mxu0
      %v4331 = vadd.f32 0.0, %v4330
      %4332 = vmatmul.f32.gmra.mxu0 %v4160
      %v4333 = vpop.f32.mrf.mxu0
      %v4334 = vadd.f32 0.0, %v4333
      %4335 = vmatmul.f32.gmra.mxu0 %v4162
      %v4336 = vpop.f32.mrf.mxu0
      %v4337 = vadd.f32 0.0, %v4336
      %4338 = vmatmul.f32.gmra.mxu0 %v4164
      %v4339 = vpop.f32.mrf.mxu0
      %v4340 = vadd.f32 0.0, %v4339
      %4341 = vmatmul.f32.gmra.mxu0 %v4166
      %v4342 = vpop.f32.mrf.mxu0
      %v4343 = vadd.f32 0.0, %v4342
      %4344 = vmatmul.f32.gmra.mxu0 %v4168
      %v4345 = vpop.f32.mrf.mxu0
      %v4346 = vadd.f32 0.0, %v4345
      %4347 = vmatmul.f32.gmra.mxu0 %v4170
      %v4348 = vpop.f32.mrf.mxu0
      %v4349 = vadd.f32 0.0, %v4348
      %4350 = vmatmul.f32.gmra.mxu0 %v4172
      %v4351 = vpop.f32.mrf.mxu0
      %v4352 = vadd.f32 0.0, %v4351
      %4353 = vmatmul.f32.gmra.mxu0 %v4174
      %v4354 = vpop.f32.mrf.mxu0
      %v4355 = vadd.f32 0.0, %v4354
      %4356 = vmatmul.f32.gmra.mxu0 %v4176
      %v4357 = vpop.f32.mrf.mxu0
      %v4358 = vadd.f32 0.0, %v4357
      %4359 = vmatmul.f32.gmra.mxu0 %v4178
      %v4360 = vpop.f32.mrf.mxu0
      %v4361 = vadd.f32 0.0, %v4360
      %4362 = vmatmul.f32.gmra.mxu0 %v4180
      %v4363 = vpop.f32.mrf.mxu0
      %v4364 = vadd.f32 0.0, %v4363
      %4365 = vmatmul.f32.gmra.mxu0 %v4182
      %v4366 = vpop.f32.mrf.mxu0
      %v4367 = vadd.f32 0.0, %v4366
      %4368 = vmatmul.f32.gmra.mxu0 %v4184
      %v4369 = vpop.f32.mrf.mxu0
      %v4370 = vadd.f32 0.0, %v4369
      %4371 = vmatmul.f32.gmra.mxu0 %v4186
      %v4372 = vpop.f32.mrf.mxu0
      %v4373 = vadd.f32 0.0, %v4372
      %4374 = vmatmul.f32.gmra.mxu0 %v4188
      %v4375 = vpop.f32.mrf.mxu0
      %v4376 = vadd.f32 0.0, %v4375
      %4377 = vmatmul.f32.gmra.mxu0 %v4190
      %v4378 = vpop.f32.mrf.mxu0
      %v4379 = vadd.f32 0.0, %v4378
      %4380 = vmatmul.f32.gmra.mxu0 %v4192
      %v4381 = vpop.f32.mrf.mxu0
      %v4382 = vadd.f32 0.0, %v4381
      %4383 = vmatmul.f32.gmra.mxu0 %v4194
      %v4384 = vpop.f32.mrf.mxu0
      %v4385 = vadd.f32 0.0, %v4384
      %4386 = vmatmul.f32.gmra.mxu0 %v4196
      %v4387 = vpop.f32.mrf.mxu0
      %v4388 = vadd.f32 0.0, %v4387
      %4389 = vmatmul.f32.gmra.mxu0 %v4198
      %v4390 = vpop.f32.mrf.mxu0
      %v4391 = vadd.f32 0.0, %v4390
      %4392 = vmatmul.f32.gmra.mxu0 %v4200
      %v4393 = vpop.f32.mrf.mxu0
      %v4394 = vadd.f32 0.0, %v4393
      %4395 = vmatmul.f32.gmra.mxu0 %v4202
      %v4396 = vpop.f32.mrf.mxu0
      %v4397 = vadd.f32 0.0, %v4396
      %4398 = vmatmul.f32.gmra.mxu0 %v4204
      %v4399 = vpop.f32.mrf.mxu0
      %v4400 = vadd.f32 0.0, %v4399
      %4401 = vmatmul.f32.gmra.mxu0 %v4206
      %v4402 = vpop.f32.mrf.mxu0
      %v4403 = vadd.f32 0.0, %v4402
      %4404 = vmatmul.f32.gmra.mxu0 %v4208
      %v4405 = vpop.f32.mrf.mxu0
      %v4406 = vadd.f32 0.0, %v4405
      %4407 = vmatmul.f32.gmra.mxu0 %v4210
      %v4408 = vpop.f32.mrf.mxu0
      %v4409 = vadd.f32 0.0, %v4408
      %4410 = vmatmul.f32.gmra.mxu0 %v4212
      %v4411 = vpop.f32.mrf.mxu0
      %v4412 = vadd.f32 0.0, %v4411
      %4413 = vmatmul.f32.gmra.mxu0 %v4214
      %v4414 = vpop.f32.mrf.mxu0
      %v4415 = vadd.f32 0.0, %v4414
      %4416 = vmatmul.f32.gmra.mxu0 %v4216
      %v4417 = vpop.f32.mrf.mxu0
      %v4418 = vadd.f32 0.0, %v4417
      %4419 = vmatmul.f32.gmra.mxu0 %v4218
      %v4420 = vpop.f32.mrf.mxu0
      %v4421 = vadd.f32 0.0, %v4420
      %4422 = vmatmul.f32.gmra.mxu0 %v4220
      %v4423 = vpop.f32.mrf.mxu0
      %v4424 = vadd.f32 0.0, %v4423
      %4425 = vmatmul.f32.gmra.mxu0 %v4222
      %v4426 = vpop.f32.mrf.mxu0
      %v4427 = vadd.f32 0.0, %v4426
      %4428 = vmatmul.f32.gmra.mxu0 %v4224
      %v4429 = vpop.f32.mrf.mxu0
      %v4430 = vadd.f32 0.0, %v4429
      %4431 = vmatmul.f32.gmra.mxu0 %v4226
      %v4432 = vpop.f32.mrf.mxu0
      %v4433 = vadd.f32 0.0, %v4432
      %4434 = vmatmul.f32.gmra.mxu0 %v4228
      %v4435 = vpop.f32.mrf.mxu0
      %v4436 = vadd.f32 0.0, %v4435
      %4437 = vmatmul.f32.gmra.mxu0 %v4230
      %v4438 = vpop.f32.mrf.mxu0
      %v4439 = vadd.f32 0.0, %v4438
      %4440 = vmatmul.f32.gmra.mxu0 %v4232
      %v4441 = vpop.f32.mrf.mxu0
      %v4442 = vadd.f32 0.0, %v4441
      %4443 = vmatmul.f32.gmra.mxu0 %v4234
      %v4444 = vpop.f32.mrf.mxu0
      %v4445 = vadd.f32 0.0, %v4444
      %4446 = vmatmul.f32.gmra.mxu0 %v4236
      %v4447 = vpop.f32.mrf.mxu0
      %v4448 = vadd.f32 0.0, %v4447
      %4449 = vmatmul.f32.gmra.mxu0 %v4238
      %v4450 = vpop.f32.mrf.mxu0
      %v4451 = vadd.f32 0.0, %v4450
      %4452 = vmatmul.f32.gmra.mxu0 %v4240
      %v4453 = vpop.f32.mrf.mxu0
      %v4454 = vadd.f32 0.0, %v4453
      %4455 = vmatmul.f32.gmra.mxu0 %v4242
      %v4456 = vpop.f32.mrf.mxu0
      %v4457 = vadd.f32 0.0, %v4456
      %4458 = vmatmul.f32.gmra.mxu0 %v4244
      %v4459 = vpop.f32.mrf.mxu0
      %v4460 = vadd.f32 0.0, %v4459
      %4461 = vmatmul.f32.gmra.mxu0 %v4246
      %v4462 = vpop.f32.mrf.mxu0
      %v4463 = vadd.f32 0.0, %v4462
      %4464 = vmatmul.f32.gmra.mxu0 %v4248
      %v4465 = vpop.f32.mrf.mxu0
      %v4466 = vadd.f32 0.0, %v4465
      %4467 = vdwg.mxu0
      %v4468 = vadd.f32 %v3918, %v4271
      %v4469 = vadd.f32 %v3919, %v4274
      %v4470 = vadd.f32 %v3920, %v4277
      %v4471 = vadd.f32 %v3921, %v4280
      %v4472 = vadd.f32 %v3922, %v4283
      %v4473 = vadd.f32 %v3923, %v4286
      %v4474 = vadd.f32 %v3924, %v4289
      %v4475 = vadd.f32 %v3925, %v4292
      %v4476 = vadd.f32 %v3926, %v4295
      %v4477 = vadd.f32 %v3927, %v4298
      %v4478 = vadd.f32 %v3928, %v4301
      %v4479 = vadd.f32 %v3929, %v4304
      %v4480 = vadd.f32 %v3930, %v4307
      %v4481 = vadd.f32 %v3931, %v4310
      %v4482 = vadd.f32 %v3932, %v4313
      %v4483 = vadd.f32 %v3933, %v4316
      %v4484 = vadd.f32 %v3934, %v4319
      %v4485 = vadd.f32 %v3935, %v4322
      %v4486 = vadd.f32 %v3936, %v4325
      %v4487 = vadd.f32 %v3937, %v4328
      %v4488 = vadd.f32 %v3938, %v4331
      %v4489 = vadd.f32 %v3939, %v4334
      %v4490 = vadd.f32 %v3940, %v4337
      %v4491 = vadd.f32 %v3941, %v4340
      %v4492 = vadd.f32 %v3942, %v4343
      %v4493 = vadd.f32 %v3943, %v4346
      %v4494 = vadd.f32 %v3944, %v4349
      %v4495 = vadd.f32 %v3945, %v4352
      %v4496 = vadd.f32 %v3946, %v4355
      %v4497 = vadd.f32 %v3947, %v4358
      %v4498 = vadd.f32 %v3948, %v4361
      %v4499 = vadd.f32 %v3949, %v4364
      %v4500 = vadd.f32 %v3950, %v4367
      %v4501 = vadd.f32 %v3951, %v4370
      %v4502 = vadd.f32 %v3952, %v4373
      %v4503 = vadd.f32 %v3953, %v4376
      %v4504 = vadd.f32 %v3954, %v4379
      %v4505 = vadd.f32 %v3955, %v4382
      %v4506 = vadd.f32 %v3956, %v4385
      %v4507 = vadd.f32 %v3957, %v4388
      %v4508 = vadd.f32 %v3958, %v4391
      %v4509 = vadd.f32 %v3959, %v4394
      %v4510 = vadd.f32 %v3960, %v4397
      %v4511 = vadd.f32 %v3961, %v4400
      %v4512 = vadd.f32 %v3962, %v4403
      %v4513 = vadd.f32 %v3963, %v4406
      %v4514 = vadd.f32 %v3964, %v4409
      %v4515 = vadd.f32 %v3965, %v4412
      %v4516 = vadd.f32 %v3966, %v4415
      %v4517 = vadd.f32 %v3967, %v4418
      %v4518 = vadd.f32 %v3968, %v4421
      %v4519 = vadd.f32 %v3969, %v4424
      %v4520 = vadd.f32 %v3970, %v4427
      %v4521 = vadd.f32 %v3971, %v4430
      %v4522 = vadd.f32 %v3972, %v4433
      %v4523 = vadd.f32 %v3973, %v4436
      %v4524 = vadd.f32 %v3974, %v4439
      %v4525 = vadd.f32 %v3975, %v4442
      %v4526 = vadd.f32 %v3976, %v4445
      %v4527 = vadd.f32 %v3977, %v4448
      %v4528 = vadd.f32 %v3978, %v4451
      %v4529 = vadd.f32 %v3979, %v4454
      %v4530 = vadd.f32 %v3980, %v4457
      %v4531 = vadd.f32 %v3981, %v4460
      %v4532 = vadd.f32 %v3982, %v4463
      %v4533 = vadd.f32 %v3983, %v4466
      %s4534 = scalar_lea.vmem %s3, 32
      %v4535 = vld [vmem:[%s4534] sm:$0x3f]
      %v4536 = vrot.slane %v2453, 4
      %v4537 = vrot.slane %v2454, 4
      %v4538 = vsel %vm747, %v4536, %v4537
      %v4539 = vrot.slane %v2455, 4
      %v4540 = vsel %vm747, %v4537, %v4539
      %v4541 = vrot.slane %v2456, 4
      %v4542 = vsel %vm747, %v4539, %v4541
      %v4543 = vrot.slane %v2457, 4
      %v4544 = vsel %vm747, %v4541, %v4543
      %v4545 = vrot.slane %v2458, 4
      %v4546 = vsel %vm747, %v4543, %v4545
      %v4547 = vrot.slane %v2459, 4
      %v4548 = vsel %vm747, %v4545, %v4547
      %v4549 = vrot.slane %v2460, 4
      %v4550 = vsel %vm747, %v4547, %v4549
      %v4551 = vrot.slane %v2461, 4
      %v4552 = vsel %vm747, %v4549, %v4551
      %v4553 = vrot.slane %v2462, 4
      %v4554 = vsel %vm747, %v4551, %v4553
      %v4555 = vrot.slane %v2463, 4
      %v4556 = vsel %vm747, %v4553, %v4555
      %v4557 = vrot.slane %v2464, 4
      %v4558 = vsel %vm747, %v4555, %v4557
      %v4559 = vrot.slane %v2465, 4
      %v4560 = vsel %vm747, %v4557, %v4559
      %v4561 = vrot.slane %v2466, 4
      %v4562 = vsel %vm747, %v4559, %v4561
      %v4563 = vrot.slane %v2467, 4
      %v4564 = vsel %vm747, %v4561, %v4563
      %v4565 = vrot.slane %v2468, 4
      %v4566 = vsel %vm747, %v4563, %v4565
      %v4567 = vrot.slane %v2469, 4
      %v4568 = vsel %vm747, %v4565, %v4567
      %v4569 = vrot.slane %v2470, 4
      %v4570 = vsel %vm747, %v4567, %v4569
      %v4571 = vrot.slane %v2471, 4
      %v4572 = vsel %vm747, %v4569, %v4571
      %v4573 = vrot.slane %v2472, 4
      %v4574 = vsel %vm747, %v4571, %v4573
      %v4575 = vrot.slane %v2473, 4
      %v4576 = vsel %vm747, %v4573, %v4575
      %v4577 = vrot.slane %v2474, 4
      %v4578 = vsel %vm747, %v4575, %v4577
      %v4579 = vrot.slane %v2475, 4
      %v4580 = vsel %vm747, %v4577, %v4579
      %v4581 = vrot.slane %v2476, 4
      %v4582 = vsel %vm747, %v4579, %v4581
      %v4583 = vrot.slane %v2477, 4
      %v4584 = vsel %vm747, %v4581, %v4583
      %v4585 = vrot.slane %v2478, 4
      %v4586 = vsel %vm747, %v4583, %v4585
      %v4587 = vrot.slane %v2479, 4
      %v4588 = vsel %vm747, %v4585, %v4587
      %v4589 = vrot.slane %v2480, 4
      %v4590 = vsel %vm747, %v4587, %v4589
      %v4591 = vrot.slane %v2481, 4
      %v4592 = vsel %vm747, %v4589, %v4591
      %v4593 = vrot.slane %v2482, 4
      %v4594 = vsel %vm747, %v4591, %v4593
      %v4595 = vrot.slane %v2483, 4
      %v4596 = vsel %vm747, %v4593, %v4595
      %v4597 = vrot.slane %v2484, 4
      %v4598 = vsel %vm747, %v4595, %v4597
      %v4599 = vrot.slane %v2485, 4
      %v4600 = vsel %vm747, %v4597, %v4599
      %v4601 = vrot.slane %v2486, 4
      %v4602 = vsel %vm747, %v4599, %v4601
      %v4603 = vrot.slane %v2487, 4
      %v4604 = vsel %vm747, %v4601, %v4603
      %v4605 = vrot.slane %v2488, 4
      %v4606 = vsel %vm747, %v4603, %v4605
      %v4607 = vrot.slane %v2489, 4
      %v4608 = vsel %vm747, %v4605, %v4607
      %v4609 = vrot.slane %v2490, 4
      %v4610 = vsel %vm747, %v4607, %v4609
      %v4611 = vrot.slane %v2491, 4
      %v4612 = vsel %vm747, %v4609, %v4611
      %v4613 = vrot.slane %v2492, 4
      %v4614 = vsel %vm747, %v4611, %v4613
      %v4615 = vrot.slane %v2493, 4
      %v4616 = vsel %vm747, %v4613, %v4615
      %v4617 = vrot.slane %v2494, 4
      %v4618 = vsel %vm747, %v4615, %v4617
      %v4619 = vrot.slane %v2495, 4
      %v4620 = vsel %vm747, %v4617, %v4619
      %v4621 = vrot.slane %v2496, 4
      %v4622 = vsel %vm747, %v4619, %v4621
      %v4623 = vrot.slane %v2497, 4
      %v4624 = vsel %vm747, %v4621, %v4623
      %v4625 = vrot.slane %v2498, 4
      %v4626 = vsel %vm747, %v4623, %v4625
      %v4627 = vrot.slane %v2499, 4
      %v4628 = vsel %vm747, %v4625, %v4627
      %v4629 = vrot.slane %v2500, 4
      %v4630 = vsel %vm747, %v4627, %v4629
      %v4631 = vrot.slane %v2501, 4
      %v4632 = vsel %vm747, %v4629, %v4631
      %v4633 = vrot.slane %v2502, 4
      %v4634 = vsel %vm747, %v4631, %v4633
      %v4635 = vrot.slane %v2503, 4
      %v4636 = vsel %vm747, %v4633, %v4635
      %v4637 = vrot.slane %v2504, 4
      %v4638 = vsel %vm747, %v4635, %v4637
      %v4639 = vrot.slane %v2505, 4
      %v4640 = vsel %vm747, %v4637, %v4639
      %v4641 = vrot.slane %v2506, 4
      %v4642 = vsel %vm747, %v4639, %v4641
      %v4643 = vrot.slane %v2507, 4
      %v4644 = vsel %vm747, %v4641, %v4643
      %v4645 = vrot.slane %v2508, 4
      %v4646 = vsel %vm747, %v4643, %v4645
      %v4647 = vrot.slane %v2509, 4
      %v4648 = vsel %vm747, %v4645, %v4647
      %v4649 = vrot.slane %v2510, 4
      %v4650 = vsel %vm747, %v4647, %v4649
      %v4651 = vrot.slane %v2511, 4
      %v4652 = vsel %vm747, %v4649, %v4651
      %v4653 = vrot.slane %v2512, 4
      %v4654 = vsel %vm747, %v4651, %v4653
      %v4655 = vrot.slane %v2513, 4
      %v4656 = vsel %vm747, %v4653, %v4655
      %v4657 = vrot.slane %v2514, 4
      %v4658 = vsel %vm747, %v4655, %v4657
      %v4659 = vrot.slane %v2515, 4
      %v4660 = vsel %vm747, %v4657, %v4659
      %v4661 = vrot.slane %v2516, 4
      %v4662 = vsel %vm747, %v4659, %v4661
      %v4663 = vrot.slane %v2517, 4
      %v4664 = vsel %vm747, %v4661, %v4663
      %v4665 = vrot.slane %v2518, 4
      %v4666 = vsel %vm747, %v4663, %v4665
      %v4667 = vsel %vm2733, %v4538, 0
      %v4669 = vsel %vm2733, %v4540, 0
      %v4671 = vsel %vm2733, %v4542, 0
      %v4673 = vsel %vm2733, %v4544, 0
      %v4675 = vsel %vm2733, %v4546, 0
      %v4677 = vsel %vm2733, %v4548, 0
      %v4679 = vsel %vm2733, %v4550, 0
      %v4681 = vsel %vm2733, %v4552, 0
      %v4683 = vsel %vm2733, %v4554, 0
      %v4685 = vsel %vm2733, %v4556, 0
      %v4687 = vsel %vm2733, %v4558, 0
      %v4689 = vsel %vm2733, %v4560, 0
      %v4691 = vsel %vm2733, %v4562, 0
      %v4693 = vsel %vm2733, %v4564, 0
      %v4695 = vsel %vm2733, %v4566, 0
      %v4697 = vsel %vm2733, %v4568, 0
      %v4699 = vsel %vm2733, %v4570, 0
      %v4701 = vsel %vm2733, %v4572, 0
      %v4703 = vsel %vm2733, %v4574, 0
      %v4705 = vsel %vm2733, %v4576, 0
      %v4707 = vsel %vm2733, %v4578, 0
      %v4709 = vsel %vm2733, %v4580, 0
      %v4711 = vsel %vm2733, %v4582, 0
      %v4713 = vsel %vm2733, %v4584, 0
      %v4715 = vsel %vm2733, %v4586, 0
      %v4717 = vsel %vm2733, %v4588, 0
      %v4719 = vsel %vm2733, %v4590, 0
      %v4721 = vsel %vm2733, %v4592, 0
      %v4723 = vsel %vm2733, %v4594, 0
      %v4725 = vsel %vm2733, %v4596, 0
      %v4727 = vsel %vm2733, %v4598, 0
      %v4729 = vsel %vm2733, %v4600, 0
      %v4731 = vsel %vm2733, %v4602, 0
      %v4733 = vsel %vm2733, %v4604, 0
      %v4735 = vsel %vm2733, %v4606, 0
      %v4737 = vsel %vm2733, %v4608, 0
      %v4739 = vsel %vm2733, %v4610, 0
      %v4741 = vsel %vm2733, %v4612, 0
      %v4743 = vsel %vm2733, %v4614, 0
      %v4745 = vsel %vm2733, %v4616, 0
      %v4747 = vsel %vm2733, %v4618, 0
      %v4749 = vsel %vm2733, %v4620, 0
      %v4751 = vsel %vm2733, %v4622, 0
      %v4753 = vsel %vm2733, %v4624, 0
      %v4755 = vsel %vm2733, %v4626, 0
      %v4757 = vsel %vm2733, %v4628, 0
      %v4759 = vsel %vm2733, %v4630, 0
      %v4761 = vsel %vm2733, %v4632, 0
      %v4763 = vsel %vm2733, %v4634, 0
      %v4765 = vsel %vm2733, %v4636, 0
      %v4767 = vsel %vm2733, %v4638, 0
      %v4769 = vsel %vm2733, %v4640, 0
      %v4771 = vsel %vm2733, %v4642, 0
      %v4773 = vsel %vm2733, %v4644, 0
      %v4775 = vsel %vm2733, %v4646, 0
      %v4777 = vsel %vm2733, %v4648, 0
      %v4779 = vsel %vm2733, %v4650, 0
      %v4781 = vsel %vm2733, %v4652, 0
      %v4783 = vsel %vm2733, %v4654, 0
      %v4785 = vsel %vm2733, %v4656, 0
      %v4787 = vsel %vm2733, %v4658, 0
      %v4789 = vsel %vm2733, %v4660, 0
      %v4791 = vsel %vm2733, %v4662, 0
      %v4793 = vsel %vm2733, %v4664, 0
      %v4795 = vsel %vm2733, %v4666, 0
      %v4797 = vsel %vm2733, %v4665, 0
      %v4800 = vsel %vm2866, %v4535, 0
      %4802 = vmatpush.msra.mxu0 0.0
      %4803 = vmatpush.msra.mxu0 0.0
      %4804 = vmatpush.msra.mxu0 0.0
      %4805 = vmatpush.msra.mxu0 0.0
      %4806 = vmatpush.msra.mxu0 0.0
      %4807 = vmatpush.msra.mxu0 0.0
      %4808 = vmatpush.msra.mxu0 0.0
      %4809 = vmatpush.msra.mxu0 0.0
      %4810 = vmatpush.msra.mxu0 0.0
      %4811 = vmatpush.msra.mxu0 0.0
      %4812 = vmatpush.msra.mxu0 0.0
      %4813 = vmatpush.msra.mxu0 0.0
      %4814 = vmatpush.msra.mxu0 0.0
      %4815 = vmatpush.msra.mxu0 0.0
      %4816 = vmatpush.msra.mxu0 0.0
      %4817 = vmatpush.msra.mxu0 %v4800
      %4818 = vmatmul.f32.gmra.mxu0 %v4667
      %v4819 = vpop.f32.mrf.mxu0
      %v4820 = vadd.f32 0.0, %v4819
      %4821 = vmatmul.f32.gmra.mxu0 %v4669
      %v4822 = vpop.f32.mrf.mxu0
      %v4823 = vadd.f32 0.0, %v4822
      %4824 = vmatmul.f32.gmra.mxu0 %v4671
      %v4825 = vpop.f32.mrf.mxu0
      %v4826 = vadd.f32 0.0, %v4825
      %4827 = vmatmul.f32.gmra.mxu0 %v4673
      %v4828 = vpop.f32.mrf.mxu0
      %v4829 = vadd.f32 0.0, %v4828
      %4830 = vmatmul.f32.gmra.mxu0 %v4675
      %v4831 = vpop.f32.mrf.mxu0
      %v4832 = vadd.f32 0.0, %v4831
      %4833 = vmatmul.f32.gmra.mxu0 %v4677
      %v4834 = vpop.f32.mrf.mxu0
      %v4835 = vadd.f32 0.0, %v4834
      %4836 = vmatmul.f32.gmra.mxu0 %v4679
      %v4837 = vpop.f32.mrf.mxu0
      %v4838 = vadd.f32 0.0, %v4837
      %4839 = vmatmul.f32.gmra.mxu0 %v4681
      %v4840 = vpop.f32.mrf.mxu0
      %v4841 = vadd.f32 0.0, %v4840
      %4842 = vmatmul.f32.gmra.mxu0 %v4683
      %v4843 = vpop.f32.mrf.mxu0
      %v4844 = vadd.f32 0.0, %v4843
      %4845 = vmatmul.f32.gmra.mxu0 %v4685
      %v4846 = vpop.f32.mrf.mxu0
      %v4847 = vadd.f32 0.0, %v4846
      %4848 = vmatmul.f32.gmra.mxu0 %v4687
      %v4849 = vpop.f32.mrf.mxu0
      %v4850 = vadd.f32 0.0, %v4849
      %4851 = vmatmul.f32.gmra.mxu0 %v4689
      %v4852 = vpop.f32.mrf.mxu0
      %v4853 = vadd.f32 0.0, %v4852
      %4854 = vmatmul.f32.gmra.mxu0 %v4691
      %v4855 = vpop.f32.mrf.mxu0
      %v4856 = vadd.f32 0.0, %v4855
      %4857 = vmatmul.f32.gmra.mxu0 %v4693
      %v4858 = vpop.f32.mrf.mxu0
      %v4859 = vadd.f32 0.0, %v4858
      %4860 = vmatmul.f32.gmra.mxu0 %v4695
      %v4861 = vpop.f32.mrf.mxu0
      %v4862 = vadd.f32 0.0, %v4861
      %4863 = vmatmul.f32.gmra.mxu0 %v4697
      %v4864 = vpop.f32.mrf.mxu0
      %v4865 = vadd.f32 0.0, %v4864
      %4866 = vmatmul.f32.gmra.mxu0 %v4699
      %v4867 = vpop.f32.mrf.mxu0
      %v4868 = vadd.f32 0.0, %v4867
      %4869 = vmatmul.f32.gmra.mxu0 %v4701
      %v4870 = vpop.f32.mrf.mxu0
      %v4871 = vadd.f32 0.0, %v4870
      %4872 = vmatmul.f32.gmra.mxu0 %v4703
      %v4873 = vpop.f32.mrf.mxu0
      %v4874 = vadd.f32 0.0, %v4873
      %4875 = vmatmul.f32.gmra.mxu0 %v4705
      %v4876 = vpop.f32.mrf.mxu0
      %v4877 = vadd.f32 0.0, %v4876
      %4878 = vmatmul.f32.gmra.mxu0 %v4707
      %v4879 = vpop.f32.mrf.mxu0
      %v4880 = vadd.f32 0.0, %v4879
      %4881 = vmatmul.f32.gmra.mxu0 %v4709
      %v4882 = vpop.f32.mrf.mxu0
      %v4883 = vadd.f32 0.0, %v4882
      %4884 = vmatmul.f32.gmra.mxu0 %v4711
      %v4885 = vpop.f32.mrf.mxu0
      %v4886 = vadd.f32 0.0, %v4885
      %4887 = vmatmul.f32.gmra.mxu0 %v4713
      %v4888 = vpop.f32.mrf.mxu0
      %v4889 = vadd.f32 0.0, %v4888
      %4890 = vmatmul.f32.gmra.mxu0 %v4715
      %v4891 = vpop.f32.mrf.mxu0
      %v4892 = vadd.f32 0.0, %v4891
      %4893 = vmatmul.f32.gmra.mxu0 %v4717
      %v4894 = vpop.f32.mrf.mxu0
      %v4895 = vadd.f32 0.0, %v4894
      %4896 = vmatmul.f32.gmra.mxu0 %v4719
      %v4897 = vpop.f32.mrf.mxu0
      %v4898 = vadd.f32 0.0, %v4897
      %4899 = vmatmul.f32.gmra.mxu0 %v4721
      %v4900 = vpop.f32.mrf.mxu0
      %v4901 = vadd.f32 0.0, %v4900
      %4902 = vmatmul.f32.gmra.mxu0 %v4723
      %v4903 = vpop.f32.mrf.mxu0
      %v4904 = vadd.f32 0.0, %v4903
      %4905 = vmatmul.f32.gmra.mxu0 %v4725
      %v4906 = vpop.f32.mrf.mxu0
      %v4907 = vadd.f32 0.0, %v4906
      %4908 = vmatmul.f32.gmra.mxu0 %v4727
      %v4909 = vpop.f32.mrf.mxu0
      %v4910 = vadd.f32 0.0, %v4909
      %4911 = vmatmul.f32.gmra.mxu0 %v4729
      %v4912 = vpop.f32.mrf.mxu0
      %v4913 = vadd.f32 0.0, %v4912
      %4914 = vmatmul.f32.gmra.mxu0 %v4731
      %v4915 = vpop.f32.mrf.mxu0
      %v4916 = vadd.f32 0.0, %v4915
      %4917 = vmatmul.f32.gmra.mxu0 %v4733
      %v4918 = vpop.f32.mrf.mxu0
      %v4919 = vadd.f32 0.0, %v4918
      %4920 = vmatmul.f32.gmra.mxu0 %v4735
      %v4921 = vpop.f32.mrf.mxu0
      %v4922 = vadd.f32 0.0, %v4921
      %4923 = vmatmul.f32.gmra.mxu0 %v4737
      %v4924 = vpop.f32.mrf.mxu0
      %v4925 = vadd.f32 0.0, %v4924
      %4926 = vmatmul.f32.gmra.mxu0 %v4739
      %v4927 = vpop.f32.mrf.mxu0
      %v4928 = vadd.f32 0.0, %v4927
      %4929 = vmatmul.f32.gmra.mxu0 %v4741
      %v4930 = vpop.f32.mrf.mxu0
      %v4931 = vadd.f32 0.0, %v4930
      %4932 = vmatmul.f32.gmra.mxu0 %v4743
      %v4933 = vpop.f32.mrf.mxu0
      %v4934 = vadd.f32 0.0, %v4933
      %4935 = vmatmul.f32.gmra.mxu0 %v4745
      %v4936 = vpop.f32.mrf.mxu0
      %v4937 = vadd.f32 0.0, %v4936
      %4938 = vmatmul.f32.gmra.mxu0 %v4747
      %v4939 = vpop.f32.mrf.mxu0
      %v4940 = vadd.f32 0.0, %v4939
      %4941 = vmatmul.f32.gmra.mxu0 %v4749
      %v4942 = vpop.f32.mrf.mxu0
      %v4943 = vadd.f32 0.0, %v4942
      %4944 = vmatmul.f32.gmra.mxu0 %v4751
      %v4945 = vpop.f32.mrf.mxu0
      %v4946 = vadd.f32 0.0, %v4945
      %4947 = vmatmul.f32.gmra.mxu0 %v4753
      %v4948 = vpop.f32.mrf.mxu0
      %v4949 = vadd.f32 0.0, %v4948
      %4950 = vmatmul.f32.gmra.mxu0 %v4755
      %v4951 = vpop.f32.mrf.mxu0
      %v4952 = vadd.f32 0.0, %v4951
      %4953 = vmatmul.f32.gmra.mxu0 %v4757
      %v4954 = vpop.f32.mrf.mxu0
      %v4955 = vadd.f32 0.0, %v4954
      %4956 = vmatmul.f32.gmra.mxu0 %v4759
      %v4957 = vpop.f32.mrf.mxu0
      %v4958 = vadd.f32 0.0, %v4957
      %4959 = vmatmul.f32.gmra.mxu0 %v4761
      %v4960 = vpop.f32.mrf.mxu0
      %v4961 = vadd.f32 0.0, %v4960
      %4962 = vmatmul.f32.gmra.mxu0 %v4763
      %v4963 = vpop.f32.mrf.mxu0
      %v4964 = vadd.f32 0.0, %v4963
      %4965 = vmatmul.f32.gmra.mxu0 %v4765
      %v4966 = vpop.f32.mrf.mxu0
      %v4967 = vadd.f32 0.0, %v4966
      %4968 = vmatmul.f32.gmra.mxu0 %v4767
      %v4969 = vpop.f32.mrf.mxu0
      %v4970 = vadd.f32 0.0, %v4969
      %4971 = vmatmul.f32.gmra.mxu0 %v4769
      %v4972 = vpop.f32.mrf.mxu0
      %v4973 = vadd.f32 0.0, %v4972
      %4974 = vmatmul.f32.gmra.mxu0 %v4771
      %v4975 = vpop.f32.mrf.mxu0
      %v4976 = vadd.f32 0.0, %v4975
      %4977 = vmatmul.f32.gmra.mxu0 %v4773
      %v4978 = vpop.f32.mrf.mxu0
      %v4979 = vadd.f32 0.0, %v4978
      %4980 = vmatmul.f32.gmra.mxu0 %v4775
      %v4981 = vpop.f32.mrf.mxu0
      %v4982 = vadd.f32 0.0, %v4981
      %4983 = vmatmul.f32.gmra.mxu0 %v4777
      %v4984 = vpop.f32.mrf.mxu0
      %v4985 = vadd.f32 0.0, %v4984
      %4986 = vmatmul.f32.gmra.mxu0 %v4779
      %v4987 = vpop.f32.mrf.mxu0
      %v4988 = vadd.f32 0.0, %v4987
      %4989 = vmatmul.f32.gmra.mxu0 %v4781
      %v4990 = vpop.f32.mrf.mxu0
      %v4991 = vadd.f32 0.0, %v4990
      %4992 = vmatmul.f32.gmra.mxu0 %v4783
      %v4993 = vpop.f32.mrf.mxu0
      %v4994 = vadd.f32 0.0, %v4993
      %4995 = vmatmul.f32.gmra.mxu0 %v4785
      %v4996 = vpop.f32.mrf.mxu0
      %v4997 = vadd.f32 0.0, %v4996
      %4998 = vmatmul.f32.gmra.mxu0 %v4787
      %v4999 = vpop.f32.mrf.mxu0
      %v5000 = vadd.f32 0.0, %v4999
      %5001 = vmatmul.f32.gmra.mxu0 %v4789
      %v5002 = vpop.f32.mrf.mxu0
      %v5003 = vadd.f32 0.0, %v5002
      %5004 = vmatmul.f32.gmra.mxu0 %v4791
      %v5005 = vpop.f32.mrf.mxu0
      %v5006 = vadd.f32 0.0, %v5005
      %5007 = vmatmul.f32.gmra.mxu0 %v4793
      %v5008 = vpop.f32.mrf.mxu0
      %v5009 = vadd.f32 0.0, %v5008
      %5010 = vmatmul.f32.gmra.mxu0 %v4795
      %v5011 = vpop.f32.mrf.mxu0
      %v5012 = vadd.f32 0.0, %v5011
      %5013 = vmatmul.f32.gmra.mxu0 %v4797
      %v5014 = vpop.f32.mrf.mxu0
      %v5015 = vadd.f32 0.0, %v5014
      %5016 = vdwg.mxu0
      %v5017 = vadd.f32 %v4468, %v4820
      %v5018 = vadd.f32 %v4469, %v4823
      %v5019 = vadd.f32 %v4470, %v4826
      %v5020 = vadd.f32 %v4471, %v4829
      %v5021 = vadd.f32 %v4472, %v4832
      %v5022 = vadd.f32 %v4473, %v4835
      %v5023 = vadd.f32 %v4474, %v4838
      %v5024 = vadd.f32 %v4475, %v4841
      %v5025 = vadd.f32 %v4476, %v4844
      %v5026 = vadd.f32 %v4477, %v4847
      %v5027 = vadd.f32 %v4478, %v4850
      %v5028 = vadd.f32 %v4479, %v4853
      %v5029 = vadd.f32 %v4480, %v4856
      %v5030 = vadd.f32 %v4481, %v4859
      %v5031 = vadd.f32 %v4482, %v4862
      %v5032 = vadd.f32 %v4483, %v4865
      %v5033 = vadd.f32 %v4484, %v4868
      %v5034 = vadd.f32 %v4485, %v4871
      %v5035 = vadd.f32 %v4486, %v4874
      %v5036 = vadd.f32 %v4487, %v4877
      %v5037 = vadd.f32 %v4488, %v4880
      %v5038 = vadd.f32 %v4489, %v4883
      %v5039 = vadd.f32 %v4490, %v4886
      %v5040 = vadd.f32 %v4491, %v4889
      %v5041 = vadd.f32 %v4492, %v4892
      %v5042 = vadd.f32 %v4493, %v4895
      %v5043 = vadd.f32 %v4494, %v4898
      %v5044 = vadd.f32 %v4495, %v4901
      %v5045 = vadd.f32 %v4496, %v4904
      %v5046 = vadd.f32 %v4497, %v4907
      %v5047 = vadd.f32 %v4498, %v4910
      %v5048 = vadd.f32 %v4499, %v4913
      %v5049 = vadd.f32 %v4500, %v4916
      %v5050 = vadd.f32 %v4501, %v4919
      %v5051 = vadd.f32 %v4502, %v4922
      %v5052 = vadd.f32 %v4503, %v4925
      %v5053 = vadd.f32 %v4504, %v4928
      %v5054 = vadd.f32 %v4505, %v4931
      %v5055 = vadd.f32 %v4506, %v4934
      %v5056 = vadd.f32 %v4507, %v4937
      %v5057 = vadd.f32 %v4508, %v4940
      %v5058 = vadd.f32 %v4509, %v4943
      %v5059 = vadd.f32 %v4510, %v4946
      %v5060 = vadd.f32 %v4511, %v4949
      %v5061 = vadd.f32 %v4512, %v4952
      %v5062 = vadd.f32 %v4513, %v4955
      %v5063 = vadd.f32 %v4514, %v4958
      %v5064 = vadd.f32 %v4515, %v4961
      %v5065 = vadd.f32 %v4516, %v4964
      %v5066 = vadd.f32 %v4517, %v4967
      %v5067 = vadd.f32 %v4518, %v4970
      %v5068 = vadd.f32 %v4519, %v4973
      %v5069 = vadd.f32 %v4520, %v4976
      %v5070 = vadd.f32 %v4521, %v4979
      %v5071 = vadd.f32 %v4522, %v4982
      %v5072 = vadd.f32 %v4523, %v4985
      %v5073 = vadd.f32 %v4524, %v4988
      %v5074 = vadd.f32 %v4525, %v4991
      %v5075 = vadd.f32 %v4526, %v4994
      %v5076 = vadd.f32 %v4527, %v4997
      %v5077 = vadd.f32 %v4528, %v5000
      %v5078 = vadd.f32 %v4529, %v5003
      %v5079 = vadd.f32 %v4530, %v5006
      %v5080 = vadd.f32 %v4531, %v5009
      %v5081 = vadd.f32 %v4532, %v5012
      %v5082 = vadd.f32 %v4533, %v5015
      %s5083 = scalar_lea.vmem %s3, 40
      %v5084 = vld [vmem:[%s5083] sm:$0x3f]
      %v5088 = vrot.slane %v2519, 1
      %v5089 = vsel %vm2601, %v2731, %v5088
      %v5090 = vrot.slane %v2520, 1
      %v5091 = vsel %vm2601, %v5088, %v5090
      %v5092 = vrot.slane %v2521, 1
      %v5093 = vsel %vm2601, %v5090, %v5092
      %v5094 = vsel %vm2733, %v5089, 0
      %v5096 = vsel %vm2733, %v5091, 0
      %v5098 = vsel %vm2733, %v5093, 0
      %v5100 = vsel %vm2733, %v5092, 0
      %v5103 = vsel %vm2866, %v5084, 0
      %5105 = vmatpush.msra.mxu0 0.0
      %5106 = vmatpush.msra.mxu0 0.0
      %5107 = vmatpush.msra.mxu0 0.0
      %5108 = vmatpush.msra.mxu0 0.0
      %5109 = vmatpush.msra.mxu0 0.0
      %5110 = vmatpush.msra.mxu0 0.0
      %5111 = vmatpush.msra.mxu0 0.0
      %5112 = vmatpush.msra.mxu0 0.0
      %5113 = vmatpush.msra.mxu0 0.0
      %5114 = vmatpush.msra.mxu0 0.0
      %5115 = vmatpush.msra.mxu0 0.0
      %5116 = vmatpush.msra.mxu0 0.0
      %5117 = vmatpush.msra.mxu0 0.0
      %5118 = vmatpush.msra.mxu0 0.0
      %5119 = vmatpush.msra.mxu0 0.0
      %5120 = vmatpush.msra.mxu0 %v5103
      %5121 = vmatmul.f32.gmra.mxu0 %v2740
      %v5122 = vpop.f32.mrf.mxu0
      %v5123 = vadd.f32 0.0, %v5122
      %5124 = vmatmul.f32.gmra.mxu0 %v2742
      %v5125 = vpop.f32.mrf.mxu0
      %v5126 = vadd.f32 0.0, %v5125
      %5127 = vmatmul.f32.gmra.mxu0 %v2744
      %v5128 = vpop.f32.mrf.mxu0
      %v5129 = vadd.f32 0.0, %v5128
      %5130 = vmatmul.f32.gmra.mxu0 %v2746
      %v5131 = vpop.f32.mrf.mxu0
      %v5132 = vadd.f32 0.0, %v5131
      %5133 = vmatmul.f32.gmra.mxu0 %v2748
      %v5134 = vpop.f32.mrf.mxu0
      %v5135 = vadd.f32 0.0, %v5134
      %5136 = vmatmul.f32.gmra.mxu0 %v2750
      %v5137 = vpop.f32.mrf.mxu0
      %v5138 = vadd.f32 0.0, %v5137
      %5139 = vmatmul.f32.gmra.mxu0 %v2752
      %v5140 = vpop.f32.mrf.mxu0
      %v5141 = vadd.f32 0.0, %v5140
      %5142 = vmatmul.f32.gmra.mxu0 %v2754
      %v5143 = vpop.f32.mrf.mxu0
      %v5144 = vadd.f32 0.0, %v5143
      %5145 = vmatmul.f32.gmra.mxu0 %v2756
      %v5146 = vpop.f32.mrf.mxu0
      %v5147 = vadd.f32 0.0, %v5146
      %5148 = vmatmul.f32.gmra.mxu0 %v2758
      %v5149 = vpop.f32.mrf.mxu0
      %v5150 = vadd.f32 0.0, %v5149
      %5151 = vmatmul.f32.gmra.mxu0 %v2760
      %v5152 = vpop.f32.mrf.mxu0
      %v5153 = vadd.f32 0.0, %v5152
      %5154 = vmatmul.f32.gmra.mxu0 %v2762
      %v5155 = vpop.f32.mrf.mxu0
      %v5156 = vadd.f32 0.0, %v5155
      %5157 = vmatmul.f32.gmra.mxu0 %v2764
      %v5158 = vpop.f32.mrf.mxu0
      %v5159 = vadd.f32 0.0, %v5158
      %5160 = vmatmul.f32.gmra.mxu0 %v2766
      %v5161 = vpop.f32.mrf.mxu0
      %v5162 = vadd.f32 0.0, %v5161
      %5163 = vmatmul.f32.gmra.mxu0 %v2768
      %v5164 = vpop.f32.mrf.mxu0
      %v5165 = vadd.f32 0.0, %v5164
      %5166 = vmatmul.f32.gmra.mxu0 %v2770
      %v5167 = vpop.f32.mrf.mxu0
      %v5168 = vadd.f32 0.0, %v5167
      %5169 = vmatmul.f32.gmra.mxu0 %v2772
      %v5170 = vpop.f32.mrf.mxu0
      %v5171 = vadd.f32 0.0, %v5170
      %5172 = vmatmul.f32.gmra.mxu0 %v2774
      %v5173 = vpop.f32.mrf.mxu0
      %v5174 = vadd.f32 0.0, %v5173
      %5175 = vmatmul.f32.gmra.mxu0 %v2776
      %v5176 = vpop.f32.mrf.mxu0
      %v5177 = vadd.f32 0.0, %v5176
      %5178 = vmatmul.f32.gmra.mxu0 %v2778
      %v5179 = vpop.f32.mrf.mxu0
      %v5180 = vadd.f32 0.0, %v5179
      %5181 = vmatmul.f32.gmra.mxu0 %v2780
      %v5182 = vpop.f32.mrf.mxu0
      %v5183 = vadd.f32 0.0, %v5182
      %5184 = vmatmul.f32.gmra.mxu0 %v2782
      %v5185 = vpop.f32.mrf.mxu0
      %v5186 = vadd.f32 0.0, %v5185
      %5187 = vmatmul.f32.gmra.mxu0 %v2784
      %v5188 = vpop.f32.mrf.mxu0
      %v5189 = vadd.f32 0.0, %v5188
      %5190 = vmatmul.f32.gmra.mxu0 %v2786
      %v5191 = vpop.f32.mrf.mxu0
      %v5192 = vadd.f32 0.0, %v5191
      %5193 = vmatmul.f32.gmra.mxu0 %v2788
      %v5194 = vpop.f32.mrf.mxu0
      %v5195 = vadd.f32 0.0, %v5194
      %5196 = vmatmul.f32.gmra.mxu0 %v2790
      %v5197 = vpop.f32.mrf.mxu0
      %v5198 = vadd.f32 0.0, %v5197
      %5199 = vmatmul.f32.gmra.mxu0 %v2792
      %v5200 = vpop.f32.mrf.mxu0
      %v5201 = vadd.f32 0.0, %v5200
      %5202 = vmatmul.f32.gmra.mxu0 %v2794
      %v5203 = vpop.f32.mrf.mxu0
      %v5204 = vadd.f32 0.0, %v5203
      %5205 = vmatmul.f32.gmra.mxu0 %v2796
      %v5206 = vpop.f32.mrf.mxu0
      %v5207 = vadd.f32 0.0, %v5206
      %5208 = vmatmul.f32.gmra.mxu0 %v2798
      %v5209 = vpop.f32.mrf.mxu0
      %v5210 = vadd.f32 0.0, %v5209
      %5211 = vmatmul.f32.gmra.mxu0 %v2800
      %v5212 = vpop.f32.mrf.mxu0
      %v5213 = vadd.f32 0.0, %v5212
      %5214 = vmatmul.f32.gmra.mxu0 %v2802
      %v5215 = vpop.f32.mrf.mxu0
      %v5216 = vadd.f32 0.0, %v5215
      %5217 = vmatmul.f32.gmra.mxu0 %v2804
      %v5218 = vpop.f32.mrf.mxu0
      %v5219 = vadd.f32 0.0, %v5218
      %5220 = vmatmul.f32.gmra.mxu0 %v2806
      %v5221 = vpop.f32.mrf.mxu0
      %v5222 = vadd.f32 0.0, %v5221
      %5223 = vmatmul.f32.gmra.mxu0 %v2808
      %v5224 = vpop.f32.mrf.mxu0
      %v5225 = vadd.f32 0.0, %v5224
      %5226 = vmatmul.f32.gmra.mxu0 %v2810
      %v5227 = vpop.f32.mrf.mxu0
      %v5228 = vadd.f32 0.0, %v5227
      %5229 = vmatmul.f32.gmra.mxu0 %v2812
      %v5230 = vpop.f32.mrf.mxu0
      %v5231 = vadd.f32 0.0, %v5230
      %5232 = vmatmul.f32.gmra.mxu0 %v2814
      %v5233 = vpop.f32.mrf.mxu0
      %v5234 = vadd.f32 0.0, %v5233
      %5235 = vmatmul.f32.gmra.mxu0 %v2816
      %v5236 = vpop.f32.mrf.mxu0
      %v5237 = vadd.f32 0.0, %v5236
      %5238 = vmatmul.f32.gmra.mxu0 %v2818
      %v5239 = vpop.f32.mrf.mxu0
      %v5240 = vadd.f32 0.0, %v5239
      %5241 = vmatmul.f32.gmra.mxu0 %v2820
      %v5242 = vpop.f32.mrf.mxu0
      %v5243 = vadd.f32 0.0, %v5242
      %5244 = vmatmul.f32.gmra.mxu0 %v2822
      %v5245 = vpop.f32.mrf.mxu0
      %v5246 = vadd.f32 0.0, %v5245
      %5247 = vmatmul.f32.gmra.mxu0 %v2824
      %v5248 = vpop.f32.mrf.mxu0
      %v5249 = vadd.f32 0.0, %v5248
      %5250 = vmatmul.f32.gmra.mxu0 %v2826
      %v5251 = vpop.f32.mrf.mxu0
      %v5252 = vadd.f32 0.0, %v5251
      %5253 = vmatmul.f32.gmra.mxu0 %v2828
      %v5254 = vpop.f32.mrf.mxu0
      %v5255 = vadd.f32 0.0, %v5254
      %5256 = vmatmul.f32.gmra.mxu0 %v2830
      %v5257 = vpop.f32.mrf.mxu0
      %v5258 = vadd.f32 0.0, %v5257
      %5259 = vmatmul.f32.gmra.mxu0 %v2832
      %v5260 = vpop.f32.mrf.mxu0
      %v5261 = vadd.f32 0.0, %v5260
      %5262 = vmatmul.f32.gmra.mxu0 %v2834
      %v5263 = vpop.f32.mrf.mxu0
      %v5264 = vadd.f32 0.0, %v5263
      %5265 = vmatmul.f32.gmra.mxu0 %v2836
      %v5266 = vpop.f32.mrf.mxu0
      %v5267 = vadd.f32 0.0, %v5266
      %5268 = vmatmul.f32.gmra.mxu0 %v2838
      %v5269 = vpop.f32.mrf.mxu0
      %v5270 = vadd.f32 0.0, %v5269
      %5271 = vmatmul.f32.gmra.mxu0 %v2840
      %v5272 = vpop.f32.mrf.mxu0
      %v5273 = vadd.f32 0.0, %v5272
      %5274 = vmatmul.f32.gmra.mxu0 %v2842
      %v5275 = vpop.f32.mrf.mxu0
      %v5276 = vadd.f32 0.0, %v5275
      %5277 = vmatmul.f32.gmra.mxu0 %v2844
      %v5278 = vpop.f32.mrf.mxu0
      %v5279 = vadd.f32 0.0, %v5278
      %5280 = vmatmul.f32.gmra.mxu0 %v2846
      %v5281 = vpop.f32.mrf.mxu0
      %v5282 = vadd.f32 0.0, %v5281
      %5283 = vmatmul.f32.gmra.mxu0 %v2848
      %v5284 = vpop.f32.mrf.mxu0
      %v5285 = vadd.f32 0.0, %v5284
      %5286 = vmatmul.f32.gmra.mxu0 %v2850
      %v5287 = vpop.f32.mrf.mxu0
      %v5288 = vadd.f32 0.0, %v5287
      %5289 = vmatmul.f32.gmra.mxu0 %v2852
      %v5290 = vpop.f32.mrf.mxu0
      %v5291 = vadd.f32 0.0, %v5290
      %5292 = vmatmul.f32.gmra.mxu0 %v2854
      %v5293 = vpop.f32.mrf.mxu0
      %v5294 = vadd.f32 0.0, %v5293
      %5295 = vmatmul.f32.gmra.mxu0 %v2856
      %v5296 = vpop.f32.mrf.mxu0
      %v5297 = vadd.f32 0.0, %v5296
      %5298 = vmatmul.f32.gmra.mxu0 %v2858
      %v5299 = vpop.f32.mrf.mxu0
      %v5300 = vadd.f32 0.0, %v5299
      %5301 = vmatmul.f32.gmra.mxu0 %v2860
      %v5302 = vpop.f32.mrf.mxu0
      %v5303 = vadd.f32 0.0, %v5302
      %5304 = vmatmul.f32.gmra.mxu0 %v2862
      %v5305 = vpop.f32.mrf.mxu0
      %v5306 = vadd.f32 0.0, %v5305
      %5307 = vmatmul.f32.gmra.mxu0 %v5094
      %v5308 = vpop.f32.mrf.mxu0
      %v5309 = vadd.f32 0.0, %v5308
      %5310 = vmatmul.f32.gmra.mxu0 %v5096
      %v5311 = vpop.f32.mrf.mxu0
      %v5312 = vadd.f32 0.0, %v5311
      %5313 = vmatmul.f32.gmra.mxu0 %v5098
      %v5314 = vpop.f32.mrf.mxu0
      %v5315 = vadd.f32 0.0, %v5314
      %5316 = vmatmul.f32.gmra.mxu0 %v5100
      %v5317 = vpop.f32.mrf.mxu0
      %v5318 = vadd.f32 0.0, %v5317
      %5319 = vdwg.mxu0
      %v5320 = vadd.f32 %v5017, %v5123
      %v5321 = vadd.f32 %v5018, %v5126
      %v5322 = vadd.f32 %v5019, %v5129
      %v5323 = vadd.f32 %v5020, %v5132
      %v5324 = vadd.f32 %v5021, %v5135
      %v5325 = vadd.f32 %v5022, %v5138
      %v5326 = vadd.f32 %v5023, %v5141
      %v5327 = vadd.f32 %v5024, %v5144
      %v5328 = vadd.f32 %v5025, %v5147
      %v5329 = vadd.f32 %v5026, %v5150
      %v5330 = vadd.f32 %v5027, %v5153
      %v5331 = vadd.f32 %v5028, %v5156
      %v5332 = vadd.f32 %v5029, %v5159
      %v5333 = vadd.f32 %v5030, %v5162
      %v5334 = vadd.f32 %v5031, %v5165
      %v5335 = vadd.f32 %v5032, %v5168
      %v5336 = vadd.f32 %v5033, %v5171
      %v5337 = vadd.f32 %v5034, %v5174
      %v5338 = vadd.f32 %v5035, %v5177
      %v5339 = vadd.f32 %v5036, %v5180
      %v5340 = vadd.f32 %v5037, %v5183
      %v5341 = vadd.f32 %v5038, %v5186
      %v5342 = vadd.f32 %v5039, %v5189
      %v5343 = vadd.f32 %v5040, %v5192
      %v5344 = vadd.f32 %v5041, %v5195
      %v5345 = vadd.f32 %v5042, %v5198
      %v5346 = vadd.f32 %v5043, %v5201
      %v5347 = vadd.f32 %v5044, %v5204
      %v5348 = vadd.f32 %v5045, %v5207
      %v5349 = vadd.f32 %v5046, %v5210
      %v5350 = vadd.f32 %v5047, %v5213
      %v5351 = vadd.f32 %v5048, %v5216
      %v5352 = vadd.f32 %v5049, %v5219
      %v5353 = vadd.f32 %v5050, %v5222
      %v5354 = vadd.f32 %v5051, %v5225
      %v5355 = vadd.f32 %v5052, %v5228
      %v5356 = vadd.f32 %v5053, %v5231
      %v5357 = vadd.f32 %v5054, %v5234
      %v5358 = vadd.f32 %v5055, %v5237
      %v5359 = vadd.f32 %v5056, %v5240
      %v5360 = vadd.f32 %v5057, %v5243
      %v5361 = vadd.f32 %v5058, %v5246
      %v5362 = vadd.f32 %v5059, %v5249
      %v5363 = vadd.f32 %v5060, %v5252
      %v5364 = vadd.f32 %v5061, %v5255
      %v5365 = vadd.f32 %v5062, %v5258
      %v5366 = vadd.f32 %v5063, %v5261
      %v5367 = vadd.f32 %v5064, %v5264
      %v5368 = vadd.f32 %v5065, %v5267
      %v5369 = vadd.f32 %v5066, %v5270
      %v5370 = vadd.f32 %v5067, %v5273
      %v5371 = vadd.f32 %v5068, %v5276
      %v5372 = vadd.f32 %v5069, %v5279
      %v5373 = vadd.f32 %v5070, %v5282
      %v5374 = vadd.f32 %v5071, %v5285
      %v5375 = vadd.f32 %v5072, %v5288
      %v5376 = vadd.f32 %v5073, %v5291
      %v5377 = vadd.f32 %v5074, %v5294
      %v5378 = vadd.f32 %v5075, %v5297
      %v5379 = vadd.f32 %v5076, %v5300
      %v5380 = vadd.f32 %v5077, %v5303
      %v5381 = vadd.f32 %v5078, %v5306
      %v5382 = vadd.f32 %v5079, %v5309
      %v5383 = vadd.f32 %v5080, %v5312
      %v5384 = vadd.f32 %v5081, %v5315
      %v5385 = vadd.f32 %v5082, %v5318
      %s5386 = scalar_lea.vmem %s3, 48
      %v5387 = vld [vmem:[%s5386] sm:$0x3f]
      %v5388 = vrot.slane %v2519, 2
      %v5389 = vsel %vm2866, %v3566, %v5388
      %v5390 = vrot.slane %v2520, 2
      %v5391 = vsel %vm2866, %v5388, %v5390
      %v5392 = vrot.slane %v2521, 2
      %v5393 = vsel %vm2866, %v5390, %v5392
      %v5394 = vsel %vm2733, %v5389, 0
      %v5396 = vsel %vm2733, %v5391, 0
      %v5398 = vsel %vm2733, %v5393, 0
      %v5400 = vsel %vm2733, %v5392, 0
      %v5403 = vsel %vm2866, %v5387, 0
      %5405 = vmatpush.msra.mxu0 0.0
      %5406 = vmatpush.msra.mxu0 0.0
      %5407 = vmatpush.msra.mxu0 0.0
      %5408 = vmatpush.msra.mxu0 0.0
      %5409 = vmatpush.msra.mxu0 0.0
      %5410 = vmatpush.msra.mxu0 0.0
      %5411 = vmatpush.msra.mxu0 0.0
      %5412 = vmatpush.msra.mxu0 0.0
      %5413 = vmatpush.msra.mxu0 0.0
      %5414 = vmatpush.msra.mxu0 0.0
      %5415 = vmatpush.msra.mxu0 0.0
      %5416 = vmatpush.msra.mxu0 0.0
      %5417 = vmatpush.msra.mxu0 0.0
      %5418 = vmatpush.msra.mxu0 0.0
      %5419 = vmatpush.msra.mxu0 0.0
      %5420 = vmatpush.msra.mxu0 %v5403
      %5421 = vmatmul.f32.gmra.mxu0 %v3574
      %v5422 = vpop.f32.mrf.mxu0
      %v5423 = vadd.f32 0.0, %v5422
      %5424 = vmatmul.f32.gmra.mxu0 %v3576
      %v5425 = vpop.f32.mrf.mxu0
      %v5426 = vadd.f32 0.0, %v5425
      %5427 = vmatmul.f32.gmra.mxu0 %v3578
      %v5428 = vpop.f32.mrf.mxu0
      %v5429 = vadd.f32 0.0, %v5428
      %5430 = vmatmul.f32.gmra.mxu0 %v3580
      %v5431 = vpop.f32.mrf.mxu0
      %v5432 = vadd.f32 0.0, %v5431
      %5433 = vmatmul.f32.gmra.mxu0 %v3582
      %v5434 = vpop.f32.mrf.mxu0
      %v5435 = vadd.f32 0.0, %v5434
      %5436 = vmatmul.f32.gmra.mxu0 %v3584
      %v5437 = vpop.f32.mrf.mxu0
      %v5438 = vadd.f32 0.0, %v5437
      %5439 = vmatmul.f32.gmra.mxu0 %v3586
      %v5440 = vpop.f32.mrf.mxu0
      %v5441 = vadd.f32 0.0, %v5440
      %5442 = vmatmul.f32.gmra.mxu0 %v3588
      %v5443 = vpop.f32.mrf.mxu0
      %v5444 = vadd.f32 0.0, %v5443
      %5445 = vmatmul.f32.gmra.mxu0 %v3590
      %v5446 = vpop.f32.mrf.mxu0
      %v5447 = vadd.f32 0.0, %v5446
      %5448 = vmatmul.f32.gmra.mxu0 %v3592
      %v5449 = vpop.f32.mrf.mxu0
      %v5450 = vadd.f32 0.0, %v5449
      %5451 = vmatmul.f32.gmra.mxu0 %v3594
      %v5452 = vpop.f32.mrf.mxu0
      %v5453 = vadd.f32 0.0, %v5452
      %5454 = vmatmul.f32.gmra.mxu0 %v3596
      %v5455 = vpop.f32.mrf.mxu0
      %v5456 = vadd.f32 0.0, %v5455
      %5457 = vmatmul.f32.gmra.mxu0 %v3598
      %v5458 = vpop.f32.mrf.mxu0
      %v5459 = vadd.f32 0.0, %v5458
      %5460 = vmatmul.f32.gmra.mxu0 %v3600
      %v5461 = vpop.f32.mrf.mxu0
      %v5462 = vadd.f32 0.0, %v5461
      %5463 = vmatmul.f32.gmra.mxu0 %v3602
      %v5464 = vpop.f32.mrf.mxu0
      %v5465 = vadd.f32 0.0, %v5464
      %5466 = vmatmul.f32.gmra.mxu0 %v3604
      %v5467 = vpop.f32.mrf.mxu0
      %v5468 = vadd.f32 0.0, %v5467
      %5469 = vmatmul.f32.gmra.mxu0 %v3606
      %v5470 = vpop.f32.mrf.mxu0
      %v5471 = vadd.f32 0.0, %v5470
      %5472 = vmatmul.f32.gmra.mxu0 %v3608
      %v5473 = vpop.f32.mrf.mxu0
      %v5474 = vadd.f32 0.0, %v5473
      %5475 = vmatmul.f32.gmra.mxu0 %v3610
      %v5476 = vpop.f32.mrf.mxu0
      %v5477 = vadd.f32 0.0, %v5476
      %5478 = vmatmul.f32.gmra.mxu0 %v3612
      %v5479 = vpop.f32.mrf.mxu0
      %v5480 = vadd.f32 0.0, %v5479
      %5481 = vmatmul.f32.gmra.mxu0 %v3614
      %v5482 = vpop.f32.mrf.mxu0
      %v5483 = vadd.f32 0.0, %v5482
      %5484 = vmatmul.f32.gmra.mxu0 %v3616
      %v5485 = vpop.f32.mrf.mxu0
      %v5486 = vadd.f32 0.0, %v5485
      %5487 = vmatmul.f32.gmra.mxu0 %v3618
      %v5488 = vpop.f32.mrf.mxu0
      %v5489 = vadd.f32 0.0, %v5488
      %5490 = vmatmul.f32.gmra.mxu0 %v3620
      %v5491 = vpop.f32.mrf.mxu0
      %v5492 = vadd.f32 0.0, %v5491
      %5493 = vmatmul.f32.gmra.mxu0 %v3622
      %v5494 = vpop.f32.mrf.mxu0
      %v5495 = vadd.f32 0.0, %v5494
      %5496 = vmatmul.f32.gmra.mxu0 %v3624
      %v5497 = vpop.f32.mrf.mxu0
      %v5498 = vadd.f32 0.0, %v5497
      %5499 = vmatmul.f32.gmra.mxu0 %v3626
      %v5500 = vpop.f32.mrf.mxu0
      %v5501 = vadd.f32 0.0, %v5500
      %5502 = vmatmul.f32.gmra.mxu0 %v3628
      %v5503 = vpop.f32.mrf.mxu0
      %v5504 = vadd.f32 0.0, %v5503
      %5505 = vmatmul.f32.gmra.mxu0 %v3630
      %v5506 = vpop.f32.mrf.mxu0
      %v5507 = vadd.f32 0.0, %v5506
      %5508 = vmatmul.f32.gmra.mxu0 %v3632
      %v5509 = vpop.f32.mrf.mxu0
      %v5510 = vadd.f32 0.0, %v5509
      %5511 = vmatmul.f32.gmra.mxu0 %v3634
      %v5512 = vpop.f32.mrf.mxu0
      %v5513 = vadd.f32 0.0, %v5512
      %5514 = vmatmul.f32.gmra.mxu0 %v3636
      %v5515 = vpop.f32.mrf.mxu0
      %v5516 = vadd.f32 0.0, %v5515
      %5517 = vmatmul.f32.gmra.mxu0 %v3638
      %v5518 = vpop.f32.mrf.mxu0
      %v5519 = vadd.f32 0.0, %v5518
      %5520 = vmatmul.f32.gmra.mxu0 %v3640
      %v5521 = vpop.f32.mrf.mxu0
      %v5522 = vadd.f32 0.0, %v5521
      %5523 = vmatmul.f32.gmra.mxu0 %v3642
      %v5524 = vpop.f32.mrf.mxu0
      %v5525 = vadd.f32 0.0, %v5524
      %5526 = vmatmul.f32.gmra.mxu0 %v3644
      %v5527 = vpop.f32.mrf.mxu0
      %v5528 = vadd.f32 0.0, %v5527
      %5529 = vmatmul.f32.gmra.mxu0 %v3646
      %v5530 = vpop.f32.mrf.mxu0
      %v5531 = vadd.f32 0.0, %v5530
      %5532 = vmatmul.f32.gmra.mxu0 %v3648
      %v5533 = vpop.f32.mrf.mxu0
      %v5534 = vadd.f32 0.0, %v5533
      %5535 = vmatmul.f32.gmra.mxu0 %v3650
      %v5536 = vpop.f32.mrf.mxu0
      %v5537 = vadd.f32 0.0, %v5536
      %5538 = vmatmul.f32.gmra.mxu0 %v3652
      %v5539 = vpop.f32.mrf.mxu0
      %v5540 = vadd.f32 0.0, %v5539
      %5541 = vmatmul.f32.gmra.mxu0 %v3654
      %v5542 = vpop.f32.mrf.mxu0
      %v5543 = vadd.f32 0.0, %v5542
      %5544 = vmatmul.f32.gmra.mxu0 %v3656
      %v5545 = vpop.f32.mrf.mxu0
      %v5546 = vadd.f32 0.0, %v5545
      %5547 = vmatmul.f32.gmra.mxu0 %v3658
      %v5548 = vpop.f32.mrf.mxu0
      %v5549 = vadd.f32 0.0, %v5548
      %5550 = vmatmul.f32.gmra.mxu0 %v3660
      %v5551 = vpop.f32.mrf.mxu0
      %v5552 = vadd.f32 0.0, %v5551
      %5553 = vmatmul.f32.gmra.mxu0 %v3662
      %v5554 = vpop.f32.mrf.mxu0
      %v5555 = vadd.f32 0.0, %v5554
      %5556 = vmatmul.f32.gmra.mxu0 %v3664
      %v5557 = vpop.f32.mrf.mxu0
      %v5558 = vadd.f32 0.0, %v5557
      %5559 = vmatmul.f32.gmra.mxu0 %v3666
      %v5560 = vpop.f32.mrf.mxu0
      %v5561 = vadd.f32 0.0, %v5560
      %5562 = vmatmul.f32.gmra.mxu0 %v3668
      %v5563 = vpop.f32.mrf.mxu0
      %v5564 = vadd.f32 0.0, %v5563
      %5565 = vmatmul.f32.gmra.mxu0 %v3670
      %v5566 = vpop.f32.mrf.mxu0
      %v5567 = vadd.f32 0.0, %v5566
      %5568 = vmatmul.f32.gmra.mxu0 %v3672
      %v5569 = vpop.f32.mrf.mxu0
      %v5570 = vadd.f32 0.0, %v5569
      %5571 = vmatmul.f32.gmra.mxu0 %v3674
      %v5572 = vpop.f32.mrf.mxu0
      %v5573 = vadd.f32 0.0, %v5572
      %5574 = vmatmul.f32.gmra.mxu0 %v3676
      %v5575 = vpop.f32.mrf.mxu0
      %v5576 = vadd.f32 0.0, %v5575
      %5577 = vmatmul.f32.gmra.mxu0 %v3678
      %v5578 = vpop.f32.mrf.mxu0
      %v5579 = vadd.f32 0.0, %v5578
      %5580 = vmatmul.f32.gmra.mxu0 %v3680
      %v5581 = vpop.f32.mrf.mxu0
      %v5582 = vadd.f32 0.0, %v5581
      %5583 = vmatmul.f32.gmra.mxu0 %v3682
      %v5584 = vpop.f32.mrf.mxu0
      %v5585 = vadd.f32 0.0, %v5584
      %5586 = vmatmul.f32.gmra.mxu0 %v3684
      %v5587 = vpop.f32.mrf.mxu0
      %v5588 = vadd.f32 0.0, %v5587
      %5589 = vmatmul.f32.gmra.mxu0 %v3686
      %v5590 = vpop.f32.mrf.mxu0
      %v5591 = vadd.f32 0.0, %v5590
      %5592 = vmatmul.f32.gmra.mxu0 %v3688
      %v5593 = vpop.f32.mrf.mxu0
      %v5594 = vadd.f32 0.0, %v5593
      %5595 = vmatmul.f32.gmra.mxu0 %v3690
      %v5596 = vpop.f32.mrf.mxu0
      %v5597 = vadd.f32 0.0, %v5596
      %5598 = vmatmul.f32.gmra.mxu0 %v3692
      %v5599 = vpop.f32.mrf.mxu0
      %v5600 = vadd.f32 0.0, %v5599
      %5601 = vmatmul.f32.gmra.mxu0 %v3694
      %v5602 = vpop.f32.mrf.mxu0
      %v5603 = vadd.f32 0.0, %v5602
      %5604 = vmatmul.f32.gmra.mxu0 %v3696
      %v5605 = vpop.f32.mrf.mxu0
      %v5606 = vadd.f32 0.0, %v5605
      %5607 = vmatmul.f32.gmra.mxu0 %v5394
      %v5608 = vpop.f32.mrf.mxu0
      %v5609 = vadd.f32 0.0, %v5608
      %5610 = vmatmul.f32.gmra.mxu0 %v5396
      %v5611 = vpop.f32.mrf.mxu0
      %v5612 = vadd.f32 0.0, %v5611
      %5613 = vmatmul.f32.gmra.mxu0 %v5398
      %v5614 = vpop.f32.mrf.mxu0
      %v5615 = vadd.f32 0.0, %v5614
      %5616 = vmatmul.f32.gmra.mxu0 %v5400
      %v5617 = vpop.f32.mrf.mxu0
      %v5618 = vadd.f32 0.0, %v5617
      %5619 = vdwg.mxu0
      %v5620 = vadd.f32 %v5320, %v5423
      %v5621 = vadd.f32 %v5321, %v5426
      %v5622 = vadd.f32 %v5322, %v5429
      %v5623 = vadd.f32 %v5323, %v5432
      %v5624 = vadd.f32 %v5324, %v5435
      %v5625 = vadd.f32 %v5325, %v5438
      %v5626 = vadd.f32 %v5326, %v5441
      %v5627 = vadd.f32 %v5327, %v5444
      %v5628 = vadd.f32 %v5328, %v5447
      %v5629 = vadd.f32 %v5329, %v5450
      %v5630 = vadd.f32 %v5330, %v5453
      %v5631 = vadd.f32 %v5331, %v5456
      %v5632 = vadd.f32 %v5332, %v5459
      %v5633 = vadd.f32 %v5333, %v5462
      %v5634 = vadd.f32 %v5334, %v5465
      %v5635 = vadd.f32 %v5335, %v5468
      %v5636 = vadd.f32 %v5336, %v5471
      %v5637 = vadd.f32 %v5337, %v5474
      %v5638 = vadd.f32 %v5338, %v5477
      %v5639 = vadd.f32 %v5339, %v5480
      %v5640 = vadd.f32 %v5340, %v5483
      %v5641 = vadd.f32 %v5341, %v5486
      %v5642 = vadd.f32 %v5342, %v5489
      %v5643 = vadd.f32 %v5343, %v5492
      %v5644 = vadd.f32 %v5344, %v5495
      %v5645 = vadd.f32 %v5345, %v5498
      %v5646 = vadd.f32 %v5346, %v5501
      %v5647 = vadd.f32 %v5347, %v5504
      %v5648 = vadd.f32 %v5348, %v5507
      %v5649 = vadd.f32 %v5349, %v5510
      %v5650 = vadd.f32 %v5350, %v5513
      %v5651 = vadd.f32 %v5351, %v5516
      %v5652 = vadd.f32 %v5352, %v5519
      %v5653 = vadd.f32 %v5353, %v5522
      %v5654 = vadd.f32 %v5354, %v5525
      %v5655 = vadd.f32 %v5355, %v5528
      %v5656 = vadd.f32 %v5356, %v5531
      %v5657 = vadd.f32 %v5357, %v5534
      %v5658 = vadd.f32 %v5358, %v5537
      %v5659 = vadd.f32 %v5359, %v5540
      %v5660 = vadd.f32 %v5360, %v5543
      %v5661 = vadd.f32 %v5361, %v5546
      %v5662 = vadd.f32 %v5362, %v5549
      %v5663 = vadd.f32 %v5363, %v5552
      %v5664 = vadd.f32 %v5364, %v5555
      %v5665 = vadd.f32 %v5365, %v5558
      %v5666 = vadd.f32 %v5366, %v5561
      %v5667 = vadd.f32 %v5367, %v5564
      %v5668 = vadd.f32 %v5368, %v5567
      %v5669 = vadd.f32 %v5369, %v5570
      %v5670 = vadd.f32 %v5370, %v5573
      %v5671 = vadd.f32 %v5371, %v5576
      %v5672 = vadd.f32 %v5372, %v5579
      %v5673 = vadd.f32 %v5373, %v5582
      %v5674 = vadd.f32 %v5374, %v5585
      %v5675 = vadd.f32 %v5375, %v5588
      %v5676 = vadd.f32 %v5376, %v5591
      %v5677 = vadd.f32 %v5377, %v5594
      %v5678 = vadd.f32 %v5378, %v5597
      %v5679 = vadd.f32 %v5379, %v5600
      %v5680 = vadd.f32 %v5380, %v5603
      %v5681 = vadd.f32 %v5381, %v5606
      %v5682 = vadd.f32 %v5382, %v5609
      %v5683 = vadd.f32 %v5383, %v5612
      %v5684 = vadd.f32 %v5384, %v5615
      %v5685 = vadd.f32 %v5385, %v5618
      %s5686 = scalar_lea.vmem %s3, 56
      %v5687 = vld [vmem:[%s5686] sm:$0x3f]
      %v5688 = vrot.slane %v2519, 3
      %v5689 = vsel %vm3986, %v4116, %v5688
      %v5690 = vrot.slane %v2520, 3
      %v5691 = vsel %vm3986, %v5688, %v5690
      %v5692 = vrot.slane %v2521, 3
      %v5693 = vsel %vm3986, %v5690, %v5692
      %v5694 = vsel %vm2733, %v5689, 0
      %v5696 = vsel %vm2733, %v5691, 0
      %v5698 = vsel %vm2733, %v5693, 0
      %v5700 = vsel %vm2733, %v5692, 0
      %v5703 = vsel %vm2866, %v5687, 0
      %5705 = vmatpush.msra.mxu0 0.0
      %5706 = vmatpush.msra.mxu0 0.0
      %5707 = vmatpush.msra.mxu0 0.0
      %5708 = vmatpush.msra.mxu0 0.0
      %5709 = vmatpush.msra.mxu0 0.0
      %5710 = vmatpush.msra.mxu0 0.0
      %5711 = vmatpush.msra.mxu0 0.0
      %5712 = vmatpush.msra.mxu0 0.0
      %5713 = vmatpush.msra.mxu0 0.0
      %5714 = vmatpush.msra.mxu0 0.0
      %5715 = vmatpush.msra.mxu0 0.0
      %5716 = vmatpush.msra.mxu0 0.0
      %5717 = vmatpush.msra.mxu0 0.0
      %5718 = vmatpush.msra.mxu0 0.0
      %5719 = vmatpush.msra.mxu0 0.0
      %5720 = vmatpush.msra.mxu0 %v5703
      %5721 = vmatmul.f32.gmra.mxu0 %v4124
      %v5722 = vpop.f32.mrf.mxu0
      %v5723 = vadd.f32 0.0, %v5722
      %5724 = vmatmul.f32.gmra.mxu0 %v4126
      %v5725 = vpop.f32.mrf.mxu0
      %v5726 = vadd.f32 0.0, %v5725
      %5727 = vmatmul.f32.gmra.mxu0 %v4128
      %v5728 = vpop.f32.mrf.mxu0
      %v5729 = vadd.f32 0.0, %v5728
      %5730 = vmatmul.f32.gmra.mxu0 %v4130
      %v5731 = vpop.f32.mrf.mxu0
      %v5732 = vadd.f32 0.0, %v5731
      %5733 = vmatmul.f32.gmra.mxu0 %v4132
      %v5734 = vpop.f32.mrf.mxu0
      %v5735 = vadd.f32 0.0, %v5734
      %5736 = vmatmul.f32.gmra.mxu0 %v4134
      %v5737 = vpop.f32.mrf.mxu0
      %v5738 = vadd.f32 0.0, %v5737
      %5739 = vmatmul.f32.gmra.mxu0 %v4136
      %v5740 = vpop.f32.mrf.mxu0
      %v5741 = vadd.f32 0.0, %v5740
      %5742 = vmatmul.f32.gmra.mxu0 %v4138
      %v5743 = vpop.f32.mrf.mxu0
      %v5744 = vadd.f32 0.0, %v5743
      %5745 = vmatmul.f32.gmra.mxu0 %v4140
      %v5746 = vpop.f32.mrf.mxu0
      %v5747 = vadd.f32 0.0, %v5746
      %5748 = vmatmul.f32.gmra.mxu0 %v4142
      %v5749 = vpop.f32.mrf.mxu0
      %v5750 = vadd.f32 0.0, %v5749
      %5751 = vmatmul.f32.gmra.mxu0 %v4144
      %v5752 = vpop.f32.mrf.mxu0
      %v5753 = vadd.f32 0.0, %v5752
      %5754 = vmatmul.f32.gmra.mxu0 %v4146
      %v5755 = vpop.f32.mrf.mxu0
      %v5756 = vadd.f32 0.0, %v5755
      %5757 = vmatmul.f32.gmra.mxu0 %v4148
      %v5758 = vpop.f32.mrf.mxu0
      %v5759 = vadd.f32 0.0, %v5758
      %5760 = vmatmul.f32.gmra.mxu0 %v4150
      %v5761 = vpop.f32.mrf.mxu0
      %v5762 = vadd.f32 0.0, %v5761
      %5763 = vmatmul.f32.gmra.mxu0 %v4152
      %v5764 = vpop.f32.mrf.mxu0
      %v5765 = vadd.f32 0.0, %v5764
      %5766 = vmatmul.f32.gmra.mxu0 %v4154
      %v5767 = vpop.f32.mrf.mxu0
      %v5768 = vadd.f32 0.0, %v5767
      %5769 = vmatmul.f32.gmra.mxu0 %v4156
      %v5770 = vpop.f32.mrf.mxu0
      %v5771 = vadd.f32 0.0, %v5770
      %5772 = vmatmul.f32.gmra.mxu0 %v4158
      %v5773 = vpop.f32.mrf.mxu0
      %v5774 = vadd.f32 0.0, %v5773
      %5775 = vmatmul.f32.gmra.mxu0 %v4160
      %v5776 = vpop.f32.mrf.mxu0
      %v5777 = vadd.f32 0.0, %v5776
      %5778 = vmatmul.f32.gmra.mxu0 %v4162
      %v5779 = vpop.f32.mrf.mxu0
      %v5780 = vadd.f32 0.0, %v5779
      %5781 = vmatmul.f32.gmra.mxu0 %v4164
      %v5782 = vpop.f32.mrf.mxu0
      %v5783 = vadd.f32 0.0, %v5782
      %5784 = vmatmul.f32.gmra.mxu0 %v4166
      %v5785 = vpop.f32.mrf.mxu0
      %v5786 = vadd.f32 0.0, %v5785
      %5787 = vmatmul.f32.gmra.mxu0 %v4168
      %v5788 = vpop.f32.mrf.mxu0
      %v5789 = vadd.f32 0.0, %v5788
      %5790 = vmatmul.f32.gmra.mxu0 %v4170
      %v5791 = vpop.f32.mrf.mxu0
      %v5792 = vadd.f32 0.0, %v5791
      %5793 = vmatmul.f32.gmra.mxu0 %v4172
      %v5794 = vpop.f32.mrf.mxu0
      %v5795 = vadd.f32 0.0, %v5794
      %5796 = vmatmul.f32.gmra.mxu0 %v4174
      %v5797 = vpop.f32.mrf.mxu0
      %v5798 = vadd.f32 0.0, %v5797
      %5799 = vmatmul.f32.gmra.mxu0 %v4176
      %v5800 = vpop.f32.mrf.mxu0
      %v5801 = vadd.f32 0.0, %v5800
      %5802 = vmatmul.f32.gmra.mxu0 %v4178
      %v5803 = vpop.f32.mrf.mxu0
      %v5804 = vadd.f32 0.0, %v5803
      %5805 = vmatmul.f32.gmra.mxu0 %v4180
      %v5806 = vpop.f32.mrf.mxu0
      %v5807 = vadd.f32 0.0, %v5806
      %5808 = vmatmul.f32.gmra.mxu0 %v4182
      %v5809 = vpop.f32.mrf.mxu0
      %v5810 = vadd.f32 0.0, %v5809
      %5811 = vmatmul.f32.gmra.mxu0 %v4184
      %v5812 = vpop.f32.mrf.mxu0
      %v5813 = vadd.f32 0.0, %v5812
      %5814 = vmatmul.f32.gmra.mxu0 %v4186
      %v5815 = vpop.f32.mrf.mxu0
      %v5816 = vadd.f32 0.0, %v5815
      %5817 = vmatmul.f32.gmra.mxu0 %v4188
      %v5818 = vpop.f32.mrf.mxu0
      %v5819 = vadd.f32 0.0, %v5818
      %5820 = vmatmul.f32.gmra.mxu0 %v4190
      %v5821 = vpop.f32.mrf.mxu0
      %v5822 = vadd.f32 0.0, %v5821
      %5823 = vmatmul.f32.gmra.mxu0 %v4192
      %v5824 = vpop.f32.mrf.mxu0
      %v5825 = vadd.f32 0.0, %v5824
      %5826 = vmatmul.f32.gmra.mxu0 %v4194
      %v5827 = vpop.f32.mrf.mxu0
      %v5828 = vadd.f32 0.0, %v5827
      %5829 = vmatmul.f32.gmra.mxu0 %v4196
      %v5830 = vpop.f32.mrf.mxu0
      %v5831 = vadd.f32 0.0, %v5830
      %5832 = vmatmul.f32.gmra.mxu0 %v4198
      %v5833 = vpop.f32.mrf.mxu0
      %v5834 = vadd.f32 0.0, %v5833
      %5835 = vmatmul.f32.gmra.mxu0 %v4200
      %v5836 = vpop.f32.mrf.mxu0
      %v5837 = vadd.f32 0.0, %v5836
      %5838 = vmatmul.f32.gmra.mxu0 %v4202
      %v5839 = vpop.f32.mrf.mxu0
      %v5840 = vadd.f32 0.0, %v5839
      %5841 = vmatmul.f32.gmra.mxu0 %v4204
      %v5842 = vpop.f32.mrf.mxu0
      %v5843 = vadd.f32 0.0, %v5842
      %5844 = vmatmul.f32.gmra.mxu0 %v4206
      %v5845 = vpop.f32.mrf.mxu0
      %v5846 = vadd.f32 0.0, %v5845
      %5847 = vmatmul.f32.gmra.mxu0 %v4208
      %v5848 = vpop.f32.mrf.mxu0
      %v5849 = vadd.f32 0.0, %v5848
      %5850 = vmatmul.f32.gmra.mxu0 %v4210
      %v5851 = vpop.f32.mrf.mxu0
      %v5852 = vadd.f32 0.0, %v5851
      %5853 = vmatmul.f32.gmra.mxu0 %v4212
      %v5854 = vpop.f32.mrf.mxu0
      %v5855 = vadd.f32 0.0, %v5854
      %5856 = vmatmul.f32.gmra.mxu0 %v4214
      %v5857 = vpop.f32.mrf.mxu0
      %v5858 = vadd.f32 0.0, %v5857
      %5859 = vmatmul.f32.gmra.mxu0 %v4216
      %v5860 = vpop.f32.mrf.mxu0
      %v5861 = vadd.f32 0.0, %v5860
      %5862 = vmatmul.f32.gmra.mxu0 %v4218
      %v5863 = vpop.f32.mrf.mxu0
      %v5864 = vadd.f32 0.0, %v5863
      %5865 = vmatmul.f32.gmra.mxu0 %v4220
      %v5866 = vpop.f32.mrf.mxu0
      %v5867 = vadd.f32 0.0, %v5866
      %5868 = vmatmul.f32.gmra.mxu0 %v4222
      %v5869 = vpop.f32.mrf.mxu0
      %v5870 = vadd.f32 0.0, %v5869
      %5871 = vmatmul.f32.gmra.mxu0 %v4224
      %v5872 = vpop.f32.mrf.mxu0
      %v5873 = vadd.f32 0.0, %v5872
      %5874 = vmatmul.f32.gmra.mxu0 %v4226
      %v5875 = vpop.f32.mrf.mxu0
      %v5876 = vadd.f32 0.0, %v5875
      %5877 = vmatmul.f32.gmra.mxu0 %v4228
      %v5878 = vpop.f32.mrf.mxu0
      %v5879 = vadd.f32 0.0, %v5878
      %5880 = vmatmul.f32.gmra.mxu0 %v4230
      %v5881 = vpop.f32.mrf.mxu0
      %v5882 = vadd.f32 0.0, %v5881
      %5883 = vmatmul.f32.gmra.mxu0 %v4232
      %v5884 = vpop.f32.mrf.mxu0
      %v5885 = vadd.f32 0.0, %v5884
      %5886 = vmatmul.f32.gmra.mxu0 %v4234
      %v5887 = vpop.f32.mrf.mxu0
      %v5888 = vadd.f32 0.0, %v5887
      %5889 = vmatmul.f32.gmra.mxu0 %v4236
      %v5890 = vpop.f32.mrf.mxu0
      %v5891 = vadd.f32 0.0, %v5890
      %5892 = vmatmul.f32.gmra.mxu0 %v4238
      %v5893 = vpop.f32.mrf.mxu0
      %v5894 = vadd.f32 0.0, %v5893
      %5895 = vmatmul.f32.gmra.mxu0 %v4240
      %v5896 = vpop.f32.mrf.mxu0
      %v5897 = vadd.f32 0.0, %v5896
      %5898 = vmatmul.f32.gmra.mxu0 %v4242
      %v5899 = vpop.f32.mrf.mxu0
      %v5900 = vadd.f32 0.0, %v5899
      %5901 = vmatmul.f32.gmra.mxu0 %v4244
      %v5902 = vpop.f32.mrf.mxu0
      %v5903 = vadd.f32 0.0, %v5902
      %5904 = vmatmul.f32.gmra.mxu0 %v4246
      %v5905 = vpop.f32.mrf.mxu0
      %v5906 = vadd.f32 0.0, %v5905
      %5907 = vmatmul.f32.gmra.mxu0 %v5694
      %v5908 = vpop.f32.mrf.mxu0
      %v5909 = vadd.f32 0.0, %v5908
      %5910 = vmatmul.f32.gmra.mxu0 %v5696
      %v5911 = vpop.f32.mrf.mxu0
      %v5912 = vadd.f32 0.0, %v5911
      %5913 = vmatmul.f32.gmra.mxu0 %v5698
      %v5914 = vpop.f32.mrf.mxu0
      %v5915 = vadd.f32 0.0, %v5914
      %5916 = vmatmul.f32.gmra.mxu0 %v5700
      %v5917 = vpop.f32.mrf.mxu0
      %v5918 = vadd.f32 0.0, %v5917
      %5919 = vdwg.mxu0
      %v5920 = vadd.f32 %v5620, %v5723
      %v5921 = vadd.f32 %v5621, %v5726
      %v5922 = vadd.f32 %v5622, %v5729
      %v5923 = vadd.f32 %v5623, %v5732
      %v5924 = vadd.f32 %v5624, %v5735
      %v5925 = vadd.f32 %v5625, %v5738
      %v5926 = vadd.f32 %v5626, %v5741
      %v5927 = vadd.f32 %v5627, %v5744
      %v5928 = vadd.f32 %v5628, %v5747
      %v5929 = vadd.f32 %v5629, %v5750
      %v5930 = vadd.f32 %v5630, %v5753
      %v5931 = vadd.f32 %v5631, %v5756
      %v5932 = vadd.f32 %v5632, %v5759
      %v5933 = vadd.f32 %v5633, %v5762
      %v5934 = vadd.f32 %v5634, %v5765
      %v5935 = vadd.f32 %v5635, %v5768
      %v5936 = vadd.f32 %v5636, %v5771
      %v5937 = vadd.f32 %v5637, %v5774
      %v5938 = vadd.f32 %v5638, %v5777
      %v5939 = vadd.f32 %v5639, %v5780
      %v5940 = vadd.f32 %v5640, %v5783
      %v5941 = vadd.f32 %v5641, %v5786
      %v5942 = vadd.f32 %v5642, %v5789
      %v5943 = vadd.f32 %v5643, %v5792
      %v5944 = vadd.f32 %v5644, %v5795
      %v5945 = vadd.f32 %v5645, %v5798
      %v5946 = vadd.f32 %v5646, %v5801
      %v5947 = vadd.f32 %v5647, %v5804
      %v5948 = vadd.f32 %v5648, %v5807
      %v5949 = vadd.f32 %v5649, %v5810
      %v5950 = vadd.f32 %v5650, %v5813
      %v5951 = vadd.f32 %v5651, %v5816
      %v5952 = vadd.f32 %v5652, %v5819
      %v5953 = vadd.f32 %v5653, %v5822
      %v5954 = vadd.f32 %v5654, %v5825
      %v5955 = vadd.f32 %v5655, %v5828
      %v5956 = vadd.f32 %v5656, %v5831
      %v5957 = vadd.f32 %v5657, %v5834
      %v5958 = vadd.f32 %v5658, %v5837
      %v5959 = vadd.f32 %v5659, %v5840
      %v5960 = vadd.f32 %v5660, %v5843
      %v5961 = vadd.f32 %v5661, %v5846
      %v5962 = vadd.f32 %v5662, %v5849
      %v5963 = vadd.f32 %v5663, %v5852
      %v5964 = vadd.f32 %v5664, %v5855
      %v5965 = vadd.f32 %v5665, %v5858
      %v5966 = vadd.f32 %v5666, %v5861
      %v5967 = vadd.f32 %v5667, %v5864
      %v5968 = vadd.f32 %v5668, %v5867
      %v5969 = vadd.f32 %v5669, %v5870
      %v5970 = vadd.f32 %v5670, %v5873
      %v5971 = vadd.f32 %v5671, %v5876
      %v5972 = vadd.f32 %v5672, %v5879
      %v5973 = vadd.f32 %v5673, %v5882
      %v5974 = vadd.f32 %v5674, %v5885
      %v5975 = vadd.f32 %v5675, %v5888
      %v5976 = vadd.f32 %v5676, %v5891
      %v5977 = vadd.f32 %v5677, %v5894
      %v5978 = vadd.f32 %v5678, %v5897
      %v5979 = vadd.f32 %v5679, %v5900
      %v5980 = vadd.f32 %v5680, %v5903
      %v5981 = vadd.f32 %v5681, %v5906
      %v5982 = vadd.f32 %v5682, %v5909
      %v5983 = vadd.f32 %v5683, %v5912
      %v5984 = vadd.f32 %v5684, %v5915
      %v5985 = vadd.f32 %v5685, %v5918
      %s5986 = scalar_lea.vmem %s3, 64
      %v5987 = vld [vmem:[%s5986] sm:$0x3f]
      %v5988 = vrot.slane %v2519, 4
      %v5989 = vsel %vm747, %v4665, %v5988
      %v5990 = vrot.slane %v2520, 4
      %v5991 = vsel %vm747, %v5988, %v5990
      %v5992 = vrot.slane %v2521, 4
      %v5993 = vsel %vm747, %v5990, %v5992
      %v5994 = vsel %vm2733, %v5989, 0
      %v5996 = vsel %vm2733, %v5991, 0
      %v5998 = vsel %vm2733, %v5993, 0
      %v6000 = vsel %vm2733, %v5992, 0
      %v6003 = vsel %vm2866, %v5987, 0
      %6005 = vmatpush.msra.mxu0 0.0
      %6006 = vmatpush.msra.mxu0 0.0
      %6007 = vmatpush.msra.mxu0 0.0
      %6008 = vmatpush.msra.mxu0 0.0
      %6009 = vmatpush.msra.mxu0 0.0
      %6010 = vmatpush.msra.mxu0 0.0
      %6011 = vmatpush.msra.mxu0 0.0
      %6012 = vmatpush.msra.mxu0 0.0
      %6013 = vmatpush.msra.mxu0 0.0
      %6014 = vmatpush.msra.mxu0 0.0
      %6015 = vmatpush.msra.mxu0 0.0
      %6016 = vmatpush.msra.mxu0 0.0
      %6017 = vmatpush.msra.mxu0 0.0
      %6018 = vmatpush.msra.mxu0 0.0
      %6019 = vmatpush.msra.mxu0 0.0
      %6020 = vmatpush.msra.mxu0 %v6003
      %6021 = vmatmul.f32.gmra.mxu0 %v4673
      %v6022 = vpop.f32.mrf.mxu0
      %v6023 = vadd.f32 0.0, %v6022
      %6024 = vmatmul.f32.gmra.mxu0 %v4675
      %v6025 = vpop.f32.mrf.mxu0
      %v6026 = vadd.f32 0.0, %v6025
      %6027 = vmatmul.f32.gmra.mxu0 %v4677
      %v6028 = vpop.f32.mrf.mxu0
      %v6029 = vadd.f32 0.0, %v6028
      %6030 = vmatmul.f32.gmra.mxu0 %v4679
      %v6031 = vpop.f32.mrf.mxu0
      %v6032 = vadd.f32 0.0, %v6031
      %6033 = vmatmul.f32.gmra.mxu0 %v4681
      %v6034 = vpop.f32.mrf.mxu0
      %v6035 = vadd.f32 0.0, %v6034
      %6036 = vmatmul.f32.gmra.mxu0 %v4683
      %v6037 = vpop.f32.mrf.mxu0
      %v6038 = vadd.f32 0.0, %v6037
      %6039 = vmatmul.f32.gmra.mxu0 %v4685
      %v6040 = vpop.f32.mrf.mxu0
      %v6041 = vadd.f32 0.0, %v6040
      %6042 = vmatmul.f32.gmra.mxu0 %v4687
      %v6043 = vpop.f32.mrf.mxu0
      %v6044 = vadd.f32 0.0, %v6043
      %6045 = vmatmul.f32.gmra.mxu0 %v4689
      %v6046 = vpop.f32.mrf.mxu0
      %v6047 = vadd.f32 0.0, %v6046
      %6048 = vmatmul.f32.gmra.mxu0 %v4691
      %v6049 = vpop.f32.mrf.mxu0
      %v6050 = vadd.f32 0.0, %v6049
      %6051 = vmatmul.f32.gmra.mxu0 %v4693
      %v6052 = vpop.f32.mrf.mxu0
      %v6053 = vadd.f32 0.0, %v6052
      %6054 = vmatmul.f32.gmra.mxu0 %v4695
      %v6055 = vpop.f32.mrf.mxu0
      %v6056 = vadd.f32 0.0, %v6055
      %6057 = vmatmul.f32.gmra.mxu0 %v4697
      %v6058 = vpop.f32.mrf.mxu0
      %v6059 = vadd.f32 0.0, %v6058
      %6060 = vmatmul.f32.gmra.mxu0 %v4699
      %v6061 = vpop.f32.mrf.mxu0
      %v6062 = vadd.f32 0.0, %v6061
      %6063 = vmatmul.f32.gmra.mxu0 %v4701
      %v6064 = vpop.f32.mrf.mxu0
      %v6065 = vadd.f32 0.0, %v6064
      %6066 = vmatmul.f32.gmra.mxu0 %v4703
      %v6067 = vpop.f32.mrf.mxu0
      %v6068 = vadd.f32 0.0, %v6067
      %6069 = vmatmul.f32.gmra.mxu0 %v4705
      %v6070 = vpop.f32.mrf.mxu0
      %v6071 = vadd.f32 0.0, %v6070
      %6072 = vmatmul.f32.gmra.mxu0 %v4707
      %v6073 = vpop.f32.mrf.mxu0
      %v6074 = vadd.f32 0.0, %v6073
      %6075 = vmatmul.f32.gmra.mxu0 %v4709
      %v6076 = vpop.f32.mrf.mxu0
      %v6077 = vadd.f32 0.0, %v6076
      %6078 = vmatmul.f32.gmra.mxu0 %v4711
      %v6079 = vpop.f32.mrf.mxu0
      %v6080 = vadd.f32 0.0, %v6079
      %6081 = vmatmul.f32.gmra.mxu0 %v4713
      %v6082 = vpop.f32.mrf.mxu0
      %v6083 = vadd.f32 0.0, %v6082
      %6084 = vmatmul.f32.gmra.mxu0 %v4715
      %v6085 = vpop.f32.mrf.mxu0
      %v6086 = vadd.f32 0.0, %v6085
      %6087 = vmatmul.f32.gmra.mxu0 %v4717
      %v6088 = vpop.f32.mrf.mxu0
      %v6089 = vadd.f32 0.0, %v6088
      %6090 = vmatmul.f32.gmra.mxu0 %v4719
      %v6091 = vpop.f32.mrf.mxu0
      %v6092 = vadd.f32 0.0, %v6091
      %6093 = vmatmul.f32.gmra.mxu0 %v4721
      %v6094 = vpop.f32.mrf.mxu0
      %v6095 = vadd.f32 0.0, %v6094
      %6096 = vmatmul.f32.gmra.mxu0 %v4723
      %v6097 = vpop.f32.mrf.mxu0
      %v6098 = vadd.f32 0.0, %v6097
      %6099 = vmatmul.f32.gmra.mxu0 %v4725
      %v6100 = vpop.f32.mrf.mxu0
      %v6101 = vadd.f32 0.0, %v6100
      %6102 = vmatmul.f32.gmra.mxu0 %v4727
      %v6103 = vpop.f32.mrf.mxu0
      %v6104 = vadd.f32 0.0, %v6103
      %6105 = vmatmul.f32.gmra.mxu0 %v4729
      %v6106 = vpop.f32.mrf.mxu0
      %v6107 = vadd.f32 0.0, %v6106
      %6108 = vmatmul.f32.gmra.mxu0 %v4731
      %v6109 = vpop.f32.mrf.mxu0
      %v6110 = vadd.f32 0.0, %v6109
      %6111 = vmatmul.f32.gmra.mxu0 %v4733
      %v6112 = vpop.f32.mrf.mxu0
      %v6113 = vadd.f32 0.0, %v6112
      %6114 = vmatmul.f32.gmra.mxu0 %v4735
      %v6115 = vpop.f32.mrf.mxu0
      %v6116 = vadd.f32 0.0, %v6115
      %6117 = vmatmul.f32.gmra.mxu0 %v4737
      %v6118 = vpop.f32.mrf.mxu0
      %v6119 = vadd.f32 0.0, %v6118
      %6120 = vmatmul.f32.gmra.mxu0 %v4739
      %v6121 = vpop.f32.mrf.mxu0
      %v6122 = vadd.f32 0.0, %v6121
      %6123 = vmatmul.f32.gmra.mxu0 %v4741
      %v6124 = vpop.f32.mrf.mxu0
      %v6125 = vadd.f32 0.0, %v6124
      %6126 = vmatmul.f32.gmra.mxu0 %v4743
      %v6127 = vpop.f32.mrf.mxu0
      %v6128 = vadd.f32 0.0, %v6127
      %6129 = vmatmul.f32.gmra.mxu0 %v4745
      %v6130 = vpop.f32.mrf.mxu0
      %v6131 = vadd.f32 0.0, %v6130
      %6132 = vmatmul.f32.gmra.mxu0 %v4747
      %v6133 = vpop.f32.mrf.mxu0
      %v6134 = vadd.f32 0.0, %v6133
      %6135 = vmatmul.f32.gmra.mxu0 %v4749
      %v6136 = vpop.f32.mrf.mxu0
      %v6137 = vadd.f32 0.0, %v6136
      %6138 = vmatmul.f32.gmra.mxu0 %v4751
      %v6139 = vpop.f32.mrf.mxu0
      %v6140 = vadd.f32 0.0, %v6139
      %6141 = vmatmul.f32.gmra.mxu0 %v4753
      %v6142 = vpop.f32.mrf.mxu0
      %v6143 = vadd.f32 0.0, %v6142
      %6144 = vmatmul.f32.gmra.mxu0 %v4755
      %v6145 = vpop.f32.mrf.mxu0
      %v6146 = vadd.f32 0.0, %v6145
      %6147 = vmatmul.f32.gmra.mxu0 %v4757
      %v6148 = vpop.f32.mrf.mxu0
      %v6149 = vadd.f32 0.0, %v6148
      %6150 = vmatmul.f32.gmra.mxu0 %v4759
      %v6151 = vpop.f32.mrf.mxu0
      %v6152 = vadd.f32 0.0, %v6151
      %6153 = vmatmul.f32.gmra.mxu0 %v4761
      %v6154 = vpop.f32.mrf.mxu0
      %v6155 = vadd.f32 0.0, %v6154
      %6156 = vmatmul.f32.gmra.mxu0 %v4763
      %v6157 = vpop.f32.mrf.mxu0
      %v6158 = vadd.f32 0.0, %v6157
      %6159 = vmatmul.f32.gmra.mxu0 %v4765
      %v6160 = vpop.f32.mrf.mxu0
      %v6161 = vadd.f32 0.0, %v6160
      %6162 = vmatmul.f32.gmra.mxu0 %v4767
      %v6163 = vpop.f32.mrf.mxu0
      %v6164 = vadd.f32 0.0, %v6163
      %6165 = vmatmul.f32.gmra.mxu0 %v4769
      %v6166 = vpop.f32.mrf.mxu0
      %v6167 = vadd.f32 0.0, %v6166
      %6168 = vmatmul.f32.gmra.mxu0 %v4771
      %v6169 = vpop.f32.mrf.mxu0
      %v6170 = vadd.f32 0.0, %v6169
      %6171 = vmatmul.f32.gmra.mxu0 %v4773
      %v6172 = vpop.f32.mrf.mxu0
      %v6173 = vadd.f32 0.0, %v6172
      %6174 = vmatmul.f32.gmra.mxu0 %v4775
      %v6175 = vpop.f32.mrf.mxu0
      %v6176 = vadd.f32 0.0, %v6175
      %6177 = vmatmul.f32.gmra.mxu0 %v4777
      %v6178 = vpop.f32.mrf.mxu0
      %v6179 = vadd.f32 0.0, %v6178
      %6180 = vmatmul.f32.gmra.mxu0 %v4779
      %v6181 = vpop.f32.mrf.mxu0
      %v6182 = vadd.f32 0.0, %v6181
      %6183 = vmatmul.f32.gmra.mxu0 %v4781
      %v6184 = vpop.f32.mrf.mxu0
      %v6185 = vadd.f32 0.0, %v6184
      %6186 = vmatmul.f32.gmra.mxu0 %v4783
      %v6187 = vpop.f32.mrf.mxu0
      %v6188 = vadd.f32 0.0, %v6187
      %6189 = vmatmul.f32.gmra.mxu0 %v4785
      %v6190 = vpop.f32.mrf.mxu0
      %v6191 = vadd.f32 0.0, %v6190
      %6192 = vmatmul.f32.gmra.mxu0 %v4787
      %v6193 = vpop.f32.mrf.mxu0
      %v6194 = vadd.f32 0.0, %v6193
      %6195 = vmatmul.f32.gmra.mxu0 %v4789
      %v6196 = vpop.f32.mrf.mxu0
      %v6197 = vadd.f32 0.0, %v6196
      %6198 = vmatmul.f32.gmra.mxu0 %v4791
      %v6199 = vpop.f32.mrf.mxu0
      %v6200 = vadd.f32 0.0, %v6199
      %6201 = vmatmul.f32.gmra.mxu0 %v4793
      %v6202 = vpop.f32.mrf.mxu0
      %v6203 = vadd.f32 0.0, %v6202
      %6204 = vmatmul.f32.gmra.mxu0 %v4795
      %v6205 = vpop.f32.mrf.mxu0
      %v6206 = vadd.f32 0.0, %v6205
      %6207 = vmatmul.f32.gmra.mxu0 %v5994
      %v6208 = vpop.f32.mrf.mxu0
      %v6209 = vadd.f32 0.0, %v6208
      %6210 = vmatmul.f32.gmra.mxu0 %v5996
      %v6211 = vpop.f32.mrf.mxu0
      %v6212 = vadd.f32 0.0, %v6211
      %6213 = vmatmul.f32.gmra.mxu0 %v5998
      %v6214 = vpop.f32.mrf.mxu0
      %v6215 = vadd.f32 0.0, %v6214
      %6216 = vmatmul.f32.gmra.mxu0 %v6000
      %v6217 = vpop.f32.mrf.mxu0
      %v6218 = vadd.f32 0.0, %v6217
      %6219 = vdwg.mxu0
      %v6220 = vadd.f32 %v5920, %v6023
      %v6221 = vadd.f32 %v5921, %v6026
      %v6222 = vadd.f32 %v5922, %v6029
      %v6223 = vadd.f32 %v5923, %v6032
      %v6224 = vadd.f32 %v5924, %v6035
      %v6225 = vadd.f32 %v5925, %v6038
      %v6226 = vadd.f32 %v5926, %v6041
      %v6227 = vadd.f32 %v5927, %v6044
      %v6228 = vadd.f32 %v5928, %v6047
      %v6229 = vadd.f32 %v5929, %v6050
      %v6230 = vadd.f32 %v5930, %v6053
      %v6231 = vadd.f32 %v5931, %v6056
      %v6232 = vadd.f32 %v5932, %v6059
      %v6233 = vadd.f32 %v5933, %v6062
      %v6234 = vadd.f32 %v5934, %v6065
      %v6235 = vadd.f32 %v5935, %v6068
      %v6236 = vadd.f32 %v5936, %v6071
      %v6237 = vadd.f32 %v5937, %v6074
      %v6238 = vadd.f32 %v5938, %v6077
      %v6239 = vadd.f32 %v5939, %v6080
      %v6240 = vadd.f32 %v5940, %v6083
      %v6241 = vadd.f32 %v5941, %v6086
      %v6242 = vadd.f32 %v5942, %v6089
      %v6243 = vadd.f32 %v5943, %v6092
      %v6244 = vadd.f32 %v5944, %v6095
      %v6245 = vadd.f32 %v5945, %v6098
      %v6246 = vadd.f32 %v5946, %v6101
      %v6247 = vadd.f32 %v5947, %v6104
      %v6248 = vadd.f32 %v5948, %v6107
      %v6249 = vadd.f32 %v5949, %v6110
      %v6250 = vadd.f32 %v5950, %v6113
      %v6251 = vadd.f32 %v5951, %v6116
      %v6252 = vadd.f32 %v5952, %v6119
      %v6253 = vadd.f32 %v5953, %v6122
      %v6254 = vadd.f32 %v5954, %v6125
      %v6255 = vadd.f32 %v5955, %v6128
      %v6256 = vadd.f32 %v5956, %v6131
      %v6257 = vadd.f32 %v5957, %v6134
      %v6258 = vadd.f32 %v5958, %v6137
      %v6259 = vadd.f32 %v5959, %v6140
      %v6260 = vadd.f32 %v5960, %v6143
      %v6261 = vadd.f32 %v5961, %v6146
      %v6262 = vadd.f32 %v5962, %v6149
      %v6263 = vadd.f32 %v5963, %v6152
      %v6264 = vadd.f32 %v5964, %v6155
      %v6265 = vadd.f32 %v5965, %v6158
      %v6266 = vadd.f32 %v5966, %v6161
      %v6267 = vadd.f32 %v5967, %v6164
      %v6268 = vadd.f32 %v5968, %v6167
      %v6269 = vadd.f32 %v5969, %v6170
      %v6270 = vadd.f32 %v5970, %v6173
      %v6271 = vadd.f32 %v5971, %v6176
      %v6272 = vadd.f32 %v5972, %v6179
      %v6273 = vadd.f32 %v5973, %v6182
      %v6274 = vadd.f32 %v5974, %v6185
      %v6275 = vadd.f32 %v5975, %v6188
      %v6276 = vadd.f32 %v5976, %v6191
      %v6277 = vadd.f32 %v5977, %v6194
      %v6278 = vadd.f32 %v5978, %v6197
      %v6279 = vadd.f32 %v5979, %v6200
      %v6280 = vadd.f32 %v5980, %v6203
      %v6281 = vadd.f32 %v5981, %v6206
      %v6282 = vadd.f32 %v5982, %v6209
      %v6283 = vadd.f32 %v5983, %v6212
      %v6284 = vadd.f32 %v5984, %v6215
      %v6285 = vadd.f32 %v5985, %v6218
      %s6286 = scalar_lea.vmem %s3, 72
      %v6287 = vld [vmem:[%s6286] sm:$0x3f]
      %vm6288 = vcmask 1042432
      %v6289 = vrot.slane %v2456, 5
      %v6290 = vrot.slane %v2457, 5
      %v6291 = vsel %vm6288, %v6289, %v6290
      %v6292 = vrot.slane %v2458, 5
      %v6293 = vsel %vm6288, %v6290, %v6292
      %v6294 = vrot.slane %v2459, 5
      %v6295 = vsel %vm6288, %v6292, %v6294
      %v6296 = vrot.slane %v2460, 5
      %v6297 = vsel %vm6288, %v6294, %v6296
      %v6298 = vrot.slane %v2461, 5
      %v6299 = vsel %vm6288, %v6296, %v6298
      %v6300 = vrot.slane %v2462, 5
      %v6301 = vsel %vm6288, %v6298, %v6300
      %v6302 = vrot.slane %v2463, 5
      %v6303 = vsel %vm6288, %v6300, %v6302
      %v6304 = vrot.slane %v2464, 5
      %v6305 = vsel %vm6288, %v6302, %v6304
      %v6306 = vrot.slane %v2465, 5
      %v6307 = vsel %vm6288, %v6304, %v6306
      %v6308 = vrot.slane %v2466, 5
      %v6309 = vsel %vm6288, %v6306, %v6308
      %v6310 = vrot.slane %v2467, 5
      %v6311 = vsel %vm6288, %v6308, %v6310
      %v6312 = vrot.slane %v2468, 5
      %v6313 = vsel %vm6288, %v6310, %v6312
      %v6314 = vrot.slane %v2469, 5
      %v6315 = vsel %vm6288, %v6312, %v6314
      %v6316 = vrot.slane %v2470, 5
      %v6317 = vsel %vm6288, %v6314, %v6316
      %v6318 = vrot.slane %v2471, 5
      %v6319 = vsel %vm6288, %v6316, %v6318
      %v6320 = vrot.slane %v2472, 5
      %v6321 = vsel %vm6288, %v6318, %v6320
      %v6322 = vrot.slane %v2473, 5
      %v6323 = vsel %vm6288, %v6320, %v6322
      %v6324 = vrot.slane %v2474, 5
      %v6325 = vsel %vm6288, %v6322, %v6324
      %v6326 = vrot.slane %v2475, 5
      %v6327 = vsel %vm6288, %v6324, %v6326
      %v6328 = vrot.slane %v2476, 5
      %v6329 = vsel %vm6288, %v6326, %v6328
      %v6330 = vrot.slane %v2477, 5
      %v6331 = vsel %vm6288, %v6328, %v6330
      %v6332 = vrot.slane %v2478, 5
      %v6333 = vsel %vm6288, %v6330, %v6332
      %v6334 = vrot.slane %v2479, 5
      %v6335 = vsel %vm6288, %v6332, %v6334
      %v6336 = vrot.slane %v2480, 5
      %v6337 = vsel %vm6288, %v6334, %v6336
      %v6338 = vrot.slane %v2481, 5
      %v6339 = vsel %vm6288, %v6336, %v6338
      %v6340 = vrot.slane %v2482, 5
      %v6341 = vsel %vm6288, %v6338, %v6340
      %v6342 = vrot.slane %v2483, 5
      %v6343 = vsel %vm6288, %v6340, %v6342
      %v6344 = vrot.slane %v2484, 5
      %v6345 = vsel %vm6288, %v6342, %v6344
      %v6346 = vrot.slane %v2485, 5
      %v6347 = vsel %vm6288, %v6344, %v6346
      %v6348 = vrot.slane %v2486, 5
      %v6349 = vsel %vm6288, %v6346, %v6348
      %v6350 = vrot.slane %v2487, 5
      %v6351 = vsel %vm6288, %v6348, %v6350
      %v6352 = vrot.slane %v2488, 5
      %v6353 = vsel %vm6288, %v6350, %v6352
      %v6354 = vrot.slane %v2489, 5
      %v6355 = vsel %vm6288, %v6352, %v6354
      %v6356 = vrot.slane %v2490, 5
      %v6357 = vsel %vm6288, %v6354, %v6356
      %v6358 = vrot.slane %v2491, 5
      %v6359 = vsel %vm6288, %v6356, %v6358
      %v6360 = vrot.slane %v2492, 5
      %v6361 = vsel %vm6288, %v6358, %v6360
      %v6362 = vrot.slane %v2493, 5
      %v6363 = vsel %vm6288, %v6360, %v6362
      %v6364 = vrot.slane %v2494, 5
      %v6365 = vsel %vm6288, %v6362, %v6364
      %v6366 = vrot.slane %v2495, 5
      %v6367 = vsel %vm6288, %v6364, %v6366
      %v6368 = vrot.slane %v2496, 5
      %v6369 = vsel %vm6288, %v6366, %v6368
      %v6370 = vrot.slane %v2497, 5
      %v6371 = vsel %vm6288, %v6368, %v6370
      %v6372 = vrot.slane %v2498, 5
      %v6373 = vsel %vm6288, %v6370, %v6372
      %v6374 = vrot.slane %v2499, 5
      %v6375 = vsel %vm6288, %v6372, %v6374
      %v6376 = vrot.slane %v2500, 5
      %v6377 = vsel %vm6288, %v6374, %v6376
      %v6378 = vrot.slane %v2501, 5
      %v6379 = vsel %vm6288, %v6376, %v6378
      %v6380 = vrot.slane %v2502, 5
      %v6381 = vsel %vm6288, %v6378, %v6380
      %v6382 = vrot.slane %v2503, 5
      %v6383 = vsel %vm6288, %v6380, %v6382
      %v6384 = vrot.slane %v2504, 5
      %v6385 = vsel %vm6288, %v6382, %v6384
      %v6386 = vrot.slane %v2505, 5
      %v6387 = vsel %vm6288, %v6384, %v6386
      %v6388 = vrot.slane %v2506, 5
      %v6389 = vsel %vm6288, %v6386, %v6388
      %v6390 = vrot.slane %v2507, 5
      %v6391 = vsel %vm6288, %v6388, %v6390
      %v6392 = vrot.slane %v2508, 5
      %v6393 = vsel %vm6288, %v6390, %v6392
      %v6394 = vrot.slane %v2509, 5
      %v6395 = vsel %vm6288, %v6392, %v6394
      %v6396 = vrot.slane %v2510, 5
      %v6397 = vsel %vm6288, %v6394, %v6396
      %v6398 = vrot.slane %v2511, 5
      %v6399 = vsel %vm6288, %v6396, %v6398
      %v6400 = vrot.slane %v2512, 5
      %v6401 = vsel %vm6288, %v6398, %v6400
      %v6402 = vrot.slane %v2513, 5
      %v6403 = vsel %vm6288, %v6400, %v6402
      %v6404 = vrot.slane %v2514, 5
      %v6405 = vsel %vm6288, %v6402, %v6404
      %v6406 = vrot.slane %v2515, 5
      %v6407 = vsel %vm6288, %v6404, %v6406
      %v6408 = vrot.slane %v2516, 5
      %v6409 = vsel %vm6288, %v6406, %v6408
      %v6410 = vrot.slane %v2517, 5
      %v6411 = vsel %vm6288, %v6408, %v6410
      %v6412 = vrot.slane %v2518, 5
      %v6413 = vsel %vm6288, %v6410, %v6412
      %v6414 = vrot.slane %v2519, 5
      %v6415 = vsel %vm6288, %v6412, %v6414
      %v6416 = vrot.slane %v2520, 5
      %v6417 = vsel %vm6288, %v6414, %v6416
      %v6418 = vrot.slane %v2521, 5
      %v6419 = vsel %vm6288, %v6416, %v6418
      %v6420 = vsel %vm2733, %v6291, 0
      %v6422 = vsel %vm2733, %v6293, 0
      %v6424 = vsel %vm2733, %v6295, 0
      %v6426 = vsel %vm2733, %v6297, 0
      %v6428 = vsel %vm2733, %v6299, 0
      %v6430 = vsel %vm2733, %v6301, 0
      %v6432 = vsel %vm2733, %v6303, 0
      %v6434 = vsel %vm2733, %v6305, 0
      %v6436 = vsel %vm2733, %v6307, 0
      %v6438 = vsel %vm2733, %v6309, 0
      %v6440 = vsel %vm2733, %v6311, 0
      %v6442 = vsel %vm2733, %v6313, 0
      %v6444 = vsel %vm2733, %v6315, 0
      %v6446 = vsel %vm2733, %v6317, 0
      %v6448 = vsel %vm2733, %v6319, 0
      %v6450 = vsel %vm2733, %v6321, 0
      %v6452 = vsel %vm2733, %v6323, 0
      %v6454 = vsel %vm2733, %v6325, 0
      %v6456 = vsel %vm2733, %v6327, 0
      %v6458 = vsel %vm2733, %v6329, 0
      %v6460 = vsel %vm2733, %v6331, 0
      %v6462 = vsel %vm2733, %v6333, 0
      %v6464 = vsel %vm2733, %v6335, 0
      %v6466 = vsel %vm2733, %v6337, 0
      %v6468 = vsel %vm2733, %v6339, 0
      %v6470 = vsel %vm2733, %v6341, 0
      %v6472 = vsel %vm2733, %v6343, 0
      %v6474 = vsel %vm2733, %v6345, 0
      %v6476 = vsel %vm2733, %v6347, 0
      %v6478 = vsel %vm2733, %v6349, 0
      %v6480 = vsel %vm2733, %v6351, 0
      %v6482 = vsel %vm2733, %v6353, 0
      %v6484 = vsel %vm2733, %v6355, 0
      %v6486 = vsel %vm2733, %v6357, 0
      %v6488 = vsel %vm2733, %v6359, 0
      %v6490 = vsel %vm2733, %v6361, 0
      %v6492 = vsel %vm2733, %v6363, 0
      %v6494 = vsel %vm2733, %v6365, 0
      %v6496 = vsel %vm2733, %v6367, 0
      %v6498 = vsel %vm2733, %v6369, 0
      %v6500 = vsel %vm2733, %v6371, 0
      %v6502 = vsel %vm2733, %v6373, 0
      %v6504 = vsel %vm2733, %v6375, 0
      %v6506 = vsel %vm2733, %v6377, 0
      %v6508 = vsel %vm2733, %v6379, 0
      %v6510 = vsel %vm2733, %v6381, 0
      %v6512 = vsel %vm2733, %v6383, 0
      %v6514 = vsel %vm2733, %v6385, 0
      %v6516 = vsel %vm2733, %v6387, 0
      %v6518 = vsel %vm2733, %v6389, 0
      %v6520 = vsel %vm2733, %v6391, 0
      %v6522 = vsel %vm2733, %v6393, 0
      %v6524 = vsel %vm2733, %v6395, 0
      %v6526 = vsel %vm2733, %v6397, 0
      %v6528 = vsel %vm2733, %v6399, 0
      %v6530 = vsel %vm2733, %v6401, 0
      %v6532 = vsel %vm2733, %v6403, 0
      %v6534 = vsel %vm2733, %v6405, 0
      %v6536 = vsel %vm2733, %v6407, 0
      %v6538 = vsel %vm2733, %v6409, 0
      %v6540 = vsel %vm2733, %v6411, 0
      %v6542 = vsel %vm2733, %v6413, 0
      %v6544 = vsel %vm2733, %v6415, 0
      %v6546 = vsel %vm2733, %v6417, 0
      %v6548 = vsel %vm2733, %v6419, 0
      %v6550 = vsel %vm2733, %v6418, 0
      %v6553 = vsel %vm2866, %v6287, 0
      %6555 = vmatpush.msra.mxu0 0.0
      %6556 = vmatpush.msra.mxu0 0.0
      %6557 = vmatpush.msra.mxu0 0.0
      %6558 = vmatpush.msra.mxu0 0.0
      %6559 = vmatpush.msra.mxu0 0.0
      %6560 = vmatpush.msra.mxu0 0.0
      %6561 = vmatpush.msra.mxu0 0.0
      %6562 = vmatpush.msra.mxu0 0.0
      %6563 = vmatpush.msra.mxu0 0.0
      %6564 = vmatpush.msra.mxu0 0.0
      %6565 = vmatpush.msra.mxu0 0.0
      %6566 = vmatpush.msra.mxu0 0.0
      %6567 = vmatpush.msra.mxu0 0.0
      %6568 = vmatpush.msra.mxu0 0.0
      %6569 = vmatpush.msra.mxu0 0.0
      %6570 = vmatpush.msra.mxu0 %v6553
      %6571 = vmatmul.f32.gmra.mxu0 %v6420
      %v6572 = vpop.f32.mrf.mxu0
      %v6573 = vadd.f32 0.0, %v6572
      %6574 = vmatmul.f32.gmra.mxu0 %v6422
      %v6575 = vpop.f32.mrf.mxu0
      %v6576 = vadd.f32 0.0, %v6575
      %6577 = vmatmul.f32.gmra.mxu0 %v6424
      %v6578 = vpop.f32.mrf.mxu0
      %v6579 = vadd.f32 0.0, %v6578
      %6580 = vmatmul.f32.gmra.mxu0 %v6426
      %v6581 = vpop.f32.mrf.mxu0
      %v6582 = vadd.f32 0.0, %v6581
      %6583 = vmatmul.f32.gmra.mxu0 %v6428
      %v6584 = vpop.f32.mrf.mxu0
      %v6585 = vadd.f32 0.0, %v6584
      %6586 = vmatmul.f32.gmra.mxu0 %v6430
      %v6587 = vpop.f32.mrf.mxu0
      %v6588 = vadd.f32 0.0, %v6587
      %6589 = vmatmul.f32.gmra.mxu0 %v6432
      %v6590 = vpop.f32.mrf.mxu0
      %v6591 = vadd.f32 0.0, %v6590
      %6592 = vmatmul.f32.gmra.mxu0 %v6434
      %v6593 = vpop.f32.mrf.mxu0
      %v6594 = vadd.f32 0.0, %v6593
      %6595 = vmatmul.f32.gmra.mxu0 %v6436
      %v6596 = vpop.f32.mrf.mxu0
      %v6597 = vadd.f32 0.0, %v6596
      %6598 = vmatmul.f32.gmra.mxu0 %v6438
      %v6599 = vpop.f32.mrf.mxu0
      %v6600 = vadd.f32 0.0, %v6599
      %6601 = vmatmul.f32.gmra.mxu0 %v6440
      %v6602 = vpop.f32.mrf.mxu0
      %v6603 = vadd.f32 0.0, %v6602
      %6604 = vmatmul.f32.gmra.mxu0 %v6442
      %v6605 = vpop.f32.mrf.mxu0
      %v6606 = vadd.f32 0.0, %v6605
      %6607 = vmatmul.f32.gmra.mxu0 %v6444
      %v6608 = vpop.f32.mrf.mxu0
      %v6609 = vadd.f32 0.0, %v6608
      %6610 = vmatmul.f32.gmra.mxu0 %v6446
      %v6611 = vpop.f32.mrf.mxu0
      %v6612 = vadd.f32 0.0, %v6611
      %6613 = vmatmul.f32.gmra.mxu0 %v6448
      %v6614 = vpop.f32.mrf.mxu0
      %v6615 = vadd.f32 0.0, %v6614
      %6616 = vmatmul.f32.gmra.mxu0 %v6450
      %v6617 = vpop.f32.mrf.mxu0
      %v6618 = vadd.f32 0.0, %v6617
      %6619 = vmatmul.f32.gmra.mxu0 %v6452
      %v6620 = vpop.f32.mrf.mxu0
      %v6621 = vadd.f32 0.0, %v6620
      %6622 = vmatmul.f32.gmra.mxu0 %v6454
      %v6623 = vpop.f32.mrf.mxu0
      %v6624 = vadd.f32 0.0, %v6623
      %6625 = vmatmul.f32.gmra.mxu0 %v6456
      %v6626 = vpop.f32.mrf.mxu0
      %v6627 = vadd.f32 0.0, %v6626
      %6628 = vmatmul.f32.gmra.mxu0 %v6458
      %v6629 = vpop.f32.mrf.mxu0
      %v6630 = vadd.f32 0.0, %v6629
      %6631 = vmatmul.f32.gmra.mxu0 %v6460
      %v6632 = vpop.f32.mrf.mxu0
      %v6633 = vadd.f32 0.0, %v6632
      %6634 = vmatmul.f32.gmra.mxu0 %v6462
      %v6635 = vpop.f32.mrf.mxu0
      %v6636 = vadd.f32 0.0, %v6635
      %6637 = vmatmul.f32.gmra.mxu0 %v6464
      %v6638 = vpop.f32.mrf.mxu0
      %v6639 = vadd.f32 0.0, %v6638
      %6640 = vmatmul.f32.gmra.mxu0 %v6466
      %v6641 = vpop.f32.mrf.mxu0
      %v6642 = vadd.f32 0.0, %v6641
      %6643 = vmatmul.f32.gmra.mxu0 %v6468
      %v6644 = vpop.f32.mrf.mxu0
      %v6645 = vadd.f32 0.0, %v6644
      %6646 = vmatmul.f32.gmra.mxu0 %v6470
      %v6647 = vpop.f32.mrf.mxu0
      %v6648 = vadd.f32 0.0, %v6647
      %6649 = vmatmul.f32.gmra.mxu0 %v6472
      %v6650 = vpop.f32.mrf.mxu0
      %v6651 = vadd.f32 0.0, %v6650
      %6652 = vmatmul.f32.gmra.mxu0 %v6474
      %v6653 = vpop.f32.mrf.mxu0
      %v6654 = vadd.f32 0.0, %v6653
      %6655 = vmatmul.f32.gmra.mxu0 %v6476
      %v6656 = vpop.f32.mrf.mxu0
      %v6657 = vadd.f32 0.0, %v6656
      %6658 = vmatmul.f32.gmra.mxu0 %v6478
      %v6659 = vpop.f32.mrf.mxu0
      %v6660 = vadd.f32 0.0, %v6659
      %6661 = vmatmul.f32.gmra.mxu0 %v6480
      %v6662 = vpop.f32.mrf.mxu0
      %v6663 = vadd.f32 0.0, %v6662
      %6664 = vmatmul.f32.gmra.mxu0 %v6482
      %v6665 = vpop.f32.mrf.mxu0
      %v6666 = vadd.f32 0.0, %v6665
      %6667 = vmatmul.f32.gmra.mxu0 %v6484
      %v6668 = vpop.f32.mrf.mxu0
      %v6669 = vadd.f32 0.0, %v6668
      %6670 = vmatmul.f32.gmra.mxu0 %v6486
      %v6671 = vpop.f32.mrf.mxu0
      %v6672 = vadd.f32 0.0, %v6671
      %6673 = vmatmul.f32.gmra.mxu0 %v6488
      %v6674 = vpop.f32.mrf.mxu0
      %v6675 = vadd.f32 0.0, %v6674
      %6676 = vmatmul.f32.gmra.mxu0 %v6490
      %v6677 = vpop.f32.mrf.mxu0
      %v6678 = vadd.f32 0.0, %v6677
      %6679 = vmatmul.f32.gmra.mxu0 %v6492
      %v6680 = vpop.f32.mrf.mxu0
      %v6681 = vadd.f32 0.0, %v6680
      %6682 = vmatmul.f32.gmra.mxu0 %v6494
      %v6683 = vpop.f32.mrf.mxu0
      %v6684 = vadd.f32 0.0, %v6683
      %6685 = vmatmul.f32.gmra.mxu0 %v6496
      %v6686 = vpop.f32.mrf.mxu0
      %v6687 = vadd.f32 0.0, %v6686
      %6688 = vmatmul.f32.gmra.mxu0 %v6498
      %v6689 = vpop.f32.mrf.mxu0
      %v6690 = vadd.f32 0.0, %v6689
      %6691 = vmatmul.f32.gmra.mxu0 %v6500
      %v6692 = vpop.f32.mrf.mxu0
      %v6693 = vadd.f32 0.0, %v6692
      %6694 = vmatmul.f32.gmra.mxu0 %v6502
      %v6695 = vpop.f32.mrf.mxu0
      %v6696 = vadd.f32 0.0, %v6695
      %6697 = vmatmul.f32.gmra.mxu0 %v6504
      %v6698 = vpop.f32.mrf.mxu0
      %v6699 = vadd.f32 0.0, %v6698
      %6700 = vmatmul.f32.gmra.mxu0 %v6506
      %v6701 = vpop.f32.mrf.mxu0
      %v6702 = vadd.f32 0.0, %v6701
      %6703 = vmatmul.f32.gmra.mxu0 %v6508
      %v6704 = vpop.f32.mrf.mxu0
      %v6705 = vadd.f32 0.0, %v6704
      %6706 = vmatmul.f32.gmra.mxu0 %v6510
      %v6707 = vpop.f32.mrf.mxu0
      %v6708 = vadd.f32 0.0, %v6707
      %6709 = vmatmul.f32.gmra.mxu0 %v6512
      %v6710 = vpop.f32.mrf.mxu0
      %v6711 = vadd.f32 0.0, %v6710
      %6712 = vmatmul.f32.gmra.mxu0 %v6514
      %v6713 = vpop.f32.mrf.mxu0
      %v6714 = vadd.f32 0.0, %v6713
      %6715 = vmatmul.f32.gmra.mxu0 %v6516
      %v6716 = vpop.f32.mrf.mxu0
      %v6717 = vadd.f32 0.0, %v6716
      %6718 = vmatmul.f32.gmra.mxu0 %v6518
      %v6719 = vpop.f32.mrf.mxu0
      %v6720 = vadd.f32 0.0, %v6719
      %6721 = vmatmul.f32.gmra.mxu0 %v6520
      %v6722 = vpop.f32.mrf.mxu0
      %v6723 = vadd.f32 0.0, %v6722
      %6724 = vmatmul.f32.gmra.mxu0 %v6522
      %v6725 = vpop.f32.mrf.mxu0
      %v6726 = vadd.f32 0.0, %v6725
      %6727 = vmatmul.f32.gmra.mxu0 %v6524
      %v6728 = vpop.f32.mrf.mxu0
      %v6729 = vadd.f32 0.0, %v6728
      %6730 = vmatmul.f32.gmra.mxu0 %v6526
      %v6731 = vpop.f32.mrf.mxu0
      %v6732 = vadd.f32 0.0, %v6731
      %6733 = vmatmul.f32.gmra.mxu0 %v6528
      %v6734 = vpop.f32.mrf.mxu0
      %v6735 = vadd.f32 0.0, %v6734
      %6736 = vmatmul.f32.gmra.mxu0 %v6530
      %v6737 = vpop.f32.mrf.mxu0
      %v6738 = vadd.f32 0.0, %v6737
      %6739 = vmatmul.f32.gmra.mxu0 %v6532
      %v6740 = vpop.f32.mrf.mxu0
      %v6741 = vadd.f32 0.0, %v6740
      %6742 = vmatmul.f32.gmra.mxu0 %v6534
      %v6743 = vpop.f32.mrf.mxu0
      %v6744 = vadd.f32 0.0, %v6743
      %6745 = vmatmul.f32.gmra.mxu0 %v6536
      %v6746 = vpop.f32.mrf.mxu0
      %v6747 = vadd.f32 0.0, %v6746
      %6748 = vmatmul.f32.gmra.mxu0 %v6538
      %v6749 = vpop.f32.mrf.mxu0
      %v6750 = vadd.f32 0.0, %v6749
      %6751 = vmatmul.f32.gmra.mxu0 %v6540
      %v6752 = vpop.f32.mrf.mxu0
      %v6753 = vadd.f32 0.0, %v6752
      %6754 = vmatmul.f32.gmra.mxu0 %v6542
      %v6755 = vpop.f32.mrf.mxu0
      %v6756 = vadd.f32 0.0, %v6755
      %6757 = vmatmul.f32.gmra.mxu0 %v6544
      %v6758 = vpop.f32.mrf.mxu0
      %v6759 = vadd.f32 0.0, %v6758
      %6760 = vmatmul.f32.gmra.mxu0 %v6546
      %v6761 = vpop.f32.mrf.mxu0
      %v6762 = vadd.f32 0.0, %v6761
      %6763 = vmatmul.f32.gmra.mxu0 %v6548
      %v6764 = vpop.f32.mrf.mxu0
      %v6765 = vadd.f32 0.0, %v6764
      %6766 = vmatmul.f32.gmra.mxu0 %v6550
      %v6767 = vpop.f32.mrf.mxu0
      %v6768 = vadd.f32 0.0, %v6767
      %6769 = vdwg.mxu0
      %v6770 = vadd.f32 %v6220, %v6573
      %v6771 = vadd.f32 %v6221, %v6576
      %v6772 = vadd.f32 %v6222, %v6579
      %v6773 = vadd.f32 %v6223, %v6582
      %v6774 = vadd.f32 %v6224, %v6585
      %v6775 = vadd.f32 %v6225, %v6588
      %v6776 = vadd.f32 %v6226, %v6591
      %v6777 = vadd.f32 %v6227, %v6594
      %v6778 = vadd.f32 %v6228, %v6597
      %v6779 = vadd.f32 %v6229, %v6600
      %v6780 = vadd.f32 %v6230, %v6603
      %v6781 = vadd.f32 %v6231, %v6606
      %v6782 = vadd.f32 %v6232, %v6609
      %v6783 = vadd.f32 %v6233, %v6612
      %v6784 = vadd.f32 %v6234, %v6615
      %v6785 = vadd.f32 %v6235, %v6618
      %v6786 = vadd.f32 %v6236, %v6621
      %v6787 = vadd.f32 %v6237, %v6624
      %v6788 = vadd.f32 %v6238, %v6627
      %v6789 = vadd.f32 %v6239, %v6630
      %v6790 = vadd.f32 %v6240, %v6633
      %v6791 = vadd.f32 %v6241, %v6636
      %v6792 = vadd.f32 %v6242, %v6639
      %v6793 = vadd.f32 %v6243, %v6642
      %v6794 = vadd.f32 %v6244, %v6645
      %v6795 = vadd.f32 %v6245, %v6648
      %v6796 = vadd.f32 %v6246, %v6651
      %v6797 = vadd.f32 %v6247, %v6654
      %v6798 = vadd.f32 %v6248, %v6657
      %v6799 = vadd.f32 %v6249, %v6660
      %v6800 = vadd.f32 %v6250, %v6663
      %v6801 = vadd.f32 %v6251, %v6666
      %v6802 = vadd.f32 %v6252, %v6669
      %v6803 = vadd.f32 %v6253, %v6672
      %v6804 = vadd.f32 %v6254, %v6675
      %v6805 = vadd.f32 %v6255, %v6678
      %v6806 = vadd.f32 %v6256, %v6681
      %v6807 = vadd.f32 %v6257, %v6684
      %v6808 = vadd.f32 %v6258, %v6687
      %v6809 = vadd.f32 %v6259, %v6690
      %v6810 = vadd.f32 %v6260, %v6693
      %v6811 = vadd.f32 %v6261, %v6696
      %v6812 = vadd.f32 %v6262, %v6699
      %v6813 = vadd.f32 %v6263, %v6702
      %v6814 = vadd.f32 %v6264, %v6705
      %v6815 = vadd.f32 %v6265, %v6708
      %v6816 = vadd.f32 %v6266, %v6711
      %v6817 = vadd.f32 %v6267, %v6714
      %v6818 = vadd.f32 %v6268, %v6717
      %v6819 = vadd.f32 %v6269, %v6720
      %v6820 = vadd.f32 %v6270, %v6723
      %v6821 = vadd.f32 %v6271, %v6726
      %v6822 = vadd.f32 %v6272, %v6729
      %v6823 = vadd.f32 %v6273, %v6732
      %v6824 = vadd.f32 %v6274, %v6735
      %v6825 = vadd.f32 %v6275, %v6738
      %v6826 = vadd.f32 %v6276, %v6741
      %v6827 = vadd.f32 %v6277, %v6744
      %v6828 = vadd.f32 %v6278, %v6747
      %v6829 = vadd.f32 %v6279, %v6750
      %v6830 = vadd.f32 %v6280, %v6753
      %v6831 = vadd.f32 %v6281, %v6756
      %v6832 = vadd.f32 %v6282, %v6759
      %v6833 = vadd.f32 %v6283, %v6762
      %v6834 = vadd.f32 %v6284, %v6765
      %v6835 = vadd.f32 %v6285, %v6768
      %s6836 = scalar_lea.vmem %s3, 80
      %v6837 = vld [vmem:[%s6836] sm:$0x3f]
      %v6841 = vrot.slane %v2522, 2
      %v6842 = vsel %vm2866, %v5392, %v6841
      %v6843 = vrot.slane %v2523, 2
      %v6844 = vsel %vm2866, %v6841, %v6843
      %v6845 = vrot.slane %v2524, 2
      %v6846 = vsel %vm2866, %v6843, %v6845
      %v6847 = vsel %vm2733, %v6842, 0
      %v6849 = vsel %vm2733, %v6844, 0
      %v6851 = vsel %vm2733, %v6846, 0
      %v6853 = vsel %vm2733, %v6845, 0
      %v6856 = vsel %vm2866, %v6837, 0
      %6858 = vmatpush.msra.mxu0 0.0
      %6859 = vmatpush.msra.mxu0 0.0
      %6860 = vmatpush.msra.mxu0 0.0
      %6861 = vmatpush.msra.mxu0 0.0
      %6862 = vmatpush.msra.mxu0 0.0
      %6863 = vmatpush.msra.mxu0 0.0
      %6864 = vmatpush.msra.mxu0 0.0
      %6865 = vmatpush.msra.mxu0 0.0
      %6866 = vmatpush.msra.mxu0 0.0
      %6867 = vmatpush.msra.mxu0 0.0
      %6868 = vmatpush.msra.mxu0 0.0
      %6869 = vmatpush.msra.mxu0 0.0
      %6870 = vmatpush.msra.mxu0 0.0
      %6871 = vmatpush.msra.mxu0 0.0
      %6872 = vmatpush.msra.mxu0 0.0
      %6873 = vmatpush.msra.mxu0 %v6856
      %6874 = vmatmul.f32.gmra.mxu0 %v3580
      %v6875 = vpop.f32.mrf.mxu0
      %v6876 = vadd.f32 0.0, %v6875
      %6877 = vmatmul.f32.gmra.mxu0 %v3582
      %v6878 = vpop.f32.mrf.mxu0
      %v6879 = vadd.f32 0.0, %v6878
      %6880 = vmatmul.f32.gmra.mxu0 %v3584
      %v6881 = vpop.f32.mrf.mxu0
      %v6882 = vadd.f32 0.0, %v6881
      %6883 = vmatmul.f32.gmra.mxu0 %v3586
      %v6884 = vpop.f32.mrf.mxu0
      %v6885 = vadd.f32 0.0, %v6884
      %6886 = vmatmul.f32.gmra.mxu0 %v3588
      %v6887 = vpop.f32.mrf.mxu0
      %v6888 = vadd.f32 0.0, %v6887
      %6889 = vmatmul.f32.gmra.mxu0 %v3590
      %v6890 = vpop.f32.mrf.mxu0
      %v6891 = vadd.f32 0.0, %v6890
      %6892 = vmatmul.f32.gmra.mxu0 %v3592
      %v6893 = vpop.f32.mrf.mxu0
      %v6894 = vadd.f32 0.0, %v6893
      %6895 = vmatmul.f32.gmra.mxu0 %v3594
      %v6896 = vpop.f32.mrf.mxu0
      %v6897 = vadd.f32 0.0, %v6896
      %6898 = vmatmul.f32.gmra.mxu0 %v3596
      %v6899 = vpop.f32.mrf.mxu0
      %v6900 = vadd.f32 0.0, %v6899
      %6901 = vmatmul.f32.gmra.mxu0 %v3598
      %v6902 = vpop.f32.mrf.mxu0
      %v6903 = vadd.f32 0.0, %v6902
      %6904 = vmatmul.f32.gmra.mxu0 %v3600
      %v6905 = vpop.f32.mrf.mxu0
      %v6906 = vadd.f32 0.0, %v6905
      %6907 = vmatmul.f32.gmra.mxu0 %v3602
      %v6908 = vpop.f32.mrf.mxu0
      %v6909 = vadd.f32 0.0, %v6908
      %6910 = vmatmul.f32.gmra.mxu0 %v3604
      %v6911 = vpop.f32.mrf.mxu0
      %v6912 = vadd.f32 0.0, %v6911
      %6913 = vmatmul.f32.gmra.mxu0 %v3606
      %v6914 = vpop.f32.mrf.mxu0
      %v6915 = vadd.f32 0.0, %v6914
      %6916 = vmatmul.f32.gmra.mxu0 %v3608
      %v6917 = vpop.f32.mrf.mxu0
      %v6918 = vadd.f32 0.0, %v6917
      %6919 = vmatmul.f32.gmra.mxu0 %v3610
      %v6920 = vpop.f32.mrf.mxu0
      %v6921 = vadd.f32 0.0, %v6920
      %6922 = vmatmul.f32.gmra.mxu0 %v3612
      %v6923 = vpop.f32.mrf.mxu0
      %v6924 = vadd.f32 0.0, %v6923
      %6925 = vmatmul.f32.gmra.mxu0 %v3614
      %v6926 = vpop.f32.mrf.mxu0
      %v6927 = vadd.f32 0.0, %v6926
      %6928 = vmatmul.f32.gmra.mxu0 %v3616
      %v6929 = vpop.f32.mrf.mxu0
      %v6930 = vadd.f32 0.0, %v6929
      %6931 = vmatmul.f32.gmra.mxu0 %v3618
      %v6932 = vpop.f32.mrf.mxu0
      %v6933 = vadd.f32 0.0, %v6932
      %6934 = vmatmul.f32.gmra.mxu0 %v3620
      %v6935 = vpop.f32.mrf.mxu0
      %v6936 = vadd.f32 0.0, %v6935
      %6937 = vmatmul.f32.gmra.mxu0 %v3622
      %v6938 = vpop.f32.mrf.mxu0
      %v6939 = vadd.f32 0.0, %v6938
      %6940 = vmatmul.f32.gmra.mxu0 %v3624
      %v6941 = vpop.f32.mrf.mxu0
      %v6942 = vadd.f32 0.0, %v6941
      %6943 = vmatmul.f32.gmra.mxu0 %v3626
      %v6944 = vpop.f32.mrf.mxu0
      %v6945 = vadd.f32 0.0, %v6944
      %6946 = vmatmul.f32.gmra.mxu0 %v3628
      %v6947 = vpop.f32.mrf.mxu0
      %v6948 = vadd.f32 0.0, %v6947
      %6949 = vmatmul.f32.gmra.mxu0 %v3630
      %v6950 = vpop.f32.mrf.mxu0
      %v6951 = vadd.f32 0.0, %v6950
      %6952 = vmatmul.f32.gmra.mxu0 %v3632
      %v6953 = vpop.f32.mrf.mxu0
      %v6954 = vadd.f32 0.0, %v6953
      %6955 = vmatmul.f32.gmra.mxu0 %v3634
      %v6956 = vpop.f32.mrf.mxu0
      %v6957 = vadd.f32 0.0, %v6956
      %6958 = vmatmul.f32.gmra.mxu0 %v3636
      %v6959 = vpop.f32.mrf.mxu0
      %v6960 = vadd.f32 0.0, %v6959
      %6961 = vmatmul.f32.gmra.mxu0 %v3638
      %v6962 = vpop.f32.mrf.mxu0
      %v6963 = vadd.f32 0.0, %v6962
      %6964 = vmatmul.f32.gmra.mxu0 %v3640
      %v6965 = vpop.f32.mrf.mxu0
      %v6966 = vadd.f32 0.0, %v6965
      %6967 = vmatmul.f32.gmra.mxu0 %v3642
      %v6968 = vpop.f32.mrf.mxu0
      %v6969 = vadd.f32 0.0, %v6968
      %6970 = vmatmul.f32.gmra.mxu0 %v3644
      %v6971 = vpop.f32.mrf.mxu0
      %v6972 = vadd.f32 0.0, %v6971
      %6973 = vmatmul.f32.gmra.mxu0 %v3646
      %v6974 = vpop.f32.mrf.mxu0
      %v6975 = vadd.f32 0.0, %v6974
      %6976 = vmatmul.f32.gmra.mxu0 %v3648
      %v6977 = vpop.f32.mrf.mxu0
      %v6978 = vadd.f32 0.0, %v6977
      %6979 = vmatmul.f32.gmra.mxu0 %v3650
      %v6980 = vpop.f32.mrf.mxu0
      %v6981 = vadd.f32 0.0, %v6980
      %6982 = vmatmul.f32.gmra.mxu0 %v3652
      %v6983 = vpop.f32.mrf.mxu0
      %v6984 = vadd.f32 0.0, %v6983
      %6985 = vmatmul.f32.gmra.mxu0 %v3654
      %v6986 = vpop.f32.mrf.mxu0
      %v6987 = vadd.f32 0.0, %v6986
      %6988 = vmatmul.f32.gmra.mxu0 %v3656
      %v6989 = vpop.f32.mrf.mxu0
      %v6990 = vadd.f32 0.0, %v6989
      %6991 = vmatmul.f32.gmra.mxu0 %v3658
      %v6992 = vpop.f32.mrf.mxu0
      %v6993 = vadd.f32 0.0, %v6992
      %6994 = vmatmul.f32.gmra.mxu0 %v3660
      %v6995 = vpop.f32.mrf.mxu0
      %v6996 = vadd.f32 0.0, %v6995
      %6997 = vmatmul.f32.gmra.mxu0 %v3662
      %v6998 = vpop.f32.mrf.mxu0
      %v6999 = vadd.f32 0.0, %v6998
      %7000 = vmatmul.f32.gmra.mxu0 %v3664
      %v7001 = vpop.f32.mrf.mxu0
      %v7002 = vadd.f32 0.0, %v7001
      %7003 = vmatmul.f32.gmra.mxu0 %v3666
      %v7004 = vpop.f32.mrf.mxu0
      %v7005 = vadd.f32 0.0, %v7004
      %7006 = vmatmul.f32.gmra.mxu0 %v3668
      %v7007 = vpop.f32.mrf.mxu0
      %v7008 = vadd.f32 0.0, %v7007
      %7009 = vmatmul.f32.gmra.mxu0 %v3670
      %v7010 = vpop.f32.mrf.mxu0
      %v7011 = vadd.f32 0.0, %v7010
      %7012 = vmatmul.f32.gmra.mxu0 %v3672
      %v7013 = vpop.f32.mrf.mxu0
      %v7014 = vadd.f32 0.0, %v7013
      %7015 = vmatmul.f32.gmra.mxu0 %v3674
      %v7016 = vpop.f32.mrf.mxu0
      %v7017 = vadd.f32 0.0, %v7016
      %7018 = vmatmul.f32.gmra.mxu0 %v3676
      %v7019 = vpop.f32.mrf.mxu0
      %v7020 = vadd.f32 0.0, %v7019
      %7021 = vmatmul.f32.gmra.mxu0 %v3678
      %v7022 = vpop.f32.mrf.mxu0
      %v7023 = vadd.f32 0.0, %v7022
      %7024 = vmatmul.f32.gmra.mxu0 %v3680
      %v7025 = vpop.f32.mrf.mxu0
      %v7026 = vadd.f32 0.0, %v7025
      %7027 = vmatmul.f32.gmra.mxu0 %v3682
      %v7028 = vpop.f32.mrf.mxu0
      %v7029 = vadd.f32 0.0, %v7028
      %7030 = vmatmul.f32.gmra.mxu0 %v3684
      %v7031 = vpop.f32.mrf.mxu0
      %v7032 = vadd.f32 0.0, %v7031
      %7033 = vmatmul.f32.gmra.mxu0 %v3686
      %v7034 = vpop.f32.mrf.mxu0
      %v7035 = vadd.f32 0.0, %v7034
      %7036 = vmatmul.f32.gmra.mxu0 %v3688
      %v7037 = vpop.f32.mrf.mxu0
      %v7038 = vadd.f32 0.0, %v7037
      %7039 = vmatmul.f32.gmra.mxu0 %v3690
      %v7040 = vpop.f32.mrf.mxu0
      %v7041 = vadd.f32 0.0, %v7040
      %7042 = vmatmul.f32.gmra.mxu0 %v3692
      %v7043 = vpop.f32.mrf.mxu0
      %v7044 = vadd.f32 0.0, %v7043
      %7045 = vmatmul.f32.gmra.mxu0 %v3694
      %v7046 = vpop.f32.mrf.mxu0
      %v7047 = vadd.f32 0.0, %v7046
      %7048 = vmatmul.f32.gmra.mxu0 %v3696
      %v7049 = vpop.f32.mrf.mxu0
      %v7050 = vadd.f32 0.0, %v7049
      %7051 = vmatmul.f32.gmra.mxu0 %v5394
      %v7052 = vpop.f32.mrf.mxu0
      %v7053 = vadd.f32 0.0, %v7052
      %7054 = vmatmul.f32.gmra.mxu0 %v5396
      %v7055 = vpop.f32.mrf.mxu0
      %v7056 = vadd.f32 0.0, %v7055
      %7057 = vmatmul.f32.gmra.mxu0 %v5398
      %v7058 = vpop.f32.mrf.mxu0
      %v7059 = vadd.f32 0.0, %v7058
      %7060 = vmatmul.f32.gmra.mxu0 %v6847
      %v7061 = vpop.f32.mrf.mxu0
      %v7062 = vadd.f32 0.0, %v7061
      %7063 = vmatmul.f32.gmra.mxu0 %v6849
      %v7064 = vpop.f32.mrf.mxu0
      %v7065 = vadd.f32 0.0, %v7064
      %7066 = vmatmul.f32.gmra.mxu0 %v6851
      %v7067 = vpop.f32.mrf.mxu0
      %v7068 = vadd.f32 0.0, %v7067
      %7069 = vmatmul.f32.gmra.mxu0 %v6853
      %v7070 = vpop.f32.mrf.mxu0
      %v7071 = vadd.f32 0.0, %v7070
      %7072 = vdwg.mxu0
      %v7073 = vadd.f32 %v6770, %v6876
      %v7074 = vadd.f32 %v6771, %v6879
      %v7075 = vadd.f32 %v6772, %v6882
      %v7076 = vadd.f32 %v6773, %v6885
      %v7077 = vadd.f32 %v6774, %v6888
      %v7078 = vadd.f32 %v6775, %v6891
      %v7079 = vadd.f32 %v6776, %v6894
      %v7080 = vadd.f32 %v6777, %v6897
      %v7081 = vadd.f32 %v6778, %v6900
      %v7082 = vadd.f32 %v6779, %v6903
      %v7083 = vadd.f32 %v6780, %v6906
      %v7084 = vadd.f32 %v6781, %v6909
      %v7085 = vadd.f32 %v6782, %v6912
      %v7086 = vadd.f32 %v6783, %v6915
      %v7087 = vadd.f32 %v6784, %v6918
      %v7088 = vadd.f32 %v6785, %v6921
      %v7089 = vadd.f32 %v6786, %v6924
      %v7090 = vadd.f32 %v6787, %v6927
      %v7091 = vadd.f32 %v6788, %v6930
      %v7092 = vadd.f32 %v6789, %v6933
      %v7093 = vadd.f32 %v6790, %v6936
      %v7094 = vadd.f32 %v6791, %v6939
      %v7095 = vadd.f32 %v6792, %v6942
      %v7096 = vadd.f32 %v6793, %v6945
      %v7097 = vadd.f32 %v6794, %v6948
      %v7098 = vadd.f32 %v6795, %v6951
      %v7099 = vadd.f32 %v6796, %v6954
      %v7100 = vadd.f32 %v6797, %v6957
      %v7101 = vadd.f32 %v6798, %v6960
      %v7102 = vadd.f32 %v6799, %v6963
      %v7103 = vadd.f32 %v6800, %v6966
      %v7104 = vadd.f32 %v6801, %v6969
      %v7105 = vadd.f32 %v6802, %v6972
      %v7106 = vadd.f32 %v6803, %v6975
      %v7107 = vadd.f32 %v6804, %v6978
      %v7108 = vadd.f32 %v6805, %v6981
      %v7109 = vadd.f32 %v6806, %v6984
      %v7110 = vadd.f32 %v6807, %v6987
      %v7111 = vadd.f32 %v6808, %v6990
      %v7112 = vadd.f32 %v6809, %v6993
      %v7113 = vadd.f32 %v6810, %v6996
      %v7114 = vadd.f32 %v6811, %v6999
      %v7115 = vadd.f32 %v6812, %v7002
      %v7116 = vadd.f32 %v6813, %v7005
      %v7117 = vadd.f32 %v6814, %v7008
      %v7118 = vadd.f32 %v6815, %v7011
      %v7119 = vadd.f32 %v6816, %v7014
      %v7120 = vadd.f32 %v6817, %v7017
      %v7121 = vadd.f32 %v6818, %v7020
      %v7122 = vadd.f32 %v6819, %v7023
      %v7123 = vadd.f32 %v6820, %v7026
      %v7124 = vadd.f32 %v6821, %v7029
      %v7125 = vadd.f32 %v6822, %v7032
      %v7126 = vadd.f32 %v6823, %v7035
      %v7127 = vadd.f32 %v6824, %v7038
      %v7128 = vadd.f32 %v6825, %v7041
      %v7129 = vadd.f32 %v6826, %v7044
      %v7130 = vadd.f32 %v6827, %v7047
      %v7131 = vadd.f32 %v6828, %v7050
      %v7132 = vadd.f32 %v6829, %v7053
      %v7133 = vadd.f32 %v6830, %v7056
      %v7134 = vadd.f32 %v6831, %v7059
      %v7135 = vadd.f32 %v6832, %v7062
      %v7136 = vadd.f32 %v6833, %v7065
      %v7137 = vadd.f32 %v6834, %v7068
      %v7138 = vadd.f32 %v6835, %v7071
      %s7139 = scalar_lea.vmem %s3, 88
      %v7140 = vld [vmem:[%s7139] sm:$0x3f]
      %v7141 = vrot.slane %v2522, 3
      %v7142 = vsel %vm3986, %v5692, %v7141
      %v7143 = vrot.slane %v2523, 3
      %v7144 = vsel %vm3986, %v7141, %v7143
      %v7145 = vrot.slane %v2524, 3
      %v7146 = vsel %vm3986, %v7143, %v7145
      %v7147 = vsel %vm2733, %v7142, 0
      %v7149 = vsel %vm2733, %v7144, 0
      %v7151 = vsel %vm2733, %v7146, 0
      %v7153 = vsel %vm2733, %v7145, 0
      %v7156 = vsel %vm2866, %v7140, 0
      %7158 = vmatpush.msra.mxu0 0.0
      %7159 = vmatpush.msra.mxu0 0.0
      %7160 = vmatpush.msra.mxu0 0.0
      %7161 = vmatpush.msra.mxu0 0.0
      %7162 = vmatpush.msra.mxu0 0.0
      %7163 = vmatpush.msra.mxu0 0.0
      %7164 = vmatpush.msra.mxu0 0.0
      %7165 = vmatpush.msra.mxu0 0.0
      %7166 = vmatpush.msra.mxu0 0.0
      %7167 = vmatpush.msra.mxu0 0.0
      %7168 = vmatpush.msra.mxu0 0.0
      %7169 = vmatpush.msra.mxu0 0.0
      %7170 = vmatpush.msra.mxu0 0.0
      %7171 = vmatpush.msra.mxu0 0.0
      %7172 = vmatpush.msra.mxu0 0.0
      %7173 = vmatpush.msra.mxu0 %v7156
      %7174 = vmatmul.f32.gmra.mxu0 %v4130
      %v7175 = vpop.f32.mrf.mxu0
      %v7176 = vadd.f32 0.0, %v7175
      %7177 = vmatmul.f32.gmra.mxu0 %v4132
      %v7178 = vpop.f32.mrf.mxu0
      %v7179 = vadd.f32 0.0, %v7178
      %7180 = vmatmul.f32.gmra.mxu0 %v4134
      %v7181 = vpop.f32.mrf.mxu0
      %v7182 = vadd.f32 0.0, %v7181
      %7183 = vmatmul.f32.gmra.mxu0 %v4136
      %v7184 = vpop.f32.mrf.mxu0
      %v7185 = vadd.f32 0.0, %v7184
      %7186 = vmatmul.f32.gmra.mxu0 %v4138
      %v7187 = vpop.f32.mrf.mxu0
      %v7188 = vadd.f32 0.0, %v7187
      %7189 = vmatmul.f32.gmra.mxu0 %v4140
      %v7190 = vpop.f32.mrf.mxu0
      %v7191 = vadd.f32 0.0, %v7190
      %7192 = vmatmul.f32.gmra.mxu0 %v4142
      %v7193 = vpop.f32.mrf.mxu0
      %v7194 = vadd.f32 0.0, %v7193
      %7195 = vmatmul.f32.gmra.mxu0 %v4144
      %v7196 = vpop.f32.mrf.mxu0
      %v7197 = vadd.f32 0.0, %v7196
      %7198 = vmatmul.f32.gmra.mxu0 %v4146
      %v7199 = vpop.f32.mrf.mxu0
      %v7200 = vadd.f32 0.0, %v7199
      %7201 = vmatmul.f32.gmra.mxu0 %v4148
      %v7202 = vpop.f32.mrf.mxu0
      %v7203 = vadd.f32 0.0, %v7202
      %7204 = vmatmul.f32.gmra.mxu0 %v4150
      %v7205 = vpop.f32.mrf.mxu0
      %v7206 = vadd.f32 0.0, %v7205
      %7207 = vmatmul.f32.gmra.mxu0 %v4152
      %v7208 = vpop.f32.mrf.mxu0
      %v7209 = vadd.f32 0.0, %v7208
      %7210 = vmatmul.f32.gmra.mxu0 %v4154
      %v7211 = vpop.f32.mrf.mxu0
      %v7212 = vadd.f32 0.0, %v7211
      %7213 = vmatmul.f32.gmra.mxu0 %v4156
      %v7214 = vpop.f32.mrf.mxu0
      %v7215 = vadd.f32 0.0, %v7214
      %7216 = vmatmul.f32.gmra.mxu0 %v4158
      %v7217 = vpop.f32.mrf.mxu0
      %v7218 = vadd.f32 0.0, %v7217
      %7219 = vmatmul.f32.gmra.mxu0 %v4160
      %v7220 = vpop.f32.mrf.mxu0
      %v7221 = vadd.f32 0.0, %v7220
      %7222 = vmatmul.f32.gmra.mxu0 %v4162
      %v7223 = vpop.f32.mrf.mxu0
      %v7224 = vadd.f32 0.0, %v7223
      %7225 = vmatmul.f32.gmra.mxu0 %v4164
      %v7226 = vpop.f32.mrf.mxu0
      %v7227 = vadd.f32 0.0, %v7226
      %7228 = vmatmul.f32.gmra.mxu0 %v4166
      %v7229 = vpop.f32.mrf.mxu0
      %v7230 = vadd.f32 0.0, %v7229
      %7231 = vmatmul.f32.gmra.mxu0 %v4168
      %v7232 = vpop.f32.mrf.mxu0
      %v7233 = vadd.f32 0.0, %v7232
      %7234 = vmatmul.f32.gmra.mxu0 %v4170
      %v7235 = vpop.f32.mrf.mxu0
      %v7236 = vadd.f32 0.0, %v7235
      %7237 = vmatmul.f32.gmra.mxu0 %v4172
      %v7238 = vpop.f32.mrf.mxu0
      %v7239 = vadd.f32 0.0, %v7238
      %7240 = vmatmul.f32.gmra.mxu0 %v4174
      %v7241 = vpop.f32.mrf.mxu0
      %v7242 = vadd.f32 0.0, %v7241
      %7243 = vmatmul.f32.gmra.mxu0 %v4176
      %v7244 = vpop.f32.mrf.mxu0
      %v7245 = vadd.f32 0.0, %v7244
      %7246 = vmatmul.f32.gmra.mxu0 %v4178
      %v7247 = vpop.f32.mrf.mxu0
      %v7248 = vadd.f32 0.0, %v7247
      %7249 = vmatmul.f32.gmra.mxu0 %v4180
      %v7250 = vpop.f32.mrf.mxu0
      %v7251 = vadd.f32 0.0, %v7250
      %7252 = vmatmul.f32.gmra.mxu0 %v4182
      %v7253 = vpop.f32.mrf.mxu0
      %v7254 = vadd.f32 0.0, %v7253
      %7255 = vmatmul.f32.gmra.mxu0 %v4184
      %v7256 = vpop.f32.mrf.mxu0
      %v7257 = vadd.f32 0.0, %v7256
      %7258 = vmatmul.f32.gmra.mxu0 %v4186
      %v7259 = vpop.f32.mrf.mxu0
      %v7260 = vadd.f32 0.0, %v7259
      %7261 = vmatmul.f32.gmra.mxu0 %v4188
      %v7262 = vpop.f32.mrf.mxu0
      %v7263 = vadd.f32 0.0, %v7262
      %7264 = vmatmul.f32.gmra.mxu0 %v4190
      %v7265 = vpop.f32.mrf.mxu0
      %v7266 = vadd.f32 0.0, %v7265
      %7267 = vmatmul.f32.gmra.mxu0 %v4192
      %v7268 = vpop.f32.mrf.mxu0
      %v7269 = vadd.f32 0.0, %v7268
      %7270 = vmatmul.f32.gmra.mxu0 %v4194
      %v7271 = vpop.f32.mrf.mxu0
      %v7272 = vadd.f32 0.0, %v7271
      %7273 = vmatmul.f32.gmra.mxu0 %v4196
      %v7274 = vpop.f32.mrf.mxu0
      %v7275 = vadd.f32 0.0, %v7274
      %7276 = vmatmul.f32.gmra.mxu0 %v4198
      %v7277 = vpop.f32.mrf.mxu0
      %v7278 = vadd.f32 0.0, %v7277
      %7279 = vmatmul.f32.gmra.mxu0 %v4200
      %v7280 = vpop.f32.mrf.mxu0
      %v7281 = vadd.f32 0.0, %v7280
      %7282 = vmatmul.f32.gmra.mxu0 %v4202
      %v7283 = vpop.f32.mrf.mxu0
      %v7284 = vadd.f32 0.0, %v7283
      %7285 = vmatmul.f32.gmra.mxu0 %v4204
      %v7286 = vpop.f32.mrf.mxu0
      %v7287 = vadd.f32 0.0, %v7286
      %7288 = vmatmul.f32.gmra.mxu0 %v4206
      %v7289 = vpop.f32.mrf.mxu0
      %v7290 = vadd.f32 0.0, %v7289
      %7291 = vmatmul.f32.gmra.mxu0 %v4208
      %v7292 = vpop.f32.mrf.mxu0
      %v7293 = vadd.f32 0.0, %v7292
      %7294 = vmatmul.f32.gmra.mxu0 %v4210
      %v7295 = vpop.f32.mrf.mxu0
      %v7296 = vadd.f32 0.0, %v7295
      %7297 = vmatmul.f32.gmra.mxu0 %v4212
      %v7298 = vpop.f32.mrf.mxu0
      %v7299 = vadd.f32 0.0, %v7298
      %7300 = vmatmul.f32.gmra.mxu0 %v4214
      %v7301 = vpop.f32.mrf.mxu0
      %v7302 = vadd.f32 0.0, %v7301
      %7303 = vmatmul.f32.gmra.mxu0 %v4216
      %v7304 = vpop.f32.mrf.mxu0
      %v7305 = vadd.f32 0.0, %v7304
      %7306 = vmatmul.f32.gmra.mxu0 %v4218
      %v7307 = vpop.f32.mrf.mxu0
      %v7308 = vadd.f32 0.0, %v7307
      %7309 = vmatmul.f32.gmra.mxu0 %v4220
      %v7310 = vpop.f32.mrf.mxu0
      %v7311 = vadd.f32 0.0, %v7310
      %7312 = vmatmul.f32.gmra.mxu0 %v4222
      %v7313 = vpop.f32.mrf.mxu0
      %v7314 = vadd.f32 0.0, %v7313
      %7315 = vmatmul.f32.gmra.mxu0 %v4224
      %v7316 = vpop.f32.mrf.mxu0
      %v7317 = vadd.f32 0.0, %v7316
      %7318 = vmatmul.f32.gmra.mxu0 %v4226
      %v7319 = vpop.f32.mrf.mxu0
      %v7320 = vadd.f32 0.0, %v7319
      %7321 = vmatmul.f32.gmra.mxu0 %v4228
      %v7322 = vpop.f32.mrf.mxu0
      %v7323 = vadd.f32 0.0, %v7322
      %7324 = vmatmul.f32.gmra.mxu0 %v4230
      %v7325 = vpop.f32.mrf.mxu0
      %v7326 = vadd.f32 0.0, %v7325
      %7327 = vmatmul.f32.gmra.mxu0 %v4232
      %v7328 = vpop.f32.mrf.mxu0
      %v7329 = vadd.f32 0.0, %v7328
      %7330 = vmatmul.f32.gmra.mxu0 %v4234
      %v7331 = vpop.f32.mrf.mxu0
      %v7332 = vadd.f32 0.0, %v7331
      %7333 = vmatmul.f32.gmra.mxu0 %v4236
      %v7334 = vpop.f32.mrf.mxu0
      %v7335 = vadd.f32 0.0, %v7334
      %7336 = vmatmul.f32.gmra.mxu0 %v4238
      %v7337 = vpop.f32.mrf.mxu0
      %v7338 = vadd.f32 0.0, %v7337
      %7339 = vmatmul.f32.gmra.mxu0 %v4240
      %v7340 = vpop.f32.mrf.mxu0
      %v7341 = vadd.f32 0.0, %v7340
      %7342 = vmatmul.f32.gmra.mxu0 %v4242
      %v7343 = vpop.f32.mrf.mxu0
      %v7344 = vadd.f32 0.0, %v7343
      %7345 = vmatmul.f32.gmra.mxu0 %v4244
      %v7346 = vpop.f32.mrf.mxu0
      %v7347 = vadd.f32 0.0, %v7346
      %7348 = vmatmul.f32.gmra.mxu0 %v4246
      %v7349 = vpop.f32.mrf.mxu0
      %v7350 = vadd.f32 0.0, %v7349
      %7351 = vmatmul.f32.gmra.mxu0 %v5694
      %v7352 = vpop.f32.mrf.mxu0
      %v7353 = vadd.f32 0.0, %v7352
      %7354 = vmatmul.f32.gmra.mxu0 %v5696
      %v7355 = vpop.f32.mrf.mxu0
      %v7356 = vadd.f32 0.0, %v7355
      %7357 = vmatmul.f32.gmra.mxu0 %v5698
      %v7358 = vpop.f32.mrf.mxu0
      %v7359 = vadd.f32 0.0, %v7358
      %7360 = vmatmul.f32.gmra.mxu0 %v7147
      %v7361 = vpop.f32.mrf.mxu0
      %v7362 = vadd.f32 0.0, %v7361
      %7363 = vmatmul.f32.gmra.mxu0 %v7149
      %v7364 = vpop.f32.mrf.mxu0
      %v7365 = vadd.f32 0.0, %v7364
      %7366 = vmatmul.f32.gmra.mxu0 %v7151
      %v7367 = vpop.f32.mrf.mxu0
      %v7368 = vadd.f32 0.0, %v7367
      %7369 = vmatmul.f32.gmra.mxu0 %v7153
      %v7370 = vpop.f32.mrf.mxu0
      %v7371 = vadd.f32 0.0, %v7370
      %7372 = vdwg.mxu0
      %v7373 = vadd.f32 %v7073, %v7176
      %v7374 = vadd.f32 %v7074, %v7179
      %v7375 = vadd.f32 %v7075, %v7182
      %v7376 = vadd.f32 %v7076, %v7185
      %v7377 = vadd.f32 %v7077, %v7188
      %v7378 = vadd.f32 %v7078, %v7191
      %v7379 = vadd.f32 %v7079, %v7194
      %v7380 = vadd.f32 %v7080, %v7197
      %v7381 = vadd.f32 %v7081, %v7200
      %v7382 = vadd.f32 %v7082, %v7203
      %v7383 = vadd.f32 %v7083, %v7206
      %v7384 = vadd.f32 %v7084, %v7209
      %v7385 = vadd.f32 %v7085, %v7212
      %v7386 = vadd.f32 %v7086, %v7215
      %v7387 = vadd.f32 %v7087, %v7218
      %v7388 = vadd.f32 %v7088, %v7221
      %v7389 = vadd.f32 %v7089, %v7224
      %v7390 = vadd.f32 %v7090, %v7227
      %v7391 = vadd.f32 %v7091, %v7230
      %v7392 = vadd.f32 %v7092, %v7233
      %v7393 = vadd.f32 %v7093, %v7236
      %v7394 = vadd.f32 %v7094, %v7239
      %v7395 = vadd.f32 %v7095, %v7242
      %v7396 = vadd.f32 %v7096, %v7245
      %v7397 = vadd.f32 %v7097, %v7248
      %v7398 = vadd.f32 %v7098, %v7251
      %v7399 = vadd.f32 %v7099, %v7254
      %v7400 = vadd.f32 %v7100, %v7257
      %v7401 = vadd.f32 %v7101, %v7260
      %v7402 = vadd.f32 %v7102, %v7263
      %v7403 = vadd.f32 %v7103, %v7266
      %v7404 = vadd.f32 %v7104, %v7269
      %v7405 = vadd.f32 %v7105, %v7272
      %v7406 = vadd.f32 %v7106, %v7275
      %v7407 = vadd.f32 %v7107, %v7278
      %v7408 = vadd.f32 %v7108, %v7281
      %v7409 = vadd.f32 %v7109, %v7284
      %v7410 = vadd.f32 %v7110, %v7287
      %v7411 = vadd.f32 %v7111, %v7290
      %v7412 = vadd.f32 %v7112, %v7293
      %v7413 = vadd.f32 %v7113, %v7296
      %v7414 = vadd.f32 %v7114, %v7299
      %v7415 = vadd.f32 %v7115, %v7302
      %v7416 = vadd.f32 %v7116, %v7305
      %v7417 = vadd.f32 %v7117, %v7308
      %v7418 = vadd.f32 %v7118, %v7311
      %v7419 = vadd.f32 %v7119, %v7314
      %v7420 = vadd.f32 %v7120, %v7317
      %v7421 = vadd.f32 %v7121, %v7320
      %v7422 = vadd.f32 %v7122, %v7323
      %v7423 = vadd.f32 %v7123, %v7326
      %v7424 = vadd.f32 %v7124, %v7329
      %v7425 = vadd.f32 %v7125, %v7332
      %v7426 = vadd.f32 %v7126, %v7335
      %v7427 = vadd.f32 %v7127, %v7338
      %v7428 = vadd.f32 %v7128, %v7341
      %v7429 = vadd.f32 %v7129, %v7344
      %v7430 = vadd.f32 %v7130, %v7347
      %v7431 = vadd.f32 %v7131, %v7350
      %v7432 = vadd.f32 %v7132, %v7353
      %v7433 = vadd.f32 %v7133, %v7356
      %v7434 = vadd.f32 %v7134, %v7359
      %v7435 = vadd.f32 %v7135, %v7362
      %v7436 = vadd.f32 %v7136, %v7365
      %v7437 = vadd.f32 %v7137, %v7368
      %v7438 = vadd.f32 %v7138, %v7371
      %s7439 = scalar_lea.vmem %s3, 96
      %v7440 = vld [vmem:[%s7439] sm:$0x3f]
      %v7441 = vrot.slane %v2522, 4
      %v7442 = vsel %vm747, %v5992, %v7441
      %v7443 = vrot.slane %v2523, 4
      %v7444 = vsel %vm747, %v7441, %v7443
      %v7445 = vrot.slane %v2524, 4
      %v7446 = vsel %vm747, %v7443, %v7445
      %v7447 = vsel %vm2733, %v7442, 0
      %v7449 = vsel %vm2733, %v7444, 0
      %v7451 = vsel %vm2733, %v7446, 0
      %v7453 = vsel %vm2733, %v7445, 0
      %v7456 = vsel %vm2866, %v7440, 0
      %7458 = vmatpush.msra.mxu0 0.0
      %7459 = vmatpush.msra.mxu0 0.0
      %7460 = vmatpush.msra.mxu0 0.0
      %7461 = vmatpush.msra.mxu0 0.0
      %7462 = vmatpush.msra.mxu0 0.0
      %7463 = vmatpush.msra.mxu0 0.0
      %7464 = vmatpush.msra.mxu0 0.0
      %7465 = vmatpush.msra.mxu0 0.0
      %7466 = vmatpush.msra.mxu0 0.0
      %7467 = vmatpush.msra.mxu0 0.0
      %7468 = vmatpush.msra.mxu0 0.0
      %7469 = vmatpush.msra.mxu0 0.0
      %7470 = vmatpush.msra.mxu0 0.0
      %7471 = vmatpush.msra.mxu0 0.0
      %7472 = vmatpush.msra.mxu0 0.0
      %7473 = vmatpush.msra.mxu0 %v7456
      %7474 = vmatmul.f32.gmra.mxu0 %v4679
      %v7475 = vpop.f32.mrf.mxu0
      %v7476 = vadd.f32 0.0, %v7475
      %7477 = vmatmul.f32.gmra.mxu0 %v4681
      %v7478 = vpop.f32.mrf.mxu0
      %v7479 = vadd.f32 0.0, %v7478
      %7480 = vmatmul.f32.gmra.mxu0 %v4683
      %v7481 = vpop.f32.mrf.mxu0
      %v7482 = vadd.f32 0.0, %v7481
      %7483 = vmatmul.f32.gmra.mxu0 %v4685
      %v7484 = vpop.f32.mrf.mxu0
      %v7485 = vadd.f32 0.0, %v7484
      %7486 = vmatmul.f32.gmra.mxu0 %v4687
      %v7487 = vpop.f32.mrf.mxu0
      %v7488 = vadd.f32 0.0, %v7487
      %7489 = vmatmul.f32.gmra.mxu0 %v4689
      %v7490 = vpop.f32.mrf.mxu0
      %v7491 = vadd.f32 0.0, %v7490
      %7492 = vmatmul.f32.gmra.mxu0 %v4691
      %v7493 = vpop.f32.mrf.mxu0
      %v7494 = vadd.f32 0.0, %v7493
      %7495 = vmatmul.f32.gmra.mxu0 %v4693
      %v7496 = vpop.f32.mrf.mxu0
      %v7497 = vadd.f32 0.0, %v7496
      %7498 = vmatmul.f32.gmra.mxu0 %v4695
      %v7499 = vpop.f32.mrf.mxu0
      %v7500 = vadd.f32 0.0, %v7499
      %7501 = vmatmul.f32.gmra.mxu0 %v4697
      %v7502 = vpop.f32.mrf.mxu0
      %v7503 = vadd.f32 0.0, %v7502
      %7504 = vmatmul.f32.gmra.mxu0 %v4699
      %v7505 = vpop.f32.mrf.mxu0
      %v7506 = vadd.f32 0.0, %v7505
      %7507 = vmatmul.f32.gmra.mxu0 %v4701
      %v7508 = vpop.f32.mrf.mxu0
      %v7509 = vadd.f32 0.0, %v7508
      %7510 = vmatmul.f32.gmra.mxu0 %v4703
      %v7511 = vpop.f32.mrf.mxu0
      %v7512 = vadd.f32 0.0, %v7511
      %7513 = vmatmul.f32.gmra.mxu0 %v4705
      %v7514 = vpop.f32.mrf.mxu0
      %v7515 = vadd.f32 0.0, %v7514
      %7516 = vmatmul.f32.gmra.mxu0 %v4707
      %v7517 = vpop.f32.mrf.mxu0
      %v7518 = vadd.f32 0.0, %v7517
      %7519 = vmatmul.f32.gmra.mxu0 %v4709
      %v7520 = vpop.f32.mrf.mxu0
      %v7521 = vadd.f32 0.0, %v7520
      %7522 = vmatmul.f32.gmra.mxu0 %v4711
      %v7523 = vpop.f32.mrf.mxu0
      %v7524 = vadd.f32 0.0, %v7523
      %7525 = vmatmul.f32.gmra.mxu0 %v4713
      %v7526 = vpop.f32.mrf.mxu0
      %v7527 = vadd.f32 0.0, %v7526
      %7528 = vmatmul.f32.gmra.mxu0 %v4715
      %v7529 = vpop.f32.mrf.mxu0
      %v7530 = vadd.f32 0.0, %v7529
      %7531 = vmatmul.f32.gmra.mxu0 %v4717
      %v7532 = vpop.f32.mrf.mxu0
      %v7533 = vadd.f32 0.0, %v7532
      %7534 = vmatmul.f32.gmra.mxu0 %v4719
      %v7535 = vpop.f32.mrf.mxu0
      %v7536 = vadd.f32 0.0, %v7535
      %7537 = vmatmul.f32.gmra.mxu0 %v4721
      %v7538 = vpop.f32.mrf.mxu0
      %v7539 = vadd.f32 0.0, %v7538
      %7540 = vmatmul.f32.gmra.mxu0 %v4723
      %v7541 = vpop.f32.mrf.mxu0
      %v7542 = vadd.f32 0.0, %v7541
      %7543 = vmatmul.f32.gmra.mxu0 %v4725
      %v7544 = vpop.f32.mrf.mxu0
      %v7545 = vadd.f32 0.0, %v7544
      %7546 = vmatmul.f32.gmra.mxu0 %v4727
      %v7547 = vpop.f32.mrf.mxu0
      %v7548 = vadd.f32 0.0, %v7547
      %7549 = vmatmul.f32.gmra.mxu0 %v4729
      %v7550 = vpop.f32.mrf.mxu0
      %v7551 = vadd.f32 0.0, %v7550
      %7552 = vmatmul.f32.gmra.mxu0 %v4731
      %v7553 = vpop.f32.mrf.mxu0
      %v7554 = vadd.f32 0.0, %v7553
      %7555 = vmatmul.f32.gmra.mxu0 %v4733
      %v7556 = vpop.f32.mrf.mxu0
      %v7557 = vadd.f32 0.0, %v7556
      %7558 = vmatmul.f32.gmra.mxu0 %v4735
      %v7559 = vpop.f32.mrf.mxu0
      %v7560 = vadd.f32 0.0, %v7559
      %7561 = vmatmul.f32.gmra.mxu0 %v4737
      %v7562 = vpop.f32.mrf.mxu0
      %v7563 = vadd.f32 0.0, %v7562
      %7564 = vmatmul.f32.gmra.mxu0 %v4739
      %v7565 = vpop.f32.mrf.mxu0
      %v7566 = vadd.f32 0.0, %v7565
      %7567 = vmatmul.f32.gmra.mxu0 %v4741
      %v7568 = vpop.f32.mrf.mxu0
      %v7569 = vadd.f32 0.0, %v7568
      %7570 = vmatmul.f32.gmra.mxu0 %v4743
      %v7571 = vpop.f32.mrf.mxu0
      %v7572 = vadd.f32 0.0, %v7571
      %7573 = vmatmul.f32.gmra.mxu0 %v4745
      %v7574 = vpop.f32.mrf.mxu0
      %v7575 = vadd.f32 0.0, %v7574
      %7576 = vmatmul.f32.gmra.mxu0 %v4747
      %v7577 = vpop.f32.mrf.mxu0
      %v7578 = vadd.f32 0.0, %v7577
      %7579 = vmatmul.f32.gmra.mxu0 %v4749
      %v7580 = vpop.f32.mrf.mxu0
      %v7581 = vadd.f32 0.0, %v7580
      %7582 = vmatmul.f32.gmra.mxu0 %v4751
      %v7583 = vpop.f32.mrf.mxu0
      %v7584 = vadd.f32 0.0, %v7583
      %7585 = vmatmul.f32.gmra.mxu0 %v4753
      %v7586 = vpop.f32.mrf.mxu0
      %v7587 = vadd.f32 0.0, %v7586
      %7588 = vmatmul.f32.gmra.mxu0 %v4755
      %v7589 = vpop.f32.mrf.mxu0
      %v7590 = vadd.f32 0.0, %v7589
      %7591 = vmatmul.f32.gmra.mxu0 %v4757
      %v7592 = vpop.f32.mrf.mxu0
      %v7593 = vadd.f32 0.0, %v7592
      %7594 = vmatmul.f32.gmra.mxu0 %v4759
      %v7595 = vpop.f32.mrf.mxu0
      %v7596 = vadd.f32 0.0, %v7595
      %7597 = vmatmul.f32.gmra.mxu0 %v4761
      %v7598 = vpop.f32.mrf.mxu0
      %v7599 = vadd.f32 0.0, %v7598
      %7600 = vmatmul.f32.gmra.mxu0 %v4763
      %v7601 = vpop.f32.mrf.mxu0
      %v7602 = vadd.f32 0.0, %v7601
      %7603 = vmatmul.f32.gmra.mxu0 %v4765
      %v7604 = vpop.f32.mrf.mxu0
      %v7605 = vadd.f32 0.0, %v7604
      %7606 = vmatmul.f32.gmra.mxu0 %v4767
      %v7607 = vpop.f32.mrf.mxu0
      %v7608 = vadd.f32 0.0, %v7607
      %7609 = vmatmul.f32.gmra.mxu0 %v4769
      %v7610 = vpop.f32.mrf.mxu0
      %v7611 = vadd.f32 0.0, %v7610
      %7612 = vmatmul.f32.gmra.mxu0 %v4771
      %v7613 = vpop.f32.mrf.mxu0
      %v7614 = vadd.f32 0.0, %v7613
      %7615 = vmatmul.f32.gmra.mxu0 %v4773
      %v7616 = vpop.f32.mrf.mxu0
      %v7617 = vadd.f32 0.0, %v7616
      %7618 = vmatmul.f32.gmra.mxu0 %v4775
      %v7619 = vpop.f32.mrf.mxu0
      %v7620 = vadd.f32 0.0, %v7619
      %7621 = vmatmul.f32.gmra.mxu0 %v4777
      %v7622 = vpop.f32.mrf.mxu0
      %v7623 = vadd.f32 0.0, %v7622
      %7624 = vmatmul.f32.gmra.mxu0 %v4779
      %v7625 = vpop.f32.mrf.mxu0
      %v7626 = vadd.f32 0.0, %v7625
      %7627 = vmatmul.f32.gmra.mxu0 %v4781
      %v7628 = vpop.f32.mrf.mxu0
      %v7629 = vadd.f32 0.0, %v7628
      %7630 = vmatmul.f32.gmra.mxu0 %v4783
      %v7631 = vpop.f32.mrf.mxu0
      %v7632 = vadd.f32 0.0, %v7631
      %7633 = vmatmul.f32.gmra.mxu0 %v4785
      %v7634 = vpop.f32.mrf.mxu0
      %v7635 = vadd.f32 0.0, %v7634
      %7636 = vmatmul.f32.gmra.mxu0 %v4787
      %v7637 = vpop.f32.mrf.mxu0
      %v7638 = vadd.f32 0.0, %v7637
      %7639 = vmatmul.f32.gmra.mxu0 %v4789
      %v7640 = vpop.f32.mrf.mxu0
      %v7641 = vadd.f32 0.0, %v7640
      %7642 = vmatmul.f32.gmra.mxu0 %v4791
      %v7643 = vpop.f32.mrf.mxu0
      %v7644 = vadd.f32 0.0, %v7643
      %7645 = vmatmul.f32.gmra.mxu0 %v4793
      %v7646 = vpop.f32.mrf.mxu0
      %v7647 = vadd.f32 0.0, %v7646
      %7648 = vmatmul.f32.gmra.mxu0 %v4795
      %v7649 = vpop.f32.mrf.mxu0
      %v7650 = vadd.f32 0.0, %v7649
      %7651 = vmatmul.f32.gmra.mxu0 %v5994
      %v7652 = vpop.f32.mrf.mxu0
      %v7653 = vadd.f32 0.0, %v7652
      %7654 = vmatmul.f32.gmra.mxu0 %v5996
      %v7655 = vpop.f32.mrf.mxu0
      %v7656 = vadd.f32 0.0, %v7655
      %7657 = vmatmul.f32.gmra.mxu0 %v5998
      %v7658 = vpop.f32.mrf.mxu0
      %v7659 = vadd.f32 0.0, %v7658
      %7660 = vmatmul.f32.gmra.mxu0 %v7447
      %v7661 = vpop.f32.mrf.mxu0
      %v7662 = vadd.f32 0.0, %v7661
      %7663 = vmatmul.f32.gmra.mxu0 %v7449
      %v7664 = vpop.f32.mrf.mxu0
      %v7665 = vadd.f32 0.0, %v7664
      %7666 = vmatmul.f32.gmra.mxu0 %v7451
      %v7667 = vpop.f32.mrf.mxu0
      %v7668 = vadd.f32 0.0, %v7667
      %7669 = vmatmul.f32.gmra.mxu0 %v7453
      %v7670 = vpop.f32.mrf.mxu0
      %v7671 = vadd.f32 0.0, %v7670
      %7672 = vdwg.mxu0
      %v7673 = vadd.f32 %v7373, %v7476
      %v7674 = vadd.f32 %v7374, %v7479
      %v7675 = vadd.f32 %v7375, %v7482
      %v7676 = vadd.f32 %v7376, %v7485
      %v7677 = vadd.f32 %v7377, %v7488
      %v7678 = vadd.f32 %v7378, %v7491
      %v7679 = vadd.f32 %v7379, %v7494
      %v7680 = vadd.f32 %v7380, %v7497
      %v7681 = vadd.f32 %v7381, %v7500
      %v7682 = vadd.f32 %v7382, %v7503
      %v7683 = vadd.f32 %v7383, %v7506
      %v7684 = vadd.f32 %v7384, %v7509
      %v7685 = vadd.f32 %v7385, %v7512
      %v7686 = vadd.f32 %v7386, %v7515
      %v7687 = vadd.f32 %v7387, %v7518
      %v7688 = vadd.f32 %v7388, %v7521
      %v7689 = vadd.f32 %v7389, %v7524
      %v7690 = vadd.f32 %v7390, %v7527
      %v7691 = vadd.f32 %v7391, %v7530
      %v7692 = vadd.f32 %v7392, %v7533
      %v7693 = vadd.f32 %v7393, %v7536
      %v7694 = vadd.f32 %v7394, %v7539
      %v7695 = vadd.f32 %v7395, %v7542
      %v7696 = vadd.f32 %v7396, %v7545
      %v7697 = vadd.f32 %v7397, %v7548
      %v7698 = vadd.f32 %v7398, %v7551
      %v7699 = vadd.f32 %v7399, %v7554
      %v7700 = vadd.f32 %v7400, %v7557
      %v7701 = vadd.f32 %v7401, %v7560
      %v7702 = vadd.f32 %v7402, %v7563
      %v7703 = vadd.f32 %v7403, %v7566
      %v7704 = vadd.f32 %v7404, %v7569
      %v7705 = vadd.f32 %v7405, %v7572
      %v7706 = vadd.f32 %v7406, %v7575
      %v7707 = vadd.f32 %v7407, %v7578
      %v7708 = vadd.f32 %v7408, %v7581
      %v7709 = vadd.f32 %v7409, %v7584
      %v7710 = vadd.f32 %v7410, %v7587
      %v7711 = vadd.f32 %v7411, %v7590
      %v7712 = vadd.f32 %v7412, %v7593
      %v7713 = vadd.f32 %v7413, %v7596
      %v7714 = vadd.f32 %v7414, %v7599
      %v7715 = vadd.f32 %v7415, %v7602
      %v7716 = vadd.f32 %v7416, %v7605
      %v7717 = vadd.f32 %v7417, %v7608
      %v7718 = vadd.f32 %v7418, %v7611
      %v7719 = vadd.f32 %v7419, %v7614
      %v7720 = vadd.f32 %v7420, %v7617
      %v7721 = vadd.f32 %v7421, %v7620
      %v7722 = vadd.f32 %v7422, %v7623
      %v7723 = vadd.f32 %v7423, %v7626
      %v7724 = vadd.f32 %v7424, %v7629
      %v7725 = vadd.f32 %v7425, %v7632
      %v7726 = vadd.f32 %v7426, %v7635
      %v7727 = vadd.f32 %v7427, %v7638
      %v7728 = vadd.f32 %v7428, %v7641
      %v7729 = vadd.f32 %v7429, %v7644
      %v7730 = vadd.f32 %v7430, %v7647
      %v7731 = vadd.f32 %v7431, %v7650
      %v7732 = vadd.f32 %v7432, %v7653
      %v7733 = vadd.f32 %v7433, %v7656
      %v7734 = vadd.f32 %v7434, %v7659
      %v7735 = vadd.f32 %v7435, %v7662
      %v7736 = vadd.f32 %v7436, %v7665
      %v7737 = vadd.f32 %v7437, %v7668
      %v7738 = vadd.f32 %v7438, %v7671
      %s7739 = scalar_lea.vmem %s3, 104
      %v7740 = vld [vmem:[%s7739] sm:$0x3f]
      %v7741 = vrot.slane %v2522, 5
      %v7742 = vsel %vm6288, %v6418, %v7741
      %v7743 = vrot.slane %v2523, 5
      %v7744 = vsel %vm6288, %v7741, %v7743
      %v7745 = vrot.slane %v2524, 5
      %v7746 = vsel %vm6288, %v7743, %v7745
      %v7747 = vsel %vm2733, %v7742, 0
      %v7749 = vsel %vm2733, %v7744, 0
      %v7751 = vsel %vm2733, %v7746, 0
      %v7753 = vsel %vm2733, %v7745, 0
      %v7756 = vsel %vm2866, %v7740, 0
      %7758 = vmatpush.msra.mxu0 0.0
      %7759 = vmatpush.msra.mxu0 0.0
      %7760 = vmatpush.msra.mxu0 0.0
      %7761 = vmatpush.msra.mxu0 0.0
      %7762 = vmatpush.msra.mxu0 0.0
      %7763 = vmatpush.msra.mxu0 0.0
      %7764 = vmatpush.msra.mxu0 0.0
      %7765 = vmatpush.msra.mxu0 0.0
      %7766 = vmatpush.msra.mxu0 0.0
      %7767 = vmatpush.msra.mxu0 0.0
      %7768 = vmatpush.msra.mxu0 0.0
      %7769 = vmatpush.msra.mxu0 0.0
      %7770 = vmatpush.msra.mxu0 0.0
      %7771 = vmatpush.msra.mxu0 0.0
      %7772 = vmatpush.msra.mxu0 0.0
      %7773 = vmatpush.msra.mxu0 %v7756
      %7774 = vmatmul.f32.gmra.mxu0 %v6426
      %v7775 = vpop.f32.mrf.mxu0
      %v7776 = vadd.f32 0.0, %v7775
      %7777 = vmatmul.f32.gmra.mxu0 %v6428
      %v7778 = vpop.f32.mrf.mxu0
      %v7779 = vadd.f32 0.0, %v7778
      %7780 = vmatmul.f32.gmra.mxu0 %v6430
      %v7781 = vpop.f32.mrf.mxu0
      %v7782 = vadd.f32 0.0, %v7781
      %7783 = vmatmul.f32.gmra.mxu0 %v6432
      %v7784 = vpop.f32.mrf.mxu0
      %v7785 = vadd.f32 0.0, %v7784
      %7786 = vmatmul.f32.gmra.mxu0 %v6434
      %v7787 = vpop.f32.mrf.mxu0
      %v7788 = vadd.f32 0.0, %v7787
      %7789 = vmatmul.f32.gmra.mxu0 %v6436
      %v7790 = vpop.f32.mrf.mxu0
      %v7791 = vadd.f32 0.0, %v7790
      %7792 = vmatmul.f32.gmra.mxu0 %v6438
      %v7793 = vpop.f32.mrf.mxu0
      %v7794 = vadd.f32 0.0, %v7793
      %7795 = vmatmul.f32.gmra.mxu0 %v6440
      %v7796 = vpop.f32.mrf.mxu0
      %v7797 = vadd.f32 0.0, %v7796
      %7798 = vmatmul.f32.gmra.mxu0 %v6442
      %v7799 = vpop.f32.mrf.mxu0
      %v7800 = vadd.f32 0.0, %v7799
      %7801 = vmatmul.f32.gmra.mxu0 %v6444
      %v7802 = vpop.f32.mrf.mxu0
      %v7803 = vadd.f32 0.0, %v7802
      %7804 = vmatmul.f32.gmra.mxu0 %v6446
      %v7805 = vpop.f32.mrf.mxu0
      %v7806 = vadd.f32 0.0, %v7805
      %7807 = vmatmul.f32.gmra.mxu0 %v6448
      %v7808 = vpop.f32.mrf.mxu0
      %v7809 = vadd.f32 0.0, %v7808
      %7810 = vmatmul.f32.gmra.mxu0 %v6450
      %v7811 = vpop.f32.mrf.mxu0
      %v7812 = vadd.f32 0.0, %v7811
      %7813 = vmatmul.f32.gmra.mxu0 %v6452
      %v7814 = vpop.f32.mrf.mxu0
      %v7815 = vadd.f32 0.0, %v7814
      %7816 = vmatmul.f32.gmra.mxu0 %v6454
      %v7817 = vpop.f32.mrf.mxu0
      %v7818 = vadd.f32 0.0, %v7817
      %7819 = vmatmul.f32.gmra.mxu0 %v6456
      %v7820 = vpop.f32.mrf.mxu0
      %v7821 = vadd.f32 0.0, %v7820
      %7822 = vmatmul.f32.gmra.mxu0 %v6458
      %v7823 = vpop.f32.mrf.mxu0
      %v7824 = vadd.f32 0.0, %v7823
      %7825 = vmatmul.f32.gmra.mxu0 %v6460
      %v7826 = vpop.f32.mrf.mxu0
      %v7827 = vadd.f32 0.0, %v7826
      %7828 = vmatmul.f32.gmra.mxu0 %v6462
      %v7829 = vpop.f32.mrf.mxu0
      %v7830 = vadd.f32 0.0, %v7829
      %7831 = vmatmul.f32.gmra.mxu0 %v6464
      %v7832 = vpop.f32.mrf.mxu0
      %v7833 = vadd.f32 0.0, %v7832
      %7834 = vmatmul.f32.gmra.mxu0 %v6466
      %v7835 = vpop.f32.mrf.mxu0
      %v7836 = vadd.f32 0.0, %v7835
      %7837 = vmatmul.f32.gmra.mxu0 %v6468
      %v7838 = vpop.f32.mrf.mxu0
      %v7839 = vadd.f32 0.0, %v7838
      %7840 = vmatmul.f32.gmra.mxu0 %v6470
      %v7841 = vpop.f32.mrf.mxu0
      %v7842 = vadd.f32 0.0, %v7841
      %7843 = vmatmul.f32.gmra.mxu0 %v6472
      %v7844 = vpop.f32.mrf.mxu0
      %v7845 = vadd.f32 0.0, %v7844
      %7846 = vmatmul.f32.gmra.mxu0 %v6474
      %v7847 = vpop.f32.mrf.mxu0
      %v7848 = vadd.f32 0.0, %v7847
      %7849 = vmatmul.f32.gmra.mxu0 %v6476
      %v7850 = vpop.f32.mrf.mxu0
      %v7851 = vadd.f32 0.0, %v7850
      %7852 = vmatmul.f32.gmra.mxu0 %v6478
      %v7853 = vpop.f32.mrf.mxu0
      %v7854 = vadd.f32 0.0, %v7853
      %7855 = vmatmul.f32.gmra.mxu0 %v6480
      %v7856 = vpop.f32.mrf.mxu0
      %v7857 = vadd.f32 0.0, %v7856
      %7858 = vmatmul.f32.gmra.mxu0 %v6482
      %v7859 = vpop.f32.mrf.mxu0
      %v7860 = vadd.f32 0.0, %v7859
      %7861 = vmatmul.f32.gmra.mxu0 %v6484
      %v7862 = vpop.f32.mrf.mxu0
      %v7863 = vadd.f32 0.0, %v7862
      %7864 = vmatmul.f32.gmra.mxu0 %v6486
      %v7865 = vpop.f32.mrf.mxu0
      %v7866 = vadd.f32 0.0, %v7865
      %7867 = vmatmul.f32.gmra.mxu0 %v6488
      %v7868 = vpop.f32.mrf.mxu0
      %v7869 = vadd.f32 0.0, %v7868
      %7870 = vmatmul.f32.gmra.mxu0 %v6490
      %v7871 = vpop.f32.mrf.mxu0
      %v7872 = vadd.f32 0.0, %v7871
      %7873 = vmatmul.f32.gmra.mxu0 %v6492
      %v7874 = vpop.f32.mrf.mxu0
      %v7875 = vadd.f32 0.0, %v7874
      %7876 = vmatmul.f32.gmra.mxu0 %v6494
      %v7877 = vpop.f32.mrf.mxu0
      %v7878 = vadd.f32 0.0, %v7877
      %7879 = vmatmul.f32.gmra.mxu0 %v6496
      %v7880 = vpop.f32.mrf.mxu0
      %v7881 = vadd.f32 0.0, %v7880
      %7882 = vmatmul.f32.gmra.mxu0 %v6498
      %v7883 = vpop.f32.mrf.mxu0
      %v7884 = vadd.f32 0.0, %v7883
      %7885 = vmatmul.f32.gmra.mxu0 %v6500
      %v7886 = vpop.f32.mrf.mxu0
      %v7887 = vadd.f32 0.0, %v7886
      %7888 = vmatmul.f32.gmra.mxu0 %v6502
      %v7889 = vpop.f32.mrf.mxu0
      %v7890 = vadd.f32 0.0, %v7889
      %7891 = vmatmul.f32.gmra.mxu0 %v6504
      %v7892 = vpop.f32.mrf.mxu0
      %v7893 = vadd.f32 0.0, %v7892
      %7894 = vmatmul.f32.gmra.mxu0 %v6506
      %v7895 = vpop.f32.mrf.mxu0
      %v7896 = vadd.f32 0.0, %v7895
      %7897 = vmatmul.f32.gmra.mxu0 %v6508
      %v7898 = vpop.f32.mrf.mxu0
      %v7899 = vadd.f32 0.0, %v7898
      %7900 = vmatmul.f32.gmra.mxu0 %v6510
      %v7901 = vpop.f32.mrf.mxu0
      %v7902 = vadd.f32 0.0, %v7901
      %7903 = vmatmul.f32.gmra.mxu0 %v6512
      %v7904 = vpop.f32.mrf.mxu0
      %v7905 = vadd.f32 0.0, %v7904
      %7906 = vmatmul.f32.gmra.mxu0 %v6514
      %v7907 = vpop.f32.mrf.mxu0
      %v7908 = vadd.f32 0.0, %v7907
      %7909 = vmatmul.f32.gmra.mxu0 %v6516
      %v7910 = vpop.f32.mrf.mxu0
      %v7911 = vadd.f32 0.0, %v7910
      %7912 = vmatmul.f32.gmra.mxu0 %v6518
      %v7913 = vpop.f32.mrf.mxu0
      %v7914 = vadd.f32 0.0, %v7913
      %7915 = vmatmul.f32.gmra.mxu0 %v6520
      %v7916 = vpop.f32.mrf.mxu0
      %v7917 = vadd.f32 0.0, %v7916
      %7918 = vmatmul.f32.gmra.mxu0 %v6522
      %v7919 = vpop.f32.mrf.mxu0
      %v7920 = vadd.f32 0.0, %v7919
      %7921 = vmatmul.f32.gmra.mxu0 %v6524
      %v7922 = vpop.f32.mrf.mxu0
      %v7923 = vadd.f32 0.0, %v7922
      %7924 = vmatmul.f32.gmra.mxu0 %v6526
      %v7925 = vpop.f32.mrf.mxu0
      %v7926 = vadd.f32 0.0, %v7925
      %7927 = vmatmul.f32.gmra.mxu0 %v6528
      %v7928 = vpop.f32.mrf.mxu0
      %v7929 = vadd.f32 0.0, %v7928
      %7930 = vmatmul.f32.gmra.mxu0 %v6530
      %v7931 = vpop.f32.mrf.mxu0
      %v7932 = vadd.f32 0.0, %v7931
      %7933 = vmatmul.f32.gmra.mxu0 %v6532
      %v7934 = vpop.f32.mrf.mxu0
      %v7935 = vadd.f32 0.0, %v7934
      %7936 = vmatmul.f32.gmra.mxu0 %v6534
      %v7937 = vpop.f32.mrf.mxu0
      %v7938 = vadd.f32 0.0, %v7937
      %7939 = vmatmul.f32.gmra.mxu0 %v6536
      %v7940 = vpop.f32.mrf.mxu0
      %v7941 = vadd.f32 0.0, %v7940
      %7942 = vmatmul.f32.gmra.mxu0 %v6538
      %v7943 = vpop.f32.mrf.mxu0
      %v7944 = vadd.f32 0.0, %v7943
      %7945 = vmatmul.f32.gmra.mxu0 %v6540
      %v7946 = vpop.f32.mrf.mxu0
      %v7947 = vadd.f32 0.0, %v7946
      %7948 = vmatmul.f32.gmra.mxu0 %v6542
      %v7949 = vpop.f32.mrf.mxu0
      %v7950 = vadd.f32 0.0, %v7949
      %7951 = vmatmul.f32.gmra.mxu0 %v6544
      %v7952 = vpop.f32.mrf.mxu0
      %v7953 = vadd.f32 0.0, %v7952
      %7954 = vmatmul.f32.gmra.mxu0 %v6546
      %v7955 = vpop.f32.mrf.mxu0
      %v7956 = vadd.f32 0.0, %v7955
      %7957 = vmatmul.f32.gmra.mxu0 %v6548
      %v7958 = vpop.f32.mrf.mxu0
      %v7959 = vadd.f32 0.0, %v7958
      %7960 = vmatmul.f32.gmra.mxu0 %v7747
      %v7961 = vpop.f32.mrf.mxu0
      %v7962 = vadd.f32 0.0, %v7961
      %7963 = vmatmul.f32.gmra.mxu0 %v7749
      %v7964 = vpop.f32.mrf.mxu0
      %v7965 = vadd.f32 0.0, %v7964
      %7966 = vmatmul.f32.gmra.mxu0 %v7751
      %v7967 = vpop.f32.mrf.mxu0
      %v7968 = vadd.f32 0.0, %v7967
      %7969 = vmatmul.f32.gmra.mxu0 %v7753
      %v7970 = vpop.f32.mrf.mxu0
      %v7971 = vadd.f32 0.0, %v7970
      %7972 = vdwg.mxu0
      %v7973 = vadd.f32 %v7673, %v7776
      %v7974 = vadd.f32 %v7674, %v7779
      %v7975 = vadd.f32 %v7675, %v7782
      %v7976 = vadd.f32 %v7676, %v7785
      %v7977 = vadd.f32 %v7677, %v7788
      %v7978 = vadd.f32 %v7678, %v7791
      %v7979 = vadd.f32 %v7679, %v7794
      %v7980 = vadd.f32 %v7680, %v7797
      %v7981 = vadd.f32 %v7681, %v7800
      %v7982 = vadd.f32 %v7682, %v7803
      %v7983 = vadd.f32 %v7683, %v7806
      %v7984 = vadd.f32 %v7684, %v7809
      %v7985 = vadd.f32 %v7685, %v7812
      %v7986 = vadd.f32 %v7686, %v7815
      %v7987 = vadd.f32 %v7687, %v7818
      %v7988 = vadd.f32 %v7688, %v7821
      %v7989 = vadd.f32 %v7689, %v7824
      %v7990 = vadd.f32 %v7690, %v7827
      %v7991 = vadd.f32 %v7691, %v7830
      %v7992 = vadd.f32 %v7692, %v7833
      %v7993 = vadd.f32 %v7693, %v7836
      %v7994 = vadd.f32 %v7694, %v7839
      %v7995 = vadd.f32 %v7695, %v7842
      %v7996 = vadd.f32 %v7696, %v7845
      %v7997 = vadd.f32 %v7697, %v7848
      %v7998 = vadd.f32 %v7698, %v7851
      %v7999 = vadd.f32 %v7699, %v7854
      %v8000 = vadd.f32 %v7700, %v7857
      %v8001 = vadd.f32 %v7701, %v7860
      %v8002 = vadd.f32 %v7702, %v7863
      %v8003 = vadd.f32 %v7703, %v7866
      %v8004 = vadd.f32 %v7704, %v7869
      %v8005 = vadd.f32 %v7705, %v7872
      %v8006 = vadd.f32 %v7706, %v7875
      %v8007 = vadd.f32 %v7707, %v7878
      %v8008 = vadd.f32 %v7708, %v7881
      %v8009 = vadd.f32 %v7709, %v7884
      %v8010 = vadd.f32 %v7710, %v7887
      %v8011 = vadd.f32 %v7711, %v7890
      %v8012 = vadd.f32 %v7712, %v7893
      %v8013 = vadd.f32 %v7713, %v7896
      %v8014 = vadd.f32 %v7714, %v7899
      %v8015 = vadd.f32 %v7715, %v7902
      %v8016 = vadd.f32 %v7716, %v7905
      %v8017 = vadd.f32 %v7717, %v7908
      %v8018 = vadd.f32 %v7718, %v7911
      %v8019 = vadd.f32 %v7719, %v7914
      %v8020 = vadd.f32 %v7720, %v7917
      %v8021 = vadd.f32 %v7721, %v7920
      %v8022 = vadd.f32 %v7722, %v7923
      %v8023 = vadd.f32 %v7723, %v7926
      %v8024 = vadd.f32 %v7724, %v7929
      %v8025 = vadd.f32 %v7725, %v7932
      %v8026 = vadd.f32 %v7726, %v7935
      %v8027 = vadd.f32 %v7727, %v7938
      %v8028 = vadd.f32 %v7728, %v7941
      %v8029 = vadd.f32 %v7729, %v7944
      %v8030 = vadd.f32 %v7730, %v7947
      %v8031 = vadd.f32 %v7731, %v7950
      %v8032 = vadd.f32 %v7732, %v7953
      %v8033 = vadd.f32 %v7733, %v7956
      %v8034 = vadd.f32 %v7734, %v7959
      %v8035 = vadd.f32 %v7735, %v7962
      %v8036 = vadd.f32 %v7736, %v7965
      %v8037 = vadd.f32 %v7737, %v7968
      %v8038 = vadd.f32 %v7738, %v7971
      %s8039 = scalar_lea.vmem %s3, 112
      %v8040 = vld [vmem:[%s8039] sm:$0x3f]
      %vm8041 = vcmask 1041408
      %v8042 = vrot.slane %v2459, 6
      %v8043 = vrot.slane %v2460, 6
      %v8044 = vsel %vm8041, %v8042, %v8043
      %v8045 = vrot.slane %v2461, 6
      %v8046 = vsel %vm8041, %v8043, %v8045
      %v8047 = vrot.slane %v2462, 6
      %v8048 = vsel %vm8041, %v8045, %v8047
      %v8049 = vrot.slane %v2463, 6
      %v8050 = vsel %vm8041, %v8047, %v8049
      %v8051 = vrot.slane %v2464, 6
      %v8052 = vsel %vm8041, %v8049, %v8051
      %v8053 = vrot.slane %v2465, 6
      %v8054 = vsel %vm8041, %v8051, %v8053
      %v8055 = vrot.slane %v2466, 6
      %v8056 = vsel %vm8041, %v8053, %v8055
      %v8057 = vrot.slane %v2467, 6
      %v8058 = vsel %vm8041, %v8055, %v8057
      %v8059 = vrot.slane %v2468, 6
      %v8060 = vsel %vm8041, %v8057, %v8059
      %v8061 = vrot.slane %v2469, 6
      %v8062 = vsel %vm8041, %v8059, %v8061
      %v8063 = vrot.slane %v2470, 6
      %v8064 = vsel %vm8041, %v8061, %v8063
      %v8065 = vrot.slane %v2471, 6
      %v8066 = vsel %vm8041, %v8063, %v8065
      %v8067 = vrot.slane %v2472, 6
      %v8068 = vsel %vm8041, %v8065, %v8067
      %v8069 = vrot.slane %v2473, 6
      %v8070 = vsel %vm8041, %v8067, %v8069
      %v8071 = vrot.slane %v2474, 6
      %v8072 = vsel %vm8041, %v8069, %v8071
      %v8073 = vrot.slane %v2475, 6
      %v8074 = vsel %vm8041, %v8071, %v8073
      %v8075 = vrot.slane %v2476, 6
      %v8076 = vsel %vm8041, %v8073, %v8075
      %v8077 = vrot.slane %v2477, 6
      %v8078 = vsel %vm8041, %v8075, %v8077
      %v8079 = vrot.slane %v2478, 6
      %v8080 = vsel %vm8041, %v8077, %v8079
      %v8081 = vrot.slane %v2479, 6
      %v8082 = vsel %vm8041, %v8079, %v8081
      %v8083 = vrot.slane %v2480, 6
      %v8084 = vsel %vm8041, %v8081, %v8083
      %v8085 = vrot.slane %v2481, 6
      %v8086 = vsel %vm8041, %v8083, %v8085
      %v8087 = vrot.slane %v2482, 6
      %v8088 = vsel %vm8041, %v8085, %v8087
      %v8089 = vrot.slane %v2483, 6
      %v8090 = vsel %vm8041, %v8087, %v8089
      %v8091 = vrot.slane %v2484, 6
      %v8092 = vsel %vm8041, %v8089, %v8091
      %v8093 = vrot.slane %v2485, 6
      %v8094 = vsel %vm8041, %v8091, %v8093
      %v8095 = vrot.slane %v2486, 6
      %v8096 = vsel %vm8041, %v8093, %v8095
      %v8097 = vrot.slane %v2487, 6
      %v8098 = vsel %vm8041, %v8095, %v8097
      %v8099 = vrot.slane %v2488, 6
      %v8100 = vsel %vm8041, %v8097, %v8099
      %v8101 = vrot.slane %v2489, 6
      %v8102 = vsel %vm8041, %v8099, %v8101
      %v8103 = vrot.slane %v2490, 6
      %v8104 = vsel %vm8041, %v8101, %v8103
      %v8105 = vrot.slane %v2491, 6
      %v8106 = vsel %vm8041, %v8103, %v8105
      %v8107 = vrot.slane %v2492, 6
      %v8108 = vsel %vm8041, %v8105, %v8107
      %v8109 = vrot.slane %v2493, 6
      %v8110 = vsel %vm8041, %v8107, %v8109
      %v8111 = vrot.slane %v2494, 6
      %v8112 = vsel %vm8041, %v8109, %v8111
      %v8113 = vrot.slane %v2495, 6
      %v8114 = vsel %vm8041, %v8111, %v8113
      %v8115 = vrot.slane %v2496, 6
      %v8116 = vsel %vm8041, %v8113, %v8115
      %v8117 = vrot.slane %v2497, 6
      %v8118 = vsel %vm8041, %v8115, %v8117
      %v8119 = vrot.slane %v2498, 6
      %v8120 = vsel %vm8041, %v8117, %v8119
      %v8121 = vrot.slane %v2499, 6
      %v8122 = vsel %vm8041, %v8119, %v8121
      %v8123 = vrot.slane %v2500, 6
      %v8124 = vsel %vm8041, %v8121, %v8123
      %v8125 = vrot.slane %v2501, 6
      %v8126 = vsel %vm8041, %v8123, %v8125
      %v8127 = vrot.slane %v2502, 6
      %v8128 = vsel %vm8041, %v8125, %v8127
      %v8129 = vrot.slane %v2503, 6
      %v8130 = vsel %vm8041, %v8127, %v8129
      %v8131 = vrot.slane %v2504, 6
      %v8132 = vsel %vm8041, %v8129, %v8131
      %v8133 = vrot.slane %v2505, 6
      %v8134 = vsel %vm8041, %v8131, %v8133
      %v8135 = vrot.slane %v2506, 6
      %v8136 = vsel %vm8041, %v8133, %v8135
      %v8137 = vrot.slane %v2507, 6
      %v8138 = vsel %vm8041, %v8135, %v8137
      %v8139 = vrot.slane %v2508, 6
      %v8140 = vsel %vm8041, %v8137, %v8139
      %v8141 = vrot.slane %v2509, 6
      %v8142 = vsel %vm8041, %v8139, %v8141
      %v8143 = vrot.slane %v2510, 6
      %v8144 = vsel %vm8041, %v8141, %v8143
      %v8145 = vrot.slane %v2511, 6
      %v8146 = vsel %vm8041, %v8143, %v8145
      %v8147 = vrot.slane %v2512, 6
      %v8148 = vsel %vm8041, %v8145, %v8147
      %v8149 = vrot.slane %v2513, 6
      %v8150 = vsel %vm8041, %v8147, %v8149
      %v8151 = vrot.slane %v2514, 6
      %v8152 = vsel %vm8041, %v8149, %v8151
      %v8153 = vrot.slane %v2515, 6
      %v8154 = vsel %vm8041, %v8151, %v8153
      %v8155 = vrot.slane %v2516, 6
      %v8156 = vsel %vm8041, %v8153, %v8155
      %v8157 = vrot.slane %v2517, 6
      %v8158 = vsel %vm8041, %v8155, %v8157
      %v8159 = vrot.slane %v2518, 6
      %v8160 = vsel %vm8041, %v8157, %v8159
      %v8161 = vrot.slane %v2519, 6
      %v8162 = vsel %vm8041, %v8159, %v8161
      %v8163 = vrot.slane %v2520, 6
      %v8164 = vsel %vm8041, %v8161, %v8163
      %v8165 = vrot.slane %v2521, 6
      %v8166 = vsel %vm8041, %v8163, %v8165
      %v8167 = vrot.slane %v2522, 6
      %v8168 = vsel %vm8041, %v8165, %v8167
      %v8169 = vrot.slane %v2523, 6
      %v8170 = vsel %vm8041, %v8167, %v8169
      %v8171 = vrot.slane %v2524, 6
      %v8172 = vsel %vm8041, %v8169, %v8171
      %v8173 = vsel %vm2733, %v8044, 0
      %v8175 = vsel %vm2733, %v8046, 0
      %v8177 = vsel %vm2733, %v8048, 0
      %v8179 = vsel %vm2733, %v8050, 0
      %v8181 = vsel %vm2733, %v8052, 0
      %v8183 = vsel %vm2733, %v8054, 0
      %v8185 = vsel %vm2733, %v8056, 0
      %v8187 = vsel %vm2733, %v8058, 0
      %v8189 = vsel %vm2733, %v8060, 0
      %v8191 = vsel %vm2733, %v8062, 0
      %v8193 = vsel %vm2733, %v8064, 0
      %v8195 = vsel %vm2733, %v8066, 0
      %v8197 = vsel %vm2733, %v8068, 0
      %v8199 = vsel %vm2733, %v8070, 0
      %v8201 = vsel %vm2733, %v8072, 0
      %v8203 = vsel %vm2733, %v8074, 0
      %v8205 = vsel %vm2733, %v8076, 0
      %v8207 = vsel %vm2733, %v8078, 0
      %v8209 = vsel %vm2733, %v8080, 0
      %v8211 = vsel %vm2733, %v8082, 0
      %v8213 = vsel %vm2733, %v8084, 0
      %v8215 = vsel %vm2733, %v8086, 0
      %v8217 = vsel %vm2733, %v8088, 0
      %v8219 = vsel %vm2733, %v8090, 0
      %v8221 = vsel %vm2733, %v8092, 0
      %v8223 = vsel %vm2733, %v8094, 0
      %v8225 = vsel %vm2733, %v8096, 0
      %v8227 = vsel %vm2733, %v8098, 0
      %v8229 = vsel %vm2733, %v8100, 0
      %v8231 = vsel %vm2733, %v8102, 0
      %v8233 = vsel %vm2733, %v8104, 0
      %v8235 = vsel %vm2733, %v8106, 0
      %v8237 = vsel %vm2733, %v8108, 0
      %v8239 = vsel %vm2733, %v8110, 0
      %v8241 = vsel %vm2733, %v8112, 0
      %v8243 = vsel %vm2733, %v8114, 0
      %v8245 = vsel %vm2733, %v8116, 0
      %v8247 = vsel %vm2733, %v8118, 0
      %v8249 = vsel %vm2733, %v8120, 0
      %v8251 = vsel %vm2733, %v8122, 0
      %v8253 = vsel %vm2733, %v8124, 0
      %v8255 = vsel %vm2733, %v8126, 0
      %v8257 = vsel %vm2733, %v8128, 0
      %v8259 = vsel %vm2733, %v8130, 0
      %v8261 = vsel %vm2733, %v8132, 0
      %v8263 = vsel %vm2733, %v8134, 0
      %v8265 = vsel %vm2733, %v8136, 0
      %v8267 = vsel %vm2733, %v8138, 0
      %v8269 = vsel %vm2733, %v8140, 0
      %v8271 = vsel %vm2733, %v8142, 0
      %v8273 = vsel %vm2733, %v8144, 0
      %v8275 = vsel %vm2733, %v8146, 0
      %v8277 = vsel %vm2733, %v8148, 0
      %v8279 = vsel %vm2733, %v8150, 0
      %v8281 = vsel %vm2733, %v8152, 0
      %v8283 = vsel %vm2733, %v8154, 0
      %v8285 = vsel %vm2733, %v8156, 0
      %v8287 = vsel %vm2733, %v8158, 0
      %v8289 = vsel %vm2733, %v8160, 0
      %v8291 = vsel %vm2733, %v8162, 0
      %v8293 = vsel %vm2733, %v8164, 0
      %v8295 = vsel %vm2733, %v8166, 0
      %v8297 = vsel %vm2733, %v8168, 0
      %v8299 = vsel %vm2733, %v8170, 0
      %v8301 = vsel %vm2733, %v8172, 0
      %v8303 = vsel %vm2733, %v8171, 0
      %v8306 = vsel %vm2866, %v8040, 0
      %8308 = vmatpush.msra.mxu0 0.0
      %8309 = vmatpush.msra.mxu0 0.0
      %8310 = vmatpush.msra.mxu0 0.0
      %8311 = vmatpush.msra.mxu0 0.0
      %8312 = vmatpush.msra.mxu0 0.0
      %8313 = vmatpush.msra.mxu0 0.0
      %8314 = vmatpush.msra.mxu0 0.0
      %8315 = vmatpush.msra.mxu0 0.0
      %8316 = vmatpush.msra.mxu0 0.0
      %8317 = vmatpush.msra.mxu0 0.0
      %8318 = vmatpush.msra.mxu0 0.0
      %8319 = vmatpush.msra.mxu0 0.0
      %8320 = vmatpush.msra.mxu0 0.0
      %8321 = vmatpush.msra.mxu0 0.0
      %8322 = vmatpush.msra.mxu0 0.0
      %8323 = vmatpush.msra.mxu0 %v8306
      %8324 = vmatmul.f32.gmra.mxu0 %v8173
      %v8325 = vpop.f32.mrf.mxu0
      %v8326 = vadd.f32 0.0, %v8325
      %8327 = vmatmul.f32.gmra.mxu0 %v8175
      %v8328 = vpop.f32.mrf.mxu0
      %v8329 = vadd.f32 0.0, %v8328
      %8330 = vmatmul.f32.gmra.mxu0 %v8177
      %v8331 = vpop.f32.mrf.mxu0
      %v8332 = vadd.f32 0.0, %v8331
      %8333 = vmatmul.f32.gmra.mxu0 %v8179
      %v8334 = vpop.f32.mrf.mxu0
      %v8335 = vadd.f32 0.0, %v8334
      %8336 = vmatmul.f32.gmra.mxu0 %v8181
      %v8337 = vpop.f32.mrf.mxu0
      %v8338 = vadd.f32 0.0, %v8337
      %8339 = vmatmul.f32.gmra.mxu0 %v8183
      %v8340 = vpop.f32.mrf.mxu0
      %v8341 = vadd.f32 0.0, %v8340
      %8342 = vmatmul.f32.gmra.mxu0 %v8185
      %v8343 = vpop.f32.mrf.mxu0
      %v8344 = vadd.f32 0.0, %v8343
      %8345 = vmatmul.f32.gmra.mxu0 %v8187
      %v8346 = vpop.f32.mrf.mxu0
      %v8347 = vadd.f32 0.0, %v8346
      %8348 = vmatmul.f32.gmra.mxu0 %v8189
      %v8349 = vpop.f32.mrf.mxu0
      %v8350 = vadd.f32 0.0, %v8349
      %8351 = vmatmul.f32.gmra.mxu0 %v8191
      %v8352 = vpop.f32.mrf.mxu0
      %v8353 = vadd.f32 0.0, %v8352
      %8354 = vmatmul.f32.gmra.mxu0 %v8193
      %v8355 = vpop.f32.mrf.mxu0
      %v8356 = vadd.f32 0.0, %v8355
      %8357 = vmatmul.f32.gmra.mxu0 %v8195
      %v8358 = vpop.f32.mrf.mxu0
      %v8359 = vadd.f32 0.0, %v8358
      %8360 = vmatmul.f32.gmra.mxu0 %v8197
      %v8361 = vpop.f32.mrf.mxu0
      %v8362 = vadd.f32 0.0, %v8361
      %8363 = vmatmul.f32.gmra.mxu0 %v8199
      %v8364 = vpop.f32.mrf.mxu0
      %v8365 = vadd.f32 0.0, %v8364
      %8366 = vmatmul.f32.gmra.mxu0 %v8201
      %v8367 = vpop.f32.mrf.mxu0
      %v8368 = vadd.f32 0.0, %v8367
      %8369 = vmatmul.f32.gmra.mxu0 %v8203
      %v8370 = vpop.f32.mrf.mxu0
      %v8371 = vadd.f32 0.0, %v8370
      %8372 = vmatmul.f32.gmra.mxu0 %v8205
      %v8373 = vpop.f32.mrf.mxu0
      %v8374 = vadd.f32 0.0, %v8373
      %8375 = vmatmul.f32.gmra.mxu0 %v8207
      %v8376 = vpop.f32.mrf.mxu0
      %v8377 = vadd.f32 0.0, %v8376
      %8378 = vmatmul.f32.gmra.mxu0 %v8209
      %v8379 = vpop.f32.mrf.mxu0
      %v8380 = vadd.f32 0.0, %v8379
      %8381 = vmatmul.f32.gmra.mxu0 %v8211
      %v8382 = vpop.f32.mrf.mxu0
      %v8383 = vadd.f32 0.0, %v8382
      %8384 = vmatmul.f32.gmra.mxu0 %v8213
      %v8385 = vpop.f32.mrf.mxu0
      %v8386 = vadd.f32 0.0, %v8385
      %8387 = vmatmul.f32.gmra.mxu0 %v8215
      %v8388 = vpop.f32.mrf.mxu0
      %v8389 = vadd.f32 0.0, %v8388
      %8390 = vmatmul.f32.gmra.mxu0 %v8217
      %v8391 = vpop.f32.mrf.mxu0
      %v8392 = vadd.f32 0.0, %v8391
      %8393 = vmatmul.f32.gmra.mxu0 %v8219
      %v8394 = vpop.f32.mrf.mxu0
      %v8395 = vadd.f32 0.0, %v8394
      %8396 = vmatmul.f32.gmra.mxu0 %v8221
      %v8397 = vpop.f32.mrf.mxu0
      %v8398 = vadd.f32 0.0, %v8397
      %8399 = vmatmul.f32.gmra.mxu0 %v8223
      %v8400 = vpop.f32.mrf.mxu0
      %v8401 = vadd.f32 0.0, %v8400
      %8402 = vmatmul.f32.gmra.mxu0 %v8225
      %v8403 = vpop.f32.mrf.mxu0
      %v8404 = vadd.f32 0.0, %v8403
      %8405 = vmatmul.f32.gmra.mxu0 %v8227
      %v8406 = vpop.f32.mrf.mxu0
      %v8407 = vadd.f32 0.0, %v8406
      %8408 = vmatmul.f32.gmra.mxu0 %v8229
      %v8409 = vpop.f32.mrf.mxu0
      %v8410 = vadd.f32 0.0, %v8409
      %8411 = vmatmul.f32.gmra.mxu0 %v8231
      %v8412 = vpop.f32.mrf.mxu0
      %v8413 = vadd.f32 0.0, %v8412
      %8414 = vmatmul.f32.gmra.mxu0 %v8233
      %v8415 = vpop.f32.mrf.mxu0
      %v8416 = vadd.f32 0.0, %v8415
      %8417 = vmatmul.f32.gmra.mxu0 %v8235
      %v8418 = vpop.f32.mrf.mxu0
      %v8419 = vadd.f32 0.0, %v8418
      %8420 = vmatmul.f32.gmra.mxu0 %v8237
      %v8421 = vpop.f32.mrf.mxu0
      %v8422 = vadd.f32 0.0, %v8421
      %8423 = vmatmul.f32.gmra.mxu0 %v8239
      %v8424 = vpop.f32.mrf.mxu0
      %v8425 = vadd.f32 0.0, %v8424
      %8426 = vmatmul.f32.gmra.mxu0 %v8241
      %v8427 = vpop.f32.mrf.mxu0
      %v8428 = vadd.f32 0.0, %v8427
      %8429 = vmatmul.f32.gmra.mxu0 %v8243
      %v8430 = vpop.f32.mrf.mxu0
      %v8431 = vadd.f32 0.0, %v8430
      %8432 = vmatmul.f32.gmra.mxu0 %v8245
      %v8433 = vpop.f32.mrf.mxu0
      %v8434 = vadd.f32 0.0, %v8433
      %8435 = vmatmul.f32.gmra.mxu0 %v8247
      %v8436 = vpop.f32.mrf.mxu0
      %v8437 = vadd.f32 0.0, %v8436
      %8438 = vmatmul.f32.gmra.mxu0 %v8249
      %v8439 = vpop.f32.mrf.mxu0
      %v8440 = vadd.f32 0.0, %v8439
      %8441 = vmatmul.f32.gmra.mxu0 %v8251
      %v8442 = vpop.f32.mrf.mxu0
      %v8443 = vadd.f32 0.0, %v8442
      %8444 = vmatmul.f32.gmra.mxu0 %v8253
      %v8445 = vpop.f32.mrf.mxu0
      %v8446 = vadd.f32 0.0, %v8445
      %8447 = vmatmul.f32.gmra.mxu0 %v8255
      %v8448 = vpop.f32.mrf.mxu0
      %v8449 = vadd.f32 0.0, %v8448
      %8450 = vmatmul.f32.gmra.mxu0 %v8257
      %v8451 = vpop.f32.mrf.mxu0
      %v8452 = vadd.f32 0.0, %v8451
      %8453 = vmatmul.f32.gmra.mxu0 %v8259
      %v8454 = vpop.f32.mrf.mxu0
      %v8455 = vadd.f32 0.0, %v8454
      %8456 = vmatmul.f32.gmra.mxu0 %v8261
      %v8457 = vpop.f32.mrf.mxu0
      %v8458 = vadd.f32 0.0, %v8457
      %8459 = vmatmul.f32.gmra.mxu0 %v8263
      %v8460 = vpop.f32.mrf.mxu0
      %v8461 = vadd.f32 0.0, %v8460
      %8462 = vmatmul.f32.gmra.mxu0 %v8265
      %v8463 = vpop.f32.mrf.mxu0
      %v8464 = vadd.f32 0.0, %v8463
      %8465 = vmatmul.f32.gmra.mxu0 %v8267
      %v8466 = vpop.f32.mrf.mxu0
      %v8467 = vadd.f32 0.0, %v8466
      %8468 = vmatmul.f32.gmra.mxu0 %v8269
      %v8469 = vpop.f32.mrf.mxu0
      %v8470 = vadd.f32 0.0, %v8469
      %8471 = vmatmul.f32.gmra.mxu0 %v8271
      %v8472 = vpop.f32.mrf.mxu0
      %v8473 = vadd.f32 0.0, %v8472
      %8474 = vmatmul.f32.gmra.mxu0 %v8273
      %v8475 = vpop.f32.mrf.mxu0
      %v8476 = vadd.f32 0.0, %v8475
      %8477 = vmatmul.f32.gmra.mxu0 %v8275
      %v8478 = vpop.f32.mrf.mxu0
      %v8479 = vadd.f32 0.0, %v8478
      %8480 = vmatmul.f32.gmra.mxu0 %v8277
      %v8481 = vpop.f32.mrf.mxu0
      %v8482 = vadd.f32 0.0, %v8481
      %8483 = vmatmul.f32.gmra.mxu0 %v8279
      %v8484 = vpop.f32.mrf.mxu0
      %v8485 = vadd.f32 0.0, %v8484
      %8486 = vmatmul.f32.gmra.mxu0 %v8281
      %v8487 = vpop.f32.mrf.mxu0
      %v8488 = vadd.f32 0.0, %v8487
      %8489 = vmatmul.f32.gmra.mxu0 %v8283
      %v8490 = vpop.f32.mrf.mxu0
      %v8491 = vadd.f32 0.0, %v8490
      %8492 = vmatmul.f32.gmra.mxu0 %v8285
      %v8493 = vpop.f32.mrf.mxu0
      %v8494 = vadd.f32 0.0, %v8493
      %8495 = vmatmul.f32.gmra.mxu0 %v8287
      %v8496 = vpop.f32.mrf.mxu0
      %v8497 = vadd.f32 0.0, %v8496
      %8498 = vmatmul.f32.gmra.mxu0 %v8289
      %v8499 = vpop.f32.mrf.mxu0
      %v8500 = vadd.f32 0.0, %v8499
      %8501 = vmatmul.f32.gmra.mxu0 %v8291
      %v8502 = vpop.f32.mrf.mxu0
      %v8503 = vadd.f32 0.0, %v8502
      %8504 = vmatmul.f32.gmra.mxu0 %v8293
      %v8505 = vpop.f32.mrf.mxu0
      %v8506 = vadd.f32 0.0, %v8505
      %8507 = vmatmul.f32.gmra.mxu0 %v8295
      %v8508 = vpop.f32.mrf.mxu0
      %v8509 = vadd.f32 0.0, %v8508
      %8510 = vmatmul.f32.gmra.mxu0 %v8297
      %v8511 = vpop.f32.mrf.mxu0
      %v8512 = vadd.f32 0.0, %v8511
      %8513 = vmatmul.f32.gmra.mxu0 %v8299
      %v8514 = vpop.f32.mrf.mxu0
      %v8515 = vadd.f32 0.0, %v8514
      %8516 = vmatmul.f32.gmra.mxu0 %v8301
      %v8517 = vpop.f32.mrf.mxu0
      %v8518 = vadd.f32 0.0, %v8517
      %8519 = vmatmul.f32.gmra.mxu0 %v8303
      %v8520 = vpop.f32.mrf.mxu0
      %v8521 = vadd.f32 0.0, %v8520
      %8522 = vdwg.mxu0
      %v8523 = vadd.f32 %v7973, %v8326
      %v8524 = vadd.f32 %v7974, %v8329
      %v8525 = vadd.f32 %v7975, %v8332
      %v8526 = vadd.f32 %v7976, %v8335
      %v8527 = vadd.f32 %v7977, %v8338
      %v8528 = vadd.f32 %v7978, %v8341
      %v8529 = vadd.f32 %v7979, %v8344
      %v8530 = vadd.f32 %v7980, %v8347
      %v8531 = vadd.f32 %v7981, %v8350
      %v8532 = vadd.f32 %v7982, %v8353
      %v8533 = vadd.f32 %v7983, %v8356
      %v8534 = vadd.f32 %v7984, %v8359
      %v8535 = vadd.f32 %v7985, %v8362
      %v8536 = vadd.f32 %v7986, %v8365
      %v8537 = vadd.f32 %v7987, %v8368
      %v8538 = vadd.f32 %v7988, %v8371
      %v8539 = vadd.f32 %v7989, %v8374
      %v8540 = vadd.f32 %v7990, %v8377
      %v8541 = vadd.f32 %v7991, %v8380
      %v8542 = vadd.f32 %v7992, %v8383
      %v8543 = vadd.f32 %v7993, %v8386
      %v8544 = vadd.f32 %v7994, %v8389
      %v8545 = vadd.f32 %v7995, %v8392
      %v8546 = vadd.f32 %v7996, %v8395
      %v8547 = vadd.f32 %v7997, %v8398
      %v8548 = vadd.f32 %v7998, %v8401
      %v8549 = vadd.f32 %v7999, %v8404
      %v8550 = vadd.f32 %v8000, %v8407
      %v8551 = vadd.f32 %v8001, %v8410
      %v8552 = vadd.f32 %v8002, %v8413
      %v8553 = vadd.f32 %v8003, %v8416
      %v8554 = vadd.f32 %v8004, %v8419
      %v8555 = vadd.f32 %v8005, %v8422
      %v8556 = vadd.f32 %v8006, %v8425
      %v8557 = vadd.f32 %v8007, %v8428
      %v8558 = vadd.f32 %v8008, %v8431
      %v8559 = vadd.f32 %v8009, %v8434
      %v8560 = vadd.f32 %v8010, %v8437
      %v8561 = vadd.f32 %v8011, %v8440
      %v8562 = vadd.f32 %v8012, %v8443
      %v8563 = vadd.f32 %v8013, %v8446
      %v8564 = vadd.f32 %v8014, %v8449
      %v8565 = vadd.f32 %v8015, %v8452
      %v8566 = vadd.f32 %v8016, %v8455
      %v8567 = vadd.f32 %v8017, %v8458
      %v8568 = vadd.f32 %v8018, %v8461
      %v8569 = vadd.f32 %v8019, %v8464
      %v8570 = vadd.f32 %v8020, %v8467
      %v8571 = vadd.f32 %v8021, %v8470
      %v8572 = vadd.f32 %v8022, %v8473
      %v8573 = vadd.f32 %v8023, %v8476
      %v8574 = vadd.f32 %v8024, %v8479
      %v8575 = vadd.f32 %v8025, %v8482
      %v8576 = vadd.f32 %v8026, %v8485
      %v8577 = vadd.f32 %v8027, %v8488
      %v8578 = vadd.f32 %v8028, %v8491
      %v8579 = vadd.f32 %v8029, %v8494
      %v8580 = vadd.f32 %v8030, %v8497
      %v8581 = vadd.f32 %v8031, %v8500
      %v8582 = vadd.f32 %v8032, %v8503
      %v8583 = vadd.f32 %v8033, %v8506
      %v8584 = vadd.f32 %v8034, %v8509
      %v8585 = vadd.f32 %v8035, %v8512
      %v8586 = vadd.f32 %v8036, %v8515
      %v8587 = vadd.f32 %v8037, %v8518
      %v8588 = vadd.f32 %v8038, %v8521
      %s8589 = scalar_lea.vmem %s3, 120
      %v8590 = vld [vmem:[%s8589] sm:$0x3f]
      %v8594 = vrot.slane %v2525, 3
      %v8595 = vsel %vm3986, %v7145, %v8594
      %v8596 = vrot.slane %v2526, 3
      %v8597 = vsel %vm3986, %v8594, %v8596
      %v8598 = vrot.slane %v2527, 3
      %v8599 = vsel %vm3986, %v8596, %v8598
      %v8600 = vsel %vm2733, %v8595, 0
      %v8602 = vsel %vm2733, %v8597, 0
      %v8604 = vsel %vm2733, %v8599, 0
      %v8606 = vsel %vm2733, %v8598, 0
      %v8609 = vsel %vm2866, %v8590, 0
      %8611 = vmatpush.msra.mxu0 0.0
      %8612 = vmatpush.msra.mxu0 0.0
      %8613 = vmatpush.msra.mxu0 0.0
      %8614 = vmatpush.msra.mxu0 0.0
      %8615 = vmatpush.msra.mxu0 0.0
      %8616 = vmatpush.msra.mxu0 0.0
      %8617 = vmatpush.msra.mxu0 0.0
      %8618 = vmatpush.msra.mxu0 0.0
      %8619 = vmatpush.msra.mxu0 0.0
      %8620 = vmatpush.msra.mxu0 0.0
      %8621 = vmatpush.msra.mxu0 0.0
      %8622 = vmatpush.msra.mxu0 0.0
      %8623 = vmatpush.msra.mxu0 0.0
      %8624 = vmatpush.msra.mxu0 0.0
      %8625 = vmatpush.msra.mxu0 0.0
      %8626 = vmatpush.msra.mxu0 %v8609
      %8627 = vmatmul.f32.gmra.mxu0 %v4136
      %v8628 = vpop.f32.mrf.mxu0
      %v8629 = vadd.f32 0.0, %v8628
      %8630 = vmatmul.f32.gmra.mxu0 %v4138
      %v8631 = vpop.f32.mrf.mxu0
      %v8632 = vadd.f32 0.0, %v8631
      %8633 = vmatmul.f32.gmra.mxu0 %v4140
      %v8634 = vpop.f32.mrf.mxu0
      %v8635 = vadd.f32 0.0, %v8634
      %8636 = vmatmul.f32.gmra.mxu0 %v4142
      %v8637 = vpop.f32.mrf.mxu0
      %v8638 = vadd.f32 0.0, %v8637
      %8639 = vmatmul.f32.gmra.mxu0 %v4144
      %v8640 = vpop.f32.mrf.mxu0
      %v8641 = vadd.f32 0.0, %v8640
      %8642 = vmatmul.f32.gmra.mxu0 %v4146
      %v8643 = vpop.f32.mrf.mxu0
      %v8644 = vadd.f32 0.0, %v8643
      %8645 = vmatmul.f32.gmra.mxu0 %v4148
      %v8646 = vpop.f32.mrf.mxu0
      %v8647 = vadd.f32 0.0, %v8646
      %8648 = vmatmul.f32.gmra.mxu0 %v4150
      %v8649 = vpop.f32.mrf.mxu0
      %v8650 = vadd.f32 0.0, %v8649
      %8651 = vmatmul.f32.gmra.mxu0 %v4152
      %v8652 = vpop.f32.mrf.mxu0
      %v8653 = vadd.f32 0.0, %v8652
      %8654 = vmatmul.f32.gmra.mxu0 %v4154
      %v8655 = vpop.f32.mrf.mxu0
      %v8656 = vadd.f32 0.0, %v8655
      %8657 = vmatmul.f32.gmra.mxu0 %v4156
      %v8658 = vpop.f32.mrf.mxu0
      %v8659 = vadd.f32 0.0, %v8658
      %8660 = vmatmul.f32.gmra.mxu0 %v4158
      %v8661 = vpop.f32.mrf.mxu0
      %v8662 = vadd.f32 0.0, %v8661
      %8663 = vmatmul.f32.gmra.mxu0 %v4160
      %v8664 = vpop.f32.mrf.mxu0
      %v8665 = vadd.f32 0.0, %v8664
      %8666 = vmatmul.f32.gmra.mxu0 %v4162
      %v8667 = vpop.f32.mrf.mxu0
      %v8668 = vadd.f32 0.0, %v8667
      %8669 = vmatmul.f32.gmra.mxu0 %v4164
      %v8670 = vpop.f32.mrf.mxu0
      %v8671 = vadd.f32 0.0, %v8670
      %8672 = vmatmul.f32.gmra.mxu0 %v4166
      %v8673 = vpop.f32.mrf.mxu0
      %v8674 = vadd.f32 0.0, %v8673
      %8675 = vmatmul.f32.gmra.mxu0 %v4168
      %v8676 = vpop.f32.mrf.mxu0
      %v8677 = vadd.f32 0.0, %v8676
      %8678 = vmatmul.f32.gmra.mxu0 %v4170
      %v8679 = vpop.f32.mrf.mxu0
      %v8680 = vadd.f32 0.0, %v8679
      %8681 = vmatmul.f32.gmra.mxu0 %v4172
      %v8682 = vpop.f32.mrf.mxu0
      %v8683 = vadd.f32 0.0, %v8682
      %8684 = vmatmul.f32.gmra.mxu0 %v4174
      %v8685 = vpop.f32.mrf.mxu0
      %v8686 = vadd.f32 0.0, %v8685
      %8687 = vmatmul.f32.gmra.mxu0 %v4176
      %v8688 = vpop.f32.mrf.mxu0
      %v8689 = vadd.f32 0.0, %v8688
      %8690 = vmatmul.f32.gmra.mxu0 %v4178
      %v8691 = vpop.f32.mrf.mxu0
      %v8692 = vadd.f32 0.0, %v8691
      %8693 = vmatmul.f32.gmra.mxu0 %v4180
      %v8694 = vpop.f32.mrf.mxu0
      %v8695 = vadd.f32 0.0, %v8694
      %8696 = vmatmul.f32.gmra.mxu0 %v4182
      %v8697 = vpop.f32.mrf.mxu0
      %v8698 = vadd.f32 0.0, %v8697
      %8699 = vmatmul.f32.gmra.mxu0 %v4184
      %v8700 = vpop.f32.mrf.mxu0
      %v8701 = vadd.f32 0.0, %v8700
      %8702 = vmatmul.f32.gmra.mxu0 %v4186
      %v8703 = vpop.f32.mrf.mxu0
      %v8704 = vadd.f32 0.0, %v8703
      %8705 = vmatmul.f32.gmra.mxu0 %v4188
      %v8706 = vpop.f32.mrf.mxu0
      %v8707 = vadd.f32 0.0, %v8706
      %8708 = vmatmul.f32.gmra.mxu0 %v4190
      %v8709 = vpop.f32.mrf.mxu0
      %v8710 = vadd.f32 0.0, %v8709
      %8711 = vmatmul.f32.gmra.mxu0 %v4192
      %v8712 = vpop.f32.mrf.mxu0
      %v8713 = vadd.f32 0.0, %v8712
      %8714 = vmatmul.f32.gmra.mxu0 %v4194
      %v8715 = vpop.f32.mrf.mxu0
      %v8716 = vadd.f32 0.0, %v8715
      %8717 = vmatmul.f32.gmra.mxu0 %v4196
      %v8718 = vpop.f32.mrf.mxu0
      %v8719 = vadd.f32 0.0, %v8718
      %8720 = vmatmul.f32.gmra.mxu0 %v4198
      %v8721 = vpop.f32.mrf.mxu0
      %v8722 = vadd.f32 0.0, %v8721
      %8723 = vmatmul.f32.gmra.mxu0 %v4200
      %v8724 = vpop.f32.mrf.mxu0
      %v8725 = vadd.f32 0.0, %v8724
      %8726 = vmatmul.f32.gmra.mxu0 %v4202
      %v8727 = vpop.f32.mrf.mxu0
      %v8728 = vadd.f32 0.0, %v8727
      %8729 = vmatmul.f32.gmra.mxu0 %v4204
      %v8730 = vpop.f32.mrf.mxu0
      %v8731 = vadd.f32 0.0, %v8730
      %8732 = vmatmul.f32.gmra.mxu0 %v4206
      %v8733 = vpop.f32.mrf.mxu0
      %v8734 = vadd.f32 0.0, %v8733
      %8735 = vmatmul.f32.gmra.mxu0 %v4208
      %v8736 = vpop.f32.mrf.mxu0
      %v8737 = vadd.f32 0.0, %v8736
      %8738 = vmatmul.f32.gmra.mxu0 %v4210
      %v8739 = vpop.f32.mrf.mxu0
      %v8740 = vadd.f32 0.0, %v8739
      %8741 = vmatmul.f32.gmra.mxu0 %v4212
      %v8742 = vpop.f32.mrf.mxu0
      %v8743 = vadd.f32 0.0, %v8742
      %8744 = vmatmul.f32.gmra.mxu0 %v4214
      %v8745 = vpop.f32.mrf.mxu0
      %v8746 = vadd.f32 0.0, %v8745
      %8747 = vmatmul.f32.gmra.mxu0 %v4216
      %v8748 = vpop.f32.mrf.mxu0
      %v8749 = vadd.f32 0.0, %v8748
      %8750 = vmatmul.f32.gmra.mxu0 %v4218
      %v8751 = vpop.f32.mrf.mxu0
      %v8752 = vadd.f32 0.0, %v8751
      %8753 = vmatmul.f32.gmra.mxu0 %v4220
      %v8754 = vpop.f32.mrf.mxu0
      %v8755 = vadd.f32 0.0, %v8754
      %8756 = vmatmul.f32.gmra.mxu0 %v4222
      %v8757 = vpop.f32.mrf.mxu0
      %v8758 = vadd.f32 0.0, %v8757
      %8759 = vmatmul.f32.gmra.mxu0 %v4224
      %v8760 = vpop.f32.mrf.mxu0
      %v8761 = vadd.f32 0.0, %v8760
      %8762 = vmatmul.f32.gmra.mxu0 %v4226
      %v8763 = vpop.f32.mrf.mxu0
      %v8764 = vadd.f32 0.0, %v8763
      %8765 = vmatmul.f32.gmra.mxu0 %v4228
      %v8766 = vpop.f32.mrf.mxu0
      %v8767 = vadd.f32 0.0, %v8766
      %8768 = vmatmul.f32.gmra.mxu0 %v4230
      %v8769 = vpop.f32.mrf.mxu0
      %v8770 = vadd.f32 0.0, %v8769
      %8771 = vmatmul.f32.gmra.mxu0 %v4232
      %v8772 = vpop.f32.mrf.mxu0
      %v8773 = vadd.f32 0.0, %v8772
      %8774 = vmatmul.f32.gmra.mxu0 %v4234
      %v8775 = vpop.f32.mrf.mxu0
      %v8776 = vadd.f32 0.0, %v8775
      %8777 = vmatmul.f32.gmra.mxu0 %v4236
      %v8778 = vpop.f32.mrf.mxu0
      %v8779 = vadd.f32 0.0, %v8778
      %8780 = vmatmul.f32.gmra.mxu0 %v4238
      %v8781 = vpop.f32.mrf.mxu0
      %v8782 = vadd.f32 0.0, %v8781
      %8783 = vmatmul.f32.gmra.mxu0 %v4240
      %v8784 = vpop.f32.mrf.mxu0
      %v8785 = vadd.f32 0.0, %v8784
      %8786 = vmatmul.f32.gmra.mxu0 %v4242
      %v8787 = vpop.f32.mrf.mxu0
      %v8788 = vadd.f32 0.0, %v8787
      %8789 = vmatmul.f32.gmra.mxu0 %v4244
      %v8790 = vpop.f32.mrf.mxu0
      %v8791 = vadd.f32 0.0, %v8790
      %8792 = vmatmul.f32.gmra.mxu0 %v4246
      %v8793 = vpop.f32.mrf.mxu0
      %v8794 = vadd.f32 0.0, %v8793
      %8795 = vmatmul.f32.gmra.mxu0 %v5694
      %v8796 = vpop.f32.mrf.mxu0
      %v8797 = vadd.f32 0.0, %v8796
      %8798 = vmatmul.f32.gmra.mxu0 %v5696
      %v8799 = vpop.f32.mrf.mxu0
      %v8800 = vadd.f32 0.0, %v8799
      %8801 = vmatmul.f32.gmra.mxu0 %v5698
      %v8802 = vpop.f32.mrf.mxu0
      %v8803 = vadd.f32 0.0, %v8802
      %8804 = vmatmul.f32.gmra.mxu0 %v7147
      %v8805 = vpop.f32.mrf.mxu0
      %v8806 = vadd.f32 0.0, %v8805
      %8807 = vmatmul.f32.gmra.mxu0 %v7149
      %v8808 = vpop.f32.mrf.mxu0
      %v8809 = vadd.f32 0.0, %v8808
      %8810 = vmatmul.f32.gmra.mxu0 %v7151
      %v8811 = vpop.f32.mrf.mxu0
      %v8812 = vadd.f32 0.0, %v8811
      %8813 = vmatmul.f32.gmra.mxu0 %v8600
      %v8814 = vpop.f32.mrf.mxu0
      %v8815 = vadd.f32 0.0, %v8814
      %8816 = vmatmul.f32.gmra.mxu0 %v8602
      %v8817 = vpop.f32.mrf.mxu0
      %v8818 = vadd.f32 0.0, %v8817
      %8819 = vmatmul.f32.gmra.mxu0 %v8604
      %v8820 = vpop.f32.mrf.mxu0
      %v8821 = vadd.f32 0.0, %v8820
      %8822 = vmatmul.f32.gmra.mxu0 %v8606
      %v8823 = vpop.f32.mrf.mxu0
      %v8824 = vadd.f32 0.0, %v8823
      %8825 = vdwg.mxu0
      %v8826 = vadd.f32 %v8523, %v8629
      %v8827 = vadd.f32 %v8524, %v8632
      %v8828 = vadd.f32 %v8525, %v8635
      %v8829 = vadd.f32 %v8526, %v8638
      %v8830 = vadd.f32 %v8527, %v8641
      %v8831 = vadd.f32 %v8528, %v8644
      %v8832 = vadd.f32 %v8529, %v8647
      %v8833 = vadd.f32 %v8530, %v8650
      %v8834 = vadd.f32 %v8531, %v8653
      %v8835 = vadd.f32 %v8532, %v8656
      %v8836 = vadd.f32 %v8533, %v8659
      %v8837 = vadd.f32 %v8534, %v8662
      %v8838 = vadd.f32 %v8535, %v8665
      %v8839 = vadd.f32 %v8536, %v8668
      %v8840 = vadd.f32 %v8537, %v8671
      %v8841 = vadd.f32 %v8538, %v8674
      %v8842 = vadd.f32 %v8539, %v8677
      %v8843 = vadd.f32 %v8540, %v8680
      %v8844 = vadd.f32 %v8541, %v8683
      %v8845 = vadd.f32 %v8542, %v8686
      %v8846 = vadd.f32 %v8543, %v8689
      %v8847 = vadd.f32 %v8544, %v8692
      %v8848 = vadd.f32 %v8545, %v8695
      %v8849 = vadd.f32 %v8546, %v8698
      %v8850 = vadd.f32 %v8547, %v8701
      %v8851 = vadd.f32 %v8548, %v8704
      %v8852 = vadd.f32 %v8549, %v8707
      %v8853 = vadd.f32 %v8550, %v8710
      %v8854 = vadd.f32 %v8551, %v8713
      %v8855 = vadd.f32 %v8552, %v8716
      %v8856 = vadd.f32 %v8553, %v8719
      %v8857 = vadd.f32 %v8554, %v8722
      %v8858 = vadd.f32 %v8555, %v8725
      %v8859 = vadd.f32 %v8556, %v8728
      %v8860 = vadd.f32 %v8557, %v8731
      %v8861 = vadd.f32 %v8558, %v8734
      %v8862 = vadd.f32 %v8559, %v8737
      %v8863 = vadd.f32 %v8560, %v8740
      %v8864 = vadd.f32 %v8561, %v8743
      %v8865 = vadd.f32 %v8562, %v8746
      %v8866 = vadd.f32 %v8563, %v8749
      %v8867 = vadd.f32 %v8564, %v8752
      %v8868 = vadd.f32 %v8565, %v8755
      %v8869 = vadd.f32 %v8566, %v8758
      %v8870 = vadd.f32 %v8567, %v8761
      %v8871 = vadd.f32 %v8568, %v8764
      %v8872 = vadd.f32 %v8569, %v8767
      %v8873 = vadd.f32 %v8570, %v8770
      %v8874 = vadd.f32 %v8571, %v8773
      %v8875 = vadd.f32 %v8572, %v8776
      %v8876 = vadd.f32 %v8573, %v8779
      %v8877 = vadd.f32 %v8574, %v8782
      %v8878 = vadd.f32 %v8575, %v8785
      %v8879 = vadd.f32 %v8576, %v8788
      %v8880 = vadd.f32 %v8577, %v8791
      %v8881 = vadd.f32 %v8578, %v8794
      %v8882 = vadd.f32 %v8579, %v8797
      %v8883 = vadd.f32 %v8580, %v8800
      %v8884 = vadd.f32 %v8581, %v8803
      %v8885 = vadd.f32 %v8582, %v8806
      %v8886 = vadd.f32 %v8583, %v8809
      %v8887 = vadd.f32 %v8584, %v8812
      %v8888 = vadd.f32 %v8585, %v8815
      %v8889 = vadd.f32 %v8586, %v8818
      %v8890 = vadd.f32 %v8587, %v8821
      %v8891 = vadd.f32 %v8588, %v8824
      %s8892 = scalar_lea.vmem %s3, 128
      %v8893 = vld [vmem:[%s8892] sm:$0x3f]
      %v8894 = vrot.slane %v2525, 4
      %v8895 = vsel %vm747, %v7445, %v8894
      %v8896 = vrot.slane %v2526, 4
      %v8897 = vsel %vm747, %v8894, %v8896
      %v8898 = vrot.slane %v2527, 4
      %v8899 = vsel %vm747, %v8896, %v8898
      %v8900 = vsel %vm2733, %v8895, 0
      %v8902 = vsel %vm2733, %v8897, 0
      %v8904 = vsel %vm2733, %v8899, 0
      %v8906 = vsel %vm2733, %v8898, 0
      %v8909 = vsel %vm2866, %v8893, 0
      %8911 = vmatpush.msra.mxu0 0.0
      %8912 = vmatpush.msra.mxu0 0.0
      %8913 = vmatpush.msra.mxu0 0.0
      %8914 = vmatpush.msra.mxu0 0.0
      %8915 = vmatpush.msra.mxu0 0.0
      %8916 = vmatpush.msra.mxu0 0.0
      %8917 = vmatpush.msra.mxu0 0.0
      %8918 = vmatpush.msra.mxu0 0.0
      %8919 = vmatpush.msra.mxu0 0.0
      %8920 = vmatpush.msra.mxu0 0.0
      %8921 = vmatpush.msra.mxu0 0.0
      %8922 = vmatpush.msra.mxu0 0.0
      %8923 = vmatpush.msra.mxu0 0.0
      %8924 = vmatpush.msra.mxu0 0.0
      %8925 = vmatpush.msra.mxu0 0.0
      %8926 = vmatpush.msra.mxu0 %v8909
      %8927 = vmatmul.f32.gmra.mxu0 %v4685
      %v8928 = vpop.f32.mrf.mxu0
      %v8929 = vadd.f32 0.0, %v8928
      %8930 = vmatmul.f32.gmra.mxu0 %v4687
      %v8931 = vpop.f32.mrf.mxu0
      %v8932 = vadd.f32 0.0, %v8931
      %8933 = vmatmul.f32.gmra.mxu0 %v4689
      %v8934 = vpop.f32.mrf.mxu0
      %v8935 = vadd.f32 0.0, %v8934
      %8936 = vmatmul.f32.gmra.mxu0 %v4691
      %v8937 = vpop.f32.mrf.mxu0
      %v8938 = vadd.f32 0.0, %v8937
      %8939 = vmatmul.f32.gmra.mxu0 %v4693
      %v8940 = vpop.f32.mrf.mxu0
      %v8941 = vadd.f32 0.0, %v8940
      %8942 = vmatmul.f32.gmra.mxu0 %v4695
      %v8943 = vpop.f32.mrf.mxu0
      %v8944 = vadd.f32 0.0, %v8943
      %8945 = vmatmul.f32.gmra.mxu0 %v4697
      %v8946 = vpop.f32.mrf.mxu0
      %v8947 = vadd.f32 0.0, %v8946
      %8948 = vmatmul.f32.gmra.mxu0 %v4699
      %v8949 = vpop.f32.mrf.mxu0
      %v8950 = vadd.f32 0.0, %v8949
      %8951 = vmatmul.f32.gmra.mxu0 %v4701
      %v8952 = vpop.f32.mrf.mxu0
      %v8953 = vadd.f32 0.0, %v8952
      %8954 = vmatmul.f32.gmra.mxu0 %v4703
      %v8955 = vpop.f32.mrf.mxu0
      %v8956 = vadd.f32 0.0, %v8955
      %8957 = vmatmul.f32.gmra.mxu0 %v4705
      %v8958 = vpop.f32.mrf.mxu0
      %v8959 = vadd.f32 0.0, %v8958
      %8960 = vmatmul.f32.gmra.mxu0 %v4707
      %v8961 = vpop.f32.mrf.mxu0
      %v8962 = vadd.f32 0.0, %v8961
      %8963 = vmatmul.f32.gmra.mxu0 %v4709
      %v8964 = vpop.f32.mrf.mxu0
      %v8965 = vadd.f32 0.0, %v8964
      %8966 = vmatmul.f32.gmra.mxu0 %v4711
      %v8967 = vpop.f32.mrf.mxu0
      %v8968 = vadd.f32 0.0, %v8967
      %8969 = vmatmul.f32.gmra.mxu0 %v4713
      %v8970 = vpop.f32.mrf.mxu0
      %v8971 = vadd.f32 0.0, %v8970
      %8972 = vmatmul.f32.gmra.mxu0 %v4715
      %v8973 = vpop.f32.mrf.mxu0
      %v8974 = vadd.f32 0.0, %v8973
      %8975 = vmatmul.f32.gmra.mxu0 %v4717
      %v8976 = vpop.f32.mrf.mxu0
      %v8977 = vadd.f32 0.0, %v8976
      %8978 = vmatmul.f32.gmra.mxu0 %v4719
      %v8979 = vpop.f32.mrf.mxu0
      %v8980 = vadd.f32 0.0, %v8979
      %8981 = vmatmul.f32.gmra.mxu0 %v4721
      %v8982 = vpop.f32.mrf.mxu0
      %v8983 = vadd.f32 0.0, %v8982
      %8984 = vmatmul.f32.gmra.mxu0 %v4723
      %v8985 = vpop.f32.mrf.mxu0
      %v8986 = vadd.f32 0.0, %v8985
      %8987 = vmatmul.f32.gmra.mxu0 %v4725
      %v8988 = vpop.f32.mrf.mxu0
      %v8989 = vadd.f32 0.0, %v8988
      %8990 = vmatmul.f32.gmra.mxu0 %v4727
      %v8991 = vpop.f32.mrf.mxu0
      %v8992 = vadd.f32 0.0, %v8991
      %8993 = vmatmul.f32.gmra.mxu0 %v4729
      %v8994 = vpop.f32.mrf.mxu0
      %v8995 = vadd.f32 0.0, %v8994
      %8996 = vmatmul.f32.gmra.mxu0 %v4731
      %v8997 = vpop.f32.mrf.mxu0
      %v8998 = vadd.f32 0.0, %v8997
      %8999 = vmatmul.f32.gmra.mxu0 %v4733
      %v9000 = vpop.f32.mrf.mxu0
      %v9001 = vadd.f32 0.0, %v9000
      %9002 = vmatmul.f32.gmra.mxu0 %v4735
      %v9003 = vpop.f32.mrf.mxu0
      %v9004 = vadd.f32 0.0, %v9003
      %9005 = vmatmul.f32.gmra.mxu0 %v4737
      %v9006 = vpop.f32.mrf.mxu0
      %v9007 = vadd.f32 0.0, %v9006
      %9008 = vmatmul.f32.gmra.mxu0 %v4739
      %v9009 = vpop.f32.mrf.mxu0
      %v9010 = vadd.f32 0.0, %v9009
      %9011 = vmatmul.f32.gmra.mxu0 %v4741
      %v9012 = vpop.f32.mrf.mxu0
      %v9013 = vadd.f32 0.0, %v9012
      %9014 = vmatmul.f32.gmra.mxu0 %v4743
      %v9015 = vpop.f32.mrf.mxu0
      %v9016 = vadd.f32 0.0, %v9015
      %9017 = vmatmul.f32.gmra.mxu0 %v4745
      %v9018 = vpop.f32.mrf.mxu0
      %v9019 = vadd.f32 0.0, %v9018
      %9020 = vmatmul.f32.gmra.mxu0 %v4747
      %v9021 = vpop.f32.mrf.mxu0
      %v9022 = vadd.f32 0.0, %v9021
      %9023 = vmatmul.f32.gmra.mxu0 %v4749
      %v9024 = vpop.f32.mrf.mxu0
      %v9025 = vadd.f32 0.0, %v9024
      %9026 = vmatmul.f32.gmra.mxu0 %v4751
      %v9027 = vpop.f32.mrf.mxu0
      %v9028 = vadd.f32 0.0, %v9027
      %9029 = vmatmul.f32.gmra.mxu0 %v4753
      %v9030 = vpop.f32.mrf.mxu0
      %v9031 = vadd.f32 0.0, %v9030
      %9032 = vmatmul.f32.gmra.mxu0 %v4755
      %v9033 = vpop.f32.mrf.mxu0
      %v9034 = vadd.f32 0.0, %v9033
      %9035 = vmatmul.f32.gmra.mxu0 %v4757
      %v9036 = vpop.f32.mrf.mxu0
      %v9037 = vadd.f32 0.0, %v9036
      %9038 = vmatmul.f32.gmra.mxu0 %v4759
      %v9039 = vpop.f32.mrf.mxu0
      %v9040 = vadd.f32 0.0, %v9039
      %9041 = vmatmul.f32.gmra.mxu0 %v4761
      %v9042 = vpop.f32.mrf.mxu0
      %v9043 = vadd.f32 0.0, %v9042
      %9044 = vmatmul.f32.gmra.mxu0 %v4763
      %v9045 = vpop.f32.mrf.mxu0
      %v9046 = vadd.f32 0.0, %v9045
      %9047 = vmatmul.f32.gmra.mxu0 %v4765
      %v9048 = vpop.f32.mrf.mxu0
      %v9049 = vadd.f32 0.0, %v9048
      %9050 = vmatmul.f32.gmra.mxu0 %v4767
      %v9051 = vpop.f32.mrf.mxu0
      %v9052 = vadd.f32 0.0, %v9051
      %9053 = vmatmul.f32.gmra.mxu0 %v4769
      %v9054 = vpop.f32.mrf.mxu0
      %v9055 = vadd.f32 0.0, %v9054
      %9056 = vmatmul.f32.gmra.mxu0 %v4771
      %v9057 = vpop.f32.mrf.mxu0
      %v9058 = vadd.f32 0.0, %v9057
      %9059 = vmatmul.f32.gmra.mxu0 %v4773
      %v9060 = vpop.f32.mrf.mxu0
      %v9061 = vadd.f32 0.0, %v9060
      %9062 = vmatmul.f32.gmra.mxu0 %v4775
      %v9063 = vpop.f32.mrf.mxu0
      %v9064 = vadd.f32 0.0, %v9063
      %9065 = vmatmul.f32.gmra.mxu0 %v4777
      %v9066 = vpop.f32.mrf.mxu0
      %v9067 = vadd.f32 0.0, %v9066
      %9068 = vmatmul.f32.gmra.mxu0 %v4779
      %v9069 = vpop.f32.mrf.mxu0
      %v9070 = vadd.f32 0.0, %v9069
      %9071 = vmatmul.f32.gmra.mxu0 %v4781
      %v9072 = vpop.f32.mrf.mxu0
      %v9073 = vadd.f32 0.0, %v9072
      %9074 = vmatmul.f32.gmra.mxu0 %v4783
      %v9075 = vpop.f32.mrf.mxu0
      %v9076 = vadd.f32 0.0, %v9075
      %9077 = vmatmul.f32.gmra.mxu0 %v4785
      %v9078 = vpop.f32.mrf.mxu0
      %v9079 = vadd.f32 0.0, %v9078
      %9080 = vmatmul.f32.gmra.mxu0 %v4787
      %v9081 = vpop.f32.mrf.mxu0
      %v9082 = vadd.f32 0.0, %v9081
      %9083 = vmatmul.f32.gmra.mxu0 %v4789
      %v9084 = vpop.f32.mrf.mxu0
      %v9085 = vadd.f32 0.0, %v9084
      %9086 = vmatmul.f32.gmra.mxu0 %v4791
      %v9087 = vpop.f32.mrf.mxu0
      %v9088 = vadd.f32 0.0, %v9087
      %9089 = vmatmul.f32.gmra.mxu0 %v4793
      %v9090 = vpop.f32.mrf.mxu0
      %v9091 = vadd.f32 0.0, %v9090
      %9092 = vmatmul.f32.gmra.mxu0 %v4795
      %v9093 = vpop.f32.mrf.mxu0
      %v9094 = vadd.f32 0.0, %v9093
      %9095 = vmatmul.f32.gmra.mxu0 %v5994
      %v9096 = vpop.f32.mrf.mxu0
      %v9097 = vadd.f32 0.0, %v9096
      %9098 = vmatmul.f32.gmra.mxu0 %v5996
      %v9099 = vpop.f32.mrf.mxu0
      %v9100 = vadd.f32 0.0, %v9099
      %9101 = vmatmul.f32.gmra.mxu0 %v5998
      %v9102 = vpop.f32.mrf.mxu0
      %v9103 = vadd.f32 0.0, %v9102
      %9104 = vmatmul.f32.gmra.mxu0 %v7447
      %v9105 = vpop.f32.mrf.mxu0
      %v9106 = vadd.f32 0.0, %v9105
      %9107 = vmatmul.f32.gmra.mxu0 %v7449
      %v9108 = vpop.f32.mrf.mxu0
      %v9109 = vadd.f32 0.0, %v9108
      %9110 = vmatmul.f32.gmra.mxu0 %v7451
      %v9111 = vpop.f32.mrf.mxu0
      %v9112 = vadd.f32 0.0, %v9111
      %9113 = vmatmul.f32.gmra.mxu0 %v8900
      %v9114 = vpop.f32.mrf.mxu0
      %v9115 = vadd.f32 0.0, %v9114
      %9116 = vmatmul.f32.gmra.mxu0 %v8902
      %v9117 = vpop.f32.mrf.mxu0
      %v9118 = vadd.f32 0.0, %v9117
      %9119 = vmatmul.f32.gmra.mxu0 %v8904
      %v9120 = vpop.f32.mrf.mxu0
      %v9121 = vadd.f32 0.0, %v9120
      %9122 = vmatmul.f32.gmra.mxu0 %v8906
      %v9123 = vpop.f32.mrf.mxu0
      %v9124 = vadd.f32 0.0, %v9123
      %9125 = vdwg.mxu0
      %v9126 = vadd.f32 %v8826, %v8929
      %v9127 = vadd.f32 %v8827, %v8932
      %v9128 = vadd.f32 %v8828, %v8935
      %v9129 = vadd.f32 %v8829, %v8938
      %v9130 = vadd.f32 %v8830, %v8941
      %v9131 = vadd.f32 %v8831, %v8944
      %v9132 = vadd.f32 %v8832, %v8947
      %v9133 = vadd.f32 %v8833, %v8950
      %v9134 = vadd.f32 %v8834, %v8953
      %v9135 = vadd.f32 %v8835, %v8956
      %v9136 = vadd.f32 %v8836, %v8959
      %v9137 = vadd.f32 %v8837, %v8962
      %v9138 = vadd.f32 %v8838, %v8965
      %v9139 = vadd.f32 %v8839, %v8968
      %v9140 = vadd.f32 %v8840, %v8971
      %v9141 = vadd.f32 %v8841, %v8974
      %v9142 = vadd.f32 %v8842, %v8977
      %v9143 = vadd.f32 %v8843, %v8980
      %v9144 = vadd.f32 %v8844, %v8983
      %v9145 = vadd.f32 %v8845, %v8986
      %v9146 = vadd.f32 %v8846, %v8989
      %v9147 = vadd.f32 %v8847, %v8992
      %v9148 = vadd.f32 %v8848, %v8995
      %v9149 = vadd.f32 %v8849, %v8998
      %v9150 = vadd.f32 %v8850, %v9001
      %v9151 = vadd.f32 %v8851, %v9004
      %v9152 = vadd.f32 %v8852, %v9007
      %v9153 = vadd.f32 %v8853, %v9010
      %v9154 = vadd.f32 %v8854, %v9013
      %v9155 = vadd.f32 %v8855, %v9016
      %v9156 = vadd.f32 %v8856, %v9019
      %v9157 = vadd.f32 %v8857, %v9022
      %v9158 = vadd.f32 %v8858, %v9025
      %v9159 = vadd.f32 %v8859, %v9028
      %v9160 = vadd.f32 %v8860, %v9031
      %v9161 = vadd.f32 %v8861, %v9034
      %v9162 = vadd.f32 %v8862, %v9037
      %v9163 = vadd.f32 %v8863, %v9040
      %v9164 = vadd.f32 %v8864, %v9043
      %v9165 = vadd.f32 %v8865, %v9046
      %v9166 = vadd.f32 %v8866, %v9049
      %v9167 = vadd.f32 %v8867, %v9052
      %v9168 = vadd.f32 %v8868, %v9055
      %v9169 = vadd.f32 %v8869, %v9058
      %v9170 = vadd.f32 %v8870, %v9061
      %v9171 = vadd.f32 %v8871, %v9064
      %v9172 = vadd.f32 %v8872, %v9067
      %v9173 = vadd.f32 %v8873, %v9070
      %v9174 = vadd.f32 %v8874, %v9073
      %v9175 = vadd.f32 %v8875, %v9076
      %v9176 = vadd.f32 %v8876, %v9079
      %v9177 = vadd.f32 %v8877, %v9082
      %v9178 = vadd.f32 %v8878, %v9085
      %v9179 = vadd.f32 %v8879, %v9088
      %v9180 = vadd.f32 %v8880, %v9091
      %v9181 = vadd.f32 %v8881, %v9094
      %v9182 = vadd.f32 %v8882, %v9097
      %v9183 = vadd.f32 %v8883, %v9100
      %v9184 = vadd.f32 %v8884, %v9103
      %v9185 = vadd.f32 %v8885, %v9106
      %v9186 = vadd.f32 %v8886, %v9109
      %v9187 = vadd.f32 %v8887, %v9112
      %v9188 = vadd.f32 %v8888, %v9115
      %v9189 = vadd.f32 %v8889, %v9118
      %v9190 = vadd.f32 %v8890, %v9121
      %v9191 = vadd.f32 %v8891, %v9124
      %s9192 = scalar_lea.vmem %s3, 136
      %v9193 = vld [vmem:[%s9192] sm:$0x3f]
      %v9194 = vrot.slane %v2525, 5
      %v9195 = vsel %vm6288, %v7745, %v9194
      %v9196 = vrot.slane %v2526, 5
      %v9197 = vsel %vm6288, %v9194, %v9196
      %v9198 = vrot.slane %v2527, 5
      %v9199 = vsel %vm6288, %v9196, %v9198
      %v9200 = vsel %vm2733, %v9195, 0
      %v9202 = vsel %vm2733, %v9197, 0
      %v9204 = vsel %vm2733, %v9199, 0
      %v9206 = vsel %vm2733, %v9198, 0
      %v9209 = vsel %vm2866, %v9193, 0
      %9211 = vmatpush.msra.mxu0 0.0
      %9212 = vmatpush.msra.mxu0 0.0
      %9213 = vmatpush.msra.mxu0 0.0
      %9214 = vmatpush.msra.mxu0 0.0
      %9215 = vmatpush.msra.mxu0 0.0
      %9216 = vmatpush.msra.mxu0 0.0
      %9217 = vmatpush.msra.mxu0 0.0
      %9218 = vmatpush.msra.mxu0 0.0
      %9219 = vmatpush.msra.mxu0 0.0
      %9220 = vmatpush.msra.mxu0 0.0
      %9221 = vmatpush.msra.mxu0 0.0
      %9222 = vmatpush.msra.mxu0 0.0
      %9223 = vmatpush.msra.mxu0 0.0
      %9224 = vmatpush.msra.mxu0 0.0
      %9225 = vmatpush.msra.mxu0 0.0
      %9226 = vmatpush.msra.mxu0 %v9209
      %9227 = vmatmul.f32.gmra.mxu0 %v6432
      %v9228 = vpop.f32.mrf.mxu0
      %v9229 = vadd.f32 0.0, %v9228
      %9230 = vmatmul.f32.gmra.mxu0 %v6434
      %v9231 = vpop.f32.mrf.mxu0
      %v9232 = vadd.f32 0.0, %v9231
      %9233 = vmatmul.f32.gmra.mxu0 %v6436
      %v9234 = vpop.f32.mrf.mxu0
      %v9235 = vadd.f32 0.0, %v9234
      %9236 = vmatmul.f32.gmra.mxu0 %v6438
      %v9237 = vpop.f32.mrf.mxu0
      %v9238 = vadd.f32 0.0, %v9237
      %9239 = vmatmul.f32.gmra.mxu0 %v6440
      %v9240 = vpop.f32.mrf.mxu0
      %v9241 = vadd.f32 0.0, %v9240
      %9242 = vmatmul.f32.gmra.mxu0 %v6442
      %v9243 = vpop.f32.mrf.mxu0
      %v9244 = vadd.f32 0.0, %v9243
      %9245 = vmatmul.f32.gmra.mxu0 %v6444
      %v9246 = vpop.f32.mrf.mxu0
      %v9247 = vadd.f32 0.0, %v9246
      %9248 = vmatmul.f32.gmra.mxu0 %v6446
      %v9249 = vpop.f32.mrf.mxu0
      %v9250 = vadd.f32 0.0, %v9249
      %9251 = vmatmul.f32.gmra.mxu0 %v6448
      %v9252 = vpop.f32.mrf.mxu0
      %v9253 = vadd.f32 0.0, %v9252
      %9254 = vmatmul.f32.gmra.mxu0 %v6450
      %v9255 = vpop.f32.mrf.mxu0
      %v9256 = vadd.f32 0.0, %v9255
      %9257 = vmatmul.f32.gmra.mxu0 %v6452
      %v9258 = vpop.f32.mrf.mxu0
      %v9259 = vadd.f32 0.0, %v9258
      %9260 = vmatmul.f32.gmra.mxu0 %v6454
      %v9261 = vpop.f32.mrf.mxu0
      %v9262 = vadd.f32 0.0, %v9261
      %9263 = vmatmul.f32.gmra.mxu0 %v6456
      %v9264 = vpop.f32.mrf.mxu0
      %v9265 = vadd.f32 0.0, %v9264
      %9266 = vmatmul.f32.gmra.mxu0 %v6458
      %v9267 = vpop.f32.mrf.mxu0
      %v9268 = vadd.f32 0.0, %v9267
      %9269 = vmatmul.f32.gmra.mxu0 %v6460
      %v9270 = vpop.f32.mrf.mxu0
      %v9271 = vadd.f32 0.0, %v9270
      %9272 = vmatmul.f32.gmra.mxu0 %v6462
      %v9273 = vpop.f32.mrf.mxu0
      %v9274 = vadd.f32 0.0, %v9273
      %9275 = vmatmul.f32.gmra.mxu0 %v6464
      %v9276 = vpop.f32.mrf.mxu0
      %v9277 = vadd.f32 0.0, %v9276
      %9278 = vmatmul.f32.gmra.mxu0 %v6466
      %v9279 = vpop.f32.mrf.mxu0
      %v9280 = vadd.f32 0.0, %v9279
      %9281 = vmatmul.f32.gmra.mxu0 %v6468
      %v9282 = vpop.f32.mrf.mxu0
      %v9283 = vadd.f32 0.0, %v9282
      %9284 = vmatmul.f32.gmra.mxu0 %v6470
      %v9285 = vpop.f32.mrf.mxu0
      %v9286 = vadd.f32 0.0, %v9285
      %9287 = vmatmul.f32.gmra.mxu0 %v6472
      %v9288 = vpop.f32.mrf.mxu0
      %v9289 = vadd.f32 0.0, %v9288
      %9290 = vmatmul.f32.gmra.mxu0 %v6474
      %v9291 = vpop.f32.mrf.mxu0
      %v9292 = vadd.f32 0.0, %v9291
      %9293 = vmatmul.f32.gmra.mxu0 %v6476
      %v9294 = vpop.f32.mrf.mxu0
      %v9295 = vadd.f32 0.0, %v9294
      %9296 = vmatmul.f32.gmra.mxu0 %v6478
      %v9297 = vpop.f32.mrf.mxu0
      %v9298 = vadd.f32 0.0, %v9297
      %9299 = vmatmul.f32.gmra.mxu0 %v6480
      %v9300 = vpop.f32.mrf.mxu0
      %v9301 = vadd.f32 0.0, %v9300
      %9302 = vmatmul.f32.gmra.mxu0 %v6482
      %v9303 = vpop.f32.mrf.mxu0
      %v9304 = vadd.f32 0.0, %v9303
      %9305 = vmatmul.f32.gmra.mxu0 %v6484
      %v9306 = vpop.f32.mrf.mxu0
      %v9307 = vadd.f32 0.0, %v9306
      %9308 = vmatmul.f32.gmra.mxu0 %v6486
      %v9309 = vpop.f32.mrf.mxu0
      %v9310 = vadd.f32 0.0, %v9309
      %9311 = vmatmul.f32.gmra.mxu0 %v6488
      %v9312 = vpop.f32.mrf.mxu0
      %v9313 = vadd.f32 0.0, %v9312
      %9314 = vmatmul.f32.gmra.mxu0 %v6490
      %v9315 = vpop.f32.mrf.mxu0
      %v9316 = vadd.f32 0.0, %v9315
      %9317 = vmatmul.f32.gmra.mxu0 %v6492
      %v9318 = vpop.f32.mrf.mxu0
      %v9319 = vadd.f32 0.0, %v9318
      %9320 = vmatmul.f32.gmra.mxu0 %v6494
      %v9321 = vpop.f32.mrf.mxu0
      %v9322 = vadd.f32 0.0, %v9321
      %9323 = vmatmul.f32.gmra.mxu0 %v6496
      %v9324 = vpop.f32.mrf.mxu0
      %v9325 = vadd.f32 0.0, %v9324
      %9326 = vmatmul.f32.gmra.mxu0 %v6498
      %v9327 = vpop.f32.mrf.mxu0
      %v9328 = vadd.f32 0.0, %v9327
      %9329 = vmatmul.f32.gmra.mxu0 %v6500
      %v9330 = vpop.f32.mrf.mxu0
      %v9331 = vadd.f32 0.0, %v9330
      %9332 = vmatmul.f32.gmra.mxu0 %v6502
      %v9333 = vpop.f32.mrf.mxu0
      %v9334 = vadd.f32 0.0, %v9333
      %9335 = vmatmul.f32.gmra.mxu0 %v6504
      %v9336 = vpop.f32.mrf.mxu0
      %v9337 = vadd.f32 0.0, %v9336
      %9338 = vmatmul.f32.gmra.mxu0 %v6506
      %v9339 = vpop.f32.mrf.mxu0
      %v9340 = vadd.f32 0.0, %v9339
      %9341 = vmatmul.f32.gmra.mxu0 %v6508
      %v9342 = vpop.f32.mrf.mxu0
      %v9343 = vadd.f32 0.0, %v9342
      %9344 = vmatmul.f32.gmra.mxu0 %v6510
      %v9345 = vpop.f32.mrf.mxu0
      %v9346 = vadd.f32 0.0, %v9345
      %9347 = vmatmul.f32.gmra.mxu0 %v6512
      %v9348 = vpop.f32.mrf.mxu0
      %v9349 = vadd.f32 0.0, %v9348
      %9350 = vmatmul.f32.gmra.mxu0 %v6514
      %v9351 = vpop.f32.mrf.mxu0
      %v9352 = vadd.f32 0.0, %v9351
      %9353 = vmatmul.f32.gmra.mxu0 %v6516
      %v9354 = vpop.f32.mrf.mxu0
      %v9355 = vadd.f32 0.0, %v9354
      %9356 = vmatmul.f32.gmra.mxu0 %v6518
      %v9357 = vpop.f32.mrf.mxu0
      %v9358 = vadd.f32 0.0, %v9357
      %9359 = vmatmul.f32.gmra.mxu0 %v6520
      %v9360 = vpop.f32.mrf.mxu0
      %v9361 = vadd.f32 0.0, %v9360
      %9362 = vmatmul.f32.gmra.mxu0 %v6522
      %v9363 = vpop.f32.mrf.mxu0
      %v9364 = vadd.f32 0.0, %v9363
      %9365 = vmatmul.f32.gmra.mxu0 %v6524
      %v9366 = vpop.f32.mrf.mxu0
      %v9367 = vadd.f32 0.0, %v9366
      %9368 = vmatmul.f32.gmra.mxu0 %v6526
      %v9369 = vpop.f32.mrf.mxu0
      %v9370 = vadd.f32 0.0, %v9369
      %9371 = vmatmul.f32.gmra.mxu0 %v6528
      %v9372 = vpop.f32.mrf.mxu0
      %v9373 = vadd.f32 0.0, %v9372
      %9374 = vmatmul.f32.gmra.mxu0 %v6530
      %v9375 = vpop.f32.mrf.mxu0
      %v9376 = vadd.f32 0.0, %v9375
      %9377 = vmatmul.f32.gmra.mxu0 %v6532
      %v9378 = vpop.f32.mrf.mxu0
      %v9379 = vadd.f32 0.0, %v9378
      %9380 = vmatmul.f32.gmra.mxu0 %v6534
      %v9381 = vpop.f32.mrf.mxu0
      %v9382 = vadd.f32 0.0, %v9381
      %9383 = vmatmul.f32.gmra.mxu0 %v6536
      %v9384 = vpop.f32.mrf.mxu0
      %v9385 = vadd.f32 0.0, %v9384
      %9386 = vmatmul.f32.gmra.mxu0 %v6538
      %v9387 = vpop.f32.mrf.mxu0
      %v9388 = vadd.f32 0.0, %v9387
      %9389 = vmatmul.f32.gmra.mxu0 %v6540
      %v9390 = vpop.f32.mrf.mxu0
      %v9391 = vadd.f32 0.0, %v9390
      %9392 = vmatmul.f32.gmra.mxu0 %v6542
      %v9393 = vpop.f32.mrf.mxu0
      %v9394 = vadd.f32 0.0, %v9393
      %9395 = vmatmul.f32.gmra.mxu0 %v6544
      %v9396 = vpop.f32.mrf.mxu0
      %v9397 = vadd.f32 0.0, %v9396
      %9398 = vmatmul.f32.gmra.mxu0 %v6546
      %v9399 = vpop.f32.mrf.mxu0
      %v9400 = vadd.f32 0.0, %v9399
      %9401 = vmatmul.f32.gmra.mxu0 %v6548
      %v9402 = vpop.f32.mrf.mxu0
      %v9403 = vadd.f32 0.0, %v9402
      %9404 = vmatmul.f32.gmra.mxu0 %v7747
      %v9405 = vpop.f32.mrf.mxu0
      %v9406 = vadd.f32 0.0, %v9405
      %9407 = vmatmul.f32.gmra.mxu0 %v7749
      %v9408 = vpop.f32.mrf.mxu0
      %v9409 = vadd.f32 0.0, %v9408
      %9410 = vmatmul.f32.gmra.mxu0 %v7751
      %v9411 = vpop.f32.mrf.mxu0
      %v9412 = vadd.f32 0.0, %v9411
      %9413 = vmatmul.f32.gmra.mxu0 %v9200
      %v9414 = vpop.f32.mrf.mxu0
      %v9415 = vadd.f32 0.0, %v9414
      %9416 = vmatmul.f32.gmra.mxu0 %v9202
      %v9417 = vpop.f32.mrf.mxu0
      %v9418 = vadd.f32 0.0, %v9417
      %9419 = vmatmul.f32.gmra.mxu0 %v9204
      %v9420 = vpop.f32.mrf.mxu0
      %v9421 = vadd.f32 0.0, %v9420
      %9422 = vmatmul.f32.gmra.mxu0 %v9206
      %v9423 = vpop.f32.mrf.mxu0
      %v9424 = vadd.f32 0.0, %v9423
      %9425 = vdwg.mxu0
      %v9426 = vadd.f32 %v9126, %v9229
      %v9427 = vadd.f32 %v9127, %v9232
      %v9428 = vadd.f32 %v9128, %v9235
      %v9429 = vadd.f32 %v9129, %v9238
      %v9430 = vadd.f32 %v9130, %v9241
      %v9431 = vadd.f32 %v9131, %v9244
      %v9432 = vadd.f32 %v9132, %v9247
      %v9433 = vadd.f32 %v9133, %v9250
      %v9434 = vadd.f32 %v9134, %v9253
      %v9435 = vadd.f32 %v9135, %v9256
      %v9436 = vadd.f32 %v9136, %v9259
      %v9437 = vadd.f32 %v9137, %v9262
      %v9438 = vadd.f32 %v9138, %v9265
      %v9439 = vadd.f32 %v9139, %v9268
      %v9440 = vadd.f32 %v9140, %v9271
      %v9441 = vadd.f32 %v9141, %v9274
      %v9442 = vadd.f32 %v9142, %v9277
      %v9443 = vadd.f32 %v9143, %v9280
      %v9444 = vadd.f32 %v9144, %v9283
      %v9445 = vadd.f32 %v9145, %v9286
      %v9446 = vadd.f32 %v9146, %v9289
      %v9447 = vadd.f32 %v9147, %v9292
      %v9448 = vadd.f32 %v9148, %v9295
      %v9449 = vadd.f32 %v9149, %v9298
      %v9450 = vadd.f32 %v9150, %v9301
      %v9451 = vadd.f32 %v9151, %v9304
      %v9452 = vadd.f32 %v9152, %v9307
      %v9453 = vadd.f32 %v9153, %v9310
      %v9454 = vadd.f32 %v9154, %v9313
      %v9455 = vadd.f32 %v9155, %v9316
      %v9456 = vadd.f32 %v9156, %v9319
      %v9457 = vadd.f32 %v9157, %v9322
      %v9458 = vadd.f32 %v9158, %v9325
      %v9459 = vadd.f32 %v9159, %v9328
      %v9460 = vadd.f32 %v9160, %v9331
      %v9461 = vadd.f32 %v9161, %v9334
      %v9462 = vadd.f32 %v9162, %v9337
      %v9463 = vadd.f32 %v9163, %v9340
      %v9464 = vadd.f32 %v9164, %v9343
      %v9465 = vadd.f32 %v9165, %v9346
      %v9466 = vadd.f32 %v9166, %v9349
      %v9467 = vadd.f32 %v9167, %v9352
      %v9468 = vadd.f32 %v9168, %v9355
      %v9469 = vadd.f32 %v9169, %v9358
      %v9470 = vadd.f32 %v9170, %v9361
      %v9471 = vadd.f32 %v9171, %v9364
      %v9472 = vadd.f32 %v9172, %v9367
      %v9473 = vadd.f32 %v9173, %v9370
      %v9474 = vadd.f32 %v9174, %v9373
      %v9475 = vadd.f32 %v9175, %v9376
      %v9476 = vadd.f32 %v9176, %v9379
      %v9477 = vadd.f32 %v9177, %v9382
      %v9478 = vadd.f32 %v9178, %v9385
      %v9479 = vadd.f32 %v9179, %v9388
      %v9480 = vadd.f32 %v9180, %v9391
      %v9481 = vadd.f32 %v9181, %v9394
      %v9482 = vadd.f32 %v9182, %v9397
      %v9483 = vadd.f32 %v9183, %v9400
      %v9484 = vadd.f32 %v9184, %v9403
      %v9485 = vadd.f32 %v9185, %v9406
      %v9486 = vadd.f32 %v9186, %v9409
      %v9487 = vadd.f32 %v9187, %v9412
      %v9488 = vadd.f32 %v9188, %v9415
      %v9489 = vadd.f32 %v9189, %v9418
      %v9490 = vadd.f32 %v9190, %v9421
      %v9491 = vadd.f32 %v9191, %v9424
      %s9492 = scalar_lea.vmem %s3, 144
      %v9493 = vld [vmem:[%s9492] sm:$0x3f]
      %v9494 = vrot.slane %v2525, 6
      %v9495 = vsel %vm8041, %v8171, %v9494
      %v9496 = vrot.slane %v2526, 6
      %v9497 = vsel %vm8041, %v9494, %v9496
      %v9498 = vrot.slane %v2527, 6
      %v9499 = vsel %vm8041, %v9496, %v9498
      %v9500 = vsel %vm2733, %v9495, 0
      %v9502 = vsel %vm2733, %v9497, 0
      %v9504 = vsel %vm2733, %v9499, 0
      %v9506 = vsel %vm2733, %v9498, 0
      %v9509 = vsel %vm2866, %v9493, 0
      %9511 = vmatpush.msra.mxu0 0.0
      %9512 = vmatpush.msra.mxu0 0.0
      %9513 = vmatpush.msra.mxu0 0.0
      %9514 = vmatpush.msra.mxu0 0.0
      %9515 = vmatpush.msra.mxu0 0.0
      %9516 = vmatpush.msra.mxu0 0.0
      %9517 = vmatpush.msra.mxu0 0.0
      %9518 = vmatpush.msra.mxu0 0.0
      %9519 = vmatpush.msra.mxu0 0.0
      %9520 = vmatpush.msra.mxu0 0.0
      %9521 = vmatpush.msra.mxu0 0.0
      %9522 = vmatpush.msra.mxu0 0.0
      %9523 = vmatpush.msra.mxu0 0.0
      %9524 = vmatpush.msra.mxu0 0.0
      %9525 = vmatpush.msra.mxu0 0.0
      %9526 = vmatpush.msra.mxu0 %v9509
      %9527 = vmatmul.f32.gmra.mxu0 %v8179
      %v9528 = vpop.f32.mrf.mxu0
      %v9529 = vadd.f32 0.0, %v9528
      %9530 = vmatmul.f32.gmra.mxu0 %v8181
      %v9531 = vpop.f32.mrf.mxu0
      %v9532 = vadd.f32 0.0, %v9531
      %9533 = vmatmul.f32.gmra.mxu0 %v8183
      %v9534 = vpop.f32.mrf.mxu0
      %v9535 = vadd.f32 0.0, %v9534
      %9536 = vmatmul.f32.gmra.mxu0 %v8185
      %v9537 = vpop.f32.mrf.mxu0
      %v9538 = vadd.f32 0.0, %v9537
      %9539 = vmatmul.f32.gmra.mxu0 %v8187
      %v9540 = vpop.f32.mrf.mxu0
      %v9541 = vadd.f32 0.0, %v9540
      %9542 = vmatmul.f32.gmra.mxu0 %v8189
      %v9543 = vpop.f32.mrf.mxu0
      %v9544 = vadd.f32 0.0, %v9543
      %9545 = vmatmul.f32.gmra.mxu0 %v8191
      %v9546 = vpop.f32.mrf.mxu0
      %v9547 = vadd.f32 0.0, %v9546
      %9548 = vmatmul.f32.gmra.mxu0 %v8193
      %v9549 = vpop.f32.mrf.mxu0
      %v9550 = vadd.f32 0.0, %v9549
      %9551 = vmatmul.f32.gmra.mxu0 %v8195
      %v9552 = vpop.f32.mrf.mxu0
      %v9553 = vadd.f32 0.0, %v9552
      %9554 = vmatmul.f32.gmra.mxu0 %v8197
      %v9555 = vpop.f32.mrf.mxu0
      %v9556 = vadd.f32 0.0, %v9555
      %9557 = vmatmul.f32.gmra.mxu0 %v8199
      %v9558 = vpop.f32.mrf.mxu0
      %v9559 = vadd.f32 0.0, %v9558
      %9560 = vmatmul.f32.gmra.mxu0 %v8201
      %v9561 = vpop.f32.mrf.mxu0
      %v9562 = vadd.f32 0.0, %v9561
      %9563 = vmatmul.f32.gmra.mxu0 %v8203
      %v9564 = vpop.f32.mrf.mxu0
      %v9565 = vadd.f32 0.0, %v9564
      %9566 = vmatmul.f32.gmra.mxu0 %v8205
      %v9567 = vpop.f32.mrf.mxu0
      %v9568 = vadd.f32 0.0, %v9567
      %9569 = vmatmul.f32.gmra.mxu0 %v8207
      %v9570 = vpop.f32.mrf.mxu0
      %v9571 = vadd.f32 0.0, %v9570
      %9572 = vmatmul.f32.gmra.mxu0 %v8209
      %v9573 = vpop.f32.mrf.mxu0
      %v9574 = vadd.f32 0.0, %v9573
      %9575 = vmatmul.f32.gmra.mxu0 %v8211
      %v9576 = vpop.f32.mrf.mxu0
      %v9577 = vadd.f32 0.0, %v9576
      %9578 = vmatmul.f32.gmra.mxu0 %v8213
      %v9579 = vpop.f32.mrf.mxu0
      %v9580 = vadd.f32 0.0, %v9579
      %9581 = vmatmul.f32.gmra.mxu0 %v8215
      %v9582 = vpop.f32.mrf.mxu0
      %v9583 = vadd.f32 0.0, %v9582
      %9584 = vmatmul.f32.gmra.mxu0 %v8217
      %v9585 = vpop.f32.mrf.mxu0
      %v9586 = vadd.f32 0.0, %v9585
      %9587 = vmatmul.f32.gmra.mxu0 %v8219
      %v9588 = vpop.f32.mrf.mxu0
      %v9589 = vadd.f32 0.0, %v9588
      %9590 = vmatmul.f32.gmra.mxu0 %v8221
      %v9591 = vpop.f32.mrf.mxu0
      %v9592 = vadd.f32 0.0, %v9591
      %9593 = vmatmul.f32.gmra.mxu0 %v8223
      %v9594 = vpop.f32.mrf.mxu0
      %v9595 = vadd.f32 0.0, %v9594
      %9596 = vmatmul.f32.gmra.mxu0 %v8225
      %v9597 = vpop.f32.mrf.mxu0
      %v9598 = vadd.f32 0.0, %v9597
      %9599 = vmatmul.f32.gmra.mxu0 %v8227
      %v9600 = vpop.f32.mrf.mxu0
      %v9601 = vadd.f32 0.0, %v9600
      %9602 = vmatmul.f32.gmra.mxu0 %v8229
      %v9603 = vpop.f32.mrf.mxu0
      %v9604 = vadd.f32 0.0, %v9603
      %9605 = vmatmul.f32.gmra.mxu0 %v8231
      %v9606 = vpop.f32.mrf.mxu0
      %v9607 = vadd.f32 0.0, %v9606
      %9608 = vmatmul.f32.gmra.mxu0 %v8233
      %v9609 = vpop.f32.mrf.mxu0
      %v9610 = vadd.f32 0.0, %v9609
      %9611 = vmatmul.f32.gmra.mxu0 %v8235
      %v9612 = vpop.f32.mrf.mxu0
      %v9613 = vadd.f32 0.0, %v9612
      %9614 = vmatmul.f32.gmra.mxu0 %v8237
      %v9615 = vpop.f32.mrf.mxu0
      %v9616 = vadd.f32 0.0, %v9615
      %9617 = vmatmul.f32.gmra.mxu0 %v8239
      %v9618 = vpop.f32.mrf.mxu0
      %v9619 = vadd.f32 0.0, %v9618
      %9620 = vmatmul.f32.gmra.mxu0 %v8241
      %v9621 = vpop.f32.mrf.mxu0
      %v9622 = vadd.f32 0.0, %v9621
      %9623 = vmatmul.f32.gmra.mxu0 %v8243
      %v9624 = vpop.f32.mrf.mxu0
      %v9625 = vadd.f32 0.0, %v9624
      %9626 = vmatmul.f32.gmra.mxu0 %v8245
      %v9627 = vpop.f32.mrf.mxu0
      %v9628 = vadd.f32 0.0, %v9627
      %9629 = vmatmul.f32.gmra.mxu0 %v8247
      %v9630 = vpop.f32.mrf.mxu0
      %v9631 = vadd.f32 0.0, %v9630
      %9632 = vmatmul.f32.gmra.mxu0 %v8249
      %v9633 = vpop.f32.mrf.mxu0
      %v9634 = vadd.f32 0.0, %v9633
      %9635 = vmatmul.f32.gmra.mxu0 %v8251
      %v9636 = vpop.f32.mrf.mxu0
      %v9637 = vadd.f32 0.0, %v9636
      %9638 = vmatmul.f32.gmra.mxu0 %v8253
      %v9639 = vpop.f32.mrf.mxu0
      %v9640 = vadd.f32 0.0, %v9639
      %9641 = vmatmul.f32.gmra.mxu0 %v8255
      %v9642 = vpop.f32.mrf.mxu0
      %v9643 = vadd.f32 0.0, %v9642
      %9644 = vmatmul.f32.gmra.mxu0 %v8257
      %v9645 = vpop.f32.mrf.mxu0
      %v9646 = vadd.f32 0.0, %v9645
      %9647 = vmatmul.f32.gmra.mxu0 %v8259
      %v9648 = vpop.f32.mrf.mxu0
      %v9649 = vadd.f32 0.0, %v9648
      %9650 = vmatmul.f32.gmra.mxu0 %v8261
      %v9651 = vpop.f32.mrf.mxu0
      %v9652 = vadd.f32 0.0, %v9651
      %9653 = vmatmul.f32.gmra.mxu0 %v8263
      %v9654 = vpop.f32.mrf.mxu0
      %v9655 = vadd.f32 0.0, %v9654
      %9656 = vmatmul.f32.gmra.mxu0 %v8265
      %v9657 = vpop.f32.mrf.mxu0
      %v9658 = vadd.f32 0.0, %v9657
      %9659 = vmatmul.f32.gmra.mxu0 %v8267
      %v9660 = vpop.f32.mrf.mxu0
      %v9661 = vadd.f32 0.0, %v9660
      %9662 = vmatmul.f32.gmra.mxu0 %v8269
      %v9663 = vpop.f32.mrf.mxu0
      %v9664 = vadd.f32 0.0, %v9663
      %9665 = vmatmul.f32.gmra.mxu0 %v8271
      %v9666 = vpop.f32.mrf.mxu0
      %v9667 = vadd.f32 0.0, %v9666
      %9668 = vmatmul.f32.gmra.mxu0 %v8273
      %v9669 = vpop.f32.mrf.mxu0
      %v9670 = vadd.f32 0.0, %v9669
      %9671 = vmatmul.f32.gmra.mxu0 %v8275
      %v9672 = vpop.f32.mrf.mxu0
      %v9673 = vadd.f32 0.0, %v9672
      %9674 = vmatmul.f32.gmra.mxu0 %v8277
      %v9675 = vpop.f32.mrf.mxu0
      %v9676 = vadd.f32 0.0, %v9675
      %9677 = vmatmul.f32.gmra.mxu0 %v8279
      %v9678 = vpop.f32.mrf.mxu0
      %v9679 = vadd.f32 0.0, %v9678
      %9680 = vmatmul.f32.gmra.mxu0 %v8281
      %v9681 = vpop.f32.mrf.mxu0
      %v9682 = vadd.f32 0.0, %v9681
      %9683 = vmatmul.f32.gmra.mxu0 %v8283
      %v9684 = vpop.f32.mrf.mxu0
      %v9685 = vadd.f32 0.0, %v9684
      %9686 = vmatmul.f32.gmra.mxu0 %v8285
      %v9687 = vpop.f32.mrf.mxu0
      %v9688 = vadd.f32 0.0, %v9687
      %9689 = vmatmul.f32.gmra.mxu0 %v8287
      %v9690 = vpop.f32.mrf.mxu0
      %v9691 = vadd.f32 0.0, %v9690
      %9692 = vmatmul.f32.gmra.mxu0 %v8289
      %v9693 = vpop.f32.mrf.mxu0
      %v9694 = vadd.f32 0.0, %v9693
      %9695 = vmatmul.f32.gmra.mxu0 %v8291
      %v9696 = vpop.f32.mrf.mxu0
      %v9697 = vadd.f32 0.0, %v9696
      %9698 = vmatmul.f32.gmra.mxu0 %v8293
      %v9699 = vpop.f32.mrf.mxu0
      %v9700 = vadd.f32 0.0, %v9699
      %9701 = vmatmul.f32.gmra.mxu0 %v8295
      %v9702 = vpop.f32.mrf.mxu0
      %v9703 = vadd.f32 0.0, %v9702
      %9704 = vmatmul.f32.gmra.mxu0 %v8297
      %v9705 = vpop.f32.mrf.mxu0
      %v9706 = vadd.f32 0.0, %v9705
      %9707 = vmatmul.f32.gmra.mxu0 %v8299
      %v9708 = vpop.f32.mrf.mxu0
      %v9709 = vadd.f32 0.0, %v9708
      %9710 = vmatmul.f32.gmra.mxu0 %v8301
      %v9711 = vpop.f32.mrf.mxu0
      %v9712 = vadd.f32 0.0, %v9711
      %9713 = vmatmul.f32.gmra.mxu0 %v9500
      %v9714 = vpop.f32.mrf.mxu0
      %v9715 = vadd.f32 0.0, %v9714
      %9716 = vmatmul.f32.gmra.mxu0 %v9502
      %v9717 = vpop.f32.mrf.mxu0
      %v9718 = vadd.f32 0.0, %v9717
      %9719 = vmatmul.f32.gmra.mxu0 %v9504
      %v9720 = vpop.f32.mrf.mxu0
      %v9721 = vadd.f32 0.0, %v9720
      %9722 = vmatmul.f32.gmra.mxu0 %v9506
      %v9723 = vpop.f32.mrf.mxu0
      %v9724 = vadd.f32 0.0, %v9723
      %9725 = vdwg.mxu0
      %v9726 = vadd.f32 %v9426, %v9529
      %v9727 = vadd.f32 %v9427, %v9532
      %v9728 = vadd.f32 %v9428, %v9535
      %v9729 = vadd.f32 %v9429, %v9538
      %v9730 = vadd.f32 %v9430, %v9541
      %v9731 = vadd.f32 %v9431, %v9544
      %v9732 = vadd.f32 %v9432, %v9547
      %v9733 = vadd.f32 %v9433, %v9550
      %v9734 = vadd.f32 %v9434, %v9553
      %v9735 = vadd.f32 %v9435, %v9556
      %v9736 = vadd.f32 %v9436, %v9559
      %v9737 = vadd.f32 %v9437, %v9562
      %v9738 = vadd.f32 %v9438, %v9565
      %v9739 = vadd.f32 %v9439, %v9568
      %v9740 = vadd.f32 %v9440, %v9571
      %v9741 = vadd.f32 %v9441, %v9574
      %v9742 = vadd.f32 %v9442, %v9577
      %v9743 = vadd.f32 %v9443, %v9580
      %v9744 = vadd.f32 %v9444, %v9583
      %v9745 = vadd.f32 %v9445, %v9586
      %v9746 = vadd.f32 %v9446, %v9589
      %v9747 = vadd.f32 %v9447, %v9592
      %v9748 = vadd.f32 %v9448, %v9595
      %v9749 = vadd.f32 %v9449, %v9598
      %v9750 = vadd.f32 %v9450, %v9601
      %v9751 = vadd.f32 %v9451, %v9604
      %v9752 = vadd.f32 %v9452, %v9607
      %v9753 = vadd.f32 %v9453, %v9610
      %v9754 = vadd.f32 %v9454, %v9613
      %v9755 = vadd.f32 %v9455, %v9616
      %v9756 = vadd.f32 %v9456, %v9619
      %v9757 = vadd.f32 %v9457, %v9622
      %v9758 = vadd.f32 %v9458, %v9625
      %v9759 = vadd.f32 %v9459, %v9628
      %v9760 = vadd.f32 %v9460, %v9631
      %v9761 = vadd.f32 %v9461, %v9634
      %v9762 = vadd.f32 %v9462, %v9637
      %v9763 = vadd.f32 %v9463, %v9640
      %v9764 = vadd.f32 %v9464, %v9643
      %v9765 = vadd.f32 %v9465, %v9646
      %v9766 = vadd.f32 %v9466, %v9649
      %v9767 = vadd.f32 %v9467, %v9652
      %v9768 = vadd.f32 %v9468, %v9655
      %v9769 = vadd.f32 %v9469, %v9658
      %v9770 = vadd.f32 %v9470, %v9661
      %v9771 = vadd.f32 %v9471, %v9664
      %v9772 = vadd.f32 %v9472, %v9667
      %v9773 = vadd.f32 %v9473, %v9670
      %v9774 = vadd.f32 %v9474, %v9673
      %v9775 = vadd.f32 %v9475, %v9676
      %v9776 = vadd.f32 %v9476, %v9679
      %v9777 = vadd.f32 %v9477, %v9682
      %v9778 = vadd.f32 %v9478, %v9685
      %v9779 = vadd.f32 %v9479, %v9688
      %v9780 = vadd.f32 %v9480, %v9691
      %v9781 = vadd.f32 %v9481, %v9694
      %v9782 = vadd.f32 %v9482, %v9697
      %v9783 = vadd.f32 %v9483, %v9700
      %v9784 = vadd.f32 %v9484, %v9703
      %v9785 = vadd.f32 %v9485, %v9706
      %v9786 = vadd.f32 %v9486, %v9709
      %v9787 = vadd.f32 %v9487, %v9712
      %v9788 = vadd.f32 %v9488, %v9715
      %v9789 = vadd.f32 %v9489, %v9718
      %v9790 = vadd.f32 %v9490, %v9721
      %v9791 = vadd.f32 %v9491, %v9724
      %s9792 = scalar_lea.vmem %s3, 152
      %v9793 = vld [vmem:[%s9792] sm:$0x3f]
      %vm9794 = vcmask 1040384
      %v9795 = vrot.slane %v2462, 7
      %v9796 = vrot.slane %v2463, 7
      %v9797 = vsel %vm9794, %v9795, %v9796
      %v9798 = vrot.slane %v2464, 7
      %v9799 = vsel %vm9794, %v9796, %v9798
      %v9800 = vrot.slane %v2465, 7
      %v9801 = vsel %vm9794, %v9798, %v9800
      %v9802 = vrot.slane %v2466, 7
      %v9803 = vsel %vm9794, %v9800, %v9802
      %v9804 = vrot.slane %v2467, 7
      %v9805 = vsel %vm9794, %v9802, %v9804
      %v9806 = vrot.slane %v2468, 7
      %v9807 = vsel %vm9794, %v9804, %v9806
      %v9808 = vrot.slane %v2469, 7
      %v9809 = vsel %vm9794, %v9806, %v9808
      %v9810 = vrot.slane %v2470, 7
      %v9811 = vsel %vm9794, %v9808, %v9810
      %v9812 = vrot.slane %v2471, 7
      %v9813 = vsel %vm9794, %v9810, %v9812
      %v9814 = vrot.slane %v2472, 7
      %v9815 = vsel %vm9794, %v9812, %v9814
      %v9816 = vrot.slane %v2473, 7
      %v9817 = vsel %vm9794, %v9814, %v9816
      %v9818 = vrot.slane %v2474, 7
      %v9819 = vsel %vm9794, %v9816, %v9818
      %v9820 = vrot.slane %v2475, 7
      %v9821 = vsel %vm9794, %v9818, %v9820
      %v9822 = vrot.slane %v2476, 7
      %v9823 = vsel %vm9794, %v9820, %v9822
      %v9824 = vrot.slane %v2477, 7
      %v9825 = vsel %vm9794, %v9822, %v9824
      %v9826 = vrot.slane %v2478, 7
      %v9827 = vsel %vm9794, %v9824, %v9826
      %v9828 = vrot.slane %v2479, 7
      %v9829 = vsel %vm9794, %v9826, %v9828
      %v9830 = vrot.slane %v2480, 7
      %v9831 = vsel %vm9794, %v9828, %v9830
      %v9832 = vrot.slane %v2481, 7
      %v9833 = vsel %vm9794, %v9830, %v9832
      %v9834 = vrot.slane %v2482, 7
      %v9835 = vsel %vm9794, %v9832, %v9834
      %v9836 = vrot.slane %v2483, 7
      %v9837 = vsel %vm9794, %v9834, %v9836
      %v9838 = vrot.slane %v2484, 7
      %v9839 = vsel %vm9794, %v9836, %v9838
      %v9840 = vrot.slane %v2485, 7
      %v9841 = vsel %vm9794, %v9838, %v9840
      %v9842 = vrot.slane %v2486, 7
      %v9843 = vsel %vm9794, %v9840, %v9842
      %v9844 = vrot.slane %v2487, 7
      %v9845 = vsel %vm9794, %v9842, %v9844
      %v9846 = vrot.slane %v2488, 7
      %v9847 = vsel %vm9794, %v9844, %v9846
      %v9848 = vrot.slane %v2489, 7
      %v9849 = vsel %vm9794, %v9846, %v9848
      %v9850 = vrot.slane %v2490, 7
      %v9851 = vsel %vm9794, %v9848, %v9850
      %v9852 = vrot.slane %v2491, 7
      %v9853 = vsel %vm9794, %v9850, %v9852
      %v9854 = vrot.slane %v2492, 7
      %v9855 = vsel %vm9794, %v9852, %v9854
      %v9856 = vrot.slane %v2493, 7
      %v9857 = vsel %vm9794, %v9854, %v9856
      %v9858 = vrot.slane %v2494, 7
      %v9859 = vsel %vm9794, %v9856, %v9858
      %v9860 = vrot.slane %v2495, 7
      %v9861 = vsel %vm9794, %v9858, %v9860
      %v9862 = vrot.slane %v2496, 7
      %v9863 = vsel %vm9794, %v9860, %v9862
      %v9864 = vrot.slane %v2497, 7
      %v9865 = vsel %vm9794, %v9862, %v9864
      %v9866 = vrot.slane %v2498, 7
      %v9867 = vsel %vm9794, %v9864, %v9866
      %v9868 = vrot.slane %v2499, 7
      %v9869 = vsel %vm9794, %v9866, %v9868
      %v9870 = vrot.slane %v2500, 7
      %v9871 = vsel %vm9794, %v9868, %v9870
      %v9872 = vrot.slane %v2501, 7
      %v9873 = vsel %vm9794, %v9870, %v9872
      %v9874 = vrot.slane %v2502, 7
      %v9875 = vsel %vm9794, %v9872, %v9874
      %v9876 = vrot.slane %v2503, 7
      %v9877 = vsel %vm9794, %v9874, %v9876
      %v9878 = vrot.slane %v2504, 7
      %v9879 = vsel %vm9794, %v9876, %v9878
      %v9880 = vrot.slane %v2505, 7
      %v9881 = vsel %vm9794, %v9878, %v9880
      %v9882 = vrot.slane %v2506, 7
      %v9883 = vsel %vm9794, %v9880, %v9882
      %v9884 = vrot.slane %v2507, 7
      %v9885 = vsel %vm9794, %v9882, %v9884
      %v9886 = vrot.slane %v2508, 7
      %v9887 = vsel %vm9794, %v9884, %v9886
      %v9888 = vrot.slane %v2509, 7
      %v9889 = vsel %vm9794, %v9886, %v9888
      %v9890 = vrot.slane %v2510, 7
      %v9891 = vsel %vm9794, %v9888, %v9890
      %v9892 = vrot.slane %v2511, 7
      %v9893 = vsel %vm9794, %v9890, %v9892
      %v9894 = vrot.slane %v2512, 7
      %v9895 = vsel %vm9794, %v9892, %v9894
      %v9896 = vrot.slane %v2513, 7
      %v9897 = vsel %vm9794, %v9894, %v9896
      %v9898 = vrot.slane %v2514, 7
      %v9899 = vsel %vm9794, %v9896, %v9898
      %v9900 = vrot.slane %v2515, 7
      %v9901 = vsel %vm9794, %v9898, %v9900
      %v9902 = vrot.slane %v2516, 7
      %v9903 = vsel %vm9794, %v9900, %v9902
      %v9904 = vrot.slane %v2517, 7
      %v9905 = vsel %vm9794, %v9902, %v9904
      %v9906 = vrot.slane %v2518, 7
      %v9907 = vsel %vm9794, %v9904, %v9906
      %v9908 = vrot.slane %v2519, 7
      %v9909 = vsel %vm9794, %v9906, %v9908
      %v9910 = vrot.slane %v2520, 7
      %v9911 = vsel %vm9794, %v9908, %v9910
      %v9912 = vrot.slane %v2521, 7
      %v9913 = vsel %vm9794, %v9910, %v9912
      %v9914 = vrot.slane %v2522, 7
      %v9915 = vsel %vm9794, %v9912, %v9914
      %v9916 = vrot.slane %v2523, 7
      %v9917 = vsel %vm9794, %v9914, %v9916
      %v9918 = vrot.slane %v2524, 7
      %v9919 = vsel %vm9794, %v9916, %v9918
      %v9920 = vrot.slane %v2525, 7
      %v9921 = vsel %vm9794, %v9918, %v9920
      %v9922 = vrot.slane %v2526, 7
      %v9923 = vsel %vm9794, %v9920, %v9922
      %v9924 = vrot.slane %v2527, 7
      %v9925 = vsel %vm9794, %v9922, %v9924
      %v9926 = vsel %vm2733, %v9797, 0
      %v9928 = vsel %vm2733, %v9799, 0
      %v9930 = vsel %vm2733, %v9801, 0
      %v9932 = vsel %vm2733, %v9803, 0
      %v9934 = vsel %vm2733, %v9805, 0
      %v9936 = vsel %vm2733, %v9807, 0
      %v9938 = vsel %vm2733, %v9809, 0
      %v9940 = vsel %vm2733, %v9811, 0
      %v9942 = vsel %vm2733, %v9813, 0
      %v9944 = vsel %vm2733, %v9815, 0
      %v9946 = vsel %vm2733, %v9817, 0
      %v9948 = vsel %vm2733, %v9819, 0
      %v9950 = vsel %vm2733, %v9821, 0
      %v9952 = vsel %vm2733, %v9823, 0
      %v9954 = vsel %vm2733, %v9825, 0
      %v9956 = vsel %vm2733, %v9827, 0
      %v9958 = vsel %vm2733, %v9829, 0
      %v9960 = vsel %vm2733, %v9831, 0
      %v9962 = vsel %vm2733, %v9833, 0
      %v9964 = vsel %vm2733, %v9835, 0
      %v9966 = vsel %vm2733, %v9837, 0
      %v9968 = vsel %vm2733, %v9839, 0
      %v9970 = vsel %vm2733, %v9841, 0
      %v9972 = vsel %vm2733, %v9843, 0
      %v9974 = vsel %vm2733, %v9845, 0
      %v9976 = vsel %vm2733, %v9847, 0
      %v9978 = vsel %vm2733, %v9849, 0
      %v9980 = vsel %vm2733, %v9851, 0
      %v9982 = vsel %vm2733, %v9853, 0
      %v9984 = vsel %vm2733, %v9855, 0
      %v9986 = vsel %vm2733, %v9857, 0
      %v9988 = vsel %vm2733, %v9859, 0
      %v9990 = vsel %vm2733, %v9861, 0
      %v9992 = vsel %vm2733, %v9863, 0
      %v9994 = vsel %vm2733, %v9865, 0
      %v9996 = vsel %vm2733, %v9867, 0
      %v9998 = vsel %vm2733, %v9869, 0
      %v10000 = vsel %vm2733, %v9871, 0
      %v10002 = vsel %vm2733, %v9873, 0
      %v10004 = vsel %vm2733, %v9875, 0
      %v10006 = vsel %vm2733, %v9877, 0
      %v10008 = vsel %vm2733, %v9879, 0
      %v10010 = vsel %vm2733, %v9881, 0
      %v10012 = vsel %vm2733, %v9883, 0
      %v10014 = vsel %vm2733, %v9885, 0
      %v10016 = vsel %vm2733, %v9887, 0
      %v10018 = vsel %vm2733, %v9889, 0
      %v10020 = vsel %vm2733, %v9891, 0
      %v10022 = vsel %vm2733, %v9893, 0
      %v10024 = vsel %vm2733, %v9895, 0
      %v10026 = vsel %vm2733, %v9897, 0
      %v10028 = vsel %vm2733, %v9899, 0
      %v10030 = vsel %vm2733, %v9901, 0
      %v10032 = vsel %vm2733, %v9903, 0
      %v10034 = vsel %vm2733, %v9905, 0
      %v10036 = vsel %vm2733, %v9907, 0
      %v10038 = vsel %vm2733, %v9909, 0
      %v10040 = vsel %vm2733, %v9911, 0
      %v10042 = vsel %vm2733, %v9913, 0
      %v10044 = vsel %vm2733, %v9915, 0
      %v10046 = vsel %vm2733, %v9917, 0
      %v10048 = vsel %vm2733, %v9919, 0
      %v10050 = vsel %vm2733, %v9921, 0
      %v10052 = vsel %vm2733, %v9923, 0
      %v10054 = vsel %vm2733, %v9925, 0
      %v10056 = vsel %vm2733, %v9924, 0
      %v10059 = vsel %vm2866, %v9793, 0
      %10061 = vmatpush.msra.mxu0 0.0
      %10062 = vmatpush.msra.mxu0 0.0
      %10063 = vmatpush.msra.mxu0 0.0
      %10064 = vmatpush.msra.mxu0 0.0
      %10065 = vmatpush.msra.mxu0 0.0
      %10066 = vmatpush.msra.mxu0 0.0
      %10067 = vmatpush.msra.mxu0 0.0
      %10068 = vmatpush.msra.mxu0 0.0
      %10069 = vmatpush.msra.mxu0 0.0
      %10070 = vmatpush.msra.mxu0 0.0
      %10071 = vmatpush.msra.mxu0 0.0
      %10072 = vmatpush.msra.mxu0 0.0
      %10073 = vmatpush.msra.mxu0 0.0
      %10074 = vmatpush.msra.mxu0 0.0
      %10075 = vmatpush.msra.mxu0 0.0
      %10076 = vmatpush.msra.mxu0 %v10059
      %10077 = vmatmul.f32.gmra.mxu0 %v9926
      %v10078 = vpop.f32.mrf.mxu0
      %v10079 = vadd.f32 0.0, %v10078
      %10080 = vmatmul.f32.gmra.mxu0 %v9928
      %v10081 = vpop.f32.mrf.mxu0
      %v10082 = vadd.f32 0.0, %v10081
      %10083 = vmatmul.f32.gmra.mxu0 %v9930
      %v10084 = vpop.f32.mrf.mxu0
      %v10085 = vadd.f32 0.0, %v10084
      %10086 = vmatmul.f32.gmra.mxu0 %v9932
      %v10087 = vpop.f32.mrf.mxu0
      %v10088 = vadd.f32 0.0, %v10087
      %10089 = vmatmul.f32.gmra.mxu0 %v9934
      %v10090 = vpop.f32.mrf.mxu0
      %v10091 = vadd.f32 0.0, %v10090
      %10092 = vmatmul.f32.gmra.mxu0 %v9936
      %v10093 = vpop.f32.mrf.mxu0
      %v10094 = vadd.f32 0.0, %v10093
      %10095 = vmatmul.f32.gmra.mxu0 %v9938
      %v10096 = vpop.f32.mrf.mxu0
      %v10097 = vadd.f32 0.0, %v10096
      %10098 = vmatmul.f32.gmra.mxu0 %v9940
      %v10099 = vpop.f32.mrf.mxu0
      %v10100 = vadd.f32 0.0, %v10099
      %10101 = vmatmul.f32.gmra.mxu0 %v9942
      %v10102 = vpop.f32.mrf.mxu0
      %v10103 = vadd.f32 0.0, %v10102
      %10104 = vmatmul.f32.gmra.mxu0 %v9944
      %v10105 = vpop.f32.mrf.mxu0
      %v10106 = vadd.f32 0.0, %v10105
      %10107 = vmatmul.f32.gmra.mxu0 %v9946
      %v10108 = vpop.f32.mrf.mxu0
      %v10109 = vadd.f32 0.0, %v10108
      %10110 = vmatmul.f32.gmra.mxu0 %v9948
      %v10111 = vpop.f32.mrf.mxu0
      %v10112 = vadd.f32 0.0, %v10111
      %10113 = vmatmul.f32.gmra.mxu0 %v9950
      %v10114 = vpop.f32.mrf.mxu0
      %v10115 = vadd.f32 0.0, %v10114
      %10116 = vmatmul.f32.gmra.mxu0 %v9952
      %v10117 = vpop.f32.mrf.mxu0
      %v10118 = vadd.f32 0.0, %v10117
      %10119 = vmatmul.f32.gmra.mxu0 %v9954
      %v10120 = vpop.f32.mrf.mxu0
      %v10121 = vadd.f32 0.0, %v10120
      %10122 = vmatmul.f32.gmra.mxu0 %v9956
      %v10123 = vpop.f32.mrf.mxu0
      %v10124 = vadd.f32 0.0, %v10123
      %10125 = vmatmul.f32.gmra.mxu0 %v9958
      %v10126 = vpop.f32.mrf.mxu0
      %v10127 = vadd.f32 0.0, %v10126
      %10128 = vmatmul.f32.gmra.mxu0 %v9960
      %v10129 = vpop.f32.mrf.mxu0
      %v10130 = vadd.f32 0.0, %v10129
      %10131 = vmatmul.f32.gmra.mxu0 %v9962
      %v10132 = vpop.f32.mrf.mxu0
      %v10133 = vadd.f32 0.0, %v10132
      %10134 = vmatmul.f32.gmra.mxu0 %v9964
      %v10135 = vpop.f32.mrf.mxu0
      %v10136 = vadd.f32 0.0, %v10135
      %10137 = vmatmul.f32.gmra.mxu0 %v9966
      %v10138 = vpop.f32.mrf.mxu0
      %v10139 = vadd.f32 0.0, %v10138
      %10140 = vmatmul.f32.gmra.mxu0 %v9968
      %v10141 = vpop.f32.mrf.mxu0
      %v10142 = vadd.f32 0.0, %v10141
      %10143 = vmatmul.f32.gmra.mxu0 %v9970
      %v10144 = vpop.f32.mrf.mxu0
      %v10145 = vadd.f32 0.0, %v10144
      %10146 = vmatmul.f32.gmra.mxu0 %v9972
      %v10147 = vpop.f32.mrf.mxu0
      %v10148 = vadd.f32 0.0, %v10147
      %10149 = vmatmul.f32.gmra.mxu0 %v9974
      %v10150 = vpop.f32.mrf.mxu0
      %v10151 = vadd.f32 0.0, %v10150
      %10152 = vmatmul.f32.gmra.mxu0 %v9976
      %v10153 = vpop.f32.mrf.mxu0
      %v10154 = vadd.f32 0.0, %v10153
      %10155 = vmatmul.f32.gmra.mxu0 %v9978
      %v10156 = vpop.f32.mrf.mxu0
      %v10157 = vadd.f32 0.0, %v10156
      %10158 = vmatmul.f32.gmra.mxu0 %v9980
      %v10159 = vpop.f32.mrf.mxu0
      %v10160 = vadd.f32 0.0, %v10159
      %10161 = vmatmul.f32.gmra.mxu0 %v9982
      %v10162 = vpop.f32.mrf.mxu0
      %v10163 = vadd.f32 0.0, %v10162
      %10164 = vmatmul.f32.gmra.mxu0 %v9984
      %v10165 = vpop.f32.mrf.mxu0
      %v10166 = vadd.f32 0.0, %v10165
      %10167 = vmatmul.f32.gmra.mxu0 %v9986
      %v10168 = vpop.f32.mrf.mxu0
      %v10169 = vadd.f32 0.0, %v10168
      %10170 = vmatmul.f32.gmra.mxu0 %v9988
      %v10171 = vpop.f32.mrf.mxu0
      %v10172 = vadd.f32 0.0, %v10171
      %10173 = vmatmul.f32.gmra.mxu0 %v9990
      %v10174 = vpop.f32.mrf.mxu0
      %v10175 = vadd.f32 0.0, %v10174
      %10176 = vmatmul.f32.gmra.mxu0 %v9992
      %v10177 = vpop.f32.mrf.mxu0
      %v10178 = vadd.f32 0.0, %v10177
      %10179 = vmatmul.f32.gmra.mxu0 %v9994
      %v10180 = vpop.f32.mrf.mxu0
      %v10181 = vadd.f32 0.0, %v10180
      %10182 = vmatmul.f32.gmra.mxu0 %v9996
      %v10183 = vpop.f32.mrf.mxu0
      %v10184 = vadd.f32 0.0, %v10183
      %10185 = vmatmul.f32.gmra.mxu0 %v9998
      %v10186 = vpop.f32.mrf.mxu0
      %v10187 = vadd.f32 0.0, %v10186
      %10188 = vmatmul.f32.gmra.mxu0 %v10000
      %v10189 = vpop.f32.mrf.mxu0
      %v10190 = vadd.f32 0.0, %v10189
      %10191 = vmatmul.f32.gmra.mxu0 %v10002
      %v10192 = vpop.f32.mrf.mxu0
      %v10193 = vadd.f32 0.0, %v10192
      %10194 = vmatmul.f32.gmra.mxu0 %v10004
      %v10195 = vpop.f32.mrf.mxu0
      %v10196 = vadd.f32 0.0, %v10195
      %10197 = vmatmul.f32.gmra.mxu0 %v10006
      %v10198 = vpop.f32.mrf.mxu0
      %v10199 = vadd.f32 0.0, %v10198
      %10200 = vmatmul.f32.gmra.mxu0 %v10008
      %v10201 = vpop.f32.mrf.mxu0
      %v10202 = vadd.f32 0.0, %v10201
      %10203 = vmatmul.f32.gmra.mxu0 %v10010
      %v10204 = vpop.f32.mrf.mxu0
      %v10205 = vadd.f32 0.0, %v10204
      %10206 = vmatmul.f32.gmra.mxu0 %v10012
      %v10207 = vpop.f32.mrf.mxu0
      %v10208 = vadd.f32 0.0, %v10207
      %10209 = vmatmul.f32.gmra.mxu0 %v10014
      %v10210 = vpop.f32.mrf.mxu0
      %v10211 = vadd.f32 0.0, %v10210
      %10212 = vmatmul.f32.gmra.mxu0 %v10016
      %v10213 = vpop.f32.mrf.mxu0
      %v10214 = vadd.f32 0.0, %v10213
      %10215 = vmatmul.f32.gmra.mxu0 %v10018
      %v10216 = vpop.f32.mrf.mxu0
      %v10217 = vadd.f32 0.0, %v10216
      %10218 = vmatmul.f32.gmra.mxu0 %v10020
      %v10219 = vpop.f32.mrf.mxu0
      %v10220 = vadd.f32 0.0, %v10219
      %10221 = vmatmul.f32.gmra.mxu0 %v10022
      %v10222 = vpop.f32.mrf.mxu0
      %v10223 = vadd.f32 0.0, %v10222
      %10224 = vmatmul.f32.gmra.mxu0 %v10024
      %v10225 = vpop.f32.mrf.mxu0
      %v10226 = vadd.f32 0.0, %v10225
      %10227 = vmatmul.f32.gmra.mxu0 %v10026
      %v10228 = vpop.f32.mrf.mxu0
      %v10229 = vadd.f32 0.0, %v10228
      %10230 = vmatmul.f32.gmra.mxu0 %v10028
      %v10231 = vpop.f32.mrf.mxu0
      %v10232 = vadd.f32 0.0, %v10231
      %10233 = vmatmul.f32.gmra.mxu0 %v10030
      %v10234 = vpop.f32.mrf.mxu0
      %v10235 = vadd.f32 0.0, %v10234
      %10236 = vmatmul.f32.gmra.mxu0 %v10032
      %v10237 = vpop.f32.mrf.mxu0
      %v10238 = vadd.f32 0.0, %v10237
      %10239 = vmatmul.f32.gmra.mxu0 %v10034
      %v10240 = vpop.f32.mrf.mxu0
      %v10241 = vadd.f32 0.0, %v10240
      %10242 = vmatmul.f32.gmra.mxu0 %v10036
      %v10243 = vpop.f32.mrf.mxu0
      %v10244 = vadd.f32 0.0, %v10243
      %10245 = vmatmul.f32.gmra.mxu0 %v10038
      %v10246 = vpop.f32.mrf.mxu0
      %v10247 = vadd.f32 0.0, %v10246
      %10248 = vmatmul.f32.gmra.mxu0 %v10040
      %v10249 = vpop.f32.mrf.mxu0
      %v10250 = vadd.f32 0.0, %v10249
      %10251 = vmatmul.f32.gmra.mxu0 %v10042
      %v10252 = vpop.f32.mrf.mxu0
      %v10253 = vadd.f32 0.0, %v10252
      %10254 = vmatmul.f32.gmra.mxu0 %v10044
      %v10255 = vpop.f32.mrf.mxu0
      %v10256 = vadd.f32 0.0, %v10255
      %10257 = vmatmul.f32.gmra.mxu0 %v10046
      %v10258 = vpop.f32.mrf.mxu0
      %v10259 = vadd.f32 0.0, %v10258
      %10260 = vmatmul.f32.gmra.mxu0 %v10048
      %v10261 = vpop.f32.mrf.mxu0
      %v10262 = vadd.f32 0.0, %v10261
      %10263 = vmatmul.f32.gmra.mxu0 %v10050
      %v10264 = vpop.f32.mrf.mxu0
      %v10265 = vadd.f32 0.0, %v10264
      %10266 = vmatmul.f32.gmra.mxu0 %v10052
      %v10267 = vpop.f32.mrf.mxu0
      %v10268 = vadd.f32 0.0, %v10267
      %10269 = vmatmul.f32.gmra.mxu0 %v10054
      %v10270 = vpop.f32.mrf.mxu0
      %v10271 = vadd.f32 0.0, %v10270
      %10272 = vmatmul.f32.gmra.mxu0 %v10056
      %v10273 = vpop.f32.mrf.mxu0
      %v10274 = vadd.f32 0.0, %v10273
      %10275 = vdwg.mxu0
      %v10276 = vadd.f32 %v9726, %v10079
      %v10277 = vadd.f32 %v9727, %v10082
      %v10278 = vadd.f32 %v9728, %v10085
      %v10279 = vadd.f32 %v9729, %v10088
      %v10280 = vadd.f32 %v9730, %v10091
      %v10281 = vadd.f32 %v9731, %v10094
      %v10282 = vadd.f32 %v9732, %v10097
      %v10283 = vadd.f32 %v9733, %v10100
      %v10284 = vadd.f32 %v9734, %v10103
      %v10285 = vadd.f32 %v9735, %v10106
      %v10286 = vadd.f32 %v9736, %v10109
      %v10287 = vadd.f32 %v9737, %v10112
      %v10288 = vadd.f32 %v9738, %v10115
      %v10289 = vadd.f32 %v9739, %v10118
      %v10290 = vadd.f32 %v9740, %v10121
      %v10291 = vadd.f32 %v9741, %v10124
      %v10292 = vadd.f32 %v9742, %v10127
      %v10293 = vadd.f32 %v9743, %v10130
      %v10294 = vadd.f32 %v9744, %v10133
      %v10295 = vadd.f32 %v9745, %v10136
      %v10296 = vadd.f32 %v9746, %v10139
      %v10297 = vadd.f32 %v9747, %v10142
      %v10298 = vadd.f32 %v9748, %v10145
      %v10299 = vadd.f32 %v9749, %v10148
      %v10300 = vadd.f32 %v9750, %v10151
      %v10301 = vadd.f32 %v9751, %v10154
      %v10302 = vadd.f32 %v9752, %v10157
      %v10303 = vadd.f32 %v9753, %v10160
      %v10304 = vadd.f32 %v9754, %v10163
      %v10305 = vadd.f32 %v9755, %v10166
      %v10306 = vadd.f32 %v9756, %v10169
      %v10307 = vadd.f32 %v9757, %v10172
      %v10308 = vadd.f32 %v9758, %v10175
      %v10309 = vadd.f32 %v9759, %v10178
      %v10310 = vadd.f32 %v9760, %v10181
      %v10311 = vadd.f32 %v9761, %v10184
      %v10312 = vadd.f32 %v9762, %v10187
      %v10313 = vadd.f32 %v9763, %v10190
      %v10314 = vadd.f32 %v9764, %v10193
      %v10315 = vadd.f32 %v9765, %v10196
      %v10316 = vadd.f32 %v9766, %v10199
      %v10317 = vadd.f32 %v9767, %v10202
      %v10318 = vadd.f32 %v9768, %v10205
      %v10319 = vadd.f32 %v9769, %v10208
      %v10320 = vadd.f32 %v9770, %v10211
      %v10321 = vadd.f32 %v9771, %v10214
      %v10322 = vadd.f32 %v9772, %v10217
      %v10323 = vadd.f32 %v9773, %v10220
      %v10324 = vadd.f32 %v9774, %v10223
      %v10325 = vadd.f32 %v9775, %v10226
      %v10326 = vadd.f32 %v9776, %v10229
      %v10327 = vadd.f32 %v9777, %v10232
      %v10328 = vadd.f32 %v9778, %v10235
      %v10329 = vadd.f32 %v9779, %v10238
      %v10330 = vadd.f32 %v9780, %v10241
      %v10331 = vadd.f32 %v9781, %v10244
      %v10332 = vadd.f32 %v9782, %v10247
      %v10333 = vadd.f32 %v9783, %v10250
      %v10334 = vadd.f32 %v9784, %v10253
      %v10335 = vadd.f32 %v9785, %v10256
      %v10336 = vadd.f32 %v9786, %v10259
      %v10337 = vadd.f32 %v9787, %v10262
      %v10338 = vadd.f32 %v9788, %v10265
      %v10339 = vadd.f32 %v9789, %v10268
      %v10340 = vadd.f32 %v9790, %v10271
      %v10341 = vadd.f32 %v9791, %v10274
      %s10342 = scalar_lea.vmem %s3, 160
      %v10343 = vld [vmem:[%s10342] sm:$0x3f]
      %v10347 = vrot.slane %v2528, 4
      %v10348 = vsel %vm747, %v8898, %v10347
      %v10349 = vrot.slane %v2529, 4
      %v10350 = vsel %vm747, %v10347, %v10349
      %v10351 = vrot.slane %v2530, 4
      %v10352 = vsel %vm747, %v10349, %v10351
      %v10353 = vsel %vm2733, %v10348, 0
      %v10355 = vsel %vm2733, %v10350, 0
      %v10357 = vsel %vm2733, %v10352, 0
      %v10359 = vsel %vm2733, %v10351, 0
      %v10362 = vsel %vm2866, %v10343, 0
      %10364 = vmatpush.msra.mxu0 0.0
      %10365 = vmatpush.msra.mxu0 0.0
      %10366 = vmatpush.msra.mxu0 0.0
      %10367 = vmatpush.msra.mxu0 0.0
      %10368 = vmatpush.msra.mxu0 0.0
      %10369 = vmatpush.msra.mxu0 0.0
      %10370 = vmatpush.msra.mxu0 0.0
      %10371 = vmatpush.msra.mxu0 0.0
      %10372 = vmatpush.msra.mxu0 0.0
      %10373 = vmatpush.msra.mxu0 0.0
      %10374 = vmatpush.msra.mxu0 0.0
      %10375 = vmatpush.msra.mxu0 0.0
      %10376 = vmatpush.msra.mxu0 0.0
      %10377 = vmatpush.msra.mxu0 0.0
      %10378 = vmatpush.msra.mxu0 0.0
      %10379 = vmatpush.msra.mxu0 %v10362
      %10380 = vmatmul.f32.gmra.mxu0 %v4691
      %v10381 = vpop.f32.mrf.mxu0
      %v10382 = vadd.f32 0.0, %v10381
      %10383 = vmatmul.f32.gmra.mxu0 %v4693
      %v10384 = vpop.f32.mrf.mxu0
      %v10385 = vadd.f32 0.0, %v10384
      %10386 = vmatmul.f32.gmra.mxu0 %v4695
      %v10387 = vpop.f32.mrf.mxu0
      %v10388 = vadd.f32 0.0, %v10387
      %10389 = vmatmul.f32.gmra.mxu0 %v4697
      %v10390 = vpop.f32.mrf.mxu0
      %v10391 = vadd.f32 0.0, %v10390
      %10392 = vmatmul.f32.gmra.mxu0 %v4699
      %v10393 = vpop.f32.mrf.mxu0
      %v10394 = vadd.f32 0.0, %v10393
      %10395 = vmatmul.f32.gmra.mxu0 %v4701
      %v10396 = vpop.f32.mrf.mxu0
      %v10397 = vadd.f32 0.0, %v10396
      %10398 = vmatmul.f32.gmra.mxu0 %v4703
      %v10399 = vpop.f32.mrf.mxu0
      %v10400 = vadd.f32 0.0, %v10399
      %10401 = vmatmul.f32.gmra.mxu0 %v4705
      %v10402 = vpop.f32.mrf.mxu0
      %v10403 = vadd.f32 0.0, %v10402
      %10404 = vmatmul.f32.gmra.mxu0 %v4707
      %v10405 = vpop.f32.mrf.mxu0
      %v10406 = vadd.f32 0.0, %v10405
      %10407 = vmatmul.f32.gmra.mxu0 %v4709
      %v10408 = vpop.f32.mrf.mxu0
      %v10409 = vadd.f32 0.0, %v10408
      %10410 = vmatmul.f32.gmra.mxu0 %v4711
      %v10411 = vpop.f32.mrf.mxu0
      %v10412 = vadd.f32 0.0, %v10411
      %10413 = vmatmul.f32.gmra.mxu0 %v4713
      %v10414 = vpop.f32.mrf.mxu0
      %v10415 = vadd.f32 0.0, %v10414
      %10416 = vmatmul.f32.gmra.mxu0 %v4715
      %v10417 = vpop.f32.mrf.mxu0
      %v10418 = vadd.f32 0.0, %v10417
      %10419 = vmatmul.f32.gmra.mxu0 %v4717
      %v10420 = vpop.f32.mrf.mxu0
      %v10421 = vadd.f32 0.0, %v10420
      %10422 = vmatmul.f32.gmra.mxu0 %v4719
      %v10423 = vpop.f32.mrf.mxu0
      %v10424 = vadd.f32 0.0, %v10423
      %10425 = vmatmul.f32.gmra.mxu0 %v4721
      %v10426 = vpop.f32.mrf.mxu0
      %v10427 = vadd.f32 0.0, %v10426
      %10428 = vmatmul.f32.gmra.mxu0 %v4723
      %v10429 = vpop.f32.mrf.mxu0
      %v10430 = vadd.f32 0.0, %v10429
      %10431 = vmatmul.f32.gmra.mxu0 %v4725
      %v10432 = vpop.f32.mrf.mxu0
      %v10433 = vadd.f32 0.0, %v10432
      %10434 = vmatmul.f32.gmra.mxu0 %v4727
      %v10435 = vpop.f32.mrf.mxu0
      %v10436 = vadd.f32 0.0, %v10435
      %10437 = vmatmul.f32.gmra.mxu0 %v4729
      %v10438 = vpop.f32.mrf.mxu0
      %v10439 = vadd.f32 0.0, %v10438
      %10440 = vmatmul.f32.gmra.mxu0 %v4731
      %v10441 = vpop.f32.mrf.mxu0
      %v10442 = vadd.f32 0.0, %v10441
      %10443 = vmatmul.f32.gmra.mxu0 %v4733
      %v10444 = vpop.f32.mrf.mxu0
      %v10445 = vadd.f32 0.0, %v10444
      %10446 = vmatmul.f32.gmra.mxu0 %v4735
      %v10447 = vpop.f32.mrf.mxu0
      %v10448 = vadd.f32 0.0, %v10447
      %10449 = vmatmul.f32.gmra.mxu0 %v4737
      %v10450 = vpop.f32.mrf.mxu0
      %v10451 = vadd.f32 0.0, %v10450
      %10452 = vmatmul.f32.gmra.mxu0 %v4739
      %v10453 = vpop.f32.mrf.mxu0
      %v10454 = vadd.f32 0.0, %v10453
      %10455 = vmatmul.f32.gmra.mxu0 %v4741
      %v10456 = vpop.f32.mrf.mxu0
      %v10457 = vadd.f32 0.0, %v10456
      %10458 = vmatmul.f32.gmra.mxu0 %v4743
      %v10459 = vpop.f32.mrf.mxu0
      %v10460 = vadd.f32 0.0, %v10459
      %10461 = vmatmul.f32.gmra.mxu0 %v4745
      %v10462 = vpop.f32.mrf.mxu0
      %v10463 = vadd.f32 0.0, %v10462
      %10464 = vmatmul.f32.gmra.mxu0 %v4747
      %v10465 = vpop.f32.mrf.mxu0
      %v10466 = vadd.f32 0.0, %v10465
      %10467 = vmatmul.f32.gmra.mxu0 %v4749
      %v10468 = vpop.f32.mrf.mxu0
      %v10469 = vadd.f32 0.0, %v10468
      %10470 = vmatmul.f32.gmra.mxu0 %v4751
      %v10471 = vpop.f32.mrf.mxu0
      %v10472 = vadd.f32 0.0, %v10471
      %10473 = vmatmul.f32.gmra.mxu0 %v4753
      %v10474 = vpop.f32.mrf.mxu0
      %v10475 = vadd.f32 0.0, %v10474
      %10476 = vmatmul.f32.gmra.mxu0 %v4755
      %v10477 = vpop.f32.mrf.mxu0
      %v10478 = vadd.f32 0.0, %v10477
      %10479 = vmatmul.f32.gmra.mxu0 %v4757
      %v10480 = vpop.f32.mrf.mxu0
      %v10481 = vadd.f32 0.0, %v10480
      %10482 = vmatmul.f32.gmra.mxu0 %v4759
      %v10483 = vpop.f32.mrf.mxu0
      %v10484 = vadd.f32 0.0, %v10483
      %10485 = vmatmul.f32.gmra.mxu0 %v4761
      %v10486 = vpop.f32.mrf.mxu0
      %v10487 = vadd.f32 0.0, %v10486
      %10488 = vmatmul.f32.gmra.mxu0 %v4763
      %v10489 = vpop.f32.mrf.mxu0
      %v10490 = vadd.f32 0.0, %v10489
      %10491 = vmatmul.f32.gmra.mxu0 %v4765
      %v10492 = vpop.f32.mrf.mxu0
      %v10493 = vadd.f32 0.0, %v10492
      %10494 = vmatmul.f32.gmra.mxu0 %v4767
      %v10495 = vpop.f32.mrf.mxu0
      %v10496 = vadd.f32 0.0, %v10495
      %10497 = vmatmul.f32.gmra.mxu0 %v4769
      %v10498 = vpop.f32.mrf.mxu0
      %v10499 = vadd.f32 0.0, %v10498
      %10500 = vmatmul.f32.gmra.mxu0 %v4771
      %v10501 = vpop.f32.mrf.mxu0
      %v10502 = vadd.f32 0.0, %v10501
      %10503 = vmatmul.f32.gmra.mxu0 %v4773
      %v10504 = vpop.f32.mrf.mxu0
      %v10505 = vadd.f32 0.0, %v10504
      %10506 = vmatmul.f32.gmra.mxu0 %v4775
      %v10507 = vpop.f32.mrf.mxu0
      %v10508 = vadd.f32 0.0, %v10507
      %10509 = vmatmul.f32.gmra.mxu0 %v4777
      %v10510 = vpop.f32.mrf.mxu0
      %v10511 = vadd.f32 0.0, %v10510
      %10512 = vmatmul.f32.gmra.mxu0 %v4779
      %v10513 = vpop.f32.mrf.mxu0
      %v10514 = vadd.f32 0.0, %v10513
      %10515 = vmatmul.f32.gmra.mxu0 %v4781
      %v10516 = vpop.f32.mrf.mxu0
      %v10517 = vadd.f32 0.0, %v10516
      %10518 = vmatmul.f32.gmra.mxu0 %v4783
      %v10519 = vpop.f32.mrf.mxu0
      %v10520 = vadd.f32 0.0, %v10519
      %10521 = vmatmul.f32.gmra.mxu0 %v4785
      %v10522 = vpop.f32.mrf.mxu0
      %v10523 = vadd.f32 0.0, %v10522
      %10524 = vmatmul.f32.gmra.mxu0 %v4787
      %v10525 = vpop.f32.mrf.mxu0
      %v10526 = vadd.f32 0.0, %v10525
      %10527 = vmatmul.f32.gmra.mxu0 %v4789
      %v10528 = vpop.f32.mrf.mxu0
      %v10529 = vadd.f32 0.0, %v10528
      %10530 = vmatmul.f32.gmra.mxu0 %v4791
      %v10531 = vpop.f32.mrf.mxu0
      %v10532 = vadd.f32 0.0, %v10531
      %10533 = vmatmul.f32.gmra.mxu0 %v4793
      %v10534 = vpop.f32.mrf.mxu0
      %v10535 = vadd.f32 0.0, %v10534
      %10536 = vmatmul.f32.gmra.mxu0 %v4795
      %v10537 = vpop.f32.mrf.mxu0
      %v10538 = vadd.f32 0.0, %v10537
      %10539 = vmatmul.f32.gmra.mxu0 %v5994
      %v10540 = vpop.f32.mrf.mxu0
      %v10541 = vadd.f32 0.0, %v10540
      %10542 = vmatmul.f32.gmra.mxu0 %v5996
      %v10543 = vpop.f32.mrf.mxu0
      %v10544 = vadd.f32 0.0, %v10543
      %10545 = vmatmul.f32.gmra.mxu0 %v5998
      %v10546 = vpop.f32.mrf.mxu0
      %v10547 = vadd.f32 0.0, %v10546
      %10548 = vmatmul.f32.gmra.mxu0 %v7447
      %v10549 = vpop.f32.mrf.mxu0
      %v10550 = vadd.f32 0.0, %v10549
      %10551 = vmatmul.f32.gmra.mxu0 %v7449
      %v10552 = vpop.f32.mrf.mxu0
      %v10553 = vadd.f32 0.0, %v10552
      %10554 = vmatmul.f32.gmra.mxu0 %v7451
      %v10555 = vpop.f32.mrf.mxu0
      %v10556 = vadd.f32 0.0, %v10555
      %10557 = vmatmul.f32.gmra.mxu0 %v8900
      %v10558 = vpop.f32.mrf.mxu0
      %v10559 = vadd.f32 0.0, %v10558
      %10560 = vmatmul.f32.gmra.mxu0 %v8902
      %v10561 = vpop.f32.mrf.mxu0
      %v10562 = vadd.f32 0.0, %v10561
      %10563 = vmatmul.f32.gmra.mxu0 %v8904
      %v10564 = vpop.f32.mrf.mxu0
      %v10565 = vadd.f32 0.0, %v10564
      %10566 = vmatmul.f32.gmra.mxu0 %v10353
      %v10567 = vpop.f32.mrf.mxu0
      %v10568 = vadd.f32 0.0, %v10567
      %10569 = vmatmul.f32.gmra.mxu0 %v10355
      %v10570 = vpop.f32.mrf.mxu0
      %v10571 = vadd.f32 0.0, %v10570
      %10572 = vmatmul.f32.gmra.mxu0 %v10357
      %v10573 = vpop.f32.mrf.mxu0
      %v10574 = vadd.f32 0.0, %v10573
      %10575 = vmatmul.f32.gmra.mxu0 %v10359
      %v10576 = vpop.f32.mrf.mxu0
      %v10577 = vadd.f32 0.0, %v10576
      %10578 = vdwg.mxu0
      %v10579 = vadd.f32 %v10276, %v10382
      %v10580 = vadd.f32 %v10277, %v10385
      %v10581 = vadd.f32 %v10278, %v10388
      %v10582 = vadd.f32 %v10279, %v10391
      %v10583 = vadd.f32 %v10280, %v10394
      %v10584 = vadd.f32 %v10281, %v10397
      %v10585 = vadd.f32 %v10282, %v10400
      %v10586 = vadd.f32 %v10283, %v10403
      %v10587 = vadd.f32 %v10284, %v10406
      %v10588 = vadd.f32 %v10285, %v10409
      %v10589 = vadd.f32 %v10286, %v10412
      %v10590 = vadd.f32 %v10287, %v10415
      %v10591 = vadd.f32 %v10288, %v10418
      %v10592 = vadd.f32 %v10289, %v10421
      %v10593 = vadd.f32 %v10290, %v10424
      %v10594 = vadd.f32 %v10291, %v10427
      %v10595 = vadd.f32 %v10292, %v10430
      %v10596 = vadd.f32 %v10293, %v10433
      %v10597 = vadd.f32 %v10294, %v10436
      %v10598 = vadd.f32 %v10295, %v10439
      %v10599 = vadd.f32 %v10296, %v10442
      %v10600 = vadd.f32 %v10297, %v10445
      %v10601 = vadd.f32 %v10298, %v10448
      %v10602 = vadd.f32 %v10299, %v10451
      %v10603 = vadd.f32 %v10300, %v10454
      %v10604 = vadd.f32 %v10301, %v10457
      %v10605 = vadd.f32 %v10302, %v10460
      %v10606 = vadd.f32 %v10303, %v10463
      %v10607 = vadd.f32 %v10304, %v10466
      %v10608 = vadd.f32 %v10305, %v10469
      %v10609 = vadd.f32 %v10306, %v10472
      %v10610 = vadd.f32 %v10307, %v10475
      %v10611 = vadd.f32 %v10308, %v10478
      %v10612 = vadd.f32 %v10309, %v10481
      %v10613 = vadd.f32 %v10310, %v10484
      %v10614 = vadd.f32 %v10311, %v10487
      %v10615 = vadd.f32 %v10312, %v10490
      %v10616 = vadd.f32 %v10313, %v10493
      %v10617 = vadd.f32 %v10314, %v10496
      %v10618 = vadd.f32 %v10315, %v10499
      %v10619 = vadd.f32 %v10316, %v10502
      %v10620 = vadd.f32 %v10317, %v10505
      %v10621 = vadd.f32 %v10318, %v10508
      %v10622 = vadd.f32 %v10319, %v10511
      %v10623 = vadd.f32 %v10320, %v10514
      %v10624 = vadd.f32 %v10321, %v10517
      %v10625 = vadd.f32 %v10322, %v10520
      %v10626 = vadd.f32 %v10323, %v10523
      %v10627 = vadd.f32 %v10324, %v10526
      %v10628 = vadd.f32 %v10325, %v10529
      %v10629 = vadd.f32 %v10326, %v10532
      %v10630 = vadd.f32 %v10327, %v10535
      %v10631 = vadd.f32 %v10328, %v10538
      %v10632 = vadd.f32 %v10329, %v10541
      %v10633 = vadd.f32 %v10330, %v10544
      %v10634 = vadd.f32 %v10331, %v10547
      %v10635 = vadd.f32 %v10332, %v10550
      %v10636 = vadd.f32 %v10333, %v10553
      %v10637 = vadd.f32 %v10334, %v10556
      %v10638 = vadd.f32 %v10335, %v10559
      %v10639 = vadd.f32 %v10336, %v10562
      %v10640 = vadd.f32 %v10337, %v10565
      %v10641 = vadd.f32 %v10338, %v10568
      %v10642 = vadd.f32 %v10339, %v10571
      %v10643 = vadd.f32 %v10340, %v10574
      %v10644 = vadd.f32 %v10341, %v10577
      %s10645 = scalar_lea.vmem %s3, 168
      %v10646 = vld [vmem:[%s10645] sm:$0x3f]
      %v10647 = vrot.slane %v2528, 5
      %v10648 = vsel %vm6288, %v9198, %v10647
      %v10649 = vrot.slane %v2529, 5
      %v10650 = vsel %vm6288, %v10647, %v10649
      %v10651 = vrot.slane %v2530, 5
      %v10652 = vsel %vm6288, %v10649, %v10651
      %v10653 = vsel %vm2733, %v10648, 0
      %v10655 = vsel %vm2733, %v10650, 0
      %v10657 = vsel %vm2733, %v10652, 0
      %v10659 = vsel %vm2733, %v10651, 0
      %v10662 = vsel %vm2866, %v10646, 0
      %10664 = vmatpush.msra.mxu0 0.0
      %10665 = vmatpush.msra.mxu0 0.0
      %10666 = vmatpush.msra.mxu0 0.0
      %10667 = vmatpush.msra.mxu0 0.0
      %10668 = vmatpush.msra.mxu0 0.0
      %10669 = vmatpush.msra.mxu0 0.0
      %10670 = vmatpush.msra.mxu0 0.0
      %10671 = vmatpush.msra.mxu0 0.0
      %10672 = vmatpush.msra.mxu0 0.0
      %10673 = vmatpush.msra.mxu0 0.0
      %10674 = vmatpush.msra.mxu0 0.0
      %10675 = vmatpush.msra.mxu0 0.0
      %10676 = vmatpush.msra.mxu0 0.0
      %10677 = vmatpush.msra.mxu0 0.0
      %10678 = vmatpush.msra.mxu0 0.0
      %10679 = vmatpush.msra.mxu0 %v10662
      %10680 = vmatmul.f32.gmra.mxu0 %v6438
      %v10681 = vpop.f32.mrf.mxu0
      %v10682 = vadd.f32 0.0, %v10681
      %10683 = vmatmul.f32.gmra.mxu0 %v6440
      %v10684 = vpop.f32.mrf.mxu0
      %v10685 = vadd.f32 0.0, %v10684
      %10686 = vmatmul.f32.gmra.mxu0 %v6442
      %v10687 = vpop.f32.mrf.mxu0
      %v10688 = vadd.f32 0.0, %v10687
      %10689 = vmatmul.f32.gmra.mxu0 %v6444
      %v10690 = vpop.f32.mrf.mxu0
      %v10691 = vadd.f32 0.0, %v10690
      %10692 = vmatmul.f32.gmra.mxu0 %v6446
      %v10693 = vpop.f32.mrf.mxu0
      %v10694 = vadd.f32 0.0, %v10693
      %10695 = vmatmul.f32.gmra.mxu0 %v6448
      %v10696 = vpop.f32.mrf.mxu0
      %v10697 = vadd.f32 0.0, %v10696
      %10698 = vmatmul.f32.gmra.mxu0 %v6450
      %v10699 = vpop.f32.mrf.mxu0
      %v10700 = vadd.f32 0.0, %v10699
      %10701 = vmatmul.f32.gmra.mxu0 %v6452
      %v10702 = vpop.f32.mrf.mxu0
      %v10703 = vadd.f32 0.0, %v10702
      %10704 = vmatmul.f32.gmra.mxu0 %v6454
      %v10705 = vpop.f32.mrf.mxu0
      %v10706 = vadd.f32 0.0, %v10705
      %10707 = vmatmul.f32.gmra.mxu0 %v6456
      %v10708 = vpop.f32.mrf.mxu0
      %v10709 = vadd.f32 0.0, %v10708
      %10710 = vmatmul.f32.gmra.mxu0 %v6458
      %v10711 = vpop.f32.mrf.mxu0
      %v10712 = vadd.f32 0.0, %v10711
      %10713 = vmatmul.f32.gmra.mxu0 %v6460
      %v10714 = vpop.f32.mrf.mxu0
      %v10715 = vadd.f32 0.0, %v10714
      %10716 = vmatmul.f32.gmra.mxu0 %v6462
      %v10717 = vpop.f32.mrf.mxu0
      %v10718 = vadd.f32 0.0, %v10717
      %10719 = vmatmul.f32.gmra.mxu0 %v6464
      %v10720 = vpop.f32.mrf.mxu0
      %v10721 = vadd.f32 0.0, %v10720
      %10722 = vmatmul.f32.gmra.mxu0 %v6466
      %v10723 = vpop.f32.mrf.mxu0
      %v10724 = vadd.f32 0.0, %v10723
      %10725 = vmatmul.f32.gmra.mxu0 %v6468
      %v10726 = vpop.f32.mrf.mxu0
      %v10727 = vadd.f32 0.0, %v10726
      %10728 = vmatmul.f32.gmra.mxu0 %v6470
      %v10729 = vpop.f32.mrf.mxu0
      %v10730 = vadd.f32 0.0, %v10729
      %10731 = vmatmul.f32.gmra.mxu0 %v6472
      %v10732 = vpop.f32.mrf.mxu0
      %v10733 = vadd.f32 0.0, %v10732
      %10734 = vmatmul.f32.gmra.mxu0 %v6474
      %v10735 = vpop.f32.mrf.mxu0
      %v10736 = vadd.f32 0.0, %v10735
      %10737 = vmatmul.f32.gmra.mxu0 %v6476
      %v10738 = vpop.f32.mrf.mxu0
      %v10739 = vadd.f32 0.0, %v10738
      %10740 = vmatmul.f32.gmra.mxu0 %v6478
      %v10741 = vpop.f32.mrf.mxu0
      %v10742 = vadd.f32 0.0, %v10741
      %10743 = vmatmul.f32.gmra.mxu0 %v6480
      %v10744 = vpop.f32.mrf.mxu0
      %v10745 = vadd.f32 0.0, %v10744
      %10746 = vmatmul.f32.gmra.mxu0 %v6482
      %v10747 = vpop.f32.mrf.mxu0
      %v10748 = vadd.f32 0.0, %v10747
      %10749 = vmatmul.f32.gmra.mxu0 %v6484
      %v10750 = vpop.f32.mrf.mxu0
      %v10751 = vadd.f32 0.0, %v10750
      %10752 = vmatmul.f32.gmra.mxu0 %v6486
      %v10753 = vpop.f32.mrf.mxu0
      %v10754 = vadd.f32 0.0, %v10753
      %10755 = vmatmul.f32.gmra.mxu0 %v6488
      %v10756 = vpop.f32.mrf.mxu0
      %v10757 = vadd.f32 0.0, %v10756
      %10758 = vmatmul.f32.gmra.mxu0 %v6490
      %v10759 = vpop.f32.mrf.mxu0
      %v10760 = vadd.f32 0.0, %v10759
      %10761 = vmatmul.f32.gmra.mxu0 %v6492
      %v10762 = vpop.f32.mrf.mxu0
      %v10763 = vadd.f32 0.0, %v10762
      %10764 = vmatmul.f32.gmra.mxu0 %v6494
      %v10765 = vpop.f32.mrf.mxu0
      %v10766 = vadd.f32 0.0, %v10765
      %10767 = vmatmul.f32.gmra.mxu0 %v6496
      %v10768 = vpop.f32.mrf.mxu0
      %v10769 = vadd.f32 0.0, %v10768
      %10770 = vmatmul.f32.gmra.mxu0 %v6498
      %v10771 = vpop.f32.mrf.mxu0
      %v10772 = vadd.f32 0.0, %v10771
      %10773 = vmatmul.f32.gmra.mxu0 %v6500
      %v10774 = vpop.f32.mrf.mxu0
      %v10775 = vadd.f32 0.0, %v10774
      %10776 = vmatmul.f32.gmra.mxu0 %v6502
      %v10777 = vpop.f32.mrf.mxu0
      %v10778 = vadd.f32 0.0, %v10777
      %10779 = vmatmul.f32.gmra.mxu0 %v6504
      %v10780 = vpop.f32.mrf.mxu0
      %v10781 = vadd.f32 0.0, %v10780
      %10782 = vmatmul.f32.gmra.mxu0 %v6506
      %v10783 = vpop.f32.mrf.mxu0
      %v10784 = vadd.f32 0.0, %v10783
      %10785 = vmatmul.f32.gmra.mxu0 %v6508
      %v10786 = vpop.f32.mrf.mxu0
      %v10787 = vadd.f32 0.0, %v10786
      %10788 = vmatmul.f32.gmra.mxu0 %v6510
      %v10789 = vpop.f32.mrf.mxu0
      %v10790 = vadd.f32 0.0, %v10789
      %10791 = vmatmul.f32.gmra.mxu0 %v6512
      %v10792 = vpop.f32.mrf.mxu0
      %v10793 = vadd.f32 0.0, %v10792
      %10794 = vmatmul.f32.gmra.mxu0 %v6514
      %v10795 = vpop.f32.mrf.mxu0
      %v10796 = vadd.f32 0.0, %v10795
      %10797 = vmatmul.f32.gmra.mxu0 %v6516
      %v10798 = vpop.f32.mrf.mxu0
      %v10799 = vadd.f32 0.0, %v10798
      %10800 = vmatmul.f32.gmra.mxu0 %v6518
      %v10801 = vpop.f32.mrf.mxu0
      %v10802 = vadd.f32 0.0, %v10801
      %10803 = vmatmul.f32.gmra.mxu0 %v6520
      %v10804 = vpop.f32.mrf.mxu0
      %v10805 = vadd.f32 0.0, %v10804
      %10806 = vmatmul.f32.gmra.mxu0 %v6522
      %v10807 = vpop.f32.mrf.mxu0
      %v10808 = vadd.f32 0.0, %v10807
      %10809 = vmatmul.f32.gmra.mxu0 %v6524
      %v10810 = vpop.f32.mrf.mxu0
      %v10811 = vadd.f32 0.0, %v10810
      %10812 = vmatmul.f32.gmra.mxu0 %v6526
      %v10813 = vpop.f32.mrf.mxu0
      %v10814 = vadd.f32 0.0, %v10813
      %10815 = vmatmul.f32.gmra.mxu0 %v6528
      %v10816 = vpop.f32.mrf.mxu0
      %v10817 = vadd.f32 0.0, %v10816
      %10818 = vmatmul.f32.gmra.mxu0 %v6530
      %v10819 = vpop.f32.mrf.mxu0
      %v10820 = vadd.f32 0.0, %v10819
      %10821 = vmatmul.f32.gmra.mxu0 %v6532
      %v10822 = vpop.f32.mrf.mxu0
      %v10823 = vadd.f32 0.0, %v10822
      %10824 = vmatmul.f32.gmra.mxu0 %v6534
      %v10825 = vpop.f32.mrf.mxu0
      %v10826 = vadd.f32 0.0, %v10825
      %10827 = vmatmul.f32.gmra.mxu0 %v6536
      %v10828 = vpop.f32.mrf.mxu0
      %v10829 = vadd.f32 0.0, %v10828
      %10830 = vmatmul.f32.gmra.mxu0 %v6538
      %v10831 = vpop.f32.mrf.mxu0
      %v10832 = vadd.f32 0.0, %v10831
      %10833 = vmatmul.f32.gmra.mxu0 %v6540
      %v10834 = vpop.f32.mrf.mxu0
      %v10835 = vadd.f32 0.0, %v10834
      %10836 = vmatmul.f32.gmra.mxu0 %v6542
      %v10837 = vpop.f32.mrf.mxu0
      %v10838 = vadd.f32 0.0, %v10837
      %10839 = vmatmul.f32.gmra.mxu0 %v6544
      %v10840 = vpop.f32.mrf.mxu0
      %v10841 = vadd.f32 0.0, %v10840
      %10842 = vmatmul.f32.gmra.mxu0 %v6546
      %v10843 = vpop.f32.mrf.mxu0
      %v10844 = vadd.f32 0.0, %v10843
      %10845 = vmatmul.f32.gmra.mxu0 %v6548
      %v10846 = vpop.f32.mrf.mxu0
      %v10847 = vadd.f32 0.0, %v10846
      %10848 = vmatmul.f32.gmra.mxu0 %v7747
      %v10849 = vpop.f32.mrf.mxu0
      %v10850 = vadd.f32 0.0, %v10849
      %10851 = vmatmul.f32.gmra.mxu0 %v7749
      %v10852 = vpop.f32.mrf.mxu0
      %v10853 = vadd.f32 0.0, %v10852
      %10854 = vmatmul.f32.gmra.mxu0 %v7751
      %v10855 = vpop.f32.mrf.mxu0
      %v10856 = vadd.f32 0.0, %v10855
      %10857 = vmatmul.f32.gmra.mxu0 %v9200
      %v10858 = vpop.f32.mrf.mxu0
      %v10859 = vadd.f32 0.0, %v10858
      %10860 = vmatmul.f32.gmra.mxu0 %v9202
      %v10861 = vpop.f32.mrf.mxu0
      %v10862 = vadd.f32 0.0, %v10861
      %10863 = vmatmul.f32.gmra.mxu0 %v9204
      %v10864 = vpop.f32.mrf.mxu0
      %v10865 = vadd.f32 0.0, %v10864
      %10866 = vmatmul.f32.gmra.mxu0 %v10653
      %v10867 = vpop.f32.mrf.mxu0
      %v10868 = vadd.f32 0.0, %v10867
      %10869 = vmatmul.f32.gmra.mxu0 %v10655
      %v10870 = vpop.f32.mrf.mxu0
      %v10871 = vadd.f32 0.0, %v10870
      %10872 = vmatmul.f32.gmra.mxu0 %v10657
      %v10873 = vpop.f32.mrf.mxu0
      %v10874 = vadd.f32 0.0, %v10873
      %10875 = vmatmul.f32.gmra.mxu0 %v10659
      %v10876 = vpop.f32.mrf.mxu0
      %v10877 = vadd.f32 0.0, %v10876
      %10878 = vdwg.mxu0
      %v10879 = vadd.f32 %v10579, %v10682
      %v10880 = vadd.f32 %v10580, %v10685
      %v10881 = vadd.f32 %v10581, %v10688
      %v10882 = vadd.f32 %v10582, %v10691
      %v10883 = vadd.f32 %v10583, %v10694
      %v10884 = vadd.f32 %v10584, %v10697
      %v10885 = vadd.f32 %v10585, %v10700
      %v10886 = vadd.f32 %v10586, %v10703
      %v10887 = vadd.f32 %v10587, %v10706
      %v10888 = vadd.f32 %v10588, %v10709
      %v10889 = vadd.f32 %v10589, %v10712
      %v10890 = vadd.f32 %v10590, %v10715
      %v10891 = vadd.f32 %v10591, %v10718
      %v10892 = vadd.f32 %v10592, %v10721
      %v10893 = vadd.f32 %v10593, %v10724
      %v10894 = vadd.f32 %v10594, %v10727
      %v10895 = vadd.f32 %v10595, %v10730
      %v10896 = vadd.f32 %v10596, %v10733
      %v10897 = vadd.f32 %v10597, %v10736
      %v10898 = vadd.f32 %v10598, %v10739
      %v10899 = vadd.f32 %v10599, %v10742
      %v10900 = vadd.f32 %v10600, %v10745
      %v10901 = vadd.f32 %v10601, %v10748
      %v10902 = vadd.f32 %v10602, %v10751
      %v10903 = vadd.f32 %v10603, %v10754
      %v10904 = vadd.f32 %v10604, %v10757
      %v10905 = vadd.f32 %v10605, %v10760
      %v10906 = vadd.f32 %v10606, %v10763
      %v10907 = vadd.f32 %v10607, %v10766
      %v10908 = vadd.f32 %v10608, %v10769
      %v10909 = vadd.f32 %v10609, %v10772
      %v10910 = vadd.f32 %v10610, %v10775
      %v10911 = vadd.f32 %v10611, %v10778
      %v10912 = vadd.f32 %v10612, %v10781
      %v10913 = vadd.f32 %v10613, %v10784
      %v10914 = vadd.f32 %v10614, %v10787
      %v10915 = vadd.f32 %v10615, %v10790
      %v10916 = vadd.f32 %v10616, %v10793
      %v10917 = vadd.f32 %v10617, %v10796
      %v10918 = vadd.f32 %v10618, %v10799
      %v10919 = vadd.f32 %v10619, %v10802
      %v10920 = vadd.f32 %v10620, %v10805
      %v10921 = vadd.f32 %v10621, %v10808
      %v10922 = vadd.f32 %v10622, %v10811
      %v10923 = vadd.f32 %v10623, %v10814
      %v10924 = vadd.f32 %v10624, %v10817
      %v10925 = vadd.f32 %v10625, %v10820
      %v10926 = vadd.f32 %v10626, %v10823
      %v10927 = vadd.f32 %v10627, %v10826
      %v10928 = vadd.f32 %v10628, %v10829
      %v10929 = vadd.f32 %v10629, %v10832
      %v10930 = vadd.f32 %v10630, %v10835
      %v10931 = vadd.f32 %v10631, %v10838
      %v10932 = vadd.f32 %v10632, %v10841
      %v10933 = vadd.f32 %v10633, %v10844
      %v10934 = vadd.f32 %v10634, %v10847
      %v10935 = vadd.f32 %v10635, %v10850
      %v10936 = vadd.f32 %v10636, %v10853
      %v10937 = vadd.f32 %v10637, %v10856
      %v10938 = vadd.f32 %v10638, %v10859
      %v10939 = vadd.f32 %v10639, %v10862
      %v10940 = vadd.f32 %v10640, %v10865
      %v10941 = vadd.f32 %v10641, %v10868
      %v10942 = vadd.f32 %v10642, %v10871
      %v10943 = vadd.f32 %v10643, %v10874
      %v10944 = vadd.f32 %v10644, %v10877
      %s10945 = scalar_lea.vmem %s3, 176
      %v10946 = vld [vmem:[%s10945] sm:$0x3f]
      %v10947 = vrot.slane %v2528, 6
      %v10948 = vsel %vm8041, %v9498, %v10947
      %v10949 = vrot.slane %v2529, 6
      %v10950 = vsel %vm8041, %v10947, %v10949
      %v10951 = vrot.slane %v2530, 6
      %v10952 = vsel %vm8041, %v10949, %v10951
      %v10953 = vsel %vm2733, %v10948, 0
      %v10955 = vsel %vm2733, %v10950, 0
      %v10957 = vsel %vm2733, %v10952, 0
      %v10959 = vsel %vm2733, %v10951, 0
      %v10962 = vsel %vm2866, %v10946, 0
      %10964 = vmatpush.msra.mxu0 0.0
      %10965 = vmatpush.msra.mxu0 0.0
      %10966 = vmatpush.msra.mxu0 0.0
      %10967 = vmatpush.msra.mxu0 0.0
      %10968 = vmatpush.msra.mxu0 0.0
      %10969 = vmatpush.msra.mxu0 0.0
      %10970 = vmatpush.msra.mxu0 0.0
      %10971 = vmatpush.msra.mxu0 0.0
      %10972 = vmatpush.msra.mxu0 0.0
      %10973 = vmatpush.msra.mxu0 0.0
      %10974 = vmatpush.msra.mxu0 0.0
      %10975 = vmatpush.msra.mxu0 0.0
      %10976 = vmatpush.msra.mxu0 0.0
      %10977 = vmatpush.msra.mxu0 0.0
      %10978 = vmatpush.msra.mxu0 0.0
      %10979 = vmatpush.msra.mxu0 %v10962
      %10980 = vmatmul.f32.gmra.mxu0 %v8185
      %v10981 = vpop.f32.mrf.mxu0
      %v10982 = vadd.f32 0.0, %v10981
      %10983 = vmatmul.f32.gmra.mxu0 %v8187
      %v10984 = vpop.f32.mrf.mxu0
      %v10985 = vadd.f32 0.0, %v10984
      %10986 = vmatmul.f32.gmra.mxu0 %v8189
      %v10987 = vpop.f32.mrf.mxu0
      %v10988 = vadd.f32 0.0, %v10987
      %10989 = vmatmul.f32.gmra.mxu0 %v8191
      %v10990 = vpop.f32.mrf.mxu0
      %v10991 = vadd.f32 0.0, %v10990
      %10992 = vmatmul.f32.gmra.mxu0 %v8193
      %v10993 = vpop.f32.mrf.mxu0
      %v10994 = vadd.f32 0.0, %v10993
      %10995 = vmatmul.f32.gmra.mxu0 %v8195
      %v10996 = vpop.f32.mrf.mxu0
      %v10997 = vadd.f32 0.0, %v10996
      %10998 = vmatmul.f32.gmra.mxu0 %v8197
      %v10999 = vpop.f32.mrf.mxu0
      %v11000 = vadd.f32 0.0, %v10999
      %11001 = vmatmul.f32.gmra.mxu0 %v8199
      %v11002 = vpop.f32.mrf.mxu0
      %v11003 = vadd.f32 0.0, %v11002
      %11004 = vmatmul.f32.gmra.mxu0 %v8201
      %v11005 = vpop.f32.mrf.mxu0
      %v11006 = vadd.f32 0.0, %v11005
      %11007 = vmatmul.f32.gmra.mxu0 %v8203
      %v11008 = vpop.f32.mrf.mxu0
      %v11009 = vadd.f32 0.0, %v11008
      %11010 = vmatmul.f32.gmra.mxu0 %v8205
      %v11011 = vpop.f32.mrf.mxu0
      %v11012 = vadd.f32 0.0, %v11011
      %11013 = vmatmul.f32.gmra.mxu0 %v8207
      %v11014 = vpop.f32.mrf.mxu0
      %v11015 = vadd.f32 0.0, %v11014
      %11016 = vmatmul.f32.gmra.mxu0 %v8209
      %v11017 = vpop.f32.mrf.mxu0
      %v11018 = vadd.f32 0.0, %v11017
      %11019 = vmatmul.f32.gmra.mxu0 %v8211
      %v11020 = vpop.f32.mrf.mxu0
      %v11021 = vadd.f32 0.0, %v11020
      %11022 = vmatmul.f32.gmra.mxu0 %v8213
      %v11023 = vpop.f32.mrf.mxu0
      %v11024 = vadd.f32 0.0, %v11023
      %11025 = vmatmul.f32.gmra.mxu0 %v8215
      %v11026 = vpop.f32.mrf.mxu0
      %v11027 = vadd.f32 0.0, %v11026
      %11028 = vmatmul.f32.gmra.mxu0 %v8217
      %v11029 = vpop.f32.mrf.mxu0
      %v11030 = vadd.f32 0.0, %v11029
      %11031 = vmatmul.f32.gmra.mxu0 %v8219
      %v11032 = vpop.f32.mrf.mxu0
      %v11033 = vadd.f32 0.0, %v11032
      %11034 = vmatmul.f32.gmra.mxu0 %v8221
      %v11035 = vpop.f32.mrf.mxu0
      %v11036 = vadd.f32 0.0, %v11035
      %11037 = vmatmul.f32.gmra.mxu0 %v8223
      %v11038 = vpop.f32.mrf.mxu0
      %v11039 = vadd.f32 0.0, %v11038
      %11040 = vmatmul.f32.gmra.mxu0 %v8225
      %v11041 = vpop.f32.mrf.mxu0
      %v11042 = vadd.f32 0.0, %v11041
      %11043 = vmatmul.f32.gmra.mxu0 %v8227
      %v11044 = vpop.f32.mrf.mxu0
      %v11045 = vadd.f32 0.0, %v11044
      %11046 = vmatmul.f32.gmra.mxu0 %v8229
      %v11047 = vpop.f32.mrf.mxu0
      %v11048 = vadd.f32 0.0, %v11047
      %11049 = vmatmul.f32.gmra.mxu0 %v8231
      %v11050 = vpop.f32.mrf.mxu0
      %v11051 = vadd.f32 0.0, %v11050
      %11052 = vmatmul.f32.gmra.mxu0 %v8233
      %v11053 = vpop.f32.mrf.mxu0
      %v11054 = vadd.f32 0.0, %v11053
      %11055 = vmatmul.f32.gmra.mxu0 %v8235
      %v11056 = vpop.f32.mrf.mxu0
      %v11057 = vadd.f32 0.0, %v11056
      %11058 = vmatmul.f32.gmra.mxu0 %v8237
      %v11059 = vpop.f32.mrf.mxu0
      %v11060 = vadd.f32 0.0, %v11059
      %11061 = vmatmul.f32.gmra.mxu0 %v8239
      %v11062 = vpop.f32.mrf.mxu0
      %v11063 = vadd.f32 0.0, %v11062
      %11064 = vmatmul.f32.gmra.mxu0 %v8241
      %v11065 = vpop.f32.mrf.mxu0
      %v11066 = vadd.f32 0.0, %v11065
      %11067 = vmatmul.f32.gmra.mxu0 %v8243
      %v11068 = vpop.f32.mrf.mxu0
      %v11069 = vadd.f32 0.0, %v11068
      %11070 = vmatmul.f32.gmra.mxu0 %v8245
      %v11071 = vpop.f32.mrf.mxu0
      %v11072 = vadd.f32 0.0, %v11071
      %11073 = vmatmul.f32.gmra.mxu0 %v8247
      %v11074 = vpop.f32.mrf.mxu0
      %v11075 = vadd.f32 0.0, %v11074
      %11076 = vmatmul.f32.gmra.mxu0 %v8249
      %v11077 = vpop.f32.mrf.mxu0
      %v11078 = vadd.f32 0.0, %v11077
      %11079 = vmatmul.f32.gmra.mxu0 %v8251
      %v11080 = vpop.f32.mrf.mxu0
      %v11081 = vadd.f32 0.0, %v11080
      %11082 = vmatmul.f32.gmra.mxu0 %v8253
      %v11083 = vpop.f32.mrf.mxu0
      %v11084 = vadd.f32 0.0, %v11083
      %11085 = vmatmul.f32.gmra.mxu0 %v8255
      %v11086 = vpop.f32.mrf.mxu0
      %v11087 = vadd.f32 0.0, %v11086
      %11088 = vmatmul.f32.gmra.mxu0 %v8257
      %v11089 = vpop.f32.mrf.mxu0
      %v11090 = vadd.f32 0.0, %v11089
      %11091 = vmatmul.f32.gmra.mxu0 %v8259
      %v11092 = vpop.f32.mrf.mxu0
      %v11093 = vadd.f32 0.0, %v11092
      %11094 = vmatmul.f32.gmra.mxu0 %v8261
      %v11095 = vpop.f32.mrf.mxu0
      %v11096 = vadd.f32 0.0, %v11095
      %11097 = vmatmul.f32.gmra.mxu0 %v8263
      %v11098 = vpop.f32.mrf.mxu0
      %v11099 = vadd.f32 0.0, %v11098
      %11100 = vmatmul.f32.gmra.mxu0 %v8265
      %v11101 = vpop.f32.mrf.mxu0
      %v11102 = vadd.f32 0.0, %v11101
      %11103 = vmatmul.f32.gmra.mxu0 %v8267
      %v11104 = vpop.f32.mrf.mxu0
      %v11105 = vadd.f32 0.0, %v11104
      %11106 = vmatmul.f32.gmra.mxu0 %v8269
      %v11107 = vpop.f32.mrf.mxu0
      %v11108 = vadd.f32 0.0, %v11107
      %11109 = vmatmul.f32.gmra.mxu0 %v8271
      %v11110 = vpop.f32.mrf.mxu0
      %v11111 = vadd.f32 0.0, %v11110
      %11112 = vmatmul.f32.gmra.mxu0 %v8273
      %v11113 = vpop.f32.mrf.mxu0
      %v11114 = vadd.f32 0.0, %v11113
      %11115 = vmatmul.f32.gmra.mxu0 %v8275
      %v11116 = vpop.f32.mrf.mxu0
      %v11117 = vadd.f32 0.0, %v11116
      %11118 = vmatmul.f32.gmra.mxu0 %v8277
      %v11119 = vpop.f32.mrf.mxu0
      %v11120 = vadd.f32 0.0, %v11119
      %11121 = vmatmul.f32.gmra.mxu0 %v8279
      %v11122 = vpop.f32.mrf.mxu0
      %v11123 = vadd.f32 0.0, %v11122
      %11124 = vmatmul.f32.gmra.mxu0 %v8281
      %v11125 = vpop.f32.mrf.mxu0
      %v11126 = vadd.f32 0.0, %v11125
      %11127 = vmatmul.f32.gmra.mxu0 %v8283
      %v11128 = vpop.f32.mrf.mxu0
      %v11129 = vadd.f32 0.0, %v11128
      %11130 = vmatmul.f32.gmra.mxu0 %v8285
      %v11131 = vpop.f32.mrf.mxu0
      %v11132 = vadd.f32 0.0, %v11131
      %11133 = vmatmul.f32.gmra.mxu0 %v8287
      %v11134 = vpop.f32.mrf.mxu0
      %v11135 = vadd.f32 0.0, %v11134
      %11136 = vmatmul.f32.gmra.mxu0 %v8289
      %v11137 = vpop.f32.mrf.mxu0
      %v11138 = vadd.f32 0.0, %v11137
      %11139 = vmatmul.f32.gmra.mxu0 %v8291
      %v11140 = vpop.f32.mrf.mxu0
      %v11141 = vadd.f32 0.0, %v11140
      %11142 = vmatmul.f32.gmra.mxu0 %v8293
      %v11143 = vpop.f32.mrf.mxu0
      %v11144 = vadd.f32 0.0, %v11143
      %11145 = vmatmul.f32.gmra.mxu0 %v8295
      %v11146 = vpop.f32.mrf.mxu0
      %v11147 = vadd.f32 0.0, %v11146
      %11148 = vmatmul.f32.gmra.mxu0 %v8297
      %v11149 = vpop.f32.mrf.mxu0
      %v11150 = vadd.f32 0.0, %v11149
      %11151 = vmatmul.f32.gmra.mxu0 %v8299
      %v11152 = vpop.f32.mrf.mxu0
      %v11153 = vadd.f32 0.0, %v11152
      %11154 = vmatmul.f32.gmra.mxu0 %v8301
      %v11155 = vpop.f32.mrf.mxu0
      %v11156 = vadd.f32 0.0, %v11155
      %11157 = vmatmul.f32.gmra.mxu0 %v9500
      %v11158 = vpop.f32.mrf.mxu0
      %v11159 = vadd.f32 0.0, %v11158
      %11160 = vmatmul.f32.gmra.mxu0 %v9502
      %v11161 = vpop.f32.mrf.mxu0
      %v11162 = vadd.f32 0.0, %v11161
      %11163 = vmatmul.f32.gmra.mxu0 %v9504
      %v11164 = vpop.f32.mrf.mxu0
      %v11165 = vadd.f32 0.0, %v11164
      %11166 = vmatmul.f32.gmra.mxu0 %v10953
      %v11167 = vpop.f32.mrf.mxu0
      %v11168 = vadd.f32 0.0, %v11167
      %11169 = vmatmul.f32.gmra.mxu0 %v10955
      %v11170 = vpop.f32.mrf.mxu0
      %v11171 = vadd.f32 0.0, %v11170
      %11172 = vmatmul.f32.gmra.mxu0 %v10957
      %v11173 = vpop.f32.mrf.mxu0
      %v11174 = vadd.f32 0.0, %v11173
      %11175 = vmatmul.f32.gmra.mxu0 %v10959
      %v11176 = vpop.f32.mrf.mxu0
      %v11177 = vadd.f32 0.0, %v11176
      %11178 = vdwg.mxu0
      %v11179 = vadd.f32 %v10879, %v10982
      %v11180 = vadd.f32 %v10880, %v10985
      %v11181 = vadd.f32 %v10881, %v10988
      %v11182 = vadd.f32 %v10882, %v10991
      %v11183 = vadd.f32 %v10883, %v10994
      %v11184 = vadd.f32 %v10884, %v10997
      %v11185 = vadd.f32 %v10885, %v11000
      %v11186 = vadd.f32 %v10886, %v11003
      %v11187 = vadd.f32 %v10887, %v11006
      %v11188 = vadd.f32 %v10888, %v11009
      %v11189 = vadd.f32 %v10889, %v11012
      %v11190 = vadd.f32 %v10890, %v11015
      %v11191 = vadd.f32 %v10891, %v11018
      %v11192 = vadd.f32 %v10892, %v11021
      %v11193 = vadd.f32 %v10893, %v11024
      %v11194 = vadd.f32 %v10894, %v11027
      %v11195 = vadd.f32 %v10895, %v11030
      %v11196 = vadd.f32 %v10896, %v11033
      %v11197 = vadd.f32 %v10897, %v11036
      %v11198 = vadd.f32 %v10898, %v11039
      %v11199 = vadd.f32 %v10899, %v11042
      %v11200 = vadd.f32 %v10900, %v11045
      %v11201 = vadd.f32 %v10901, %v11048
      %v11202 = vadd.f32 %v10902, %v11051
      %v11203 = vadd.f32 %v10903, %v11054
      %v11204 = vadd.f32 %v10904, %v11057
      %v11205 = vadd.f32 %v10905, %v11060
      %v11206 = vadd.f32 %v10906, %v11063
      %v11207 = vadd.f32 %v10907, %v11066
      %v11208 = vadd.f32 %v10908, %v11069
      %v11209 = vadd.f32 %v10909, %v11072
      %v11210 = vadd.f32 %v10910, %v11075
      %v11211 = vadd.f32 %v10911, %v11078
      %v11212 = vadd.f32 %v10912, %v11081
      %v11213 = vadd.f32 %v10913, %v11084
      %v11214 = vadd.f32 %v10914, %v11087
      %v11215 = vadd.f32 %v10915, %v11090
      %v11216 = vadd.f32 %v10916, %v11093
      %v11217 = vadd.f32 %v10917, %v11096
      %v11218 = vadd.f32 %v10918, %v11099
      %v11219 = vadd.f32 %v10919, %v11102
      %v11220 = vadd.f32 %v10920, %v11105
      %v11221 = vadd.f32 %v10921, %v11108
      %v11222 = vadd.f32 %v10922, %v11111
      %v11223 = vadd.f32 %v10923, %v11114
      %v11224 = vadd.f32 %v10924, %v11117
      %v11225 = vadd.f32 %v10925, %v11120
      %v11226 = vadd.f32 %v10926, %v11123
      %v11227 = vadd.f32 %v10927, %v11126
      %v11228 = vadd.f32 %v10928, %v11129
      %v11229 = vadd.f32 %v10929, %v11132
      %v11230 = vadd.f32 %v10930, %v11135
      %v11231 = vadd.f32 %v10931, %v11138
      %v11232 = vadd.f32 %v10932, %v11141
      %v11233 = vadd.f32 %v10933, %v11144
      %v11234 = vadd.f32 %v10934, %v11147
      %v11235 = vadd.f32 %v10935, %v11150
      %v11236 = vadd.f32 %v10936, %v11153
      %v11237 = vadd.f32 %v10937, %v11156
      %v11238 = vadd.f32 %v10938, %v11159
      %v11239 = vadd.f32 %v10939, %v11162
      %v11240 = vadd.f32 %v10940, %v11165
      %v11241 = vadd.f32 %v10941, %v11168
      %v11242 = vadd.f32 %v10942, %v11171
      %v11243 = vadd.f32 %v10943, %v11174
      %v11244 = vadd.f32 %v10944, %v11177
      %s11245 = scalar_lea.vmem %s3, 184
      %v11246 = vld [vmem:[%s11245] sm:$0x3f]
      %v11247 = vrot.slane %v2528, 7
      %v11248 = vsel %vm9794, %v9924, %v11247
      %v11249 = vrot.slane %v2529, 7
      %v11250 = vsel %vm9794, %v11247, %v11249
      %v11251 = vrot.slane %v2530, 7
      %v11252 = vsel %vm9794, %v11249, %v11251
      %v11253 = vsel %vm2733, %v11248, 0
      %v11255 = vsel %vm2733, %v11250, 0
      %v11257 = vsel %vm2733, %v11252, 0
      %v11259 = vsel %vm2733, %v11251, 0
      %v11262 = vsel %vm2866, %v11246, 0
      %11264 = vmatpush.msra.mxu0 0.0
      %11265 = vmatpush.msra.mxu0 0.0
      %11266 = vmatpush.msra.mxu0 0.0
      %11267 = vmatpush.msra.mxu0 0.0
      %11268 = vmatpush.msra.mxu0 0.0
      %11269 = vmatpush.msra.mxu0 0.0
      %11270 = vmatpush.msra.mxu0 0.0
      %11271 = vmatpush.msra.mxu0 0.0
      %11272 = vmatpush.msra.mxu0 0.0
      %11273 = vmatpush.msra.mxu0 0.0
      %11274 = vmatpush.msra.mxu0 0.0
      %11275 = vmatpush.msra.mxu0 0.0
      %11276 = vmatpush.msra.mxu0 0.0
      %11277 = vmatpush.msra.mxu0 0.0
      %11278 = vmatpush.msra.mxu0 0.0
      %11279 = vmatpush.msra.mxu0 %v11262
      %11280 = vmatmul.f32.gmra.mxu0 %v9932
      %v11281 = vpop.f32.mrf.mxu0
      %v11282 = vadd.f32 0.0, %v11281
      %11283 = vmatmul.f32.gmra.mxu0 %v9934
      %v11284 = vpop.f32.mrf.mxu0
      %v11285 = vadd.f32 0.0, %v11284
      %11286 = vmatmul.f32.gmra.mxu0 %v9936
      %v11287 = vpop.f32.mrf.mxu0
      %v11288 = vadd.f32 0.0, %v11287
      %11289 = vmatmul.f32.gmra.mxu0 %v9938
      %v11290 = vpop.f32.mrf.mxu0
      %v11291 = vadd.f32 0.0, %v11290
      %11292 = vmatmul.f32.gmra.mxu0 %v9940
      %v11293 = vpop.f32.mrf.mxu0
      %v11294 = vadd.f32 0.0, %v11293
      %11295 = vmatmul.f32.gmra.mxu0 %v9942
      %v11296 = vpop.f32.mrf.mxu0
      %v11297 = vadd.f32 0.0, %v11296
      %11298 = vmatmul.f32.gmra.mxu0 %v9944
      %v11299 = vpop.f32.mrf.mxu0
      %v11300 = vadd.f32 0.0, %v11299
      %11301 = vmatmul.f32.gmra.mxu0 %v9946
      %v11302 = vpop.f32.mrf.mxu0
      %v11303 = vadd.f32 0.0, %v11302
      %11304 = vmatmul.f32.gmra.mxu0 %v9948
      %v11305 = vpop.f32.mrf.mxu0
      %v11306 = vadd.f32 0.0, %v11305
      %11307 = vmatmul.f32.gmra.mxu0 %v9950
      %v11308 = vpop.f32.mrf.mxu0
      %v11309 = vadd.f32 0.0, %v11308
      %11310 = vmatmul.f32.gmra.mxu0 %v9952
      %v11311 = vpop.f32.mrf.mxu0
      %v11312 = vadd.f32 0.0, %v11311
      %11313 = vmatmul.f32.gmra.mxu0 %v9954
      %v11314 = vpop.f32.mrf.mxu0
      %v11315 = vadd.f32 0.0, %v11314
      %11316 = vmatmul.f32.gmra.mxu0 %v9956
      %v11317 = vpop.f32.mrf.mxu0
      %v11318 = vadd.f32 0.0, %v11317
      %11319 = vmatmul.f32.gmra.mxu0 %v9958
      %v11320 = vpop.f32.mrf.mxu0
      %v11321 = vadd.f32 0.0, %v11320
      %11322 = vmatmul.f32.gmra.mxu0 %v9960
      %v11323 = vpop.f32.mrf.mxu0
      %v11324 = vadd.f32 0.0, %v11323
      %11325 = vmatmul.f32.gmra.mxu0 %v9962
      %v11326 = vpop.f32.mrf.mxu0
      %v11327 = vadd.f32 0.0, %v11326
      %11328 = vmatmul.f32.gmra.mxu0 %v9964
      %v11329 = vpop.f32.mrf.mxu0
      %v11330 = vadd.f32 0.0, %v11329
      %11331 = vmatmul.f32.gmra.mxu0 %v9966
      %v11332 = vpop.f32.mrf.mxu0
      %v11333 = vadd.f32 0.0, %v11332
      %11334 = vmatmul.f32.gmra.mxu0 %v9968
      %v11335 = vpop.f32.mrf.mxu0
      %v11336 = vadd.f32 0.0, %v11335
      %11337 = vmatmul.f32.gmra.mxu0 %v9970
      %v11338 = vpop.f32.mrf.mxu0
      %v11339 = vadd.f32 0.0, %v11338
      %11340 = vmatmul.f32.gmra.mxu0 %v9972
      %v11341 = vpop.f32.mrf.mxu0
      %v11342 = vadd.f32 0.0, %v11341
      %11343 = vmatmul.f32.gmra.mxu0 %v9974
      %v11344 = vpop.f32.mrf.mxu0
      %v11345 = vadd.f32 0.0, %v11344
      %11346 = vmatmul.f32.gmra.mxu0 %v9976
      %v11347 = vpop.f32.mrf.mxu0
      %v11348 = vadd.f32 0.0, %v11347
      %11349 = vmatmul.f32.gmra.mxu0 %v9978
      %v11350 = vpop.f32.mrf.mxu0
      %v11351 = vadd.f32 0.0, %v11350
      %11352 = vmatmul.f32.gmra.mxu0 %v9980
      %v11353 = vpop.f32.mrf.mxu0
      %v11354 = vadd.f32 0.0, %v11353
      %11355 = vmatmul.f32.gmra.mxu0 %v9982
      %v11356 = vpop.f32.mrf.mxu0
      %v11357 = vadd.f32 0.0, %v11356
      %11358 = vmatmul.f32.gmra.mxu0 %v9984
      %v11359 = vpop.f32.mrf.mxu0
      %v11360 = vadd.f32 0.0, %v11359
      %11361 = vmatmul.f32.gmra.mxu0 %v9986
      %v11362 = vpop.f32.mrf.mxu0
      %v11363 = vadd.f32 0.0, %v11362
      %11364 = vmatmul.f32.gmra.mxu0 %v9988
      %v11365 = vpop.f32.mrf.mxu0
      %v11366 = vadd.f32 0.0, %v11365
      %11367 = vmatmul.f32.gmra.mxu0 %v9990
      %v11368 = vpop.f32.mrf.mxu0
      %v11369 = vadd.f32 0.0, %v11368
      %11370 = vmatmul.f32.gmra.mxu0 %v9992
      %v11371 = vpop.f32.mrf.mxu0
      %v11372 = vadd.f32 0.0, %v11371
      %11373 = vmatmul.f32.gmra.mxu0 %v9994
      %v11374 = vpop.f32.mrf.mxu0
      %v11375 = vadd.f32 0.0, %v11374
      %11376 = vmatmul.f32.gmra.mxu0 %v9996
      %v11377 = vpop.f32.mrf.mxu0
      %v11378 = vadd.f32 0.0, %v11377
      %11379 = vmatmul.f32.gmra.mxu0 %v9998
      %v11380 = vpop.f32.mrf.mxu0
      %v11381 = vadd.f32 0.0, %v11380
      %11382 = vmatmul.f32.gmra.mxu0 %v10000
      %v11383 = vpop.f32.mrf.mxu0
      %v11384 = vadd.f32 0.0, %v11383
      %11385 = vmatmul.f32.gmra.mxu0 %v10002
      %v11386 = vpop.f32.mrf.mxu0
      %v11387 = vadd.f32 0.0, %v11386
      %11388 = vmatmul.f32.gmra.mxu0 %v10004
      %v11389 = vpop.f32.mrf.mxu0
      %v11390 = vadd.f32 0.0, %v11389
      %11391 = vmatmul.f32.gmra.mxu0 %v10006
      %v11392 = vpop.f32.mrf.mxu0
      %v11393 = vadd.f32 0.0, %v11392
      %11394 = vmatmul.f32.gmra.mxu0 %v10008
      %v11395 = vpop.f32.mrf.mxu0
      %v11396 = vadd.f32 0.0, %v11395
      %11397 = vmatmul.f32.gmra.mxu0 %v10010
      %v11398 = vpop.f32.mrf.mxu0
      %v11399 = vadd.f32 0.0, %v11398
      %11400 = vmatmul.f32.gmra.mxu0 %v10012
      %v11401 = vpop.f32.mrf.mxu0
      %v11402 = vadd.f32 0.0, %v11401
      %11403 = vmatmul.f32.gmra.mxu0 %v10014
      %v11404 = vpop.f32.mrf.mxu0
      %v11405 = vadd.f32 0.0, %v11404
      %11406 = vmatmul.f32.gmra.mxu0 %v10016
      %v11407 = vpop.f32.mrf.mxu0
      %v11408 = vadd.f32 0.0, %v11407
      %11409 = vmatmul.f32.gmra.mxu0 %v10018
      %v11410 = vpop.f32.mrf.mxu0
      %v11411 = vadd.f32 0.0, %v11410
      %11412 = vmatmul.f32.gmra.mxu0 %v10020
      %v11413 = vpop.f32.mrf.mxu0
      %v11414 = vadd.f32 0.0, %v11413
      %11415 = vmatmul.f32.gmra.mxu0 %v10022
      %v11416 = vpop.f32.mrf.mxu0
      %v11417 = vadd.f32 0.0, %v11416
      %11418 = vmatmul.f32.gmra.mxu0 %v10024
      %v11419 = vpop.f32.mrf.mxu0
      %v11420 = vadd.f32 0.0, %v11419
      %11421 = vmatmul.f32.gmra.mxu0 %v10026
      %v11422 = vpop.f32.mrf.mxu0
      %v11423 = vadd.f32 0.0, %v11422
      %11424 = vmatmul.f32.gmra.mxu0 %v10028
      %v11425 = vpop.f32.mrf.mxu0
      %v11426 = vadd.f32 0.0, %v11425
      %11427 = vmatmul.f32.gmra.mxu0 %v10030
      %v11428 = vpop.f32.mrf.mxu0
      %v11429 = vadd.f32 0.0, %v11428
      %11430 = vmatmul.f32.gmra.mxu0 %v10032
      %v11431 = vpop.f32.mrf.mxu0
      %v11432 = vadd.f32 0.0, %v11431
      %11433 = vmatmul.f32.gmra.mxu0 %v10034
      %v11434 = vpop.f32.mrf.mxu0
      %v11435 = vadd.f32 0.0, %v11434
      %11436 = vmatmul.f32.gmra.mxu0 %v10036
      %v11437 = vpop.f32.mrf.mxu0
      %v11438 = vadd.f32 0.0, %v11437
      %11439 = vmatmul.f32.gmra.mxu0 %v10038
      %v11440 = vpop.f32.mrf.mxu0
      %v11441 = vadd.f32 0.0, %v11440
      %11442 = vmatmul.f32.gmra.mxu0 %v10040
      %v11443 = vpop.f32.mrf.mxu0
      %v11444 = vadd.f32 0.0, %v11443
      %11445 = vmatmul.f32.gmra.mxu0 %v10042
      %v11446 = vpop.f32.mrf.mxu0
      %v11447 = vadd.f32 0.0, %v11446
      %11448 = vmatmul.f32.gmra.mxu0 %v10044
      %v11449 = vpop.f32.mrf.mxu0
      %v11450 = vadd.f32 0.0, %v11449
      %11451 = vmatmul.f32.gmra.mxu0 %v10046
      %v11452 = vpop.f32.mrf.mxu0
      %v11453 = vadd.f32 0.0, %v11452
      %11454 = vmatmul.f32.gmra.mxu0 %v10048
      %v11455 = vpop.f32.mrf.mxu0
      %v11456 = vadd.f32 0.0, %v11455
      %11457 = vmatmul.f32.gmra.mxu0 %v10050
      %v11458 = vpop.f32.mrf.mxu0
      %v11459 = vadd.f32 0.0, %v11458
      %11460 = vmatmul.f32.gmra.mxu0 %v10052
      %v11461 = vpop.f32.mrf.mxu0
      %v11462 = vadd.f32 0.0, %v11461
      %11463 = vmatmul.f32.gmra.mxu0 %v10054
      %v11464 = vpop.f32.mrf.mxu0
      %v11465 = vadd.f32 0.0, %v11464
      %11466 = vmatmul.f32.gmra.mxu0 %v11253
      %v11467 = vpop.f32.mrf.mxu0
      %v11468 = vadd.f32 0.0, %v11467
      %11469 = vmatmul.f32.gmra.mxu0 %v11255
      %v11470 = vpop.f32.mrf.mxu0
      %v11471 = vadd.f32 0.0, %v11470
      %11472 = vmatmul.f32.gmra.mxu0 %v11257
      %v11473 = vpop.f32.mrf.mxu0
      %v11474 = vadd.f32 0.0, %v11473
      %11475 = vmatmul.f32.gmra.mxu0 %v11259
      %v11476 = vpop.f32.mrf.mxu0
      %v11477 = vadd.f32 0.0, %v11476
      %11478 = vdwg.mxu0
      %v11479 = vadd.f32 %v11179, %v11282
      %v11480 = vadd.f32 %v11180, %v11285
      %v11481 = vadd.f32 %v11181, %v11288
      %v11482 = vadd.f32 %v11182, %v11291
      %v11483 = vadd.f32 %v11183, %v11294
      %v11484 = vadd.f32 %v11184, %v11297
      %v11485 = vadd.f32 %v11185, %v11300
      %v11486 = vadd.f32 %v11186, %v11303
      %v11487 = vadd.f32 %v11187, %v11306
      %v11488 = vadd.f32 %v11188, %v11309
      %v11489 = vadd.f32 %v11189, %v11312
      %v11490 = vadd.f32 %v11190, %v11315
      %v11491 = vadd.f32 %v11191, %v11318
      %v11492 = vadd.f32 %v11192, %v11321
      %v11493 = vadd.f32 %v11193, %v11324
      %v11494 = vadd.f32 %v11194, %v11327
      %v11495 = vadd.f32 %v11195, %v11330
      %v11496 = vadd.f32 %v11196, %v11333
      %v11497 = vadd.f32 %v11197, %v11336
      %v11498 = vadd.f32 %v11198, %v11339
      %v11499 = vadd.f32 %v11199, %v11342
      %v11500 = vadd.f32 %v11200, %v11345
      %v11501 = vadd.f32 %v11201, %v11348
      %v11502 = vadd.f32 %v11202, %v11351
      %v11503 = vadd.f32 %v11203, %v11354
      %v11504 = vadd.f32 %v11204, %v11357
      %v11505 = vadd.f32 %v11205, %v11360
      %v11506 = vadd.f32 %v11206, %v11363
      %v11507 = vadd.f32 %v11207, %v11366
      %v11508 = vadd.f32 %v11208, %v11369
      %v11509 = vadd.f32 %v11209, %v11372
      %v11510 = vadd.f32 %v11210, %v11375
      %v11511 = vadd.f32 %v11211, %v11378
      %v11512 = vadd.f32 %v11212, %v11381
      %v11513 = vadd.f32 %v11213, %v11384
      %v11514 = vadd.f32 %v11214, %v11387
      %v11515 = vadd.f32 %v11215, %v11390
      %v11516 = vadd.f32 %v11216, %v11393
      %v11517 = vadd.f32 %v11217, %v11396
      %v11518 = vadd.f32 %v11218, %v11399
      %v11519 = vadd.f32 %v11219, %v11402
      %v11520 = vadd.f32 %v11220, %v11405
      %v11521 = vadd.f32 %v11221, %v11408
      %v11522 = vadd.f32 %v11222, %v11411
      %v11523 = vadd.f32 %v11223, %v11414
      %v11524 = vadd.f32 %v11224, %v11417
      %v11525 = vadd.f32 %v11225, %v11420
      %v11526 = vadd.f32 %v11226, %v11423
      %v11527 = vadd.f32 %v11227, %v11426
      %v11528 = vadd.f32 %v11228, %v11429
      %v11529 = vadd.f32 %v11229, %v11432
      %v11530 = vadd.f32 %v11230, %v11435
      %v11531 = vadd.f32 %v11231, %v11438
      %v11532 = vadd.f32 %v11232, %v11441
      %v11533 = vadd.f32 %v11233, %v11444
      %v11534 = vadd.f32 %v11234, %v11447
      %v11535 = vadd.f32 %v11235, %v11450
      %v11536 = vadd.f32 %v11236, %v11453
      %v11537 = vadd.f32 %v11237, %v11456
      %v11538 = vadd.f32 %v11238, %v11459
      %v11539 = vadd.f32 %v11239, %v11462
      %v11540 = vadd.f32 %v11240, %v11465
      %v11541 = vadd.f32 %v11241, %v11468
      %v11542 = vadd.f32 %v11242, %v11471
      %v11543 = vadd.f32 %v11243, %v11474
      %v11544 = vadd.f32 %v11244, %v11477
      %s11545 = scalar_lea.vmem %s3, 192
      %v11546 = vld [vmem:[%s11545] sm:$0x3f]
      %v11547 = vsel %vm2733, %v2519, 0
      %v11549 = vsel %vm2733, %v2520, 0
      %v11551 = vsel %vm2733, %v2521, 0
      %v11553 = vsel %vm2733, %v2522, 0
      %v11555 = vsel %vm2733, %v2523, 0
      %v11557 = vsel %vm2733, %v2524, 0
      %v11559 = vsel %vm2733, %v2525, 0
      %v11561 = vsel %vm2733, %v2526, 0
      %v11563 = vsel %vm2733, %v2527, 0
      %v11565 = vsel %vm2733, %v2528, 0
      %v11567 = vsel %vm2733, %v2529, 0
      %v11569 = vsel %vm2733, %v2530, 0
      %v11572 = vsel %vm2733, %v2531, 0
      %v11575 = vsel %vm2866, %v11546, 0
      %11577 = vmatpush.msra.mxu0 0.0
      %11578 = vmatpush.msra.mxu0 0.0
      %11579 = vmatpush.msra.mxu0 0.0
      %11580 = vmatpush.msra.mxu0 0.0
      %11581 = vmatpush.msra.mxu0 0.0
      %11582 = vmatpush.msra.mxu0 0.0
      %11583 = vmatpush.msra.mxu0 0.0
      %11584 = vmatpush.msra.mxu0 0.0
      %11585 = vmatpush.msra.mxu0 0.0
      %11586 = vmatpush.msra.mxu0 0.0
      %11587 = vmatpush.msra.mxu0 0.0
      %11588 = vmatpush.msra.mxu0 0.0
      %11589 = vmatpush.msra.mxu0 0.0
      %11590 = vmatpush.msra.mxu0 0.0
      %11591 = vmatpush.msra.mxu0 0.0
      %11592 = vmatpush.msra.mxu0 %v11575
      %11593 = vmatmul.f32.gmra.mxu0 %v3111
      %v11594 = vpop.f32.mrf.mxu0
      %v11595 = vadd.f32 0.0, %v11594
      %11596 = vmatmul.f32.gmra.mxu0 %v3113
      %v11597 = vpop.f32.mrf.mxu0
      %v11598 = vadd.f32 0.0, %v11597
      %11599 = vmatmul.f32.gmra.mxu0 %v3115
      %v11600 = vpop.f32.mrf.mxu0
      %v11601 = vadd.f32 0.0, %v11600
      %11602 = vmatmul.f32.gmra.mxu0 %v3117
      %v11603 = vpop.f32.mrf.mxu0
      %v11604 = vadd.f32 0.0, %v11603
      %11605 = vmatmul.f32.gmra.mxu0 %v3119
      %v11606 = vpop.f32.mrf.mxu0
      %v11607 = vadd.f32 0.0, %v11606
      %11608 = vmatmul.f32.gmra.mxu0 %v3121
      %v11609 = vpop.f32.mrf.mxu0
      %v11610 = vadd.f32 0.0, %v11609
      %11611 = vmatmul.f32.gmra.mxu0 %v3123
      %v11612 = vpop.f32.mrf.mxu0
      %v11613 = vadd.f32 0.0, %v11612
      %11614 = vmatmul.f32.gmra.mxu0 %v3125
      %v11615 = vpop.f32.mrf.mxu0
      %v11616 = vadd.f32 0.0, %v11615
      %11617 = vmatmul.f32.gmra.mxu0 %v3127
      %v11618 = vpop.f32.mrf.mxu0
      %v11619 = vadd.f32 0.0, %v11618
      %11620 = vmatmul.f32.gmra.mxu0 %v3129
      %v11621 = vpop.f32.mrf.mxu0
      %v11622 = vadd.f32 0.0, %v11621
      %11623 = vmatmul.f32.gmra.mxu0 %v3131
      %v11624 = vpop.f32.mrf.mxu0
      %v11625 = vadd.f32 0.0, %v11624
      %11626 = vmatmul.f32.gmra.mxu0 %v3133
      %v11627 = vpop.f32.mrf.mxu0
      %v11628 = vadd.f32 0.0, %v11627
      %11629 = vmatmul.f32.gmra.mxu0 %v3135
      %v11630 = vpop.f32.mrf.mxu0
      %v11631 = vadd.f32 0.0, %v11630
      %11632 = vmatmul.f32.gmra.mxu0 %v3137
      %v11633 = vpop.f32.mrf.mxu0
      %v11634 = vadd.f32 0.0, %v11633
      %11635 = vmatmul.f32.gmra.mxu0 %v3139
      %v11636 = vpop.f32.mrf.mxu0
      %v11637 = vadd.f32 0.0, %v11636
      %11638 = vmatmul.f32.gmra.mxu0 %v3141
      %v11639 = vpop.f32.mrf.mxu0
      %v11640 = vadd.f32 0.0, %v11639
      %11641 = vmatmul.f32.gmra.mxu0 %v3143
      %v11642 = vpop.f32.mrf.mxu0
      %v11643 = vadd.f32 0.0, %v11642
      %11644 = vmatmul.f32.gmra.mxu0 %v3145
      %v11645 = vpop.f32.mrf.mxu0
      %v11646 = vadd.f32 0.0, %v11645
      %11647 = vmatmul.f32.gmra.mxu0 %v3147
      %v11648 = vpop.f32.mrf.mxu0
      %v11649 = vadd.f32 0.0, %v11648
      %11650 = vmatmul.f32.gmra.mxu0 %v3149
      %v11651 = vpop.f32.mrf.mxu0
      %v11652 = vadd.f32 0.0, %v11651
      %11653 = vmatmul.f32.gmra.mxu0 %v3151
      %v11654 = vpop.f32.mrf.mxu0
      %v11655 = vadd.f32 0.0, %v11654
      %11656 = vmatmul.f32.gmra.mxu0 %v3153
      %v11657 = vpop.f32.mrf.mxu0
      %v11658 = vadd.f32 0.0, %v11657
      %11659 = vmatmul.f32.gmra.mxu0 %v3155
      %v11660 = vpop.f32.mrf.mxu0
      %v11661 = vadd.f32 0.0, %v11660
      %11662 = vmatmul.f32.gmra.mxu0 %v3157
      %v11663 = vpop.f32.mrf.mxu0
      %v11664 = vadd.f32 0.0, %v11663
      %11665 = vmatmul.f32.gmra.mxu0 %v3159
      %v11666 = vpop.f32.mrf.mxu0
      %v11667 = vadd.f32 0.0, %v11666
      %11668 = vmatmul.f32.gmra.mxu0 %v3161
      %v11669 = vpop.f32.mrf.mxu0
      %v11670 = vadd.f32 0.0, %v11669
      %11671 = vmatmul.f32.gmra.mxu0 %v3163
      %v11672 = vpop.f32.mrf.mxu0
      %v11673 = vadd.f32 0.0, %v11672
      %11674 = vmatmul.f32.gmra.mxu0 %v3165
      %v11675 = vpop.f32.mrf.mxu0
      %v11676 = vadd.f32 0.0, %v11675
      %11677 = vmatmul.f32.gmra.mxu0 %v3167
      %v11678 = vpop.f32.mrf.mxu0
      %v11679 = vadd.f32 0.0, %v11678
      %11680 = vmatmul.f32.gmra.mxu0 %v3169
      %v11681 = vpop.f32.mrf.mxu0
      %v11682 = vadd.f32 0.0, %v11681
      %11683 = vmatmul.f32.gmra.mxu0 %v3171
      %v11684 = vpop.f32.mrf.mxu0
      %v11685 = vadd.f32 0.0, %v11684
      %11686 = vmatmul.f32.gmra.mxu0 %v3173
      %v11687 = vpop.f32.mrf.mxu0
      %v11688 = vadd.f32 0.0, %v11687
      %11689 = vmatmul.f32.gmra.mxu0 %v3175
      %v11690 = vpop.f32.mrf.mxu0
      %v11691 = vadd.f32 0.0, %v11690
      %11692 = vmatmul.f32.gmra.mxu0 %v3177
      %v11693 = vpop.f32.mrf.mxu0
      %v11694 = vadd.f32 0.0, %v11693
      %11695 = vmatmul.f32.gmra.mxu0 %v3179
      %v11696 = vpop.f32.mrf.mxu0
      %v11697 = vadd.f32 0.0, %v11696
      %11698 = vmatmul.f32.gmra.mxu0 %v3181
      %v11699 = vpop.f32.mrf.mxu0
      %v11700 = vadd.f32 0.0, %v11699
      %11701 = vmatmul.f32.gmra.mxu0 %v3183
      %v11702 = vpop.f32.mrf.mxu0
      %v11703 = vadd.f32 0.0, %v11702
      %11704 = vmatmul.f32.gmra.mxu0 %v3185
      %v11705 = vpop.f32.mrf.mxu0
      %v11706 = vadd.f32 0.0, %v11705
      %11707 = vmatmul.f32.gmra.mxu0 %v3187
      %v11708 = vpop.f32.mrf.mxu0
      %v11709 = vadd.f32 0.0, %v11708
      %11710 = vmatmul.f32.gmra.mxu0 %v3189
      %v11711 = vpop.f32.mrf.mxu0
      %v11712 = vadd.f32 0.0, %v11711
      %11713 = vmatmul.f32.gmra.mxu0 %v3191
      %v11714 = vpop.f32.mrf.mxu0
      %v11715 = vadd.f32 0.0, %v11714
      %11716 = vmatmul.f32.gmra.mxu0 %v3193
      %v11717 = vpop.f32.mrf.mxu0
      %v11718 = vadd.f32 0.0, %v11717
      %11719 = vmatmul.f32.gmra.mxu0 %v3195
      %v11720 = vpop.f32.mrf.mxu0
      %v11721 = vadd.f32 0.0, %v11720
      %11722 = vmatmul.f32.gmra.mxu0 %v3197
      %v11723 = vpop.f32.mrf.mxu0
      %v11724 = vadd.f32 0.0, %v11723
      %11725 = vmatmul.f32.gmra.mxu0 %v3199
      %v11726 = vpop.f32.mrf.mxu0
      %v11727 = vadd.f32 0.0, %v11726
      %11728 = vmatmul.f32.gmra.mxu0 %v3201
      %v11729 = vpop.f32.mrf.mxu0
      %v11730 = vadd.f32 0.0, %v11729
      %11731 = vmatmul.f32.gmra.mxu0 %v3203
      %v11732 = vpop.f32.mrf.mxu0
      %v11733 = vadd.f32 0.0, %v11732
      %11734 = vmatmul.f32.gmra.mxu0 %v3205
      %v11735 = vpop.f32.mrf.mxu0
      %v11736 = vadd.f32 0.0, %v11735
      %11737 = vmatmul.f32.gmra.mxu0 %v3207
      %v11738 = vpop.f32.mrf.mxu0
      %v11739 = vadd.f32 0.0, %v11738
      %11740 = vmatmul.f32.gmra.mxu0 %v3209
      %v11741 = vpop.f32.mrf.mxu0
      %v11742 = vadd.f32 0.0, %v11741
      %11743 = vmatmul.f32.gmra.mxu0 %v3211
      %v11744 = vpop.f32.mrf.mxu0
      %v11745 = vadd.f32 0.0, %v11744
      %11746 = vmatmul.f32.gmra.mxu0 %v3213
      %v11747 = vpop.f32.mrf.mxu0
      %v11748 = vadd.f32 0.0, %v11747
      %11749 = vmatmul.f32.gmra.mxu0 %v3215
      %v11750 = vpop.f32.mrf.mxu0
      %v11751 = vadd.f32 0.0, %v11750
      %11752 = vmatmul.f32.gmra.mxu0 %v11547
      %v11753 = vpop.f32.mrf.mxu0
      %v11754 = vadd.f32 0.0, %v11753
      %11755 = vmatmul.f32.gmra.mxu0 %v11549
      %v11756 = vpop.f32.mrf.mxu0
      %v11757 = vadd.f32 0.0, %v11756
      %11758 = vmatmul.f32.gmra.mxu0 %v11551
      %v11759 = vpop.f32.mrf.mxu0
      %v11760 = vadd.f32 0.0, %v11759
      %11761 = vmatmul.f32.gmra.mxu0 %v11553
      %v11762 = vpop.f32.mrf.mxu0
      %v11763 = vadd.f32 0.0, %v11762
      %11764 = vmatmul.f32.gmra.mxu0 %v11555
      %v11765 = vpop.f32.mrf.mxu0
      %v11766 = vadd.f32 0.0, %v11765
      %11767 = vmatmul.f32.gmra.mxu0 %v11557
      %v11768 = vpop.f32.mrf.mxu0
      %v11769 = vadd.f32 0.0, %v11768
      %11770 = vmatmul.f32.gmra.mxu0 %v11559
      %v11771 = vpop.f32.mrf.mxu0
      %v11772 = vadd.f32 0.0, %v11771
      %11773 = vmatmul.f32.gmra.mxu0 %v11561
      %v11774 = vpop.f32.mrf.mxu0
      %v11775 = vadd.f32 0.0, %v11774
      %11776 = vmatmul.f32.gmra.mxu0 %v11563
      %v11777 = vpop.f32.mrf.mxu0
      %v11778 = vadd.f32 0.0, %v11777
      %11779 = vmatmul.f32.gmra.mxu0 %v11565
      %v11780 = vpop.f32.mrf.mxu0
      %v11781 = vadd.f32 0.0, %v11780
      %11782 = vmatmul.f32.gmra.mxu0 %v11567
      %v11783 = vpop.f32.mrf.mxu0
      %v11784 = vadd.f32 0.0, %v11783
      %11785 = vmatmul.f32.gmra.mxu0 %v11569
      %v11786 = vpop.f32.mrf.mxu0
      %v11787 = vadd.f32 0.0, %v11786
      %11788 = vmatmul.f32.gmra.mxu0 %v11572
      %v11789 = vpop.f32.mrf.mxu0
      %v11790 = vadd.f32 0.0, %v11789
      %11791 = vdwg.mxu0
      %v11792 = vadd.f32 %v11479, %v11595
      %v11793 = vadd.f32 %v11480, %v11598
      %v11794 = vadd.f32 %v11481, %v11601
      %v11795 = vadd.f32 %v11482, %v11604
      %v11796 = vadd.f32 %v11483, %v11607
      %v11797 = vadd.f32 %v11484, %v11610
      %v11798 = vadd.f32 %v11485, %v11613
      %v11799 = vadd.f32 %v11486, %v11616
      %v11800 = vadd.f32 %v11487, %v11619
      %v11801 = vadd.f32 %v11488, %v11622
      %v11802 = vadd.f32 %v11489, %v11625
      %v11803 = vadd.f32 %v11490, %v11628
      %v11804 = vadd.f32 %v11491, %v11631
      %v11805 = vadd.f32 %v11492, %v11634
      %v11806 = vadd.f32 %v11493, %v11637
      %v11807 = vadd.f32 %v11494, %v11640
      %v11808 = vadd.f32 %v11495, %v11643
      %v11809 = vadd.f32 %v11496, %v11646
      %v11810 = vadd.f32 %v11497, %v11649
      %v11811 = vadd.f32 %v11498, %v11652
      %v11812 = vadd.f32 %v11499, %v11655
      %v11813 = vadd.f32 %v11500, %v11658
      %v11814 = vadd.f32 %v11501, %v11661
      %v11815 = vadd.f32 %v11502, %v11664
      %v11816 = vadd.f32 %v11503, %v11667
      %v11817 = vadd.f32 %v11504, %v11670
      %v11818 = vadd.f32 %v11505, %v11673
      %v11819 = vadd.f32 %v11506, %v11676
      %v11820 = vadd.f32 %v11507, %v11679
      %v11821 = vadd.f32 %v11508, %v11682
      %v11822 = vadd.f32 %v11509, %v11685
      %v11823 = vadd.f32 %v11510, %v11688
      %v11824 = vadd.f32 %v11511, %v11691
      %v11825 = vadd.f32 %v11512, %v11694
      %v11826 = vadd.f32 %v11513, %v11697
      %v11827 = vadd.f32 %v11514, %v11700
      %v11828 = vadd.f32 %v11515, %v11703
      %v11829 = vadd.f32 %v11516, %v11706
      %v11830 = vadd.f32 %v11517, %v11709
      %v11831 = vadd.f32 %v11518, %v11712
      %v11832 = vadd.f32 %v11519, %v11715
      %v11833 = vadd.f32 %v11520, %v11718
      %v11834 = vadd.f32 %v11521, %v11721
      %v11835 = vadd.f32 %v11522, %v11724
      %v11836 = vadd.f32 %v11523, %v11727
      %v11837 = vadd.f32 %v11524, %v11730
      %v11838 = vadd.f32 %v11525, %v11733
      %v11839 = vadd.f32 %v11526, %v11736
      %v11840 = vadd.f32 %v11527, %v11739
      %v11841 = vadd.f32 %v11528, %v11742
      %v11842 = vadd.f32 %v11529, %v11745
      %v11843 = vadd.f32 %v11530, %v11748
      %v11844 = vadd.f32 %v11531, %v11751
      %v11845 = vadd.f32 %v11532, %v11754
      %v11846 = vadd.f32 %v11533, %v11757
      %v11847 = vadd.f32 %v11534, %v11760
      %v11848 = vadd.f32 %v11535, %v11763
      %v11849 = vadd.f32 %v11536, %v11766
      %v11850 = vadd.f32 %v11537, %v11769
      %v11851 = vadd.f32 %v11538, %v11772
      %v11852 = vadd.f32 %v11539, %v11775
      %v11853 = vadd.f32 %v11540, %v11778
      %v11854 = vadd.f32 %v11541, %v11781
      %v11855 = vadd.f32 %v11542, %v11784
      %v11856 = vadd.f32 %v11543, %v11787
      %v11857 = vadd.f32 %v11544, %v11790
      %v11858 = vld [vmem:[%s5] sm:$0xff]
      %v11859 = vld [vmem:[%s5 + $0x8] sm:$0xff]
      %v11860 = vld [vmem:[%s5 + $0x10] sm:$0xff]
      %v11861 = vld [vmem:[%s5 + $0x18] sm:$0xff]
      %v11862 = vld [vmem:[%s5 + $0x20] sm:$0xff]
      %v11863 = vld [vmem:[%s5 + $0x28] sm:$0xff]
      %v11864 = vld [vmem:[%s5 + $0x30] sm:$0xff]
      %v11865 = vld [vmem:[%s5 + $0x38] sm:$0xff]
      %v11866 = vld [vmem:[%s5 + $0x40] sm:$0xff]
      %v11867 = vld [vmem:[%s5 + $0x48] sm:$0xff]
      %v11868 = vld [vmem:[%s5 + $0x50] sm:$0xff]
      %v11869 = vld [vmem:[%s5 + $0x58] sm:$0xff]
      %v11870 = vld [vmem:[%s5 + $0x60] sm:$0xff]
      %v11871 = vld [vmem:[%s5 + $0x68] sm:$0xff]
      %v11872 = vld [vmem:[%s5 + $0x70] sm:$0xff]
      %v11873 = vld [vmem:[%s5 + $0x78] sm:$0xff]
      %v11874 = vld [vmem:[%s5 + $0x80] sm:$0xff]
      %v11875 = vld [vmem:[%s5 + $0x88] sm:$0xff]
      %v11876 = vld [vmem:[%s5 + $0x90] sm:$0xff]
      %v11877 = vld [vmem:[%s5 + $0x98] sm:$0xff]
      %v11878 = vld [vmem:[%s5 + $0xa0] sm:$0xff]
      %v11879 = vld [vmem:[%s5 + $0xa8] sm:$0xff]
      %v11880 = vld [vmem:[%s5 + $0xb0] sm:$0xff]
      %v11881 = vld [vmem:[%s5 + $0xb8] sm:$0xff]
      %v11882 = vld [vmem:[%s5 + $0xc0] sm:$0xff]
      %v11883 = vld [vmem:[%s5 + $0xc8] sm:$0xff]
      %v11884 = vld [vmem:[%s5 + $0xd0] sm:$0xff]
      %v11885 = vld [vmem:[%s5 + $0xd8] sm:$0xff]
      %v11886 = vld [vmem:[%s5 + $0xe0] sm:$0xff]
      %v11887 = vld [vmem:[%s5 + $0xe8] sm:$0xff]
      %v11888 = vld [vmem:[%s5 + $0xf0] sm:$0xff]
      %v11889 = vld [vmem:[%s5 + $0xf8] sm:$0xff]
      %v11890 = vld [vmem:[%s5 + $0x100] sm:$0xff]
      %v11891 = vld [vmem:[%s5 + $0x108] sm:$0xff]
      %v11892 = vld [vmem:[%s5 + $0x110] sm:$0xff]
      %v11893 = vld [vmem:[%s5 + $0x118] sm:$0xff]
      %v11894 = vld [vmem:[%s5 + $0x120] sm:$0xff]
      %v11895 = vld [vmem:[%s5 + $0x128] sm:$0xff]
      %v11896 = vld [vmem:[%s5 + $0x130] sm:$0xff]
      %v11897 = vld [vmem:[%s5 + $0x138] sm:$0xff]
      %v11898 = vld [vmem:[%s4] sm:$0x1]
      %v11900 = vperm.slane %v11898, 0
      %vm11902 = vcmask 72704
      %v11904 = vsel %vm11902, %v11862, 0
      %v11907 = vsel %vm11902, %v11867, 0
      %v11910 = vsel %vm11902, %v11872, 0
      %v11913 = vsel %vm11902, %v11877, 0
      %v11916 = vsel %vm11902, %v11882, 0
      %v11919 = vsel %vm11902, %v11887, 0
      %v11922 = vsel %vm11902, %v11892, 0
      %v11925 = vsel %vm11902, %v11897, 0
      %v11928 = vsel %vm9794, %v11857, 0
      %11930 = vmatpush.msra.mxu0 %v11807
      %11931 = vmatpush.msra.mxu0 %v11806
      %11932 = vmatpush.msra.mxu0 %v11805
      %11933 = vmatpush.msra.mxu0 %v11804
      %11934 = vmatpush.msra.mxu0 %v11803
      %11935 = vmatpush.msra.mxu0 %v11802
      %11936 = vmatpush.msra.mxu0 %v11801
      %11937 = vmatpush.msra.mxu0 %v11800
      %11938 = vmatpush.msra.mxu0 %v11799
      %11939 = vmatpush.msra.mxu0 %v11798
      %11940 = vmatpush.msra.mxu0 %v11797
      %11941 = vmatpush.msra.mxu0 %v11796
      %11942 = vmatpush.msra.mxu0 %v11795
      %11943 = vmatpush.msra.mxu0 %v11794
      %11944 = vmatpush.msra.mxu0 %v11793
      %11945 = vmatpush.msra.mxu0 %v11792
      %11946 = vmatmul.f32.gmra.mxu0 %v11858
      %v11947 = vpop.f32.mrf.mxu0
      %v11948 = vadd.f32 %v11900, %v11947
      %11949 = vmatmul.f32.gmra.mxu0 %v11863
      %v11950 = vpop.f32.mrf.mxu0
      %v11951 = vadd.f32 %v11900, %v11950
      %11952 = vmatmul.f32.gmra.mxu0 %v11868
      %v11953 = vpop.f32.mrf.mxu0
      %v11954 = vadd.f32 %v11900, %v11953
      %11955 = vmatmul.f32.gmra.mxu0 %v11873
      %v11956 = vpop.f32.mrf.mxu0
      %v11957 = vadd.f32 %v11900, %v11956
      %11958 = vmatmul.f32.gmra.mxu0 %v11878
      %v11959 = vpop.f32.mrf.mxu0
      %v11960 = vadd.f32 %v11900, %v11959
      %11961 = vmatmul.f32.gmra.mxu0 %v11883
      %v11962 = vpop.f32.mrf.mxu0
      %v11963 = vadd.f32 %v11900, %v11962
      %11964 = vmatmul.f32.gmra.mxu0 %v11888
      %v11965 = vpop.f32.mrf.mxu0
      %v11966 = vadd.f32 %v11900, %v11965
      %11967 = vmatmul.f32.gmra.mxu0 %v11893
      %v11968 = vpop.f32.mrf.mxu0
      %v11969 = vadd.f32 %v11900, %v11968
      %11970 = vdwg.mxu0
      %11971 = vmatpush.msra.mxu0 %v11823
      %11972 = vmatpush.msra.mxu0 %v11822
      %11973 = vmatpush.msra.mxu0 %v11821
      %11974 = vmatpush.msra.mxu0 %v11820
      %11975 = vmatpush.msra.mxu0 %v11819
      %11976 = vmatpush.msra.mxu0 %v11818
      %11977 = vmatpush.msra.mxu0 %v11817
      %11978 = vmatpush.msra.mxu0 %v11816
      %11979 = vmatpush.msra.mxu0 %v11815
      %11980 = vmatpush.msra.mxu0 %v11814
      %11981 = vmatpush.msra.mxu0 %v11813
      %11982 = vmatpush.msra.mxu0 %v11812
      %11983 = vmatpush.msra.mxu0 %v11811
      %11984 = vmatpush.msra.mxu0 %v11810
      %11985 = vmatpush.msra.mxu0 %v11809
      %11986 = vmatpush.msra.mxu0 %v11808
      %11987 = vmatmul.f32.gmra.mxu0 %v11859
      %v11988 = vpop.f32.mrf.mxu0
      %v11989 = vadd.f32 %v11948, %v11988
      %11990 = vmatmul.f32.gmra.mxu0 %v11864
      %v11991 = vpop.f32.mrf.mxu0
      %v11992 = vadd.f32 %v11951, %v11991
      %11993 = vmatmul.f32.gmra.mxu0 %v11869
      %v11994 = vpop.f32.mrf.mxu0
      %v11995 = vadd.f32 %v11954, %v11994
      %11996 = vmatmul.f32.gmra.mxu0 %v11874
      %v11997 = vpop.f32.mrf.mxu0
      %v11998 = vadd.f32 %v11957, %v11997
      %11999 = vmatmul.f32.gmra.mxu0 %v11879
      %v12000 = vpop.f32.mrf.mxu0
      %v12001 = vadd.f32 %v11960, %v12000
      %12002 = vmatmul.f32.gmra.mxu0 %v11884
      %v12003 = vpop.f32.mrf.mxu0
      %v12004 = vadd.f32 %v11963, %v12003
      %12005 = vmatmul.f32.gmra.mxu0 %v11889
      %v12006 = vpop.f32.mrf.mxu0
      %v12007 = vadd.f32 %v11966, %v12006
      %12008 = vmatmul.f32.gmra.mxu0 %v11894
      %v12009 = vpop.f32.mrf.mxu0
      %v12010 = vadd.f32 %v11969, %v12009
      %12011 = vdwg.mxu0
      %12012 = vmatpush.msra.mxu0 %v11839
      %12013 = vmatpush.msra.mxu0 %v11838
      %12014 = vmatpush.msra.mxu0 %v11837
      %12015 = vmatpush.msra.mxu0 %v11836
      %12016 = vmatpush.msra.mxu0 %v11835
      %12017 = vmatpush.msra.mxu0 %v11834
      %12018 = vmatpush.msra.mxu0 %v11833
      %12019 = vmatpush.msra.mxu0 %v11832
      %12020 = vmatpush.msra.mxu0 %v11831
      %12021 = vmatpush.msra.mxu0 %v11830
      %12022 = vmatpush.msra.mxu0 %v11829
      %12023 = vmatpush.msra.mxu0 %v11828
      %12024 = vmatpush.msra.mxu0 %v11827
      %12025 = vmatpush.msra.mxu0 %v11826
      %12026 = vmatpush.msra.mxu0 %v11825
      %12027 = vmatpush.msra.mxu0 %v11824
      %12028 = vmatmul.f32.gmra.mxu0 %v11860
      %v12029 = vpop.f32.mrf.mxu0
      %v12030 = vadd.f32 %v11989, %v12029
      %12031 = vmatmul.f32.gmra.mxu0 %v11865
      %v12032 = vpop.f32.mrf.mxu0
      %v12033 = vadd.f32 %v11992, %v12032
      %12034 = vmatmul.f32.gmra.mxu0 %v11870
      %v12035 = vpop.f32.mrf.mxu0
      %v12036 = vadd.f32 %v11995, %v12035
      %12037 = vmatmul.f32.gmra.mxu0 %v11875
      %v12038 = vpop.f32.mrf.mxu0
      %v12039 = vadd.f32 %v11998, %v12038
      %12040 = vmatmul.f32.gmra.mxu0 %v11880
      %v12041 = vpop.f32.mrf.mxu0
      %v12042 = vadd.f32 %v12001, %v12041
      %12043 = vmatmul.f32.gmra.mxu0 %v11885
      %v12044 = vpop.f32.mrf.mxu0
      %v12045 = vadd.f32 %v12004, %v12044
      %12046 = vmatmul.f32.gmra.mxu0 %v11890
      %v12047 = vpop.f32.mrf.mxu0
      %v12048 = vadd.f32 %v12007, %v12047
      %12049 = vmatmul.f32.gmra.mxu0 %v11895
      %v12050 = vpop.f32.mrf.mxu0
      %v12051 = vadd.f32 %v12010, %v12050
      %12052 = vdwg.mxu0
      %12053 = vmatpush.msra.mxu0 %v11855
      %12054 = vmatpush.msra.mxu0 %v11854
      %12055 = vmatpush.msra.mxu0 %v11853
      %12056 = vmatpush.msra.mxu0 %v11852
      %12057 = vmatpush.msra.mxu0 %v11851
      %12058 = vmatpush.msra.mxu0 %v11850
      %12059 = vmatpush.msra.mxu0 %v11849
      %12060 = vmatpush.msra.mxu0 %v11848
      %12061 = vmatpush.msra.mxu0 %v11847
      %12062 = vmatpush.msra.mxu0 %v11846
      %12063 = vmatpush.msra.mxu0 %v11845
      %12064 = vmatpush.msra.mxu0 %v11844
      %12065 = vmatpush.msra.mxu0 %v11843
      %12066 = vmatpush.msra.mxu0 %v11842
      %12067 = vmatpush.msra.mxu0 %v11841
      %12068 = vmatpush.msra.mxu0 %v11840
      %12069 = vmatmul.f32.gmra.mxu0 %v11861
      %v12070 = vpop.f32.mrf.mxu0
      %v12071 = vadd.f32 %v12030, %v12070
      %12072 = vmatmul.f32.gmra.mxu0 %v11866
      %v12073 = vpop.f32.mrf.mxu0
      %v12074 = vadd.f32 %v12033, %v12073
      %12075 = vmatmul.f32.gmra.mxu0 %v11871
      %v12076 = vpop.f32.mrf.mxu0
      %v12077 = vadd.f32 %v12036, %v12076
      %12078 = vmatmul.f32.gmra.mxu0 %v11876
      %v12079 = vpop.f32.mrf.mxu0
      %v12080 = vadd.f32 %v12039, %v12079
      %12081 = vmatmul.f32.gmra.mxu0 %v11881
      %v12082 = vpop.f32.mrf.mxu0
      %v12083 = vadd.f32 %v12042, %v12082
      %12084 = vmatmul.f32.gmra.mxu0 %v11886
      %v12085 = vpop.f32.mrf.mxu0
      %v12086 = vadd.f32 %v12045, %v12085
      %12087 = vmatmul.f32.gmra.mxu0 %v11891
      %v12088 = vpop.f32.mrf.mxu0
      %v12089 = vadd.f32 %v12048, %v12088
      %12090 = vmatmul.f32.gmra.mxu0 %v11896
      %v12091 = vpop.f32.mrf.mxu0
      %v12092 = vadd.f32 %v12051, %v12091
      %12093 = vdwg.mxu0
      %12094 = vmatpush.msra.mxu0 0.0
      %12095 = vmatpush.msra.mxu0 0.0
      %12096 = vmatpush.msra.mxu0 0.0
      %12097 = vmatpush.msra.mxu0 0.0
      %12098 = vmatpush.msra.mxu0 0.0
      %12099 = vmatpush.msra.mxu0 0.0
      %12100 = vmatpush.msra.mxu0 0.0
      %12101 = vmatpush.msra.mxu0 0.0
      %12102 = vmatpush.msra.mxu0 0.0
      %12103 = vmatpush.msra.mxu0 0.0
      %12104 = vmatpush.msra.mxu0 0.0
      %12105 = vmatpush.msra.mxu0 0.0
      %12106 = vmatpush.msra.mxu0 0.0
      %12107 = vmatpush.msra.mxu0 0.0
      %12108 = vmatpush.msra.mxu0 %v11928
      %12109 = vmatpush.msra.mxu0 %v11856
      %12110 = vmatmul.f32.gmra.mxu0 %v11904
      %v12111 = vpop.f32.mrf.mxu0
      %v12112 = vadd.f32 %v12071, %v12111
      %12113 = vmatmul.f32.gmra.mxu0 %v11907
      %v12114 = vpop.f32.mrf.mxu0
      %v12115 = vadd.f32 %v12074, %v12114
      %12116 = vmatmul.f32.gmra.mxu0 %v11910
      %v12117 = vpop.f32.mrf.mxu0
      %v12118 = vadd.f32 %v12077, %v12117
      %12119 = vmatmul.f32.gmra.mxu0 %v11913
      %v12120 = vpop.f32.mrf.mxu0
      %v12121 = vadd.f32 %v12080, %v12120
      %12122 = vmatmul.f32.gmra.mxu0 %v11916
      %v12123 = vpop.f32.mrf.mxu0
      %v12124 = vadd.f32 %v12083, %v12123
      %12125 = vmatmul.f32.gmra.mxu0 %v11919
      %v12126 = vpop.f32.mrf.mxu0
      %v12127 = vadd.f32 %v12086, %v12126
      %12128 = vmatmul.f32.gmra.mxu0 %v11922
      %v12129 = vpop.f32.mrf.mxu0
      %v12130 = vadd.f32 %v12089, %v12129
      %12131 = vmatmul.f32.gmra.mxu0 %v11925
      %v12132 = vpop.f32.mrf.mxu0
      %v12133 = vadd.f32 %v12092, %v12132
      %12134 = vdwg.mxu0
      %v12135 = vtanh.pop %v12112
      %v12136 = vtanh.pop %v12115
      %v12137 = vtanh.pop %v12118
      %v12138 = vtanh.pop %v12121
      %v12139 = vtanh.pop %v12124
      %v12140 = vtanh.pop %v12127
      %v12141 = vtanh.pop %v12130
      %v12142 = vtanh.pop %v12133
      %v12143 = vadd.f32 %v12135, %v12137
      %v12144 = vadd.f32 %v12136, %v12138
      %v12145 = vadd.f32 %v12143, %v12139
      %v12146 = vadd.f32 %v12144, %v12140
      %v12147 = vadd.f32 %v12145, %v12141
      %v12148 = vadd.f32 %v12146, %v12142
      %v12149 = vmul.f32 %v12147, 0.25
      %v12150 = vmul.f32 %v12148, 0.25
      %v12152 = vrot.slane %v12149, 1
      %12153 = vrot.lane.b32.xlu0 %v12152, 16
      %v12154 = vpop.permute.xlu0 %12153
      %v12156 = vrot.slane %v12149, 2
      %12157 = vrot.lane.b32.xlu0 %v12156, 32
      %v12158 = vpop.permute.xlu0 %12157
      %v12160 = vrot.slane %v12149, 3
      %12161 = vrot.lane.b32.xlu0 %v12160, 48
      %v12162 = vpop.permute.xlu0 %12161
      %v12164 = vrot.slane %v12149, 4
      %12165 = vrot.lane.b32.xlu0 %v12164, 64
      %v12166 = vpop.permute.xlu0 %12165
      %v12168 = vrot.slane %v12149, 5
      %12169 = vrot.lane.b32.xlu0 %v12168, 80
      %v12170 = vpop.permute.xlu0 %12169
      %v12172 = vrot.slane %v12149, 6
      %12173 = vrot.lane.b32.xlu0 %v12172, 96
      %v12174 = vpop.permute.xlu0 %12173
      %v12176 = vrot.slane %v12149, 7
      %12177 = vrot.lane.b32.xlu0 %v12176, 112
      %v12178 = vpop.permute.xlu0 %12177
      %v12181 = vrot.slane %v12150, 1
      %12182 = vrot.lane.b32.xlu0 %v12181, 16
      %v12183 = vpop.permute.xlu0 %12182
      %v12185 = vrot.slane %v12150, 2
      %12186 = vrot.lane.b32.xlu0 %v12185, 32
      %v12187 = vpop.permute.xlu0 %12186
      %v12189 = vrot.slane %v12150, 3
      %12190 = vrot.lane.b32.xlu0 %v12189, 48
      %v12191 = vpop.permute.xlu0 %12190
      %v12193 = vrot.slane %v12150, 4
      %12194 = vrot.lane.b32.xlu0 %v12193, 64
      %v12195 = vpop.permute.xlu0 %12194
      %v12197 = vrot.slane %v12150, 5
      %12198 = vrot.lane.b32.xlu0 %v12197, 80
      %v12199 = vpop.permute.xlu0 %12198
      %v12201 = vrot.slane %v12150, 6
      %12202 = vrot.lane.b32.xlu0 %v12201, 96
      %v12203 = vpop.permute.xlu0 %12202
      %v12205 = vrot.slane %v12150, 7
      %12206 = vrot.lane.b32.xlu0 %v12205, 112
      %v12207 = vpop.permute.xlu0 %12206
      %vm12209 = vcmask 130048
      %v12210 = vsel %vm12209, %v12149, %v12154
      %vm12211 = vcmask 261120
      %v12212 = vsel %vm12211, %v12210, %v12158
      %vm12213 = vcmask 392192
      %v12214 = vsel %vm12213, %v12212, %v12162
      %vm12215 = vcmask 523264
      %v12216 = vsel %vm12215, %v12214, %v12166
      %vm12217 = vcmask 654336
      %v12218 = vsel %vm12217, %v12216, %v12170
      %vm12219 = vcmask 785408
      %v12220 = vsel %vm12219, %v12218, %v12174
      %vm12221 = vcmask 916480
      %v12222 = vsel %vm12221, %v12220, %v12178
      %v12223 = vsel %vm12209, %v12150, %v12183
      %v12224 = vsel %vm12211, %v12223, %v12187
      %v12225 = vsel %vm12213, %v12224, %v12191
      %v12226 = vsel %vm12215, %v12225, %v12195
      %v12227 = vsel %vm12217, %v12226, %v12199
      %v12228 = vsel %vm12219, %v12227, %v12203
      %v12229 = vsel %vm12221, %v12228, %v12207
      %v12230 = vld [vmem:[%s6] sm:$0xff]
      %v12231 = vld [vmem:[%s6 + $0x8] sm:$0xff]
      %v12232 = vld [vmem:[%s6 + $0x10] sm:$0xff]
      %v12233 = vld [vmem:[%s6 + $0x18] sm:$0xff]
      %v12234 = vld [vmem:[%s6 + $0x20] sm:$0xff]
      %v12235 = vld [vmem:[%s6 + $0x28] sm:$0xff]
      %v12236 = vld [vmem:[%s6 + $0x30] sm:$0xff]
      %v12237 = vld [vmem:[%s6 + $0x38] sm:$0xff]
      %v12238 = vld [vmem:[%s6 + $0x40] sm:$0xff]
      %v12239 = vld [vmem:[%s6 + $0x48] sm:$0xff]
      %v12240 = vld [vmem:[%s6 + $0x50] sm:$0xff]
      %v12241 = vld [vmem:[%s6 + $0x58] sm:$0xff]
      %v12242 = vld [vmem:[%s6 + $0x60] sm:$0xff]
      %v12243 = vld [vmem:[%s6 + $0x68] sm:$0xff]
      %v12244 = vld [vmem:[%s6 + $0x70] sm:$0xff]
      %v12245 = vld [vmem:[%s6 + $0x78] sm:$0xff]
      %v12246 = vld [vmem:[%s6 + $0x80] sm:$0xff]
      %v12247 = vld [vmem:[%s6 + $0x88] sm:$0xff]
      %v12248 = vld [vmem:[%s6 + $0x90] sm:$0xff]
      %v12249 = vld [vmem:[%s6 + $0x98] sm:$0xff]
      %v12250 = vld [vmem:[%s6 + $0xa0] sm:$0xff]
      %v12251 = vld [vmem:[%s6 + $0xa8] sm:$0xff]
      %v12252 = vld [vmem:[%s6 + $0xb0] sm:$0xff]
      %v12253 = vld [vmem:[%s6 + $0xb8] sm:$0xff]
      %v12254 = vld [vmem:[%s6 + $0xc0] sm:$0xff]
      %v12255 = vld [vmem:[%s6 + $0xc8] sm:$0xff]
      %v12256 = vld [vmem:[%s6 + $0xd0] sm:$0xff]
      %v12257 = vld [vmem:[%s6 + $0xd8] sm:$0xff]
      %v12258 = vld [vmem:[%s6 + $0xe0] sm:$0xff]
      %v12259 = vld [vmem:[%s6 + $0xe8] sm:$0xff]
      %v12260 = vld [vmem:[%s6 + $0xf0] sm:$0xff]
      %v12261 = vld [vmem:[%s6 + $0xf8] sm:$0xff]
      %v12262 = vld [vmem:[%s7] sm:$0x1]
      %12263 = vmatpush.msra.mxu0 %v12245
      %12264 = vmatpush.msra.mxu0 %v12244
      %12265 = vmatpush.msra.mxu0 %v12243
      %12266 = vmatpush.msra.mxu0 %v12242
      %12267 = vmatpush.msra.mxu0 %v12241
      %12268 = vmatpush.msra.mxu0 %v12240
      %12269 = vmatpush.msra.mxu0 %v12239
      %12270 = vmatpush.msra.mxu0 %v12238
      %12271 = vmatpush.msra.mxu0 %v12237
      %12272 = vmatpush.msra.mxu0 %v12236
      %12273 = vmatpush.msra.mxu0 %v12235
      %12274 = vmatpush.msra.mxu0 %v12234
      %12275 = vmatpush.msra.mxu0 %v12233
      %12276 = vmatpush.msra.mxu0 %v12232
      %12277 = vmatpush.msra.mxu0 %v12231
      %12278 = vmatpush.msra.mxu0 %v12230
      %12279 = vmatmul.f32.gmra.mxu0 %v12222
      %v12280 = vpop.f32.mrf.mxu0
      %v12281 = vadd.f32 %v12262, %v12280
      %12282 = vdwg.mxu0
      %12283 = vmatpush.msra.mxu0 %v12261
      %12284 = vmatpush.msra.mxu0 %v12260
      %12285 = vmatpush.msra.mxu0 %v12259
      %12286 = vmatpush.msra.mxu0 %v12258
      %12287 = vmatpush.msra.mxu0 %v12257
      %12288 = vmatpush.msra.mxu0 %v12256
      %12289 = vmatpush.msra.mxu0 %v12255
      %12290 = vmatpush.msra.mxu0 %v12254
      %12291 = vmatpush.msra.mxu0 %v12253
      %12292 = vmatpush.msra.mxu0 %v12252
      %12293 = vmatpush.msra.mxu0 %v12251
      %12294 = vmatpush.msra.mxu0 %v12250
      %12295 = vmatpush.msra.mxu0 %v12249
      %12296 = vmatpush.msra.mxu0 %v12248
      %12297 = vmatpush.msra.mxu0 %v12247
      %12298 = vmatpush.msra.mxu0 %v12246
      %12299 = vmatmul.f32.gmra.mxu0 %v12229
      %v12300 = vpop.f32.mrf.mxu0
      %v12301 = vadd.f32 %v12281, %v12300
      %12302 = vdwg.mxu0
      %v12303 = vtanh.pop %v12301
      %v12304 = vld [vmem:[%s8] sm:$0xff]
      %v12305 = vld [vmem:[%s8 + $0x8] sm:$0xff]
      %v12306 = vld [vmem:[%s8 + $0x10] sm:$0xff]
      %v12307 = vld [vmem:[%s8 + $0x18] sm:$0xff]
      %v12308 = vld [vmem:[%s8 + $0x20] sm:$0xff]
      %v12309 = vld [vmem:[%s8 + $0x28] sm:$0xff]
      %v12310 = vld [vmem:[%s8 + $0x30] sm:$0xff]
      %v12311 = vld [vmem:[%s8 + $0x38] sm:$0xff]
      %v12312 = vld [vmem:[%s8 + $0x40] sm:$0xff]
      %v12313 = vld [vmem:[%s8 + $0x48] sm:$0xff]
      %v12314 = vld [vmem:[%s8 + $0x50] sm:$0xff]
      %v12315 = vld [vmem:[%s8 + $0x58] sm:$0xff]
      %v12316 = vld [vmem:[%s8 + $0x60] sm:$0xff]
      %v12317 = vld [vmem:[%s8 + $0x68] sm:$0xff]
      %v12318 = vld [vmem:[%s8 + $0x70] sm:$0xff]
      %v12319 = vld [vmem:[%s9] sm:$0x1]
      %vm12320 = vcmask 982016
      %v12322 = vsel %vm12320, %v12303, 0
      %12324 = vmatpush.msra.mxu0 0.0
      %12325 = vmatpush.msra.mxu0 %v12318
      %12326 = vmatpush.msra.mxu0 %v12317
      %12327 = vmatpush.msra.mxu0 %v12316
      %12328 = vmatpush.msra.mxu0 %v12315
      %12329 = vmatpush.msra.mxu0 %v12314
      %12330 = vmatpush.msra.mxu0 %v12313
      %12331 = vmatpush.msra.mxu0 %v12312
      %12332 = vmatpush.msra.mxu0 %v12311
      %12333 = vmatpush.msra.mxu0 %v12310
      %12334 = vmatpush.msra.mxu0 %v12309
      %12335 = vmatpush.msra.mxu0 %v12308
      %12336 = vmatpush.msra.mxu0 %v12307
      %12337 = vmatpush.msra.mxu0 %v12306
      %12338 = vmatpush.msra.mxu0 %v12305
      %12339 = vmatpush.msra.mxu0 %v12304
      %12340 = vmatmul.f32.gmra.mxu0 %v12322
      %v12341 = vpop.f32.mrf.mxu0
      %v12342 = vadd.f32 %v12319, %v12341
      %12343 = vdwg.mxu0
      %v12344 = vtanh.pop %v12342
      %v12345 = vld [vmem:[%s10] sm:$0x1]
      %v12346 = vmul.f32 %v12344, %v12345
      %vm12347 = vcmask 679936
      %v12348 = vsel %vm12347, %v12346, 0.0
      %12349 = vadd.xlane.f32.xlu0 %v12348
      %v12350 = vpop.xlane.xlu0 %12349
      %v12351 = vld [vmem:[#allocation2] sm:$0x1]
      %v12352 = vadd.f32 %v12350, %v12351
      %v12353 = vsub.f32 0.0, %v12352
      %v12354 = vmul.f32 %v12353, 1.442695
      %v12355 = vpow.pop %v12354
      %v12356 = vadd.f32 %v12355, 1.0
      %v12357 = vrcp.pop %v12356
      %v12358 = vmul.f32 %v12356, %v12357
      %v12359 = vsub.f32 1.0, %v12358
      %v12360 = vmul.f32 %v12357, %v12359
      %v12361 = vadd.f32 %v12357, %v12360
      %vm12362 = vweird.f32 %v12356
      %vm12363 = vweird.f32 %v12357
      %vm12364 = vmor %vm12362, %vm12363
      %v12365 = vsel %vm12364, %v12357, %v12361
      %v12366 = vand.u32 2147483647, %v12356
      %vm12367 = vcmp.eq.f32.partialorder %v12366, 8.507059e+37
      %v12368 = vand.u32 %v12356, 2147483648
      %v12369 = vor.u32 1.1754944e-38, %v12368
      %v12370 = vsel %vm12367, %v12369, %v12365
      %v12371 = vmul.f32 1.0, %v12370
      %vm12372 = vcmask 0
      %12373 = vst.msk [vmem:[%s411] sm:$0x1] %vm12372, %v12371
      %p12374 = scmp.lt.s32.totalorder %s25, 1
      %s12375 = scalar_select %p12374, %s25, 1
      %s12376 = scalar_lea.vmem %s12, %s12375
      // Predicated region
      $region69: #{brain_tumor_cnn_forward.1} parent=67 // pred_check
        %p12377 = pneg %p300
      $region70: #{brain_tumor_cnn_forward.1} parent=67 // pred_check_branch
        %12379 = sbr.rel (%p12377) target = $region72
      $region71: #{brain_tumor_cnn_forward.1} parent=67 // pred_region
        _
      $region72: #{brain_tumor_cnn_forward.1} parent=67 // pred_fallthru
        _
    $region68: #{brain_tumor_cnn_forward.1} parent=5 // pred_fallthru
      _
    %p12380 = scmp.le.s32.totalorder 2, %s20
    // Predicated region
    $region73: #{brain_tumor_cnn_forward.1} parent=5 // pred_check
      %p12381 = pneg %p12380
    $region74: #{brain_tumor_cnn_forward.1} parent=5 // pred_check_branch
      %12383 = sbr.rel (%p12381) target = $region76
    $region75: #{brain_tumor_cnn_forward.1} parent=5 // pred_region
      %s12384 = ssub.s32 %s20, 2
      // Predicated region
      $region77: #{brain_tumor_cnn_forward.1} parent=75 // pred_check
        %p12385 = pneg %p306
      $region78: #{brain_tumor_cnn_forward.1} parent=75 // pred_check_branch
        %12387 = sbr.rel (%p12385) target = $region80
      $region79: #{brain_tumor_cnn_forward.1} parent=75 // pred_region
        %p12388 = scmp.lt.s32.totalorder %s26, 1
        %s12389 = scalar_select %p12388, %s26, 1
        %s12390 = scalar_lea.vmem %s12, %s12389
      $region80: #{brain_tumor_cnn_forward.1} parent=75 // pred_fallthru
        _
    $region76: #{brain_tumor_cnn_forward.1} parent=5 // pred_fallthru
      _
  $region6: #{brain_tumor_cnn_forward.1} parent=0 // loop_footer
    %s24 = sadd.s32 1, %s20
  $region7: #{brain_tumor_cnn_forward.1} parent=0 // loop_footer_branch
    %19 = sbr.rel target = $region3
  $region8: #{brain_tumor_cnn_forward.1} parent=0 // loop_exit
    _

</llo_original>
